<compile_context>
chip_gen: v5e
topology: v5e:2x2
jax: 0.10.0
libtpu: 0.0.40
codegen_flags: <defaults>
</compile_context>

<pallas_src>
import jax
import jax.numpy as jnp
from jax.experimental import pallas as pl
from jax.experimental.pallas import tpu as pltpu


# ----------------------------- Pallas kernels ------------------------------

def _matmul_bias_relu_kernel(x_ref, w_ref, b_ref, o_ref):
    # x_ref: (tm, Kp) bf16   w_ref: (Kp, Np) bf16   b_ref: (1, Np) f32
    # o_ref: (tm, Np) f32 or bf16
    acc = jnp.dot(x_ref[...], w_ref[...], preferred_element_type=jnp.float32)
    o_ref[...] = jnp.maximum(acc + b_ref[...], 0.0).astype(o_ref.dtype)


def _matmul_pool_bias_relu_kernel(x_ref, w_ref, b_ref, o_ref):
    # x_ref: (4, tp, Kp) bf16 -- the four 2x2 pooling phases of the patches.
    # w_ref: (Kp, Np) bf16   b_ref: (1, Np) f32   o_ref: (tp, Np) f32 or bf16
    w = w_ref[...]
    m = jnp.dot(x_ref[0], w, preferred_element_type=jnp.float32)
    m = jnp.maximum(m, jnp.dot(x_ref[1], w, preferred_element_type=jnp.float32))
    m = jnp.maximum(m, jnp.dot(x_ref[2], w, preferred_element_type=jnp.float32))
    m = jnp.maximum(m, jnp.dot(x_ref[3], w, preferred_element_type=jnp.float32))
    o_ref[...] = jnp.maximum(m + b_ref[...], 0.0).astype(o_ref.dtype)


# ----------------------------- helpers --------------------------------------

def _round_up(x, m):
    return -(-x // m) * m


def _pick_tile(m):
    """Largest M tile (<=512) that divides m with at least 2 grid steps."""
    if m <= 512:
        return m
    for t in (512, 256, 128):
        if m % t == 0 and m // t >= 2:
            return t
    return m


def _pad_last(a, to):
    k = a.shape[-1]
    if k == to:
        return a
    pads = [(0, 0)] * (a.ndim - 1) + [(0, to - k)]
    return jnp.pad(a, pads)


def _prep_weight(w_oihw, kp, np_):
    """(Cout,Cin,KH,KW) -> zero-padded (Kp, Np) bf16, matching patch order."""
    cout, cin, kh, kw = w_oihw.shape
    w2 = jnp.transpose(w_oihw, (2, 3, 1, 0)).reshape(kh * kw * cin, cout)
    w2 = jnp.pad(w2, ((0, kp - kh * kw * cin), (0, np_ - cout)))
    return w2.astype(jnp.bfloat16)


def _prep_bias(b, np_):
    cout = b.shape[0]
    return jnp.pad(b, (0, np_ - cout)).reshape(1, np_).astype(jnp.float32)


# ----------------------------- im2col glue ----------------------------------

def _im2col(x, kh, kw, stride, pad):
    """x: (N,H,W,C) -> patches (N*Ho*Wo, KH*KW*C), plus (Ho, Wo)."""
    n, h, w, c = x.shape
    ho = (h + 2 * pad - kh) // stride + 1
    wo = (w + 2 * pad - kw) // stride + 1
    xp = jnp.pad(x, ((0, 0), (pad, pad), (pad, pad), (0, 0)))
    cols = []
    for i in range(kh):
        for j in range(kw):
            cols.append(xp[:, i:i + stride * ho:stride, j:j + stride * wo:stride, :])
    patches = jnp.stack(cols, axis=3).reshape(n * ho * wo, kh * kw * c)
    return patches, ho, wo


def _im2col_pooled(x, kh, kw, stride, pad):
    """Phase-separated im2col for conv followed by 2x2/stride-2 maxpool.

    Returns (4, N*Ho2*Wo2, KH*KW*C): phase p = (pi, pj) of the pooling window,
    rows ordered (n, pooled_h, pooled_w) so no transpose of the big patches
    array is ever needed.
    """
    n, h, w, c = x.shape
    ho = (h + 2 * pad - kh) // stride + 1
    wo = (w + 2 * pad - kw) // stride + 1
    ho2, wo2 = ho // 2, wo // 2
    xp = jnp.pad(x, ((0, 0), (pad, pad), (pad, pad), (0, 0)))
    s2 = 2 * stride
    phases = []
    for pi in range(2):
        for pj in range(2):
            cols = []
            for i in range(kh):
                for j in range(kw):
                    r0 = pi * stride + i
                    c0 = pj * stride + j
                    cols.append(xp[:, r0:r0 + s2 * ho2:s2, c0:c0 + s2 * wo2:s2, :])
            ph = jnp.stack(cols, axis=3).reshape(n, ho2, wo2, kh * kw * c)
            phases.append(ph)
    patches4 = jnp.stack(phases, axis=0).reshape(4, n * ho2 * wo2, kh * kw * c)
    return patches4, ho2, wo2


# ----------------------------- layer wrappers -------------------------------

_COMPILER_PARAMS = pltpu.CompilerParams(dimension_semantics=("parallel",))


def conv_relu(x_nhwc, w_oihw, bias, stride, pad, out_dtype):
    """Conv2d + bias + ReLU; matmul/bias/relu run inside one Pallas kernel."""
    cout, cin, kh, kw = w_oihw.shape
    n = x_nhwc.shape[0]
    patches, ho, wo = _im2col(x_nhwc, kh, kw, stride, pad)
    m = n * ho * wo
    kp = _round_up(kh * kw * cin, 128)
    np_ = _round_up(cout, 128)
    px = _pad_last(patches, kp).astype(jnp.bfloat16)
    w2 = _prep_weight(w_oihw, kp, np_)
    bp = _prep_bias(bias, np_)
    tm = _pick_tile(m)
    y = pl.pallas_call(
        _matmul_bias_relu_kernel,
        out_shape=jax.ShapeDtypeStruct((m, np_), out_dtype),
        grid=(m // tm,),
        in_specs=[
            pl.BlockSpec((tm, kp), lambda i: (i, 0)),
            pl.BlockSpec((kp, np_), lambda i: (0, 0)),
            pl.BlockSpec((1, np_), lambda i: (0, 0)),
        ],
        out_specs=pl.BlockSpec((tm, np_), lambda i: (i, 0)),
        compiler_params=_COMPILER_PARAMS,
    )(px, w2, bp)
    return y[:, :cout].reshape(n, ho, wo, cout)


def conv_relu_pool(x_nhwc, w_oihw, bias, stride, pad, out_dtype):
    """Conv2d + bias + ReLU + MaxPool2d(2,2) fused into one Pallas kernel."""
    cout, cin, kh, kw = w_oihw.shape
    n = x_nhwc.shape[0]
    patches4, ho2, wo2 = _im2col_pooled(x_nhwc, kh, kw, stride, pad)
    p = n * ho2 * wo2
    kp = _round_up(kh * kw * cin, 128)
    np_ = _round_up(cout, 128)
    px = _pad_last(patches4, kp).astype(jnp.bfloat16)
    w2 = _prep_weight(w_oihw, kp, np_)
    bp = _prep_bias(bias, np_)
    tp = _pick_tile(p)
    y = pl.pallas_call(
        _matmul_pool_bias_relu_kernel,
        out_shape=jax.ShapeDtypeStruct((p, np_), out_dtype),
        grid=(p // tp,),
        in_specs=[
            pl.BlockSpec((4, tp, kp), lambda i: (0, i, 0)),
            pl.BlockSpec((kp, np_), lambda i: (0, 0)),
            pl.BlockSpec((1, np_), lambda i: (0, 0)),
        ],
        out_specs=pl.BlockSpec((tp, np_), lambda i: (i, 0)),
        compiler_params=_COMPILER_PARAMS,
    )(px, w2, bp)
    return y[:, :cout].reshape(n, ho2, wo2, cout)


# ----------------------------- model definition -----------------------------

_LAYERS = [
    # (cout, cin, k, stride, pad, maxpool_after)
    (16, 3, 5, 2, 2, False),    # conv1
    (32, 16, 5, 1, 2, True),    # conv2 + maxpool1
    (64, 32, 3, 1, 1, True),    # conv3 + maxpool2
    (128, 64, 3, 1, 1, True),   # conv4 + maxpool3
    (256, 128, 3, 1, 1, True),  # conv5 + maxpool4
]


def init_params(key):
    """Deterministic Conv2d weights/biases (PyTorch-style uniform(+-1/sqrt(fan_in)))."""
    params = []
    for (cout, cin, k, _, _, _) in _LAYERS:
        key, kw_, kb_ = jax.random.split(key, 3)
        fan_in = cin * k * k
        bound = 1.0 / (fan_in ** 0.5)
        w = jax.random.uniform(kw_, (cout, cin, k, k), jnp.float32, -bound, bound)
        b = jax.random.uniform(kb_, (cout,), jnp.float32, -bound, bound)
        params.append((w, b))
    return params


def lane_detection_cnn_forward(x_nchw, params):
    """Matches LaneDetectionCNN.forward: conv stack -> flatten (NCHW order)."""
    x = jnp.transpose(x_nchw, (0, 2, 3, 1)).astype(jnp.float32)  # NCHW -> NHWC
    n_layers = len(_LAYERS)
    for li, ((w, b), (_, _, _, stride, pad, pooled)) in enumerate(zip(params, _LAYERS)):
        # Intermediate activations live in bf16 (they are cast to bf16 for the
        # MXU anyway); the last layer keeps f32 for the module's output.
        out_dtype = jnp.float32 if li == n_layers - 1 else jnp.bfloat16
        if pooled:
            x = conv_relu_pool(x, w, b, stride, pad, out_dtype)
        else:
            x = conv_relu(x, w, b, stride, pad, out_dtype)
    n = x.shape[0]
    # PyTorch x.view(N, -1) flattens NCHW -> (N, C*H*W); restore that ordering.
    return jnp.transpose(x, (0, 3, 1, 2)).reshape(n, -1)


# ----------------------------- pure-JAX reference ---------------------------

def _reference_forward(x_nchw, params):
    x = jnp.transpose(x_nchw, (0, 2, 3, 1)).astype(jnp.float32)
    for (w, b), (_, _, _, stride, pad, pooled) in zip(params, _LAYERS):
        w_hwio = jnp.transpose(w, (2, 3, 1, 0))
        x = jax.lax.conv_general_dilated(
            x, w_hwio, (stride, stride), [(pad, pad), (pad, pad)],
            dimension_numbers=("NHWC", "HWIO", "NHWC"),
            precision=jax.lax.Precision.HIGHEST)
        x = jnp.maximum(x + b, 0.0)
        if pooled:
            x = jax.lax.reduce_window(x, -jnp.inf, jax.lax.max,
                                      (1, 2, 2, 1), (1, 2, 2, 1), "VALID")
    n = x.shape[0]
    return jnp.transpose(x, (0, 3, 1, 2)).reshape(n, -1)


# ----------------------------------- main ------------------------------------

if __name__ == "__main__":
    key = jax.random.PRNGKey(0)
    kx, kp = jax.random.split(key)

    # Small NCHW input consistent with the module (needs >=32 spatial for
    # stride-2 conv + 4 pools); 64x64 -> final 256x2x2 feature map.
    x = jax.random.normal(kx, (2, 3, 64, 64), jnp.float32)
    params = init_params(kp)

    out = jax.jit(lane_detection_cnn_forward)(x, params)
    out = jax.block_until_ready(out)

    assert out.shape == (2, 256 * 2 * 2), out.shape

    # Reference is full-f32 HIGHEST precision; kernel uses bf16 MXU inputs /
    # bf16 intermediate activations with f32 accumulation, so a slightly
    # looser tolerance absorbs bf16 rounding.
    ref = _reference_forward(x, params)
    max_err = float(jnp.max(jnp.abs(out - ref)))
    assert jnp.allclose(out, ref, atol=5e-2, rtol=5e-2), max_err

    print("KERNEL_OK")
</pallas_src>

<mosaic_0001>
module attributes {stable_mosaic.version = 11 : i64} {
  func.func @_matmul_bias_relu_kernel(%arg0: i32, %arg1: memref<512x128xbf16, #tpu.memory_space<vmem>>, %arg2: memref<128x128xbf16, #tpu.memory_space<vmem>>, %arg3: memref<1x128xf32, #tpu.memory_space<vmem>>, %arg4: memref<512x128xbf16, #tpu.memory_space<vmem>>) attributes {dimension_semantics = [#tpu.dimension_semantics<parallel>], iteration_bounds = array<i64: 4>, scalar_prefetch = 0 : i64, scratch_operands = 0 : i64, tpu.core_type = #tpu.core_type<tc>, window_params = [{transform_indices = @transform_0, window_bounds = array<i64: 512, 128>}, {pipeline_mode = #tpu.pipeline_mode<synchronous>, transform_indices = @transform_1, window_bounds = array<i64: 128, 128>}, {pipeline_mode = #tpu.pipeline_mode<synchronous>, transform_indices = @transform_2, window_bounds = array<i64: 1, 128>}, {transform_indices = @transform_3, window_bounds = array<i64: 512, 128>}]} {
    %c0 = arith.constant 0 : index
    %c0_0 = arith.constant 0 : index
    %0 = vector.load %arg1[%c0, %c0_0] : memref<512x128xbf16, #tpu.memory_space<vmem>>, vector<512x128xbf16>
    %c0_1 = arith.constant 0 : index
    %c0_2 = arith.constant 0 : index
    %1 = vector.load %arg2[%c0_1, %c0_2] : memref<128x128xbf16, #tpu.memory_space<vmem>>, vector<128x128xbf16>
    %cst = arith.constant dense<0.000000e+00> : vector<512x128xf32>
    %2 = tpu.matmul %0, %1, %cst {dimension_numbers = #tpu.dot_dimension_numbers<[1], [0], [0], [1], [0, 0, 1, 1], [], []>} : vector<512x128xbf16>, vector<128x128xbf16>, vector<512x128xf32> -> vector<512x128xf32>
    %c0_3 = arith.constant 0 : index
    %c0_4 = arith.constant 0 : index
    %3 = vector.load %arg3[%c0_3, %c0_4] : memref<1x128xf32, #tpu.memory_space<vmem>>, vector<1x128xf32>
    %4 = vector.broadcast %3 : vector<1x128xf32> to vector<512x128xf32>
    %5 = arith.addf %2, %4 : vector<512x128xf32>
    %cst_5 = arith.constant 0.000000e+00 : f32
    %6 = vector.broadcast %cst_5 : f32 to vector<512x128xf32>
    %7 = arith.maximumf %5, %6 : vector<512x128xf32>
    %8 = arith.truncf %7 : vector<512x128xf32> to vector<512x128xbf16>
    %c0_6 = arith.constant 0 : index
    %c0_7 = arith.constant 0 : index
    %9 = vector.load %arg4[%c0_6, %c0_7] : memref<512x128xbf16, #tpu.memory_space<vmem>>, vector<512x128xbf16>
    tpu.vector_store %arg4[%c0_6, %c0_7], %8 {strides = array<i32>} : memref<512x128xbf16, #tpu.memory_space<vmem>>, vector<512x128xbf16>,
    return
  }
  func.func @transform_0(%arg0: i32) -> (i32, i32) {
    %c0_i32 = arith.constant 0 : i32
    %c0_i32_0 = arith.constant 0 : i32
    return %arg0, %c0_i32 : i32, i32
  }
  func.func @transform_1(%arg0: i32) -> (i32, i32) {
    %c0_i32 = arith.constant 0 : i32
    %c0_i32_0 = arith.constant 0 : i32
    %c0_i32_1 = arith.constant 0 : i32
    return %c0_i32, %c0_i32_0 : i32, i32
  }
  func.func @transform_2(%arg0: i32) -> (i32, i32) {
    %c0_i32 = arith.constant 0 : i32
    %c0_i32_0 = arith.constant 0 : i32
    %c0_i32_1 = arith.constant 0 : i32
    return %c0_i32, %c0_i32_0 : i32, i32
  }
  func.func @transform_3(%arg0: i32) -> (i32, i32) {
    %c0_i32 = arith.constant 0 : i32
    %c0_i32_0 = arith.constant 0 : i32
    return %arg0, %c0_i32 : i32, i32
  }
}

module attributes {stable_mosaic.version = 11 : i64} {
  func.func @_matmul_pool_bias_relu_kernel(%arg0: i32, %arg1: memref<4x512x512xbf16, #tpu.memory_space<vmem>>, %arg2: memref<512x128xbf16, #tpu.memory_space<vmem>>, %arg3: memref<1x128xf32, #tpu.memory_space<vmem>>, %arg4: memref<512x128xbf16, #tpu.memory_space<vmem>>) attributes {dimension_semantics = [#tpu.dimension_semantics<parallel>], iteration_bounds = array<i64: 1>, scalar_prefetch = 0 : i64, scratch_operands = 0 : i64, tpu.core_type = #tpu.core_type<tc>, window_params = [{transform_indices = @transform_0, window_bounds = array<i64: 4, 512, 512>}, {pipeline_mode = #tpu.pipeline_mode<synchronous>, transform_indices = @transform_1, window_bounds = array<i64: 512, 128>}, {pipeline_mode = #tpu.pipeline_mode<synchronous>, transform_indices = @transform_2, window_bounds = array<i64: 1, 128>}, {transform_indices = @transform_3, window_bounds = array<i64: 512, 128>}]} {
    %c0 = arith.constant 0 : index
    %c0_0 = arith.constant 0 : index
    %0 = vector.load %arg2[%c0, %c0_0] : memref<512x128xbf16, #tpu.memory_space<vmem>>, vector<512x128xbf16>
    %c0_1 = arith.constant 0 : index
    %c0_2 = arith.constant 0 : index
    %c0_3 = arith.constant 0 : index
    %1 = vector.load %arg1[%c0_1, %c0_2, %c0_3] : memref<4x512x512xbf16, #tpu.memory_space<vmem>>, vector<1x512x512xbf16>
    %2 = vector.shape_cast %1 : vector<1x512x512xbf16> to vector<512x512xbf16>
    %cst = arith.constant dense<0.000000e+00> : vector<512x128xf32>
    %3 = tpu.matmul %2, %0, %cst {dimension_numbers = #tpu.dot_dimension_numbers<[1], [0], [0], [1], [0, 0, 1, 1], [], []>} : vector<512x512xbf16>, vector<512x128xbf16>, vector<512x128xf32> -> vector<512x128xf32>
    %c1 = arith.constant 1 : index
    %c0_4 = arith.constant 0 : index
    %c0_5 = arith.constant 0 : index
    %4 = vector.load %arg1[%c1, %c0_4, %c0_5] : memref<4x512x512xbf16, #tpu.memory_space<vmem>>, vector<1x512x512xbf16>
    %5 = vector.shape_cast %4 : vector<1x512x512xbf16> to vector<512x512xbf16>
    %cst_6 = arith.constant dense<0.000000e+00> : vector<512x128xf32>
    %6 = tpu.matmul %5, %0, %cst_6 {dimension_numbers = #tpu.dot_dimension_numbers<[1], [0], [0], [1], [0, 0, 1, 1], [], []>} : vector<512x512xbf16>, vector<512x128xbf16>, vector<512x128xf32> -> vector<512x128xf32>
    %7 = arith.maximumf %3, %6 : vector<512x128xf32>
    %c2 = arith.constant 2 : index
    %c0_7 = arith.constant 0 : index
    %c0_8 = arith.constant 0 : index
    %8 = vector.load %arg1[%c2, %c0_7, %c0_8] : memref<4x512x512xbf16, #tpu.memory_space<vmem>>, vector<1x512x512xbf16>
    %9 = vector.shape_cast %8 : vector<1x512x512xbf16> to vector<512x512xbf16>
    %cst_9 = arith.constant dense<0.000000e+00> : vector<512x128xf32>
    %10 = tpu.matmul %9, %0, %cst_9 {dimension_numbers = #tpu.dot_dimension_numbers<[1], [0], [0], [1], [0, 0, 1, 1], [], []>} : vector<512x512xbf16>, vector<512x128xbf16>, vector<512x128xf32> -> vector<512x128xf32>
    %11 = arith.maximumf %7, %10 : vector<512x128xf32>
    %c3 = arith.constant 3 : index
    %c0_10 = arith.constant 0 : index
    %c0_11 = arith.constant 0 : index
    %12 = vector.load %arg1[%c3, %c0_10, %c0_11] : memref<4x512x512xbf16, #tpu.memory_space<vmem>>, vector<1x512x512xbf16>
    %13 = vector.shape_cast %12 : vector<1x512x512xbf16> to vector<512x512xbf16>
    %cst_12 = arith.constant dense<0.000000e+00> : vector<512x128xf32>
    %14 = tpu.matmul %13, %0, %cst_12 {dimension_numbers = #tpu.dot_dimension_numbers<[1], [0], [0], [1], [0, 0, 1, 1], [], []>} : vector<512x512xbf16>, vector<512x128xbf16>, vector<512x128xf32> -> vector<512x128xf32>
    %15 = arith.maximumf %11, %14 : vector<512x128xf32>
    %c0_13 = arith.constant 0 : index
    %c0_14 = arith.constant 0 : index
    %16 = vector.load %arg3[%c0_13, %c0_14] : memref<1x128xf32, #tpu.memory_space<vmem>>, vector<1x128xf32>
    %17 = vector.broadcast %16 : vector<1x128xf32> to vector<512x128xf32>
    %18 = arith.addf %15, %17 : vector<512x128xf32>
    %cst_15 = arith.constant 0.000000e+00 : f32
    %19 = vector.broadcast %cst_15 : f32 to vector<512x128xf32>
    %20 = arith.maximumf %18, %19 : vector<512x128xf32>
    %21 = arith.truncf %20 : vector<512x128xf32> to vector<512x128xbf16>
    %c0_16 = arith.constant 0 : index
    %c0_17 = arith.constant 0 : index
    %22 = vector.load %arg4[%c0_16, %c0_17] : memref<512x128xbf16, #tpu.memory_space<vmem>>, vector<512x128xbf16>
    tpu.vector_store %arg4[%c0_16, %c0_17], %21 {strides = array<i32>} : memref<512x128xbf16, #tpu.memory_space<vmem>>, vector<512x128xbf16>,
    return
  }
  func.func @transform_0(%arg0: i32) -> (i32, i32, i32) {
    %c0_i32 = arith.constant 0 : i32
    %c0_i32_0 = arith.constant 0 : i32
    %c0_i32_1 = arith.constant 0 : i32
    return %c0_i32, %arg0, %c0_i32_0 : i32, i32, i32
  }
  func.func @transform_1(%arg0: i32) -> (i32, i32) {
    %c0_i32 = arith.constant 0 : i32
    %c0_i32_0 = arith.constant 0 : i32
    %c0_i32_1 = arith.constant 0 : i32
    return %c0_i32, %c0_i32_0 : i32, i32
  }
  func.func @transform_2(%arg0: i32) -> (i32, i32) {
    %c0_i32 = arith.constant 0 : i32
    %c0_i32_0 = arith.constant 0 : i32
    %c0_i32_1 = arith.constant 0 : i32
    return %c0_i32, %c0_i32_0 : i32, i32
  }
  func.func @transform_3(%arg0: i32) -> (i32, i32) {
    %c0_i32 = arith.constant 0 : i32
    %c0_i32_0 = arith.constant 0 : i32
    return %arg0, %c0_i32 : i32, i32
  }
}

module attributes {stable_mosaic.version = 11 : i64} {
  func.func @_matmul_pool_bias_relu_kernel(%arg0: i32, %arg1: memref<4x128x384xbf16, #tpu.memory_space<vmem>>, %arg2: memref<384x128xbf16, #tpu.memory_space<vmem>>, %arg3: memref<1x128xf32, #tpu.memory_space<vmem>>, %arg4: memref<128x128xbf16, #tpu.memory_space<vmem>>) attributes {dimension_semantics = [#tpu.dimension_semantics<parallel>], iteration_bounds = array<i64: 1>, scalar_prefetch = 0 : i64, scratch_operands = 0 : i64, tpu.core_type = #tpu.core_type<tc>, window_params = [{transform_indices = @transform_0, window_bounds = array<i64: 4, 128, 384>}, {pipeline_mode = #tpu.pipeline_mode<synchronous>, transform_indices = @transform_1, window_bounds = array<i64: 384, 128>}, {pipeline_mode = #tpu.pipeline_mode<synchronous>, transform_indices = @transform_2, window_bounds = array<i64: 1, 128>}, {transform_indices = @transform_3, window_bounds = array<i64: 128, 128>}]} {
    %c0 = arith.constant 0 : index
    %c0_0 = arith.constant 0 : index
    %0 = vector.load %arg2[%c0, %c0_0] : memref<384x128xbf16, #tpu.memory_space<vmem>>, vector<384x128xbf16>
    %c0_1 = arith.constant 0 : index
    %c0_2 = arith.constant 0 : index
    %c0_3 = arith.constant 0 : index
    %1 = vector.load %arg1[%c0_1, %c0_2, %c0_3] : memref<4x128x384xbf16, #tpu.memory_space<vmem>>, vector<1x128x384xbf16>
    %2 = vector.shape_cast %1 : vector<1x128x384xbf16> to vector<128x384xbf16>
    %cst = arith.constant dense<0.000000e+00> : vector<128x128xf32>
    %3 = tpu.matmul %2, %0, %cst {dimension_numbers = #tpu.dot_dimension_numbers<[1], [0], [0], [1], [0, 0, 1, 1], [], []>} : vector<128x384xbf16>, vector<384x128xbf16>, vector<128x128xf32> -> vector<128x128xf32>
    %c1 = arith.constant 1 : index
    %c0_4 = arith.constant 0 : index
    %c0_5 = arith.constant 0 : index
    %4 = vector.load %arg1[%c1, %c0_4, %c0_5] : memref<4x128x384xbf16, #tpu.memory_space<vmem>>, vector<1x128x384xbf16>
    %5 = vector.shape_cast %4 : vector<1x128x384xbf16> to vector<128x384xbf16>
    %cst_6 = arith.constant dense<0.000000e+00> : vector<128x128xf32>
    %6 = tpu.matmul %5, %0, %cst_6 {dimension_numbers = #tpu.dot_dimension_numbers<[1], [0], [0], [1], [0, 0, 1, 1], [], []>} : vector<128x384xbf16>, vector<384x128xbf16>, vector<128x128xf32> -> vector<128x128xf32>
    %7 = arith.maximumf %3, %6 : vector<128x128xf32>
    %c2 = arith.constant 2 : index
    %c0_7 = arith.constant 0 : index
    %c0_8 = arith.constant 0 : index
    %8 = vector.load %arg1[%c2, %c0_7, %c0_8] : memref<4x128x384xbf16, #tpu.memory_space<vmem>>, vector<1x128x384xbf16>
    %9 = vector.shape_cast %8 : vector<1x128x384xbf16> to vector<128x384xbf16>
    %cst_9 = arith.constant dense<0.000000e+00> : vector<128x128xf32>
    %10 = tpu.matmul %9, %0, %cst_9 {dimension_numbers = #tpu.dot_dimension_numbers<[1], [0], [0], [1], [0, 0, 1, 1], [], []>} : vector<128x384xbf16>, vector<384x128xbf16>, vector<128x128xf32> -> vector<128x128xf32>
    %11 = arith.maximumf %7, %10 : vector<128x128xf32>
    %c3 = arith.constant 3 : index
    %c0_10 = arith.constant 0 : index
    %c0_11 = arith.constant 0 : index
    %12 = vector.load %arg1[%c3, %c0_10, %c0_11] : memref<4x128x384xbf16, #tpu.memory_space<vmem>>, vector<1x128x384xbf16>
    %13 = vector.shape_cast %12 : vector<1x128x384xbf16> to vector<128x384xbf16>
    %cst_12 = arith.constant dense<0.000000e+00> : vector<128x128xf32>
    %14 = tpu.matmul %13, %0, %cst_12 {dimension_numbers = #tpu.dot_dimension_numbers<[1], [0], [0], [1], [0, 0, 1, 1], [], []>} : vector<128x384xbf16>, vector<384x128xbf16>, vector<128x128xf32> -> vector<128x128xf32>
    %15 = arith.maximumf %11, %14 : vector<128x128xf32>
    %c0_13 = arith.constant 0 : index
    %c0_14 = arith.constant 0 : index
    %16 = vector.load %arg3[%c0_13, %c0_14] : memref<1x128xf32, #tpu.memory_space<vmem>>, vector<1x128xf32>
    %17 = vector.broadcast %16 : vector<1x128xf32> to vector<128x128xf32>
    %18 = arith.addf %15, %17 : vector<128x128xf32>
    %cst_15 = arith.constant 0.000000e+00 : f32
    %19 = vector.broadcast %cst_15 : f32 to vector<128x128xf32>
    %20 = arith.maximumf %18, %19 : vector<128x128xf32>
    %21 = arith.truncf %20 : vector<128x128xf32> to vector<128x128xbf16>
    %c0_16 = arith.constant 0 : index
    %c0_17 = arith.constant 0 : index
    %22 = vector.load %arg4[%c0_16, %c0_17] : memref<128x128xbf16, #tpu.memory_space<vmem>>, vector<128x128xbf16>
    tpu.vector_store %arg4[%c0_16, %c0_17], %21 {strides = array<i32>} : memref<128x128xbf16, #tpu.memory_space<vmem>>, vector<128x128xbf16>,
    return
  }
  func.func @transform_0(%arg0: i32) -> (i32, i32, i32) {
    %c0_i32 = arith.constant 0 : i32
    %c0_i32_0 = arith.constant 0 : i32
    %c0_i32_1 = arith.constant 0 : i32
    return %c0_i32, %arg0, %c0_i32_0 : i32, i32, i32
  }
  func.func @transform_1(%arg0: i32) -> (i32, i32) {
    %c0_i32 = arith.constant 0 : i32
    %c0_i32_0 = arith.constant 0 : i32
    %c0_i32_1 = arith.constant 0 : i32
    return %c0_i32, %c0_i32_0 : i32, i32
  }
  func.func @transform_2(%arg0: i32) -> (i32, i32) {
    %c0_i32 = arith.constant 0 : i32
    %c0_i32_0 = arith.constant 0 : i32
    %c0_i32_1 = arith.constant 0 : i32
    return %c0_i32, %c0_i32_0 : i32, i32
  }
  func.func @transform_3(%arg0: i32) -> (i32, i32) {
    %c0_i32 = arith.constant 0 : i32
    %c0_i32_0 = arith.constant 0 : i32
    return %arg0, %c0_i32 : i32, i32
  }
}

module attributes {stable_mosaic.version = 11 : i64} {
  func.func @_matmul_pool_bias_relu_kernel(%arg0: i32, %arg1: memref<4x32x640xbf16, #tpu.memory_space<vmem>>, %arg2: memref<640x128xbf16, #tpu.memory_space<vmem>>, %arg3: memref<1x128xf32, #tpu.memory_space<vmem>>, %arg4: memref<32x128xbf16, #tpu.memory_space<vmem>>) attributes {dimension_semantics = [#tpu.dimension_semantics<parallel>], iteration_bounds = array<i64: 1>, scalar_prefetch = 0 : i64, scratch_operands = 0 : i64, tpu.core_type = #tpu.core_type<tc>, window_params = [{transform_indices = @transform_0, window_bounds = array<i64: 4, 32, 640>}, {pipeline_mode = #tpu.pipeline_mode<synchronous>, transform_indices = @transform_1, window_bounds = array<i64: 640, 128>}, {pipeline_mode = #tpu.pipeline_mode<synchronous>, transform_indices = @transform_2, window_bounds = array<i64: 1, 128>}, {transform_indices = @transform_3, window_bounds = array<i64: 32, 128>}]} {
    %c0 = arith.constant 0 : index
    %c0_0 = arith.constant 0 : index
    %0 = vector.load %arg2[%c0, %c0_0] : memref<640x128xbf16, #tpu.memory_space<vmem>>, vector<640x128xbf16>
    %c0_1 = arith.constant 0 : index
    %c0_2 = arith.constant 0 : index
    %c0_3 = arith.constant 0 : index
    %1 = vector.load %arg1[%c0_1, %c0_2, %c0_3] : memref<4x32x640xbf16, #tpu.memory_space<vmem>>, vector<1x32x640xbf16>
    %2 = vector.shape_cast %1 : vector<1x32x640xbf16> to vector<32x640xbf16>
    %cst = arith.constant dense<0.000000e+00> : vector<32x128xf32>
    %3 = tpu.matmul %2, %0, %cst {dimension_numbers = #tpu.dot_dimension_numbers<[1], [0], [0], [1], [0, 0, 1, 1], [], []>} : vector<32x640xbf16>, vector<640x128xbf16>, vector<32x128xf32> -> vector<32x128xf32>
    %c1 = arith.constant 1 : index
    %c0_4 = arith.constant 0 : index
    %c0_5 = arith.constant 0 : index
    %4 = vector.load %arg1[%c1, %c0_4, %c0_5] : memref<4x32x640xbf16, #tpu.memory_space<vmem>>, vector<1x32x640xbf16>
    %5 = vector.shape_cast %4 : vector<1x32x640xbf16> to vector<32x640xbf16>
    %cst_6 = arith.constant dense<0.000000e+00> : vector<32x128xf32>
    %6 = tpu.matmul %5, %0, %cst_6 {dimension_numbers = #tpu.dot_dimension_numbers<[1], [0], [0], [1], [0, 0, 1, 1], [], []>} : vector<32x640xbf16>, vector<640x128xbf16>, vector<32x128xf32> -> vector<32x128xf32>
    %7 = arith.maximumf %3, %6 : vector<32x128xf32>
    %c2 = arith.constant 2 : index
    %c0_7 = arith.constant 0 : index
    %c0_8 = arith.constant 0 : index
    %8 = vector.load %arg1[%c2, %c0_7, %c0_8] : memref<4x32x640xbf16, #tpu.memory_space<vmem>>, vector<1x32x640xbf16>
    %9 = vector.shape_cast %8 : vector<1x32x640xbf16> to vector<32x640xbf16>
    %cst_9 = arith.constant dense<0.000000e+00> : vector<32x128xf32>
    %10 = tpu.matmul %9, %0, %cst_9 {dimension_numbers = #tpu.dot_dimension_numbers<[1], [0], [0], [1], [0, 0, 1, 1], [], []>} : vector<32x640xbf16>, vector<640x128xbf16>, vector<32x128xf32> -> vector<32x128xf32>
    %11 = arith.maximumf %7, %10 : vector<32x128xf32>
    %c3 = arith.constant 3 : index
    %c0_10 = arith.constant 0 : index
    %c0_11 = arith.constant 0 : index
    %12 = vector.load %arg1[%c3, %c0_10, %c0_11] : memref<4x32x640xbf16, #tpu.memory_space<vmem>>, vector<1x32x640xbf16>
    %13 = vector.shape_cast %12 : vector<1x32x640xbf16> to vector<32x640xbf16>
    %cst_12 = arith.constant dense<0.000000e+00> : vector<32x128xf32>
    %14 = tpu.matmul %13, %0, %cst_12 {dimension_numbers = #tpu.dot_dimension_numbers<[1], [0], [0], [1], [0, 0, 1, 1], [], []>} : vector<32x640xbf16>, vector<640x128xbf16>, vector<32x128xf32> -> vector<32x128xf32>
    %15 = arith.maximumf %11, %14 : vector<32x128xf32>
    %c0_13 = arith.constant 0 : index
    %c0_14 = arith.constant 0 : index
    %16 = vector.load %arg3[%c0_13, %c0_14] : memref<1x128xf32, #tpu.memory_space<vmem>>, vector<1x128xf32>
    %17 = vector.broadcast %16 : vector<1x128xf32> to vector<32x128xf32>
    %18 = arith.addf %15, %17 : vector<32x128xf32>
    %cst_15 = arith.constant 0.000000e+00 : f32
    %19 = vector.broadcast %cst_15 : f32 to vector<32x128xf32>
    %20 = arith.maximumf %18, %19 : vector<32x128xf32>
    %21 = arith.truncf %20 : vector<32x128xf32> to vector<32x128xbf16>
    %c0_16 = arith.constant 0 : index
    %c0_17 = arith.constant 0 : index
    %22 = vector.load %arg4[%c0_16, %c0_17] : memref<32x128xbf16, #tpu.memory_space<vmem>>, vector<32x128xbf16>
    tpu.vector_store %arg4[%c0_16, %c0_17], %21 {strides = array<i32>} : memref<32x128xbf16, #tpu.memory_space<vmem>>, vector<32x128xbf16>,
    return
  }
  func.func @transform_0(%arg0: i32) -> (i32, i32, i32) {
    %c0_i32 = arith.constant 0 : i32
    %c0_i32_0 = arith.constant 0 : i32
    %c0_i32_1 = arith.constant 0 : i32
    return %c0_i32, %arg0, %c0_i32_0 : i32, i32, i32
  }
  func.func @transform_1(%arg0: i32) -> (i32, i32) {
    %c0_i32 = arith.constant 0 : i32
    %c0_i32_0 = arith.constant 0 : i32
    %c0_i32_1 = arith.constant 0 : i32
    return %c0_i32, %c0_i32_0 : i32, i32
  }
  func.func @transform_2(%arg0: i32) -> (i32, i32) {
    %c0_i32 = arith.constant 0 : i32
    %c0_i32_0 = arith.constant 0 : i32
    %c0_i32_1 = arith.constant 0 : i32
    return %c0_i32, %c0_i32_0 : i32, i32
  }
  func.func @transform_3(%arg0: i32) -> (i32, i32) {
    %c0_i32 = arith.constant 0 : i32
    %c0_i32_0 = arith.constant 0 : i32
    return %arg0, %c0_i32 : i32, i32
  }
}

module attributes {stable_mosaic.version = 11 : i64} {
  func.func @_matmul_pool_bias_relu_kernel(%arg0: i32, %arg1: memref<4x8x1152xbf16, #tpu.memory_space<vmem>>, %arg2: memref<1152x256xbf16, #tpu.memory_space<vmem>>, %arg3: memref<1x256xf32, #tpu.memory_space<vmem>>, %arg4: memref<8x256xf32, #tpu.memory_space<vmem>>) attributes {dimension_semantics = [#tpu.dimension_semantics<parallel>], iteration_bounds = array<i64: 1>, scalar_prefetch = 0 : i64, scratch_operands = 0 : i64, tpu.core_type = #tpu.core_type<tc>, window_params = [{transform_indices = @transform_0, window_bounds = array<i64: 4, 8, 1152>}, {pipeline_mode = #tpu.pipeline_mode<synchronous>, transform_indices = @transform_1, window_bounds = array<i64: 1152, 256>}, {pipeline_mode = #tpu.pipeline_mode<synchronous>, transform_indices = @transform_2, window_bounds = array<i64: 1, 256>}, {transform_indices = @transform_3, window_bounds = array<i64: 8, 256>}]} {
    %c0 = arith.constant 0 : index
    %c0_0 = arith.constant 0 : index
    %0 = vector.load %arg2[%c0, %c0_0] : memref<1152x256xbf16, #tpu.memory_space<vmem>>, vector<1152x256xbf16>
    %c0_1 = arith.constant 0 : index
    %c0_2 = arith.constant 0 : index
    %c0_3 = arith.constant 0 : index
    %1 = vector.load %arg1[%c0_1, %c0_2, %c0_3] : memref<4x8x1152xbf16, #tpu.memory_space<vmem>>, vector<1x8x1152xbf16>
    %2 = vector.shape_cast %1 : vector<1x8x1152xbf16> to vector<8x1152xbf16>
    %cst = arith.constant dense<0.000000e+00> : vector<8x256xf32>
    %3 = tpu.matmul %2, %0, %cst {dimension_numbers = #tpu.dot_dimension_numbers<[1], [0], [0], [1], [0, 0, 1, 1], [], []>} : vector<8x1152xbf16>, vector<1152x256xbf16>, vector<8x256xf32> -> vector<8x256xf32>
    %c1 = arith.constant 1 : index
    %c0_4 = arith.constant 0 : index
    %c0_5 = arith.constant 0 : index
    %4 = vector.load %arg1[%c1, %c0_4, %c0_5] : memref<4x8x1152xbf16, #tpu.memory_space<vmem>>, vector<1x8x1152xbf16>
    %5 = vector.shape_cast %4 : vector<1x8x1152xbf16> to vector<8x1152xbf16>
    %cst_6 = arith.constant dense<0.000000e+00> : vector<8x256xf32>
    %6 = tpu.matmul %5, %0, %cst_6 {dimension_numbers = #tpu.dot_dimension_numbers<[1], [0], [0], [1], [0, 0, 1, 1], [], []>} : vector<8x1152xbf16>, vector<1152x256xbf16>, vector<8x256xf32> -> vector<8x256xf32>
    %7 = arith.maximumf %3, %6 : vector<8x256xf32>
    %c2 = arith.constant 2 : index
    %c0_7 = arith.constant 0 : index
    %c0_8 = arith.constant 0 : index
    %8 = vector.load %arg1[%c2, %c0_7, %c0_8] : memref<4x8x1152xbf16, #tpu.memory_space<vmem>>, vector<1x8x1152xbf16>
    %9 = vector.shape_cast %8 : vector<1x8x1152xbf16> to vector<8x1152xbf16>
    %cst_9 = arith.constant dense<0.000000e+00> : vector<8x256xf32>
    %10 = tpu.matmul %9, %0, %cst_9 {dimension_numbers = #tpu.dot_dimension_numbers<[1], [0], [0], [1], [0, 0, 1, 1], [], []>} : vector<8x1152xbf16>, vector<1152x256xbf16>, vector<8x256xf32> -> vector<8x256xf32>
    %11 = arith.maximumf %7, %10 : vector<8x256xf32>
    %c3 = arith.constant 3 : index
    %c0_10 = arith.constant 0 : index
    %c0_11 = arith.constant 0 : index
    %12 = vector.load %arg1[%c3, %c0_10, %c0_11] : memref<4x8x1152xbf16, #tpu.memory_space<vmem>>, vector<1x8x1152xbf16>
    %13 = vector.shape_cast %12 : vector<1x8x1152xbf16> to vector<8x1152xbf16>
    %cst_12 = arith.constant dense<0.000000e+00> : vector<8x256xf32>
    %14 = tpu.matmul %13, %0, %cst_12 {dimension_numbers = #tpu.dot_dimension_numbers<[1], [0], [0], [1], [0, 0, 1, 1], [], []>} : vector<8x1152xbf16>, vector<1152x256xbf16>, vector<8x256xf32> -> vector<8x256xf32>
    %15 = arith.maximumf %11, %14 : vector<8x256xf32>
    %c0_13 = arith.constant 0 : index
    %c0_14 = arith.constant 0 : index
    %16 = vector.load %arg3[%c0_13, %c0_14] : memref<1x256xf32, #tpu.memory_space<vmem>>, vector<1x256xf32>
    %17 = vector.broadcast %16 : vector<1x256xf32> to vector<8x256xf32>
    %18 = arith.addf %15, %17 : vector<8x256xf32>
    %cst_15 = arith.constant 0.000000e+00 : f32
    %19 = vector.broadcast %cst_15 : f32 to vector<8x256xf32>
    %20 = arith.maximumf %18, %19 : vector<8x256xf32>
    %c0_16 = arith.constant 0 : index
    %c0_17 = arith.constant 0 : index
    %21 = vector.load %arg4[%c0_16, %c0_17] : memref<8x256xf32, #tpu.memory_space<vmem>>, vector<8x256xf32>
    tpu.vector_store %arg4[%c0_16, %c0_17], %20 {strides = array<i32>} : memref<8x256xf32, #tpu.memory_space<vmem>>, vector<8x256xf32>,
    return
  }
  func.func @transform_0(%arg0: i32) -> (i32, i32, i32) {
    %c0_i32 = arith.constant 0 : i32
    %c0_i32_0 = arith.constant 0 : i32
    %c0_i32_1 = arith.constant 0 : i32
    return %c0_i32, %arg0, %c0_i32_0 : i32, i32, i32
  }
  func.func @transform_1(%arg0: i32) -> (i32, i32) {
    %c0_i32 = arith.constant 0 : i32
    %c0_i32_0 = arith.constant 0 : i32
    %c0_i32_1 = arith.constant 0 : i32
    return %c0_i32, %c0_i32_0 : i32, i32
  }
  func.func @transform_2(%arg0: i32) -> (i32, i32) {
    %c0_i32 = arith.constant 0 : i32
    %c0_i32_0 = arith.constant 0 : i32
    %c0_i32_1 = arith.constant 0 : i32
    return %c0_i32, %c0_i32_0 : i32, i32
  }
  func.func @transform_3(%arg0: i32) -> (i32, i32) {
    %c0_i32 = arith.constant 0 : i32
    %c0_i32_0 = arith.constant 0 : i32
    return %arg0, %c0_i32 : i32, i32
  }
}

</mosaic_0001>

<llo_original>
// kernel: lane_detection_cnn_forward.5
$region0: #{lane_detection_cnn_forward.5}
  #allocation0 [shape = 'u32[]', space=smem, size = 0x4, offset = 0x4, fixed_abs, tag = 'smem constant byte address 0x4 - core index']
  #allocation1 [shape = 'u32[72,128]{1,0:T(1,128)}', space=vmem, size = 0x9000, scoped, tag = 'internal scratch']
  %s0 = inlined_call_operand.vmem [shape: bf16[2048,128], index: 0, kind: input, shape index: {}]
  %s1 = inlined_call_operand.vmem [shape: bf16[128,128], index: 1, kind: input, shape index: {}]
  %s2 = inlined_call_operand.vmem [shape: f32[1,128], index: 2, kind: input, shape index: {}]
  %s3 = inlined_call_operand.vmem [shape: bf16[2048,128], index: 3, kind: output, shape index: {}]
  %s4 = sld [smem:[#allocation0]]
  $region45: #{lane_detection_cnn_forward.5} parent=0
    _
  %s6 = ssub.s32 1, %s4
  %s7 = scalar_select 0, %s6, %s4
  loop: start=0, step=1, limit=6
  $region2: #{lane_detection_cnn_forward.5} parent=0 // loop_pre_header
    _
  $region3: #{lane_detection_cnn_forward.5} parent=0 // loop_header
    %s9 = sphi 0, %s13
    %p10 = scmp.ge.s32.totalorder %s9, 6
    %s19 = sphi 0, %s21
    %s22 = sphi 0, %s19
    %s23 = sphi 0, %s22
    %s39 = sphi 0, %s23
    %s43 = sphi 0, %s43
    %s45 = sphi 0, %s43
    %s46 = sphi 0, %s45
    %s60 = sphi 0, %s46
    %s64 = sphi 0, %s64
    %s66 = sphi 0, %s64
    %s67 = sphi 0, %s66
    %s81 = sphi 0, %s67
    %s87 = sphi 0, %s89
    %s90 = sphi 0, %s87
    %s91 = sphi 0, %s90
    %s107 = sphi 0, %s91
  $region4: #{lane_detection_cnn_forward.5} parent=0 // loop_header_branch
    %12 = sbr.rel (%p10) target = $region8
  $region5: #{lane_detection_cnn_forward.5} parent=0 // loop_body
    %s14 = ssub.s32 %s9, 1
    %s15 = ssub.s32 %s9, 2
    %s16 = sadd.s32 %s9, 1
    %s17 = ssub.s32 %s9, %s16
    %p18 = scmp.eq.s32.totalorder %s17, 0
    %s20 = sadd.s32 %s19, 1
    %s21 = scalar_select %p18, %s19, %s20
    %p24 = pneg %p18
    %p25 = scmp.eq.s32.totalorder %s9, 3
    %p26 = por %p24, %p25
    %p27 = scmp.ne.s32.totalorder %s19, %s22
    %p28 = scmp.eq.s32.totalorder %s9, 0
    %p29 = por %p27, %p28
    %p30 = scmp.ne.s32.totalorder %s19, %s22
    %p31 = scmp.eq.s32.totalorder %s14, 3
    %p32 = por %p30, %p31
    %p33 = scmp.ne.s32.totalorder %s22, %s23
    %p34 = scmp.eq.s32.totalorder %s14, 0
    %p35 = por %p33, %p34
    %p36 = scmp.ne.s32.totalorder %s22, %s23
    %p37 = scmp.eq.s32.totalorder %s15, 3
    %p38 = por %p36, %p37
    %p40 = scmp.ne.s32.totalorder %s23, %s39
    %p41 = scmp.eq.s32.totalorder %s15, 0
    %p42 = por %p40, %p41
    %s44 = sadd.s32 %s43, 1
    %p47 = scmp.eq.s32.totalorder %s9, 3
    %p48 = scmp.ne.s32.totalorder %s43, %s45
    %p49 = scmp.eq.s32.totalorder %s9, 0
    %p50 = por %p48, %p49
    %p51 = scmp.ne.s32.totalorder %s43, %s45
    %p52 = scmp.eq.s32.totalorder %s14, 3
    %p53 = por %p51, %p52
    %p54 = scmp.ne.s32.totalorder %s45, %s46
    %p55 = scmp.eq.s32.totalorder %s14, 0
    %p56 = por %p54, %p55
    %p57 = scmp.ne.s32.totalorder %s45, %s46
    %p58 = scmp.eq.s32.totalorder %s15, 3
    %p59 = por %p57, %p58
    %p61 = scmp.ne.s32.totalorder %s46, %s60
    %p62 = scmp.eq.s32.totalorder %s15, 0
    %p63 = por %p61, %p62
    %s65 = sadd.s32 %s64, 1
    %p68 = scmp.eq.s32.totalorder %s9, 3
    %p69 = scmp.ne.s32.totalorder %s64, %s66
    %p70 = scmp.eq.s32.totalorder %s9, 0
    %p71 = por %p69, %p70
    %p72 = scmp.ne.s32.totalorder %s64, %s66
    %p73 = scmp.eq.s32.totalorder %s14, 3
    %p74 = por %p72, %p73
    %p75 = scmp.ne.s32.totalorder %s66, %s67
    %p76 = scmp.eq.s32.totalorder %s14, 0
    %p77 = por %p75, %p76
    %p78 = scmp.ne.s32.totalorder %s66, %s67
    %p79 = scmp.eq.s32.totalorder %s15, 3
    %p80 = por %p78, %p79
    %p82 = scmp.ne.s32.totalorder %s67, %s81
    %p83 = scmp.eq.s32.totalorder %s15, 0
    %p84 = por %p82, %p83
    %s85 = ssub.s32 %s9, %s16
    %p86 = scmp.eq.s32.totalorder %s85, 0
    %s88 = sadd.s32 %s87, 1
    %s89 = scalar_select %p86, %s87, %s88
    %p92 = pneg %p86
    %p93 = scmp.eq.s32.totalorder %s9, 3
    %p94 = por %p92, %p93
    %p95 = scmp.ne.s32.totalorder %s87, %s90
    %p96 = scmp.eq.s32.totalorder %s9, 0
    %p97 = por %p95, %p96
    %p98 = scmp.ne.s32.totalorder %s87, %s90
    %p99 = scmp.eq.s32.totalorder %s14, 3
    %p100 = por %p98, %p99
    %p101 = scmp.ne.s32.totalorder %s90, %s91
    %p102 = scmp.eq.s32.totalorder %s14, 0
    %p103 = por %p101, %p102
    %p104 = scmp.ne.s32.totalorder %s90, %s91
    %p105 = scmp.eq.s32.totalorder %s15, 3
    %p106 = por %p104, %p105
    %p108 = scmp.ne.s32.totalorder %s91, %s107
    %p109 = scmp.eq.s32.totalorder %s15, 0
    %p110 = por %p108, %p109
    %p111 = scmp.le.s32.totalorder 1, %s9
    %p112 = scmp.lt.s32.totalorder %s9, 5
    %p113 = pnand %p111, %p112
    %p114 = pneg %p113
    // Predicated region
    $region9: #{lane_detection_cnn_forward.5} parent=5 // pred_check
      _
    $region10: #{lane_detection_cnn_forward.5} parent=5 // pred_check_branch
      %116 = sbr.rel (%p113) target = $region12
    $region11: #{lane_detection_cnn_forward.5} parent=5 // pred_region
      %s117 = ssub.s32 %s9, 1
      // Predicated region
      $region13: #{lane_detection_cnn_forward.5} parent=11 // pred_check
        %p118 = pneg %p56
      $region14: #{lane_detection_cnn_forward.5} parent=11 // pred_check_branch
        %120 = sbr.rel (%p118) target = $region16
      $region15: #{lane_detection_cnn_forward.5} parent=11 // pred_region
        _
      $region16: #{lane_detection_cnn_forward.5} parent=11 // pred_fallthru
        _
      // Predicated region
      $region17: #{lane_detection_cnn_forward.5} parent=11 // pred_check
        %p121 = pneg %p77
      $region18: #{lane_detection_cnn_forward.5} parent=11 // pred_check_branch
        %123 = sbr.rel (%p121) target = $region20
      $region19: #{lane_detection_cnn_forward.5} parent=11 // pred_region
        _
      $region20: #{lane_detection_cnn_forward.5} parent=11 // pred_fallthru
        _
    $region12: #{lane_detection_cnn_forward.5} parent=5 // pred_fallthru
      _
    %p124 = scmp.lt.s32.totalorder %s9, 4
    // Predicated region
    $region21: #{lane_detection_cnn_forward.5} parent=5 // pred_check
      %p125 = pneg %p124
    $region22: #{lane_detection_cnn_forward.5} parent=5 // pred_check_branch
      %127 = sbr.rel (%p125) target = $region24
    $region23: #{lane_detection_cnn_forward.5} parent=5 // pred_region
      // Predicated region
      $region25: #{lane_detection_cnn_forward.5} parent=23 // pred_check
        %p128 = pneg %p29
      $region26: #{lane_detection_cnn_forward.5} parent=23 // pred_check_branch
        %130 = sbr.rel (%p128) target = $region28
      $region27: #{lane_detection_cnn_forward.5} parent=23 // pred_region
        %s131 = smul.u32 64, %s9
        %p132 = scmp.lt.s32.totalorder %s131, 255
        %s133 = scalar_select %p132, %s131, 255
        %s134 = smul.addr %s133, 4
        %s135 = scalar_lea.vmem %s0, %s134
        %s136 = smul.u32 64, %s9
      $region28: #{lane_detection_cnn_forward.5} parent=23 // pred_fallthru
        _
    $region24: #{lane_detection_cnn_forward.5} parent=5 // pred_fallthru
      _
    %p137 = scmp.le.s32.totalorder 1, %s9
    %p138 = scmp.lt.s32.totalorder %s9, 5
    %p139 = pnand %p137, %p138
    %p140 = pneg %p139
    // Predicated region
    $region29: #{lane_detection_cnn_forward.5} parent=5 // pred_check
      _
    $region30: #{lane_detection_cnn_forward.5} parent=5 // pred_check_branch
      %142 = sbr.rel (%p139) target = $region32
    $region31: #{lane_detection_cnn_forward.5} parent=5 // pred_region
      %s143 = ssub.s32 %s9, 1
      %s144 = smul.u32 64, %s14
      %p145 = scmp.lt.s32.totalorder %s144, 255
      %s146 = scalar_select %p145, %s144, 255
      %s147 = smul.addr %s146, 4
      %s148 = scalar_lea.vmem %s0, %s147
      %p149 = pneg %p35
      %p150 = pneg %p32
      %p151 = pneg %p56
      %p152 = pneg %p53
      %p153 = pneg %p77
      %p154 = pneg %p74
      %p155 = pneg %p103
      %p156 = pneg %p100
      %s157 = smul.u32 64, %s14
      %p158 = scmp.lt.s32.totalorder %s157, 255
      %s159 = scalar_select %p158, %s157, 255
      %s160 = smul.addr %s159, 4
      %s161 = scalar_lea.vmem %s3, %s160
      %s162 = smul.u32 64, %s14
      %p163 = scmp.lt.s32.totalorder %s162, 255
      %s164 = scalar_select %p163, %s162, 255
      %s165 = smul.addr %s164, 4
      %s166 = scalar_lea.vmem %s0, %s165
      %s167 = smul.u32 64, %s14
      %s168 = smul.u32 64, %s14
      %p169 = scmp.lt.s32.totalorder %s168, 255
      %s170 = scalar_select %p169, %s168, 255
      %s171 = smul.addr %s170, 4
      %s172 = scalar_lea.vmem %s3, %s171
      %s173 = smul.u32 64, %s14
      %v174 = vld [vmem:[%s166] sm:$0xf]
      %v175 = vld [vmem:[%s166 + $0x4] sm:$0xf]
      %v176 = vld [vmem:[%s166 + $0x8] sm:$0xf]
      %v177 = vld [vmem:[%s166 + $0xc] sm:$0xf]
      %v178 = vld [vmem:[%s166 + $0x10] sm:$0xf]
      %v179 = vld [vmem:[%s166 + $0x14] sm:$0xf]
      %v180 = vld [vmem:[%s166 + $0x18] sm:$0xf]
      %v181 = vld [vmem:[%s166 + $0x1c] sm:$0xf]
      %v182 = vld [vmem:[%s166 + $0x20] sm:$0xf]
      %v183 = vld [vmem:[%s166 + $0x24] sm:$0xf]
      %v184 = vld [vmem:[%s166 + $0x28] sm:$0xf]
      %v185 = vld [vmem:[%s166 + $0x2c] sm:$0xf]
      %v186 = vld [vmem:[%s166 + $0x30] sm:$0xf]
      %v187 = vld [vmem:[%s166 + $0x34] sm:$0xf]
      %v188 = vld [vmem:[%s166 + $0x38] sm:$0xf]
      %v189 = vld [vmem:[%s166 + $0x3c] sm:$0xf]
      %v190 = vld [vmem:[%s166 + $0x40] sm:$0xf]
      %v191 = vld [vmem:[%s166 + $0x44] sm:$0xf]
      %v192 = vld [vmem:[%s166 + $0x48] sm:$0xf]
      %v193 = vld [vmem:[%s166 + $0x4c] sm:$0xf]
      %v194 = vld [vmem:[%s166 + $0x50] sm:$0xf]
      %v195 = vld [vmem:[%s166 + $0x54] sm:$0xf]
      %v196 = vld [vmem:[%s166 + $0x58] sm:$0xf]
      %v197 = vld [vmem:[%s166 + $0x5c] sm:$0xf]
      %v198 = vld [vmem:[%s166 + $0x60] sm:$0xf]
      %v199 = vld [vmem:[%s166 + $0x64] sm:$0xf]
      %v200 = vld [vmem:[%s166 + $0x68] sm:$0xf]
      %v201 = vld [vmem:[%s166 + $0x6c] sm:$0xf]
      %v202 = vld [vmem:[%s166 + $0x70] sm:$0xf]
      %v203 = vld [vmem:[%s166 + $0x74] sm:$0xf]
      %v204 = vld [vmem:[%s166 + $0x78] sm:$0xf]
      %v205 = vld [vmem:[%s166 + $0x7c] sm:$0xf]
      %v206 = vld [vmem:[%s166 + $0x80] sm:$0xf]
      %v207 = vld [vmem:[%s166 + $0x84] sm:$0xf]
      %v208 = vld [vmem:[%s166 + $0x88] sm:$0xf]
      %v209 = vld [vmem:[%s166 + $0x8c] sm:$0xf]
      %v210 = vld [vmem:[%s166 + $0x90] sm:$0xf]
      %v211 = vld [vmem:[%s166 + $0x94] sm:$0xf]
      %v212 = vld [vmem:[%s166 + $0x98] sm:$0xf]
      %v213 = vld [vmem:[%s166 + $0x9c] sm:$0xf]
      %v214 = vld [vmem:[%s166 + $0xa0] sm:$0xf]
      %v215 = vld [vmem:[%s166 + $0xa4] sm:$0xf]
      %v216 = vld [vmem:[%s166 + $0xa8] sm:$0xf]
      %v217 = vld [vmem:[%s166 + $0xac] sm:$0xf]
      %v218 = vld [vmem:[%s166 + $0xb0] sm:$0xf]
      %v219 = vld [vmem:[%s166 + $0xb4] sm:$0xf]
      %v220 = vld [vmem:[%s166 + $0xb8] sm:$0xf]
      %v221 = vld [vmem:[%s166 + $0xbc] sm:$0xf]
      %v222 = vld [vmem:[%s166 + $0xc0] sm:$0xf]
      %v223 = vld [vmem:[%s166 + $0xc4] sm:$0xf]
      %v224 = vld [vmem:[%s166 + $0xc8] sm:$0xf]
      %v225 = vld [vmem:[%s166 + $0xcc] sm:$0xf]
      %v226 = vld [vmem:[%s166 + $0xd0] sm:$0xf]
      %v227 = vld [vmem:[%s166 + $0xd4] sm:$0xf]
      %v228 = vld [vmem:[%s166 + $0xd8] sm:$0xf]
      %v229 = vld [vmem:[%s166 + $0xdc] sm:$0xf]
      %v230 = vld [vmem:[%s166 + $0xe0] sm:$0xf]
      %v231 = vld [vmem:[%s166 + $0xe4] sm:$0xf]
      %v232 = vld [vmem:[%s166 + $0xe8] sm:$0xf]
      %v233 = vld [vmem:[%s166 + $0xec] sm:$0xf]
      %v234 = vld [vmem:[%s166 + $0xf0] sm:$0xf]
      %v235 = vld [vmem:[%s166 + $0xf4] sm:$0xf]
      %v236 = vld [vmem:[%s166 + $0xf8] sm:$0xf]
      %v237 = vld [vmem:[%s166 + $0xfc] sm:$0xf]
      %v238 = vld [vmem:[%s1] sm:$0xf]
      %v239 = vld [vmem:[%s1 + $0x4] sm:$0xf]
      %v240 = vld [vmem:[%s1 + $0x8] sm:$0xf]
      %v241 = vld [vmem:[%s1 + $0xc] sm:$0xf]
      %v242 = vld [vmem:[%s1 + $0x10] sm:$0xf]
      %v243 = vld [vmem:[%s1 + $0x14] sm:$0xf]
      %v244 = vld [vmem:[%s1 + $0x18] sm:$0xf]
      %v245 = vld [vmem:[%s1 + $0x1c] sm:$0xf]
      %v246 = vld [vmem:[%s1 + $0x20] sm:$0xf]
      %v247 = vld [vmem:[%s1 + $0x24] sm:$0xf]
      %v248 = vld [vmem:[%s1 + $0x28] sm:$0xf]
      %v249 = vld [vmem:[%s1 + $0x2c] sm:$0xf]
      %v250 = vld [vmem:[%s1 + $0x30] sm:$0xf]
      %v251 = vld [vmem:[%s1 + $0x34] sm:$0xf]
      %v252 = vld [vmem:[%s1 + $0x38] sm:$0xf]
      %v253 = vld [vmem:[%s1 + $0x3c] sm:$0xf]
      %v254 = vld [vmem:[%s2] sm:$0x1]
      %v256 = vperm.slane %v254, 0
      %v322 = vunpack.c.l.b16 %v174
      %v323 = vunpack.c.l.b16 %v175
      %v324 = vunpack.c.l.b16 %v176
      %v325 = vunpack.c.l.b16 %v177
      %v326 = vunpack.c.l.b16 %v178
      %v327 = vunpack.c.l.b16 %v179
      %v328 = vunpack.c.l.b16 %v180
      %v329 = vunpack.c.l.b16 %v181
      %v330 = vunpack.c.l.b16 %v182
      %v331 = vunpack.c.l.b16 %v183
      %v332 = vunpack.c.l.b16 %v184
      %v333 = vunpack.c.l.b16 %v185
      %v334 = vunpack.c.l.b16 %v186
      %v335 = vunpack.c.l.b16 %v187
      %v336 = vunpack.c.l.b16 %v188
      %v337 = vunpack.c.l.b16 %v189
      %v338 = vunpack.c.l.b16 %v190
      %v339 = vunpack.c.l.b16 %v191
      %v340 = vunpack.c.l.b16 %v192
      %v341 = vunpack.c.l.b16 %v193
      %v342 = vunpack.c.l.b16 %v194
      %v343 = vunpack.c.l.b16 %v195
      %v344 = vunpack.c.l.b16 %v196
      %v345 = vunpack.c.l.b16 %v197
      %v346 = vunpack.c.l.b16 %v198
      %v347 = vunpack.c.l.b16 %v199
      %v348 = vunpack.c.l.b16 %v200
      %v349 = vunpack.c.l.b16 %v201
      %v350 = vunpack.c.l.b16 %v202
      %v351 = vunpack.c.l.b16 %v203
      %v352 = vunpack.c.l.b16 %v204
      %v353 = vunpack.c.l.b16 %v205
      %v354 = vunpack.c.l.b16 %v206
      %v355 = vunpack.c.l.b16 %v207
      %v356 = vunpack.c.l.b16 %v208
      %v357 = vunpack.c.l.b16 %v209
      %v358 = vunpack.c.l.b16 %v210
      %v359 = vunpack.c.l.b16 %v211
      %v360 = vunpack.c.l.b16 %v212
      %v361 = vunpack.c.l.b16 %v213
      %v362 = vunpack.c.l.b16 %v214
      %v363 = vunpack.c.l.b16 %v215
      %v364 = vunpack.c.l.b16 %v216
      %v365 = vunpack.c.l.b16 %v217
      %v366 = vunpack.c.l.b16 %v218
      %v367 = vunpack.c.l.b16 %v219
      %v368 = vunpack.c.l.b16 %v220
      %v369 = vunpack.c.l.b16 %v221
      %v370 = vunpack.c.l.b16 %v222
      %v371 = vunpack.c.l.b16 %v223
      %v372 = vunpack.c.l.b16 %v224
      %v373 = vunpack.c.l.b16 %v225
      %v374 = vunpack.c.l.b16 %v226
      %v375 = vunpack.c.l.b16 %v227
      %v376 = vunpack.c.l.b16 %v228
      %v377 = vunpack.c.l.b16 %v229
      %v378 = vunpack.c.l.b16 %v230
      %v379 = vunpack.c.l.b16 %v231
      %v380 = vunpack.c.l.b16 %v232
      %v381 = vunpack.c.l.b16 %v233
      %v382 = vunpack.c.l.b16 %v234
      %v383 = vunpack.c.l.b16 %v235
      %v384 = vunpack.c.l.b16 %v236
      %v385 = vunpack.c.l.b16 %v237
      %v386 = vpack.c.b16 %v323, %v322
      %v387 = vpack.c.b16 %v325, %v324
      %v388 = vpack.c.b16 %v327, %v326
      %v389 = vpack.c.b16 %v329, %v328
      %v390 = vpack.c.b16 %v331, %v330
      %v391 = vpack.c.b16 %v333, %v332
      %v392 = vpack.c.b16 %v335, %v334
      %v393 = vpack.c.b16 %v337, %v336
      %v394 = vpack.c.b16 %v339, %v338
      %v395 = vpack.c.b16 %v341, %v340
      %v396 = vpack.c.b16 %v343, %v342
      %v397 = vpack.c.b16 %v345, %v344
      %v398 = vpack.c.b16 %v347, %v346
      %v399 = vpack.c.b16 %v349, %v348
      %v400 = vpack.c.b16 %v351, %v350
      %v401 = vpack.c.b16 %v353, %v352
      %v402 = vpack.c.b16 %v355, %v354
      %v403 = vpack.c.b16 %v357, %v356
      %v404 = vpack.c.b16 %v359, %v358
      %v405 = vpack.c.b16 %v361, %v360
      %v406 = vpack.c.b16 %v363, %v362
      %v407 = vpack.c.b16 %v365, %v364
      %v408 = vpack.c.b16 %v367, %v366
      %v409 = vpack.c.b16 %v369, %v368
      %v410 = vpack.c.b16 %v371, %v370
      %v411 = vpack.c.b16 %v373, %v372
      %v412 = vpack.c.b16 %v375, %v374
      %v413 = vpack.c.b16 %v377, %v376
      %v414 = vpack.c.b16 %v379, %v378
      %v415 = vpack.c.b16 %v381, %v380
      %v416 = vpack.c.b16 %v383, %v382
      %v417 = vpack.c.b16 %v385, %v384
      %v466 = vunpack.c.l.b16 %v238
      %v467 = vunpack.c.l.b16 %v239
      %v468 = vunpack.c.l.b16 %v240
      %v469 = vunpack.c.l.b16 %v241
      %v470 = vunpack.c.l.b16 %v242
      %v471 = vunpack.c.l.b16 %v243
      %v472 = vunpack.c.l.b16 %v244
      %v473 = vunpack.c.l.b16 %v245
      %v474 = vunpack.c.l.b16 %v246
      %v475 = vunpack.c.l.b16 %v247
      %v476 = vunpack.c.l.b16 %v248
      %v477 = vunpack.c.l.b16 %v249
      %v478 = vunpack.c.l.b16 %v250
      %v479 = vunpack.c.l.b16 %v251
      %v480 = vunpack.c.l.b16 %v252
      %v481 = vunpack.c.l.b16 %v253
      %v482 = vpack.c.b16 %v467, %v466
      %v483 = vpack.c.b16 %v469, %v468
      %v484 = vpack.c.b16 %v471, %v470
      %v485 = vpack.c.b16 %v473, %v472
      %v486 = vpack.c.b16 %v475, %v474
      %v487 = vpack.c.b16 %v477, %v476
      %v488 = vpack.c.b16 %v479, %v478
      %v489 = vpack.c.b16 %v481, %v480
      %498 = vmatpush.bf16.msra.mxu0 %v489
      %499 = vmatpush.bf16.msra.mxu0 %v488
      %500 = vmatpush.bf16.msra.mxu0 %v487
      %501 = vmatpush.bf16.msra.mxu0 %v486
      %502 = vmatpush.bf16.msra.mxu0 %v485
      %503 = vmatpush.bf16.msra.mxu0 %v484
      %504 = vmatpush.bf16.msra.mxu0 %v483
      %505 = vmatpush.bf16.msra.mxu0 %v482
      %506 = vmatmul.bf16.gmra.mxu0 %v386
      %v507 = vpop.f32.mrf.mxu0
      %v508 = vadd.f32 %v256, %v507
      %v509 = vpop.f32.mrf.mxu0
      %v510 = vadd.f32 %v256, %v509
      %511 = vmatmul.bf16.gmra.mxu0 %v387
      %v512 = vpop.f32.mrf.mxu0
      %v513 = vadd.f32 %v256, %v512
      %v514 = vpop.f32.mrf.mxu0
      %v515 = vadd.f32 %v256, %v514
      %516 = vmatmul.bf16.gmra.mxu0 %v388
      %v517 = vpop.f32.mrf.mxu0
      %v518 = vadd.f32 %v256, %v517
      %v519 = vpop.f32.mrf.mxu0
      %v520 = vadd.f32 %v256, %v519
      %521 = vmatmul.bf16.gmra.mxu0 %v389
      %v522 = vpop.f32.mrf.mxu0
      %v523 = vadd.f32 %v256, %v522
      %v524 = vpop.f32.mrf.mxu0
      %v525 = vadd.f32 %v256, %v524
      %526 = vmatmul.bf16.gmra.mxu0 %v390
      %v527 = vpop.f32.mrf.mxu0
      %v528 = vadd.f32 %v256, %v527
      %v529 = vpop.f32.mrf.mxu0
      %v530 = vadd.f32 %v256, %v529
      %531 = vmatmul.bf16.gmra.mxu0 %v391
      %v532 = vpop.f32.mrf.mxu0
      %v533 = vadd.f32 %v256, %v532
      %v534 = vpop.f32.mrf.mxu0
      %v535 = vadd.f32 %v256, %v534
      %536 = vmatmul.bf16.gmra.mxu0 %v392
      %v537 = vpop.f32.mrf.mxu0
      %v538 = vadd.f32 %v256, %v537
      %v539 = vpop.f32.mrf.mxu0
      %v540 = vadd.f32 %v256, %v539
      %541 = vmatmul.bf16.gmra.mxu0 %v393
      %v542 = vpop.f32.mrf.mxu0
      %v543 = vadd.f32 %v256, %v542
      %v544 = vpop.f32.mrf.mxu0
      %v545 = vadd.f32 %v256, %v544
      %546 = vmatmul.bf16.gmra.mxu0 %v394
      %v547 = vpop.f32.mrf.mxu0
      %v548 = vadd.f32 %v256, %v547
      %v549 = vpop.f32.mrf.mxu0
      %v550 = vadd.f32 %v256, %v549
      %551 = vmatmul.bf16.gmra.mxu0 %v395
      %v552 = vpop.f32.mrf.mxu0
      %v553 = vadd.f32 %v256, %v552
      %v554 = vpop.f32.mrf.mxu0
      %v555 = vadd.f32 %v256, %v554
      %556 = vmatmul.bf16.gmra.mxu0 %v396
      %v557 = vpop.f32.mrf.mxu0
      %v558 = vadd.f32 %v256, %v557
      %v559 = vpop.f32.mrf.mxu0
      %v560 = vadd.f32 %v256, %v559
      %561 = vmatmul.bf16.gmra.mxu0 %v397
      %v562 = vpop.f32.mrf.mxu0
      %v563 = vadd.f32 %v256, %v562
      %v564 = vpop.f32.mrf.mxu0
      %v565 = vadd.f32 %v256, %v564
      %566 = vmatmul.bf16.gmra.mxu0 %v398
      %v567 = vpop.f32.mrf.mxu0
      %v568 = vadd.f32 %v256, %v567
      %v569 = vpop.f32.mrf.mxu0
      %v570 = vadd.f32 %v256, %v569
      %571 = vmatmul.bf16.gmra.mxu0 %v399
      %v572 = vpop.f32.mrf.mxu0
      %v573 = vadd.f32 %v256, %v572
      %v574 = vpop.f32.mrf.mxu0
      %v575 = vadd.f32 %v256, %v574
      %576 = vmatmul.bf16.gmra.mxu0 %v400
      %v577 = vpop.f32.mrf.mxu0
      %v578 = vadd.f32 %v256, %v577
      %v579 = vpop.f32.mrf.mxu0
      %v580 = vadd.f32 %v256, %v579
      %581 = vmatmul.bf16.gmra.mxu0 %v401
      %v582 = vpop.f32.mrf.mxu0
      %v583 = vadd.f32 %v256, %v582
      %v584 = vpop.f32.mrf.mxu0
      %v585 = vadd.f32 %v256, %v584
      %586 = vmatmul.bf16.gmra.mxu0 %v402
      %v587 = vpop.f32.mrf.mxu0
      %v588 = vadd.f32 %v256, %v587
      %v589 = vpop.f32.mrf.mxu0
      %v590 = vadd.f32 %v256, %v589
      %591 = vmatmul.bf16.gmra.mxu0 %v403
      %v592 = vpop.f32.mrf.mxu0
      %v593 = vadd.f32 %v256, %v592
      %v594 = vpop.f32.mrf.mxu0
      %v595 = vadd.f32 %v256, %v594
      %596 = vmatmul.bf16.gmra.mxu0 %v404
      %v597 = vpop.f32.mrf.mxu0
      %v598 = vadd.f32 %v256, %v597
      %v599 = vpop.f32.mrf.mxu0
      %v600 = vadd.f32 %v256, %v599
      %601 = vmatmul.bf16.gmra.mxu0 %v405
      %v602 = vpop.f32.mrf.mxu0
      %v603 = vadd.f32 %v256, %v602
      %v604 = vpop.f32.mrf.mxu0
      %v605 = vadd.f32 %v256, %v604
      %606 = vmatmul.bf16.gmra.mxu0 %v406
      %v607 = vpop.f32.mrf.mxu0
      %v608 = vadd.f32 %v256, %v607
      %v609 = vpop.f32.mrf.mxu0
      %v610 = vadd.f32 %v256, %v609
      %611 = vmatmul.bf16.gmra.mxu0 %v407
      %v612 = vpop.f32.mrf.mxu0
      %v613 = vadd.f32 %v256, %v612
      %v614 = vpop.f32.mrf.mxu0
      %v615 = vadd.f32 %v256, %v614
      %616 = vmatmul.bf16.gmra.mxu0 %v408
      %v617 = vpop.f32.mrf.mxu0
      %v618 = vadd.f32 %v256, %v617
      %v619 = vpop.f32.mrf.mxu0
      %v620 = vadd.f32 %v256, %v619
      %621 = vmatmul.bf16.gmra.mxu0 %v409
      %v622 = vpop.f32.mrf.mxu0
      %v623 = vadd.f32 %v256, %v622
      %v624 = vpop.f32.mrf.mxu0
      %v625 = vadd.f32 %v256, %v624
      %626 = vmatmul.bf16.gmra.mxu0 %v410
      %v627 = vpop.f32.mrf.mxu0
      %v628 = vadd.f32 %v256, %v627
      %v629 = vpop.f32.mrf.mxu0
      %v630 = vadd.f32 %v256, %v629
      %631 = vmatmul.bf16.gmra.mxu0 %v411
      %v632 = vpop.f32.mrf.mxu0
      %v633 = vadd.f32 %v256, %v632
      %v634 = vpop.f32.mrf.mxu0
      %v635 = vadd.f32 %v256, %v634
      %636 = vmatmul.bf16.gmra.mxu0 %v412
      %v637 = vpop.f32.mrf.mxu0
      %v638 = vadd.f32 %v256, %v637
      %v639 = vpop.f32.mrf.mxu0
      %v640 = vadd.f32 %v256, %v639
      %641 = vmatmul.bf16.gmra.mxu0 %v413
      %v642 = vpop.f32.mrf.mxu0
      %v643 = vadd.f32 %v256, %v642
      %v644 = vpop.f32.mrf.mxu0
      %v645 = vadd.f32 %v256, %v644
      %646 = vmatmul.bf16.gmra.mxu0 %v414
      %v647 = vpop.f32.mrf.mxu0
      %v648 = vadd.f32 %v256, %v647
      %v649 = vpop.f32.mrf.mxu0
      %v650 = vadd.f32 %v256, %v649
      %651 = vmatmul.bf16.gmra.mxu0 %v415
      %v652 = vpop.f32.mrf.mxu0
      %v653 = vadd.f32 %v256, %v652
      %v654 = vpop.f32.mrf.mxu0
      %v655 = vadd.f32 %v256, %v654
      %656 = vmatmul.bf16.gmra.mxu0 %v416
      %v657 = vpop.f32.mrf.mxu0
      %v658 = vadd.f32 %v256, %v657
      %v659 = vpop.f32.mrf.mxu0
      %v660 = vadd.f32 %v256, %v659
      %661 = vmatmul.bf16.gmra.mxu0 %v417
      %v662 = vpop.f32.mrf.mxu0
      %v663 = vadd.f32 %v256, %v662
      %v664 = vpop.f32.mrf.mxu0
      %v665 = vadd.f32 %v256, %v664
      %666 = vdwg.mxu0
      %v667 = vmax.f32 %v508, 0.0
      %v668 = vmax.f32 %v510, 0.0
      %v669 = vmax.f32 %v513, 0.0
      %v670 = vmax.f32 %v515, 0.0
      %v671 = vmax.f32 %v518, 0.0
      %v672 = vmax.f32 %v520, 0.0
      %v673 = vmax.f32 %v523, 0.0
      %v674 = vmax.f32 %v525, 0.0
      %v675 = vmax.f32 %v528, 0.0
      %v676 = vmax.f32 %v530, 0.0
      %v677 = vmax.f32 %v533, 0.0
      %v678 = vmax.f32 %v535, 0.0
      %v679 = vmax.f32 %v538, 0.0
      %v680 = vmax.f32 %v540, 0.0
      %v681 = vmax.f32 %v543, 0.0
      %v682 = vmax.f32 %v545, 0.0
      %v683 = vmax.f32 %v548, 0.0
      %v684 = vmax.f32 %v550, 0.0
      %v685 = vmax.f32 %v553, 0.0
      %v686 = vmax.f32 %v555, 0.0
      %v687 = vmax.f32 %v558, 0.0
      %v688 = vmax.f32 %v560, 0.0
      %v689 = vmax.f32 %v563, 0.0
      %v690 = vmax.f32 %v565, 0.0
      %v691 = vmax.f32 %v568, 0.0
      %v692 = vmax.f32 %v570, 0.0
      %v693 = vmax.f32 %v573, 0.0
      %v694 = vmax.f32 %v575, 0.0
      %v695 = vmax.f32 %v578, 0.0
      %v696 = vmax.f32 %v580, 0.0
      %v697 = vmax.f32 %v583, 0.0
      %v698 = vmax.f32 %v585, 0.0
      %v699 = vmax.f32 %v588, 0.0
      %v700 = vmax.f32 %v590, 0.0
      %v701 = vmax.f32 %v593, 0.0
      %v702 = vmax.f32 %v595, 0.0
      %v703 = vmax.f32 %v598, 0.0
      %v704 = vmax.f32 %v600, 0.0
      %v705 = vmax.f32 %v603, 0.0
      %v706 = vmax.f32 %v605, 0.0
      %v707 = vmax.f32 %v608, 0.0
      %v708 = vmax.f32 %v610, 0.0
      %v709 = vmax.f32 %v613, 0.0
      %v710 = vmax.f32 %v615, 0.0
      %v711 = vmax.f32 %v618, 0.0
      %v712 = vmax.f32 %v620, 0.0
      %v713 = vmax.f32 %v623, 0.0
      %v714 = vmax.f32 %v625, 0.0
      %v715 = vmax.f32 %v628, 0.0
      %v716 = vmax.f32 %v630, 0.0
      %v717 = vmax.f32 %v633, 0.0
      %v718 = vmax.f32 %v635, 0.0
      %v719 = vmax.f32 %v638, 0.0
      %v720 = vmax.f32 %v640, 0.0
      %v721 = vmax.f32 %v643, 0.0
      %v722 = vmax.f32 %v645, 0.0
      %v723 = vmax.f32 %v648, 0.0
      %v724 = vmax.f32 %v650, 0.0
      %v725 = vmax.f32 %v653, 0.0
      %v726 = vmax.f32 %v655, 0.0
      %v727 = vmax.f32 %v658, 0.0
      %v728 = vmax.f32 %v660, 0.0
      %v729 = vmax.f32 %v663, 0.0
      %v730 = vmax.f32 %v665, 0.0
      %v731 = vpack.c.bf16 %v667, %v667
      %v732 = vpack.c.bf16 %v668, %v668
      %v733 = vpack.c.bf16 %v669, %v669
      %v734 = vpack.c.bf16 %v670, %v670
      %v735 = vpack.c.bf16 %v671, %v671
      %v736 = vpack.c.bf16 %v672, %v672
      %v737 = vpack.c.bf16 %v673, %v673
      %v738 = vpack.c.bf16 %v674, %v674
      %v739 = vpack.c.bf16 %v675, %v675
      %v740 = vpack.c.bf16 %v676, %v676
      %v741 = vpack.c.bf16 %v677, %v677
      %v742 = vpack.c.bf16 %v678, %v678
      %v743 = vpack.c.bf16 %v679, %v679
      %v744 = vpack.c.bf16 %v680, %v680
      %v745 = vpack.c.bf16 %v681, %v681
      %v746 = vpack.c.bf16 %v682, %v682
      %v747 = vpack.c.bf16 %v683, %v683
      %v748 = vpack.c.bf16 %v684, %v684
      %v749 = vpack.c.bf16 %v685, %v685
      %v750 = vpack.c.bf16 %v686, %v686
      %v751 = vpack.c.bf16 %v687, %v687
      %v752 = vpack.c.bf16 %v688, %v688
      %v753 = vpack.c.bf16 %v689, %v689
      %v754 = vpack.c.bf16 %v690, %v690
      %v755 = vpack.c.bf16 %v691, %v691
      %v756 = vpack.c.bf16 %v692, %v692
      %v757 = vpack.c.bf16 %v693, %v693
      %v758 = vpack.c.bf16 %v694, %v694
      %v759 = vpack.c.bf16 %v695, %v695
      %v760 = vpack.c.bf16 %v696, %v696
      %v761 = vpack.c.bf16 %v697, %v697
      %v762 = vpack.c.bf16 %v698, %v698
      %v763 = vpack.c.bf16 %v699, %v699
      %v764 = vpack.c.bf16 %v700, %v700
      %v765 = vpack.c.bf16 %v701, %v701
      %v766 = vpack.c.bf16 %v702, %v702
      %v767 = vpack.c.bf16 %v703, %v703
      %v768 = vpack.c.bf16 %v704, %v704
      %v769 = vpack.c.bf16 %v705, %v705
      %v770 = vpack.c.bf16 %v706, %v706
      %v771 = vpack.c.bf16 %v707, %v707
      %v772 = vpack.c.bf16 %v708, %v708
      %v773 = vpack.c.bf16 %v709, %v709
      %v774 = vpack.c.bf16 %v710, %v710
      %v775 = vpack.c.bf16 %v711, %v711
      %v776 = vpack.c.bf16 %v712, %v712
      %v777 = vpack.c.bf16 %v713, %v713
      %v778 = vpack.c.bf16 %v714, %v714
      %v779 = vpack.c.bf16 %v715, %v715
      %v780 = vpack.c.bf16 %v716, %v716
      %v781 = vpack.c.bf16 %v717, %v717
      %v782 = vpack.c.bf16 %v718, %v718
      %v783 = vpack.c.bf16 %v719, %v719
      %v784 = vpack.c.bf16 %v720, %v720
      %v785 = vpack.c.bf16 %v721, %v721
      %v786 = vpack.c.bf16 %v722, %v722
      %v787 = vpack.c.bf16 %v723, %v723
      %v788 = vpack.c.bf16 %v724, %v724
      %v789 = vpack.c.bf16 %v725, %v725
      %v790 = vpack.c.bf16 %v726, %v726
      %v791 = vpack.c.bf16 %v727, %v727
      %v792 = vpack.c.bf16 %v728, %v728
      %v793 = vpack.c.bf16 %v729, %v729
      %v794 = vpack.c.bf16 %v730, %v730
      %795 = vst [vmem:[%s172] sm:$0xf] %v731
      %796 = vst [vmem:[%s172 + $0x4] sm:$0xf] %v732
      %797 = vst [vmem:[%s172 + $0x8] sm:$0xf] %v733
      %798 = vst [vmem:[%s172 + $0xc] sm:$0xf] %v734
      %799 = vst [vmem:[%s172 + $0x10] sm:$0xf] %v735
      %800 = vst [vmem:[%s172 + $0x14] sm:$0xf] %v736
      %801 = vst [vmem:[%s172 + $0x18] sm:$0xf] %v737
      %802 = vst [vmem:[%s172 + $0x1c] sm:$0xf] %v738
      %803 = vst [vmem:[%s172 + $0x20] sm:$0xf] %v739
      %804 = vst [vmem:[%s172 + $0x24] sm:$0xf] %v740
      %805 = vst [vmem:[%s172 + $0x28] sm:$0xf] %v741
      %806 = vst [vmem:[%s172 + $0x2c] sm:$0xf] %v742
      %807 = vst [vmem:[%s172 + $0x30] sm:$0xf] %v743
      %808 = vst [vmem:[%s172 + $0x34] sm:$0xf] %v744
      %809 = vst [vmem:[%s172 + $0x38] sm:$0xf] %v745
      %810 = vst [vmem:[%s172 + $0x3c] sm:$0xf] %v746
      %811 = vst [vmem:[%s172 + $0x40] sm:$0xf] %v747
      %812 = vst [vmem:[%s172 + $0x44] sm:$0xf] %v748
      %813 = vst [vmem:[%s172 + $0x48] sm:$0xf] %v749
      %814 = vst [vmem:[%s172 + $0x4c] sm:$0xf] %v750
      %815 = vst [vmem:[%s172 + $0x50] sm:$0xf] %v751
      %816 = vst [vmem:[%s172 + $0x54] sm:$0xf] %v752
      %817 = vst [vmem:[%s172 + $0x58] sm:$0xf] %v753
      %818 = vst [vmem:[%s172 + $0x5c] sm:$0xf] %v754
      %819 = vst [vmem:[%s172 + $0x60] sm:$0xf] %v755
      %820 = vst [vmem:[%s172 + $0x64] sm:$0xf] %v756
      %821 = vst [vmem:[%s172 + $0x68] sm:$0xf] %v757
      %822 = vst [vmem:[%s172 + $0x6c] sm:$0xf] %v758
      %823 = vst [vmem:[%s172 + $0x70] sm:$0xf] %v759
      %824 = vst [vmem:[%s172 + $0x74] sm:$0xf] %v760
      %825 = vst [vmem:[%s172 + $0x78] sm:$0xf] %v761
      %826 = vst [vmem:[%s172 + $0x7c] sm:$0xf] %v762
      %827 = vst [vmem:[%s172 + $0x80] sm:$0xf] %v763
      %828 = vst [vmem:[%s172 + $0x84] sm:$0xf] %v764
      %829 = vst [vmem:[%s172 + $0x88] sm:$0xf] %v765
      %830 = vst [vmem:[%s172 + $0x8c] sm:$0xf] %v766
      %831 = vst [vmem:[%s172 + $0x90] sm:$0xf] %v767
      %832 = vst [vmem:[%s172 + $0x94] sm:$0xf] %v768
      %833 = vst [vmem:[%s172 + $0x98] sm:$0xf] %v769
      %834 = vst [vmem:[%s172 + $0x9c] sm:$0xf] %v770
      %835 = vst [vmem:[%s172 + $0xa0] sm:$0xf] %v771
      %836 = vst [vmem:[%s172 + $0xa4] sm:$0xf] %v772
      %837 = vst [vmem:[%s172 + $0xa8] sm:$0xf] %v773
      %838 = vst [vmem:[%s172 + $0xac] sm:$0xf] %v774
      %839 = vst [vmem:[%s172 + $0xb0] sm:$0xf] %v775
      %840 = vst [vmem:[%s172 + $0xb4] sm:$0xf] %v776
      %841 = vst [vmem:[%s172 + $0xb8] sm:$0xf] %v777
      %842 = vst [vmem:[%s172 + $0xbc] sm:$0xf] %v778
      %843 = vst [vmem:[%s172 + $0xc0] sm:$0xf] %v779
      %844 = vst [vmem:[%s172 + $0xc4] sm:$0xf] %v780
      %845 = vst [vmem:[%s172 + $0xc8] sm:$0xf] %v781
      %846 = vst [vmem:[%s172 + $0xcc] sm:$0xf] %v782
      %847 = vst [vmem:[%s172 + $0xd0] sm:$0xf] %v783
      %848 = vst [vmem:[%s172 + $0xd4] sm:$0xf] %v784
      %849 = vst [vmem:[%s172 + $0xd8] sm:$0xf] %v785
      %850 = vst [vmem:[%s172 + $0xdc] sm:$0xf] %v786
      %851 = vst [vmem:[%s172 + $0xe0] sm:$0xf] %v787
      %852 = vst [vmem:[%s172 + $0xe4] sm:$0xf] %v788
      %853 = vst [vmem:[%s172 + $0xe8] sm:$0xf] %v789
      %854 = vst [vmem:[%s172 + $0xec] sm:$0xf] %v790
      %855 = vst [vmem:[%s172 + $0xf0] sm:$0xf] %v791
      %856 = vst [vmem:[%s172 + $0xf4] sm:$0xf] %v792
      %857 = vst [vmem:[%s172 + $0xf8] sm:$0xf] %v793
      %858 = vst [vmem:[%s172 + $0xfc] sm:$0xf] %v794
      %s859 = smul.u32 64, %s14
      %p860 = scmp.lt.s32.totalorder %s859, 255
      %s861 = scalar_select %p860, %s859, 255
      %s862 = smul.addr %s861, 4
      %s863 = scalar_lea.vmem %s3, %s862
      // Predicated region
      $region33: #{lane_detection_cnn_forward.5} parent=31 // pred_check
        %p864 = pneg %p100
      $region34: #{lane_detection_cnn_forward.5} parent=31 // pred_check_branch
        %866 = sbr.rel (%p864) target = $region36
      $region35: #{lane_detection_cnn_forward.5} parent=31 // pred_region
        %s867 = smul.u32 64, %s14
      $region36: #{lane_detection_cnn_forward.5} parent=31 // pred_fallthru
        _
    $region32: #{lane_detection_cnn_forward.5} parent=5 // pred_fallthru
      _
    %p868 = scmp.le.s32.totalorder 2, %s9
    // Predicated region
    $region37: #{lane_detection_cnn_forward.5} parent=5 // pred_check
      %p869 = pneg %p868
    $region38: #{lane_detection_cnn_forward.5} parent=5 // pred_check_branch
      %871 = sbr.rel (%p869) target = $region40
    $region39: #{lane_detection_cnn_forward.5} parent=5 // pred_region
      %s872 = ssub.s32 %s9, 2
      // Predicated region
      $region41: #{lane_detection_cnn_forward.5} parent=39 // pred_check
        %p873 = pneg %p106
      $region42: #{lane_detection_cnn_forward.5} parent=39 // pred_check_branch
        %875 = sbr.rel (%p873) target = $region44
      $region43: #{lane_detection_cnn_forward.5} parent=39 // pred_region
        %s876 = smul.u32 64, %s15
        %p877 = scmp.lt.s32.totalorder %s876, 255
        %s878 = scalar_select %p877, %s876, 255
        %s879 = smul.addr %s878, 4
        %s880 = scalar_lea.vmem %s3, %s879
      $region44: #{lane_detection_cnn_forward.5} parent=39 // pred_fallthru
        _
    $region40: #{lane_detection_cnn_forward.5} parent=5 // pred_fallthru
      _
  $region6: #{lane_detection_cnn_forward.5} parent=0 // loop_footer
    %s13 = sadd.s32 1, %s9
  $region7: #{lane_detection_cnn_forward.5} parent=0 // loop_footer_branch
    %8 = sbr.rel target = $region3
  $region8: #{lane_detection_cnn_forward.5} parent=0 // loop_exit
    _

// kernel: lane_detection_cnn_forward.6
$region0: #{lane_detection_cnn_forward.6}
  #allocation0 [shape = 'u32[]', space=smem, size = 0x4, offset = 0x4, fixed_abs, tag = 'smem constant byte address 0x4 - core index']
  #allocation1 [shape = 'u32[72,128]{1,0:T(1,128)}', space=vmem, size = 0x9000, scoped, tag = 'internal scratch']
  %s0 = inlined_call_operand.vmem [shape: bf16[4,512,512], index: 0, kind: input, shape index: {}]
  %s1 = inlined_call_operand.vmem [shape: bf16[512,128], index: 1, kind: input, shape index: {}]
  %s2 = inlined_call_operand.vmem [shape: f32[1,128], index: 2, kind: input, shape index: {}]
  %s3 = inlined_call_operand.vmem [shape: bf16[512,128], index: 3, kind: output, shape index: {}]
  %s4 = sld [smem:[#allocation0]]
  $region22: #{lane_detection_cnn_forward.6} parent=0
    _
  %s6 = ssub.s32 1, %s4
  %s7 = scalar_select 0, %s6, %s4
  // Predicated region
  $region2: #{lane_detection_cnn_forward.6} parent=0 // pred_check
    _
  $region3: #{lane_detection_cnn_forward.6} parent=0 // pred_check_branch
    %9 = sbr.rel (0) target = $region5
  $region4: #{lane_detection_cnn_forward.6} parent=0 // pred_region
    _
  $region5: #{lane_detection_cnn_forward.6} parent=0 // pred_fallthru
    _
  // Predicated region
  $region6: #{lane_detection_cnn_forward.6} parent=0 // pred_check
    _
  $region7: #{lane_detection_cnn_forward.6} parent=0 // pred_check_branch
    %11 = sbr.rel (0) target = $region9
  $region8: #{lane_detection_cnn_forward.6} parent=0 // pred_region
    _
  $region9: #{lane_detection_cnn_forward.6} parent=0 // pred_fallthru
    _
  // Predicated region
  $region10: #{lane_detection_cnn_forward.6} parent=0 // pred_check
    _
  $region11: #{lane_detection_cnn_forward.6} parent=0 // pred_check_branch
    %13 = sbr.rel (0) target = $region13
  $region12: #{lane_detection_cnn_forward.6} parent=0 // pred_region
    _
  $region13: #{lane_detection_cnn_forward.6} parent=0 // pred_fallthru
    _
  %v14 = vld [vmem:[%s1] sm:$0xf]
  %v15 = vld [vmem:[%s1 + $0x4] sm:$0xf]
  %v16 = vld [vmem:[%s1 + $0x8] sm:$0xf]
  %v17 = vld [vmem:[%s1 + $0xc] sm:$0xf]
  %v18 = vld [vmem:[%s1 + $0x10] sm:$0xf]
  %v19 = vld [vmem:[%s1 + $0x14] sm:$0xf]
  %v20 = vld [vmem:[%s1 + $0x18] sm:$0xf]
  %v21 = vld [vmem:[%s1 + $0x1c] sm:$0xf]
  %v22 = vld [vmem:[%s1 + $0x20] sm:$0xf]
  %v23 = vld [vmem:[%s1 + $0x24] sm:$0xf]
  %v24 = vld [vmem:[%s1 + $0x28] sm:$0xf]
  %v25 = vld [vmem:[%s1 + $0x2c] sm:$0xf]
  %v26 = vld [vmem:[%s1 + $0x30] sm:$0xf]
  %v27 = vld [vmem:[%s1 + $0x34] sm:$0xf]
  %v28 = vld [vmem:[%s1 + $0x38] sm:$0xf]
  %v29 = vld [vmem:[%s1 + $0x3c] sm:$0xf]
  %v30 = vld [vmem:[%s1 + $0x40] sm:$0xf]
  %v31 = vld [vmem:[%s1 + $0x44] sm:$0xf]
  %v32 = vld [vmem:[%s1 + $0x48] sm:$0xf]
  %v33 = vld [vmem:[%s1 + $0x4c] sm:$0xf]
  %v34 = vld [vmem:[%s1 + $0x50] sm:$0xf]
  %v35 = vld [vmem:[%s1 + $0x54] sm:$0xf]
  %v36 = vld [vmem:[%s1 + $0x58] sm:$0xf]
  %v37 = vld [vmem:[%s1 + $0x5c] sm:$0xf]
  %v38 = vld [vmem:[%s1 + $0x60] sm:$0xf]
  %v39 = vld [vmem:[%s1 + $0x64] sm:$0xf]
  %v40 = vld [vmem:[%s1 + $0x68] sm:$0xf]
  %v41 = vld [vmem:[%s1 + $0x6c] sm:$0xf]
  %v42 = vld [vmem:[%s1 + $0x70] sm:$0xf]
  %v43 = vld [vmem:[%s1 + $0x74] sm:$0xf]
  %v44 = vld [vmem:[%s1 + $0x78] sm:$0xf]
  %v45 = vld [vmem:[%s1 + $0x7c] sm:$0xf]
  %v46 = vld [vmem:[%s1 + $0x80] sm:$0xf]
  %v47 = vld [vmem:[%s1 + $0x84] sm:$0xf]
  %v48 = vld [vmem:[%s1 + $0x88] sm:$0xf]
  %v49 = vld [vmem:[%s1 + $0x8c] sm:$0xf]
  %v50 = vld [vmem:[%s1 + $0x90] sm:$0xf]
  %v51 = vld [vmem:[%s1 + $0x94] sm:$0xf]
  %v52 = vld [vmem:[%s1 + $0x98] sm:$0xf]
  %v53 = vld [vmem:[%s1 + $0x9c] sm:$0xf]
  %v54 = vld [vmem:[%s1 + $0xa0] sm:$0xf]
  %v55 = vld [vmem:[%s1 + $0xa4] sm:$0xf]
  %v56 = vld [vmem:[%s1 + $0xa8] sm:$0xf]
  %v57 = vld [vmem:[%s1 + $0xac] sm:$0xf]
  %v58 = vld [vmem:[%s1 + $0xb0] sm:$0xf]
  %v59 = vld [vmem:[%s1 + $0xb4] sm:$0xf]
  %v60 = vld [vmem:[%s1 + $0xb8] sm:$0xf]
  %v61 = vld [vmem:[%s1 + $0xbc] sm:$0xf]
  %v62 = vld [vmem:[%s1 + $0xc0] sm:$0xf]
  %v63 = vld [vmem:[%s1 + $0xc4] sm:$0xf]
  %v64 = vld [vmem:[%s1 + $0xc8] sm:$0xf]
  %v65 = vld [vmem:[%s1 + $0xcc] sm:$0xf]
  %v66 = vld [vmem:[%s1 + $0xd0] sm:$0xf]
  %v67 = vld [vmem:[%s1 + $0xd4] sm:$0xf]
  %v68 = vld [vmem:[%s1 + $0xd8] sm:$0xf]
  %v69 = vld [vmem:[%s1 + $0xdc] sm:$0xf]
  %v70 = vld [vmem:[%s1 + $0xe0] sm:$0xf]
  %v71 = vld [vmem:[%s1 + $0xe4] sm:$0xf]
  %v72 = vld [vmem:[%s1 + $0xe8] sm:$0xf]
  %v73 = vld [vmem:[%s1 + $0xec] sm:$0xf]
  %v74 = vld [vmem:[%s1 + $0xf0] sm:$0xf]
  %v75 = vld [vmem:[%s1 + $0xf4] sm:$0xf]
  %v76 = vld [vmem:[%s1 + $0xf8] sm:$0xf]
  %v77 = vld [vmem:[%s1 + $0xfc] sm:$0xf]
  %v78 = vld [vmem:[%s0] sm:$0xff]
  %v79 = vld [vmem:[%s0 + $0x8] sm:$0xff]
  %v80 = vld [vmem:[%s0 + $0x10] sm:$0xff]
  %v81 = vld [vmem:[%s0 + $0x18] sm:$0xff]
  %v82 = vld [vmem:[%s0 + $0x20] sm:$0xff]
  %v83 = vld [vmem:[%s0 + $0x28] sm:$0xff]
  %v84 = vld [vmem:[%s0 + $0x30] sm:$0xff]
  %v85 = vld [vmem:[%s0 + $0x38] sm:$0xff]
  %v86 = vld [vmem:[%s0 + $0x40] sm:$0xff]
  %v87 = vld [vmem:[%s0 + $0x48] sm:$0xff]
  %v88 = vld [vmem:[%s0 + $0x50] sm:$0xff]
  %v89 = vld [vmem:[%s0 + $0x58] sm:$0xff]
  %v90 = vld [vmem:[%s0 + $0x60] sm:$0xff]
  %v91 = vld [vmem:[%s0 + $0x68] sm:$0xff]
  %v92 = vld [vmem:[%s0 + $0x70] sm:$0xff]
  %v93 = vld [vmem:[%s0 + $0x78] sm:$0xff]
  %v94 = vld [vmem:[%s0 + $0x80] sm:$0xff]
  %v95 = vld [vmem:[%s0 + $0x88] sm:$0xff]
  %v96 = vld [vmem:[%s0 + $0x90] sm:$0xff]
  %v97 = vld [vmem:[%s0 + $0x98] sm:$0xff]
  %v98 = vld [vmem:[%s0 + $0xa0] sm:$0xff]
  %v99 = vld [vmem:[%s0 + $0xa8] sm:$0xff]
  %v100 = vld [vmem:[%s0 + $0xb0] sm:$0xff]
  %v101 = vld [vmem:[%s0 + $0xb8] sm:$0xff]
  %v102 = vld [vmem:[%s0 + $0xc0] sm:$0xff]
  %v103 = vld [vmem:[%s0 + $0xc8] sm:$0xff]
  %v104 = vld [vmem:[%s0 + $0xd0] sm:$0xff]
  %v105 = vld [vmem:[%s0 + $0xd8] sm:$0xff]
  %v106 = vld [vmem:[%s0 + $0xe0] sm:$0xff]
  %v107 = vld [vmem:[%s0 + $0xe8] sm:$0xff]
  %v108 = vld [vmem:[%s0 + $0xf0] sm:$0xff]
  %v109 = vld [vmem:[%s0 + $0xf8] sm:$0xff]
  %v110 = vld [vmem:[%s0 + $0x100] sm:$0xff]
  %v111 = vld [vmem:[%s0 + $0x108] sm:$0xff]
  %v112 = vld [vmem:[%s0 + $0x110] sm:$0xff]
  %v113 = vld [vmem:[%s0 + $0x118] sm:$0xff]
  %v114 = vld [vmem:[%s0 + $0x120] sm:$0xff]
  %v115 = vld [vmem:[%s0 + $0x128] sm:$0xff]
  %v116 = vld [vmem:[%s0 + $0x130] sm:$0xff]
  %v117 = vld [vmem:[%s0 + $0x138] sm:$0xff]
  %v118 = vld [vmem:[%s0 + $0x140] sm:$0xff]
  %v119 = vld [vmem:[%s0 + $0x148] sm:$0xff]
  %v120 = vld [vmem:[%s0 + $0x150] sm:$0xff]
  %v121 = vld [vmem:[%s0 + $0x158] sm:$0xff]
  %v122 = vld [vmem:[%s0 + $0x160] sm:$0xff]
  %v123 = vld [vmem:[%s0 + $0x168] sm:$0xff]
  %v124 = vld [vmem:[%s0 + $0x170] sm:$0xff]
  %v125 = vld [vmem:[%s0 + $0x178] sm:$0xff]
  %v126 = vld [vmem:[%s0 + $0x180] sm:$0xff]
  %v127 = vld [vmem:[%s0 + $0x188] sm:$0xff]
  %v128 = vld [vmem:[%s0 + $0x190] sm:$0xff]
  %v129 = vld [vmem:[%s0 + $0x198] sm:$0xff]
  %v130 = vld [vmem:[%s0 + $0x1a0] sm:$0xff]
  %v131 = vld [vmem:[%s0 + $0x1a8] sm:$0xff]
  %v132 = vld [vmem:[%s0 + $0x1b0] sm:$0xff]
  %v133 = vld [vmem:[%s0 + $0x1b8] sm:$0xff]
  %v134 = vld [vmem:[%s0 + $0x1c0] sm:$0xff]
  %v135 = vld [vmem:[%s0 + $0x1c8] sm:$0xff]
  %v136 = vld [vmem:[%s0 + $0x1d0] sm:$0xff]
  %v137 = vld [vmem:[%s0 + $0x1d8] sm:$0xff]
  %v138 = vld [vmem:[%s0 + $0x1e0] sm:$0xff]
  %v139 = vld [vmem:[%s0 + $0x1e8] sm:$0xff]
  %v140 = vld [vmem:[%s0 + $0x1f0] sm:$0xff]
  %v141 = vld [vmem:[%s0 + $0x1f8] sm:$0xff]
  %v142 = vld [vmem:[%s0 + $0x200] sm:$0xff]
  %v143 = vld [vmem:[%s0 + $0x208] sm:$0xff]
  %v144 = vld [vmem:[%s0 + $0x210] sm:$0xff]
  %v145 = vld [vmem:[%s0 + $0x218] sm:$0xff]
  %v146 = vld [vmem:[%s0 + $0x220] sm:$0xff]
  %v147 = vld [vmem:[%s0 + $0x228] sm:$0xff]
  %v148 = vld [vmem:[%s0 + $0x230] sm:$0xff]
  %v149 = vld [vmem:[%s0 + $0x238] sm:$0xff]
  %v150 = vld [vmem:[%s0 + $0x240] sm:$0xff]
  %v151 = vld [vmem:[%s0 + $0x248] sm:$0xff]
  %v152 = vld [vmem:[%s0 + $0x250] sm:$0xff]
  %v153 = vld [vmem:[%s0 + $0x258] sm:$0xff]
  %v154 = vld [vmem:[%s0 + $0x260] sm:$0xff]
  %v155 = vld [vmem:[%s0 + $0x268] sm:$0xff]
  %v156 = vld [vmem:[%s0 + $0x270] sm:$0xff]
  %v157 = vld [vmem:[%s0 + $0x278] sm:$0xff]
  %v158 = vld [vmem:[%s0 + $0x280] sm:$0xff]
  %v159 = vld [vmem:[%s0 + $0x288] sm:$0xff]
  %v160 = vld [vmem:[%s0 + $0x290] sm:$0xff]
  %v161 = vld [vmem:[%s0 + $0x298] sm:$0xff]
  %v162 = vld [vmem:[%s0 + $0x2a0] sm:$0xff]
  %v163 = vld [vmem:[%s0 + $0x2a8] sm:$0xff]
  %v164 = vld [vmem:[%s0 + $0x2b0] sm:$0xff]
  %v165 = vld [vmem:[%s0 + $0x2b8] sm:$0xff]
  %v166 = vld [vmem:[%s0 + $0x2c0] sm:$0xff]
  %v167 = vld [vmem:[%s0 + $0x2c8] sm:$0xff]
  %v168 = vld [vmem:[%s0 + $0x2d0] sm:$0xff]
  %v169 = vld [vmem:[%s0 + $0x2d8] sm:$0xff]
  %v170 = vld [vmem:[%s0 + $0x2e0] sm:$0xff]
  %v171 = vld [vmem:[%s0 + $0x2e8] sm:$0xff]
  %v172 = vld [vmem:[%s0 + $0x2f0] sm:$0xff]
  %v173 = vld [vmem:[%s0 + $0x2f8] sm:$0xff]
  %v174 = vld [vmem:[%s0 + $0x300] sm:$0xff]
  %v175 = vld [vmem:[%s0 + $0x308] sm:$0xff]
  %v176 = vld [vmem:[%s0 + $0x310] sm:$0xff]
  %v177 = vld [vmem:[%s0 + $0x318] sm:$0xff]
  %v178 = vld [vmem:[%s0 + $0x320] sm:$0xff]
  %v179 = vld [vmem:[%s0 + $0x328] sm:$0xff]
  %v180 = vld [vmem:[%s0 + $0x330] sm:$0xff]
  %v181 = vld [vmem:[%s0 + $0x338] sm:$0xff]
  %v182 = vld [vmem:[%s0 + $0x340] sm:$0xff]
  %v183 = vld [vmem:[%s0 + $0x348] sm:$0xff]
  %v184 = vld [vmem:[%s0 + $0x350] sm:$0xff]
  %v185 = vld [vmem:[%s0 + $0x358] sm:$0xff]
  %v186 = vld [vmem:[%s0 + $0x360] sm:$0xff]
  %v187 = vld [vmem:[%s0 + $0x368] sm:$0xff]
  %v188 = vld [vmem:[%s0 + $0x370] sm:$0xff]
  %v189 = vld [vmem:[%s0 + $0x378] sm:$0xff]
  %v190 = vld [vmem:[%s0 + $0x380] sm:$0xff]
  %v191 = vld [vmem:[%s0 + $0x388] sm:$0xff]
  %v192 = vld [vmem:[%s0 + $0x390] sm:$0xff]
  %v193 = vld [vmem:[%s0 + $0x398] sm:$0xff]
  %v194 = vld [vmem:[%s0 + $0x3a0] sm:$0xff]
  %v195 = vld [vmem:[%s0 + $0x3a8] sm:$0xff]
  %v196 = vld [vmem:[%s0 + $0x3b0] sm:$0xff]
  %v197 = vld [vmem:[%s0 + $0x3b8] sm:$0xff]
  %v198 = vld [vmem:[%s0 + $0x3c0] sm:$0xff]
  %v199 = vld [vmem:[%s0 + $0x3c8] sm:$0xff]
  %v200 = vld [vmem:[%s0 + $0x3d0] sm:$0xff]
  %v201 = vld [vmem:[%s0 + $0x3d8] sm:$0xff]
  %v202 = vld [vmem:[%s0 + $0x3e0] sm:$0xff]
  %v203 = vld [vmem:[%s0 + $0x3e8] sm:$0xff]
  %v204 = vld [vmem:[%s0 + $0x3f0] sm:$0xff]
  %v205 = vld [vmem:[%s0 + $0x3f8] sm:$0xff]
  %v334 = vunpack.c.l.b16 %v78
  %v335 = vunpack.c.h.b16 %v78
  %v336 = vunpack.c.l.b16 %v79
  %v337 = vunpack.c.h.b16 %v79
  %v338 = vunpack.c.l.b16 %v80
  %v339 = vunpack.c.h.b16 %v80
  %v340 = vunpack.c.l.b16 %v81
  %v341 = vunpack.c.h.b16 %v81
  %v342 = vunpack.c.l.b16 %v82
  %v343 = vunpack.c.h.b16 %v82
  %v344 = vunpack.c.l.b16 %v83
  %v345 = vunpack.c.h.b16 %v83
  %v346 = vunpack.c.l.b16 %v84
  %v347 = vunpack.c.h.b16 %v84
  %v348 = vunpack.c.l.b16 %v85
  %v349 = vunpack.c.h.b16 %v85
  %v350 = vunpack.c.l.b16 %v86
  %v351 = vunpack.c.h.b16 %v86
  %v352 = vunpack.c.l.b16 %v87
  %v353 = vunpack.c.h.b16 %v87
  %v354 = vunpack.c.l.b16 %v88
  %v355 = vunpack.c.h.b16 %v88
  %v356 = vunpack.c.l.b16 %v89
  %v357 = vunpack.c.h.b16 %v89
  %v358 = vunpack.c.l.b16 %v90
  %v359 = vunpack.c.h.b16 %v90
  %v360 = vunpack.c.l.b16 %v91
  %v361 = vunpack.c.h.b16 %v91
  %v362 = vunpack.c.l.b16 %v92
  %v363 = vunpack.c.h.b16 %v92
  %v364 = vunpack.c.l.b16 %v93
  %v365 = vunpack.c.h.b16 %v93
  %v366 = vunpack.c.l.b16 %v94
  %v367 = vunpack.c.h.b16 %v94
  %v368 = vunpack.c.l.b16 %v95
  %v369 = vunpack.c.h.b16 %v95
  %v370 = vunpack.c.l.b16 %v96
  %v371 = vunpack.c.h.b16 %v96
  %v372 = vunpack.c.l.b16 %v97
  %v373 = vunpack.c.h.b16 %v97
  %v374 = vunpack.c.l.b16 %v98
  %v375 = vunpack.c.h.b16 %v98
  %v376 = vunpack.c.l.b16 %v99
  %v377 = vunpack.c.h.b16 %v99
  %v378 = vunpack.c.l.b16 %v100
  %v379 = vunpack.c.h.b16 %v100
  %v380 = vunpack.c.l.b16 %v101
  %v381 = vunpack.c.h.b16 %v101
  %v382 = vunpack.c.l.b16 %v102
  %v383 = vunpack.c.h.b16 %v102
  %v384 = vunpack.c.l.b16 %v103
  %v385 = vunpack.c.h.b16 %v103
  %v386 = vunpack.c.l.b16 %v104
  %v387 = vunpack.c.h.b16 %v104
  %v388 = vunpack.c.l.b16 %v105
  %v389 = vunpack.c.h.b16 %v105
  %v390 = vunpack.c.l.b16 %v106
  %v391 = vunpack.c.h.b16 %v106
  %v392 = vunpack.c.l.b16 %v107
  %v393 = vunpack.c.h.b16 %v107
  %v394 = vunpack.c.l.b16 %v108
  %v395 = vunpack.c.h.b16 %v108
  %v396 = vunpack.c.l.b16 %v109
  %v397 = vunpack.c.h.b16 %v109
  %v398 = vunpack.c.l.b16 %v110
  %v399 = vunpack.c.h.b16 %v110
  %v400 = vunpack.c.l.b16 %v111
  %v401 = vunpack.c.h.b16 %v111
  %v402 = vunpack.c.l.b16 %v112
  %v403 = vunpack.c.h.b16 %v112
  %v404 = vunpack.c.l.b16 %v113
  %v405 = vunpack.c.h.b16 %v113
  %v406 = vunpack.c.l.b16 %v114
  %v407 = vunpack.c.h.b16 %v114
  %v408 = vunpack.c.l.b16 %v115
  %v409 = vunpack.c.h.b16 %v115
  %v410 = vunpack.c.l.b16 %v116
  %v411 = vunpack.c.h.b16 %v116
  %v412 = vunpack.c.l.b16 %v117
  %v413 = vunpack.c.h.b16 %v117
  %v414 = vunpack.c.l.b16 %v118
  %v415 = vunpack.c.h.b16 %v118
  %v416 = vunpack.c.l.b16 %v119
  %v417 = vunpack.c.h.b16 %v119
  %v418 = vunpack.c.l.b16 %v120
  %v419 = vunpack.c.h.b16 %v120
  %v420 = vunpack.c.l.b16 %v121
  %v421 = vunpack.c.h.b16 %v121
  %v422 = vunpack.c.l.b16 %v122
  %v423 = vunpack.c.h.b16 %v122
  %v424 = vunpack.c.l.b16 %v123
  %v425 = vunpack.c.h.b16 %v123
  %v426 = vunpack.c.l.b16 %v124
  %v427 = vunpack.c.h.b16 %v124
  %v428 = vunpack.c.l.b16 %v125
  %v429 = vunpack.c.h.b16 %v125
  %v430 = vunpack.c.l.b16 %v126
  %v431 = vunpack.c.h.b16 %v126
  %v432 = vunpack.c.l.b16 %v127
  %v433 = vunpack.c.h.b16 %v127
  %v434 = vunpack.c.l.b16 %v128
  %v435 = vunpack.c.h.b16 %v128
  %v436 = vunpack.c.l.b16 %v129
  %v437 = vunpack.c.h.b16 %v129
  %v438 = vunpack.c.l.b16 %v130
  %v439 = vunpack.c.h.b16 %v130
  %v440 = vunpack.c.l.b16 %v131
  %v441 = vunpack.c.h.b16 %v131
  %v442 = vunpack.c.l.b16 %v132
  %v443 = vunpack.c.h.b16 %v132
  %v444 = vunpack.c.l.b16 %v133
  %v445 = vunpack.c.h.b16 %v133
  %v446 = vunpack.c.l.b16 %v134
  %v447 = vunpack.c.h.b16 %v134
  %v448 = vunpack.c.l.b16 %v135
  %v449 = vunpack.c.h.b16 %v135
  %v450 = vunpack.c.l.b16 %v136
  %v451 = vunpack.c.h.b16 %v136
  %v452 = vunpack.c.l.b16 %v137
  %v453 = vunpack.c.h.b16 %v137
  %v454 = vunpack.c.l.b16 %v138
  %v455 = vunpack.c.h.b16 %v138
  %v456 = vunpack.c.l.b16 %v139
  %v457 = vunpack.c.h.b16 %v139
  %v458 = vunpack.c.l.b16 %v140
  %v459 = vunpack.c.h.b16 %v140
  %v460 = vunpack.c.l.b16 %v141
  %v461 = vunpack.c.h.b16 %v141
  %v462 = vunpack.c.l.b16 %v142
  %v463 = vunpack.c.h.b16 %v142
  %v464 = vunpack.c.l.b16 %v143
  %v465 = vunpack.c.h.b16 %v143
  %v466 = vunpack.c.l.b16 %v144
  %v467 = vunpack.c.h.b16 %v144
  %v468 = vunpack.c.l.b16 %v145
  %v469 = vunpack.c.h.b16 %v145
  %v470 = vunpack.c.l.b16 %v146
  %v471 = vunpack.c.h.b16 %v146
  %v472 = vunpack.c.l.b16 %v147
  %v473 = vunpack.c.h.b16 %v147
  %v474 = vunpack.c.l.b16 %v148
  %v475 = vunpack.c.h.b16 %v148
  %v476 = vunpack.c.l.b16 %v149
  %v477 = vunpack.c.h.b16 %v149
  %v478 = vunpack.c.l.b16 %v150
  %v479 = vunpack.c.h.b16 %v150
  %v480 = vunpack.c.l.b16 %v151
  %v481 = vunpack.c.h.b16 %v151
  %v482 = vunpack.c.l.b16 %v152
  %v483 = vunpack.c.h.b16 %v152
  %v484 = vunpack.c.l.b16 %v153
  %v485 = vunpack.c.h.b16 %v153
  %v486 = vunpack.c.l.b16 %v154
  %v487 = vunpack.c.h.b16 %v154
  %v488 = vunpack.c.l.b16 %v155
  %v489 = vunpack.c.h.b16 %v155
  %v490 = vunpack.c.l.b16 %v156
  %v491 = vunpack.c.h.b16 %v156
  %v492 = vunpack.c.l.b16 %v157
  %v493 = vunpack.c.h.b16 %v157
  %v494 = vunpack.c.l.b16 %v158
  %v495 = vunpack.c.h.b16 %v158
  %v496 = vunpack.c.l.b16 %v159
  %v497 = vunpack.c.h.b16 %v159
  %v498 = vunpack.c.l.b16 %v160
  %v499 = vunpack.c.h.b16 %v160
  %v500 = vunpack.c.l.b16 %v161
  %v501 = vunpack.c.h.b16 %v161
  %v502 = vunpack.c.l.b16 %v162
  %v503 = vunpack.c.h.b16 %v162
  %v504 = vunpack.c.l.b16 %v163
  %v505 = vunpack.c.h.b16 %v163
  %v506 = vunpack.c.l.b16 %v164
  %v507 = vunpack.c.h.b16 %v164
  %v508 = vunpack.c.l.b16 %v165
  %v509 = vunpack.c.h.b16 %v165
  %v510 = vunpack.c.l.b16 %v166
  %v511 = vunpack.c.h.b16 %v166
  %v512 = vunpack.c.l.b16 %v167
  %v513 = vunpack.c.h.b16 %v167
  %v514 = vunpack.c.l.b16 %v168
  %v515 = vunpack.c.h.b16 %v168
  %v516 = vunpack.c.l.b16 %v169
  %v517 = vunpack.c.h.b16 %v169
  %v518 = vunpack.c.l.b16 %v170
  %v519 = vunpack.c.h.b16 %v170
  %v520 = vunpack.c.l.b16 %v171
  %v521 = vunpack.c.h.b16 %v171
  %v522 = vunpack.c.l.b16 %v172
  %v523 = vunpack.c.h.b16 %v172
  %v524 = vunpack.c.l.b16 %v173
  %v525 = vunpack.c.h.b16 %v173
  %v526 = vunpack.c.l.b16 %v174
  %v527 = vunpack.c.h.b16 %v174
  %v528 = vunpack.c.l.b16 %v175
  %v529 = vunpack.c.h.b16 %v175
  %v530 = vunpack.c.l.b16 %v176
  %v531 = vunpack.c.h.b16 %v176
  %v532 = vunpack.c.l.b16 %v177
  %v533 = vunpack.c.h.b16 %v177
  %v534 = vunpack.c.l.b16 %v178
  %v535 = vunpack.c.h.b16 %v178
  %v536 = vunpack.c.l.b16 %v179
  %v537 = vunpack.c.h.b16 %v179
  %v538 = vunpack.c.l.b16 %v180
  %v539 = vunpack.c.h.b16 %v180
  %v540 = vunpack.c.l.b16 %v181
  %v541 = vunpack.c.h.b16 %v181
  %v542 = vunpack.c.l.b16 %v182
  %v543 = vunpack.c.h.b16 %v182
  %v544 = vunpack.c.l.b16 %v183
  %v545 = vunpack.c.h.b16 %v183
  %v546 = vunpack.c.l.b16 %v184
  %v547 = vunpack.c.h.b16 %v184
  %v548 = vunpack.c.l.b16 %v185
  %v549 = vunpack.c.h.b16 %v185
  %v550 = vunpack.c.l.b16 %v186
  %v551 = vunpack.c.h.b16 %v186
  %v552 = vunpack.c.l.b16 %v187
  %v553 = vunpack.c.h.b16 %v187
  %v554 = vunpack.c.l.b16 %v188
  %v555 = vunpack.c.h.b16 %v188
  %v556 = vunpack.c.l.b16 %v189
  %v557 = vunpack.c.h.b16 %v189
  %v558 = vunpack.c.l.b16 %v190
  %v559 = vunpack.c.h.b16 %v190
  %v560 = vunpack.c.l.b16 %v191
  %v561 = vunpack.c.h.b16 %v191
  %v562 = vunpack.c.l.b16 %v192
  %v563 = vunpack.c.h.b16 %v192
  %v564 = vunpack.c.l.b16 %v193
  %v565 = vunpack.c.h.b16 %v193
  %v566 = vunpack.c.l.b16 %v194
  %v567 = vunpack.c.h.b16 %v194
  %v568 = vunpack.c.l.b16 %v195
  %v569 = vunpack.c.h.b16 %v195
  %v570 = vunpack.c.l.b16 %v196
  %v571 = vunpack.c.h.b16 %v196
  %v572 = vunpack.c.l.b16 %v197
  %v573 = vunpack.c.h.b16 %v197
  %v574 = vunpack.c.l.b16 %v198
  %v575 = vunpack.c.h.b16 %v198
  %v576 = vunpack.c.l.b16 %v199
  %v577 = vunpack.c.h.b16 %v199
  %v578 = vunpack.c.l.b16 %v200
  %v579 = vunpack.c.h.b16 %v200
  %v580 = vunpack.c.l.b16 %v201
  %v581 = vunpack.c.h.b16 %v201
  %v582 = vunpack.c.l.b16 %v202
  %v583 = vunpack.c.h.b16 %v202
  %v584 = vunpack.c.l.b16 %v203
  %v585 = vunpack.c.h.b16 %v203
  %v586 = vunpack.c.l.b16 %v204
  %v587 = vunpack.c.h.b16 %v204
  %v588 = vunpack.c.l.b16 %v205
  %v589 = vunpack.c.h.b16 %v205
  %v590 = vpack.c.b16 %v338, %v334
  %v591 = vpack.c.b16 %v339, %v335
  %v592 = vpack.c.b16 %v340, %v336
  %v593 = vpack.c.b16 %v341, %v337
  %v594 = vpack.c.b16 %v346, %v342
  %v595 = vpack.c.b16 %v347, %v343
  %v596 = vpack.c.b16 %v348, %v344
  %v597 = vpack.c.b16 %v349, %v345
  %v598 = vpack.c.b16 %v354, %v350
  %v599 = vpack.c.b16 %v355, %v351
  %v600 = vpack.c.b16 %v356, %v352
  %v601 = vpack.c.b16 %v357, %v353
  %v602 = vpack.c.b16 %v362, %v358
  %v603 = vpack.c.b16 %v363, %v359
  %v604 = vpack.c.b16 %v364, %v360
  %v605 = vpack.c.b16 %v365, %v361
  %v606 = vpack.c.b16 %v370, %v366
  %v607 = vpack.c.b16 %v371, %v367
  %v608 = vpack.c.b16 %v372, %v368
  %v609 = vpack.c.b16 %v373, %v369
  %v610 = vpack.c.b16 %v378, %v374
  %v611 = vpack.c.b16 %v379, %v375
  %v612 = vpack.c.b16 %v380, %v376
  %v613 = vpack.c.b16 %v381, %v377
  %v614 = vpack.c.b16 %v386, %v382
  %v615 = vpack.c.b16 %v387, %v383
  %v616 = vpack.c.b16 %v388, %v384
  %v617 = vpack.c.b16 %v389, %v385
  %v618 = vpack.c.b16 %v394, %v390
  %v619 = vpack.c.b16 %v395, %v391
  %v620 = vpack.c.b16 %v396, %v392
  %v621 = vpack.c.b16 %v397, %v393
  %v622 = vpack.c.b16 %v402, %v398
  %v623 = vpack.c.b16 %v403, %v399
  %v624 = vpack.c.b16 %v404, %v400
  %v625 = vpack.c.b16 %v405, %v401
  %v626 = vpack.c.b16 %v410, %v406
  %v627 = vpack.c.b16 %v411, %v407
  %v628 = vpack.c.b16 %v412, %v408
  %v629 = vpack.c.b16 %v413, %v409
  %v630 = vpack.c.b16 %v418, %v414
  %v631 = vpack.c.b16 %v419, %v415
  %v632 = vpack.c.b16 %v420, %v416
  %v633 = vpack.c.b16 %v421, %v417
  %v634 = vpack.c.b16 %v426, %v422
  %v635 = vpack.c.b16 %v427, %v423
  %v636 = vpack.c.b16 %v428, %v424
  %v637 = vpack.c.b16 %v429, %v425
  %v638 = vpack.c.b16 %v434, %v430
  %v639 = vpack.c.b16 %v435, %v431
  %v640 = vpack.c.b16 %v436, %v432
  %v641 = vpack.c.b16 %v437, %v433
  %v642 = vpack.c.b16 %v442, %v438
  %v643 = vpack.c.b16 %v443, %v439
  %v644 = vpack.c.b16 %v444, %v440
  %v645 = vpack.c.b16 %v445, %v441
  %v646 = vpack.c.b16 %v450, %v446
  %v647 = vpack.c.b16 %v451, %v447
  %v648 = vpack.c.b16 %v452, %v448
  %v649 = vpack.c.b16 %v453, %v449
  %v650 = vpack.c.b16 %v458, %v454
  %v651 = vpack.c.b16 %v459, %v455
  %v652 = vpack.c.b16 %v460, %v456
  %v653 = vpack.c.b16 %v461, %v457
  %v654 = vpack.c.b16 %v466, %v462
  %v655 = vpack.c.b16 %v467, %v463
  %v656 = vpack.c.b16 %v468, %v464
  %v657 = vpack.c.b16 %v469, %v465
  %v658 = vpack.c.b16 %v474, %v470
  %v659 = vpack.c.b16 %v475, %v471
  %v660 = vpack.c.b16 %v476, %v472
  %v661 = vpack.c.b16 %v477, %v473
  %v662 = vpack.c.b16 %v482, %v478
  %v663 = vpack.c.b16 %v483, %v479
  %v664 = vpack.c.b16 %v484, %v480
  %v665 = vpack.c.b16 %v485, %v481
  %v666 = vpack.c.b16 %v490, %v486
  %v667 = vpack.c.b16 %v491, %v487
  %v668 = vpack.c.b16 %v492, %v488
  %v669 = vpack.c.b16 %v493, %v489
  %v670 = vpack.c.b16 %v498, %v494
  %v671 = vpack.c.b16 %v499, %v495
  %v672 = vpack.c.b16 %v500, %v496
  %v673 = vpack.c.b16 %v501, %v497
  %v674 = vpack.c.b16 %v506, %v502
  %v675 = vpack.c.b16 %v507, %v503
  %v676 = vpack.c.b16 %v508, %v504
  %v677 = vpack.c.b16 %v509, %v505
  %v678 = vpack.c.b16 %v514, %v510
  %v679 = vpack.c.b16 %v515, %v511
  %v680 = vpack.c.b16 %v516, %v512
  %v681 = vpack.c.b16 %v517, %v513
  %v682 = vpack.c.b16 %v522, %v518
  %v683 = vpack.c.b16 %v523, %v519
  %v684 = vpack.c.b16 %v524, %v520
  %v685 = vpack.c.b16 %v525, %v521
  %v686 = vpack.c.b16 %v530, %v526
  %v687 = vpack.c.b16 %v531, %v527
  %v688 = vpack.c.b16 %v532, %v528
  %v689 = vpack.c.b16 %v533, %v529
  %v690 = vpack.c.b16 %v538, %v534
  %v691 = vpack.c.b16 %v539, %v535
  %v692 = vpack.c.b16 %v540, %v536
  %v693 = vpack.c.b16 %v541, %v537
  %v694 = vpack.c.b16 %v546, %v542
  %v695 = vpack.c.b16 %v547, %v543
  %v696 = vpack.c.b16 %v548, %v544
  %v697 = vpack.c.b16 %v549, %v545
  %v698 = vpack.c.b16 %v554, %v550
  %v699 = vpack.c.b16 %v555, %v551
  %v700 = vpack.c.b16 %v556, %v552
  %v701 = vpack.c.b16 %v557, %v553
  %v702 = vpack.c.b16 %v562, %v558
  %v703 = vpack.c.b16 %v563, %v559
  %v704 = vpack.c.b16 %v564, %v560
  %v705 = vpack.c.b16 %v565, %v561
  %v706 = vpack.c.b16 %v570, %v566
  %v707 = vpack.c.b16 %v571, %v567
  %v708 = vpack.c.b16 %v572, %v568
  %v709 = vpack.c.b16 %v573, %v569
  %v710 = vpack.c.b16 %v578, %v574
  %v711 = vpack.c.b16 %v579, %v575
  %v712 = vpack.c.b16 %v580, %v576
  %v713 = vpack.c.b16 %v581, %v577
  %v714 = vpack.c.b16 %v586, %v582
  %v715 = vpack.c.b16 %v587, %v583
  %v716 = vpack.c.b16 %v588, %v584
  %v717 = vpack.c.b16 %v589, %v585
  %v910 = vunpack.c.l.b16 %v14
  %v911 = vunpack.c.l.b16 %v15
  %v912 = vunpack.c.l.b16 %v16
  %v913 = vunpack.c.l.b16 %v17
  %v914 = vunpack.c.l.b16 %v18
  %v915 = vunpack.c.l.b16 %v19
  %v916 = vunpack.c.l.b16 %v20
  %v917 = vunpack.c.l.b16 %v21
  %v918 = vunpack.c.l.b16 %v22
  %v919 = vunpack.c.l.b16 %v23
  %v920 = vunpack.c.l.b16 %v24
  %v921 = vunpack.c.l.b16 %v25
  %v922 = vunpack.c.l.b16 %v26
  %v923 = vunpack.c.l.b16 %v27
  %v924 = vunpack.c.l.b16 %v28
  %v925 = vunpack.c.l.b16 %v29
  %v926 = vunpack.c.l.b16 %v30
  %v927 = vunpack.c.l.b16 %v31
  %v928 = vunpack.c.l.b16 %v32
  %v929 = vunpack.c.l.b16 %v33
  %v930 = vunpack.c.l.b16 %v34
  %v931 = vunpack.c.l.b16 %v35
  %v932 = vunpack.c.l.b16 %v36
  %v933 = vunpack.c.l.b16 %v37
  %v934 = vunpack.c.l.b16 %v38
  %v935 = vunpack.c.l.b16 %v39
  %v936 = vunpack.c.l.b16 %v40
  %v937 = vunpack.c.l.b16 %v41
  %v938 = vunpack.c.l.b16 %v42
  %v939 = vunpack.c.l.b16 %v43
  %v940 = vunpack.c.l.b16 %v44
  %v941 = vunpack.c.l.b16 %v45
  %v942 = vunpack.c.l.b16 %v46
  %v943 = vunpack.c.l.b16 %v47
  %v944 = vunpack.c.l.b16 %v48
  %v945 = vunpack.c.l.b16 %v49
  %v946 = vunpack.c.l.b16 %v50
  %v947 = vunpack.c.l.b16 %v51
  %v948 = vunpack.c.l.b16 %v52
  %v949 = vunpack.c.l.b16 %v53
  %v950 = vunpack.c.l.b16 %v54
  %v951 = vunpack.c.l.b16 %v55
  %v952 = vunpack.c.l.b16 %v56
  %v953 = vunpack.c.l.b16 %v57
  %v954 = vunpack.c.l.b16 %v58
  %v955 = vunpack.c.l.b16 %v59
  %v956 = vunpack.c.l.b16 %v60
  %v957 = vunpack.c.l.b16 %v61
  %v958 = vunpack.c.l.b16 %v62
  %v959 = vunpack.c.l.b16 %v63
  %v960 = vunpack.c.l.b16 %v64
  %v961 = vunpack.c.l.b16 %v65
  %v962 = vunpack.c.l.b16 %v66
  %v963 = vunpack.c.l.b16 %v67
  %v964 = vunpack.c.l.b16 %v68
  %v965 = vunpack.c.l.b16 %v69
  %v966 = vunpack.c.l.b16 %v70
  %v967 = vunpack.c.l.b16 %v71
  %v968 = vunpack.c.l.b16 %v72
  %v969 = vunpack.c.l.b16 %v73
  %v970 = vunpack.c.l.b16 %v74
  %v971 = vunpack.c.l.b16 %v75
  %v972 = vunpack.c.l.b16 %v76
  %v973 = vunpack.c.l.b16 %v77
  %v974 = vpack.c.b16 %v911, %v910
  %v975 = vpack.c.b16 %v913, %v912
  %v976 = vpack.c.b16 %v915, %v914
  %v977 = vpack.c.b16 %v917, %v916
  %v978 = vpack.c.b16 %v919, %v918
  %v979 = vpack.c.b16 %v921, %v920
  %v980 = vpack.c.b16 %v923, %v922
  %v981 = vpack.c.b16 %v925, %v924
  %v982 = vpack.c.b16 %v927, %v926
  %v983 = vpack.c.b16 %v929, %v928
  %v984 = vpack.c.b16 %v931, %v930
  %v985 = vpack.c.b16 %v933, %v932
  %v986 = vpack.c.b16 %v935, %v934
  %v987 = vpack.c.b16 %v937, %v936
  %v988 = vpack.c.b16 %v939, %v938
  %v989 = vpack.c.b16 %v941, %v940
  %v990 = vpack.c.b16 %v943, %v942
  %v991 = vpack.c.b16 %v945, %v944
  %v992 = vpack.c.b16 %v947, %v946
  %v993 = vpack.c.b16 %v949, %v948
  %v994 = vpack.c.b16 %v951, %v950
  %v995 = vpack.c.b16 %v953, %v952
  %v996 = vpack.c.b16 %v955, %v954
  %v997 = vpack.c.b16 %v957, %v956
  %v998 = vpack.c.b16 %v959, %v958
  %v999 = vpack.c.b16 %v961, %v960
  %v1000 = vpack.c.b16 %v963, %v962
  %v1001 = vpack.c.b16 %v965, %v964
  %v1002 = vpack.c.b16 %v967, %v966
  %v1003 = vpack.c.b16 %v969, %v968
  %v1004 = vpack.c.b16 %v971, %v970
  %v1005 = vpack.c.b16 %v973, %v972
  %1038 = vmatpush.bf16.msra.mxu0 %v981
  %1039 = vmatpush.bf16.msra.mxu0 %v980
  %1040 = vmatpush.bf16.msra.mxu0 %v979
  %1041 = vmatpush.bf16.msra.mxu0 %v978
  %1042 = vmatpush.bf16.msra.mxu0 %v977
  %1043 = vmatpush.bf16.msra.mxu0 %v976
  %1044 = vmatpush.bf16.msra.mxu0 %v975
  %1045 = vmatpush.bf16.msra.mxu0 %v974
  %1046 = vmatmul.bf16.gmra.mxu0 %v590
  %v1047 = vpop.f32.mrf.mxu0
  %v1048 = vadd.f32 0.0, %v1047
  %v1049 = vpop.f32.mrf.mxu0
  %v1050 = vadd.f32 0.0, %v1049
  %1051 = vmatmul.bf16.gmra.mxu0 %v594
  %v1052 = vpop.f32.mrf.mxu0
  %v1053 = vadd.f32 0.0, %v1052
  %v1054 = vpop.f32.mrf.mxu0
  %v1055 = vadd.f32 0.0, %v1054
  %1056 = vmatmul.bf16.gmra.mxu0 %v598
  %v1057 = vpop.f32.mrf.mxu0
  %v1058 = vadd.f32 0.0, %v1057
  %v1059 = vpop.f32.mrf.mxu0
  %v1060 = vadd.f32 0.0, %v1059
  %1061 = vmatmul.bf16.gmra.mxu0 %v602
  %v1062 = vpop.f32.mrf.mxu0
  %v1063 = vadd.f32 0.0, %v1062
  %v1064 = vpop.f32.mrf.mxu0
  %v1065 = vadd.f32 0.0, %v1064
  %1066 = vmatmul.bf16.gmra.mxu0 %v606
  %v1067 = vpop.f32.mrf.mxu0
  %v1068 = vadd.f32 0.0, %v1067
  %v1069 = vpop.f32.mrf.mxu0
  %v1070 = vadd.f32 0.0, %v1069
  %1071 = vmatmul.bf16.gmra.mxu0 %v610
  %v1072 = vpop.f32.mrf.mxu0
  %v1073 = vadd.f32 0.0, %v1072
  %v1074 = vpop.f32.mrf.mxu0
  %v1075 = vadd.f32 0.0, %v1074
  %1076 = vmatmul.bf16.gmra.mxu0 %v614
  %v1077 = vpop.f32.mrf.mxu0
  %v1078 = vadd.f32 0.0, %v1077
  %v1079 = vpop.f32.mrf.mxu0
  %v1080 = vadd.f32 0.0, %v1079
  %1081 = vmatmul.bf16.gmra.mxu0 %v618
  %v1082 = vpop.f32.mrf.mxu0
  %v1083 = vadd.f32 0.0, %v1082
  %v1084 = vpop.f32.mrf.mxu0
  %v1085 = vadd.f32 0.0, %v1084
  %1086 = vmatmul.bf16.gmra.mxu0 %v622
  %v1087 = vpop.f32.mrf.mxu0
  %v1088 = vadd.f32 0.0, %v1087
  %v1089 = vpop.f32.mrf.mxu0
  %v1090 = vadd.f32 0.0, %v1089
  %1091 = vmatmul.bf16.gmra.mxu0 %v626
  %v1092 = vpop.f32.mrf.mxu0
  %v1093 = vadd.f32 0.0, %v1092
  %v1094 = vpop.f32.mrf.mxu0
  %v1095 = vadd.f32 0.0, %v1094
  %1096 = vmatmul.bf16.gmra.mxu0 %v630
  %v1097 = vpop.f32.mrf.mxu0
  %v1098 = vadd.f32 0.0, %v1097
  %v1099 = vpop.f32.mrf.mxu0
  %v1100 = vadd.f32 0.0, %v1099
  %1101 = vmatmul.bf16.gmra.mxu0 %v634
  %v1102 = vpop.f32.mrf.mxu0
  %v1103 = vadd.f32 0.0, %v1102
  %v1104 = vpop.f32.mrf.mxu0
  %v1105 = vadd.f32 0.0, %v1104
  %1106 = vmatmul.bf16.gmra.mxu0 %v638
  %v1107 = vpop.f32.mrf.mxu0
  %v1108 = vadd.f32 0.0, %v1107
  %v1109 = vpop.f32.mrf.mxu0
  %v1110 = vadd.f32 0.0, %v1109
  %1111 = vmatmul.bf16.gmra.mxu0 %v642
  %v1112 = vpop.f32.mrf.mxu0
  %v1113 = vadd.f32 0.0, %v1112
  %v1114 = vpop.f32.mrf.mxu0
  %v1115 = vadd.f32 0.0, %v1114
  %1116 = vmatmul.bf16.gmra.mxu0 %v646
  %v1117 = vpop.f32.mrf.mxu0
  %v1118 = vadd.f32 0.0, %v1117
  %v1119 = vpop.f32.mrf.mxu0
  %v1120 = vadd.f32 0.0, %v1119
  %1121 = vmatmul.bf16.gmra.mxu0 %v650
  %v1122 = vpop.f32.mrf.mxu0
  %v1123 = vadd.f32 0.0, %v1122
  %v1124 = vpop.f32.mrf.mxu0
  %v1125 = vadd.f32 0.0, %v1124
  %1126 = vmatmul.bf16.gmra.mxu0 %v654
  %v1127 = vpop.f32.mrf.mxu0
  %v1128 = vadd.f32 0.0, %v1127
  %v1129 = vpop.f32.mrf.mxu0
  %v1130 = vadd.f32 0.0, %v1129
  %1131 = vmatmul.bf16.gmra.mxu0 %v658
  %v1132 = vpop.f32.mrf.mxu0
  %v1133 = vadd.f32 0.0, %v1132
  %v1134 = vpop.f32.mrf.mxu0
  %v1135 = vadd.f32 0.0, %v1134
  %1136 = vmatmul.bf16.gmra.mxu0 %v662
  %v1137 = vpop.f32.mrf.mxu0
  %v1138 = vadd.f32 0.0, %v1137
  %v1139 = vpop.f32.mrf.mxu0
  %v1140 = vadd.f32 0.0, %v1139
  %1141 = vmatmul.bf16.gmra.mxu0 %v666
  %v1142 = vpop.f32.mrf.mxu0
  %v1143 = vadd.f32 0.0, %v1142
  %v1144 = vpop.f32.mrf.mxu0
  %v1145 = vadd.f32 0.0, %v1144
  %1146 = vmatmul.bf16.gmra.mxu0 %v670
  %v1147 = vpop.f32.mrf.mxu0
  %v1148 = vadd.f32 0.0, %v1147
  %v1149 = vpop.f32.mrf.mxu0
  %v1150 = vadd.f32 0.0, %v1149
  %1151 = vmatmul.bf16.gmra.mxu0 %v674
  %v1152 = vpop.f32.mrf.mxu0
  %v1153 = vadd.f32 0.0, %v1152
  %v1154 = vpop.f32.mrf.mxu0
  %v1155 = vadd.f32 0.0, %v1154
  %1156 = vmatmul.bf16.gmra.mxu0 %v678
  %v1157 = vpop.f32.mrf.mxu0
  %v1158 = vadd.f32 0.0, %v1157
  %v1159 = vpop.f32.mrf.mxu0
  %v1160 = vadd.f32 0.0, %v1159
  %1161 = vmatmul.bf16.gmra.mxu0 %v682
  %v1162 = vpop.f32.mrf.mxu0
  %v1163 = vadd.f32 0.0, %v1162
  %v1164 = vpop.f32.mrf.mxu0
  %v1165 = vadd.f32 0.0, %v1164
  %1166 = vmatmul.bf16.gmra.mxu0 %v686
  %v1167 = vpop.f32.mrf.mxu0
  %v1168 = vadd.f32 0.0, %v1167
  %v1169 = vpop.f32.mrf.mxu0
  %v1170 = vadd.f32 0.0, %v1169
  %1171 = vmatmul.bf16.gmra.mxu0 %v690
  %v1172 = vpop.f32.mrf.mxu0
  %v1173 = vadd.f32 0.0, %v1172
  %v1174 = vpop.f32.mrf.mxu0
  %v1175 = vadd.f32 0.0, %v1174
  %1176 = vmatmul.bf16.gmra.mxu0 %v694
  %v1177 = vpop.f32.mrf.mxu0
  %v1178 = vadd.f32 0.0, %v1177
  %v1179 = vpop.f32.mrf.mxu0
  %v1180 = vadd.f32 0.0, %v1179
  %1181 = vmatmul.bf16.gmra.mxu0 %v698
  %v1182 = vpop.f32.mrf.mxu0
  %v1183 = vadd.f32 0.0, %v1182
  %v1184 = vpop.f32.mrf.mxu0
  %v1185 = vadd.f32 0.0, %v1184
  %1186 = vmatmul.bf16.gmra.mxu0 %v702
  %v1187 = vpop.f32.mrf.mxu0
  %v1188 = vadd.f32 0.0, %v1187
  %v1189 = vpop.f32.mrf.mxu0
  %v1190 = vadd.f32 0.0, %v1189
  %1191 = vmatmul.bf16.gmra.mxu0 %v706
  %v1192 = vpop.f32.mrf.mxu0
  %v1193 = vadd.f32 0.0, %v1192
  %v1194 = vpop.f32.mrf.mxu0
  %v1195 = vadd.f32 0.0, %v1194
  %1196 = vmatmul.bf16.gmra.mxu0 %v710
  %v1197 = vpop.f32.mrf.mxu0
  %v1198 = vadd.f32 0.0, %v1197
  %v1199 = vpop.f32.mrf.mxu0
  %v1200 = vadd.f32 0.0, %v1199
  %1201 = vmatmul.bf16.gmra.mxu0 %v714
  %v1202 = vpop.f32.mrf.mxu0
  %v1203 = vadd.f32 0.0, %v1202
  %v1204 = vpop.f32.mrf.mxu0
  %v1205 = vadd.f32 0.0, %v1204
  %1206 = vdwg.mxu0
  %1207 = vmatpush.bf16.msra.mxu0 %v989
  %1208 = vmatpush.bf16.msra.mxu0 %v988
  %1209 = vmatpush.bf16.msra.mxu0 %v987
  %1210 = vmatpush.bf16.msra.mxu0 %v986
  %1211 = vmatpush.bf16.msra.mxu0 %v985
  %1212 = vmatpush.bf16.msra.mxu0 %v984
  %1213 = vmatpush.bf16.msra.mxu0 %v983
  %1214 = vmatpush.bf16.msra.mxu0 %v982
  %1215 = vmatmul.bf16.gmra.mxu0 %v591
  %v1216 = vpop.f32.mrf.mxu0
  %v1217 = vadd.f32 %v1048, %v1216
  %v1218 = vpop.f32.mrf.mxu0
  %v1219 = vadd.f32 %v1050, %v1218
  %1220 = vmatmul.bf16.gmra.mxu0 %v595
  %v1221 = vpop.f32.mrf.mxu0
  %v1222 = vadd.f32 %v1053, %v1221
  %v1223 = vpop.f32.mrf.mxu0
  %v1224 = vadd.f32 %v1055, %v1223
  %1225 = vmatmul.bf16.gmra.mxu0 %v599
  %v1226 = vpop.f32.mrf.mxu0
  %v1227 = vadd.f32 %v1058, %v1226
  %v1228 = vpop.f32.mrf.mxu0
  %v1229 = vadd.f32 %v1060, %v1228
  %1230 = vmatmul.bf16.gmra.mxu0 %v603
  %v1231 = vpop.f32.mrf.mxu0
  %v1232 = vadd.f32 %v1063, %v1231
  %v1233 = vpop.f32.mrf.mxu0
  %v1234 = vadd.f32 %v1065, %v1233
  %1235 = vmatmul.bf16.gmra.mxu0 %v607
  %v1236 = vpop.f32.mrf.mxu0
  %v1237 = vadd.f32 %v1068, %v1236
  %v1238 = vpop.f32.mrf.mxu0
  %v1239 = vadd.f32 %v1070, %v1238
  %1240 = vmatmul.bf16.gmra.mxu0 %v611
  %v1241 = vpop.f32.mrf.mxu0
  %v1242 = vadd.f32 %v1073, %v1241
  %v1243 = vpop.f32.mrf.mxu0
  %v1244 = vadd.f32 %v1075, %v1243
  %1245 = vmatmul.bf16.gmra.mxu0 %v615
  %v1246 = vpop.f32.mrf.mxu0
  %v1247 = vadd.f32 %v1078, %v1246
  %v1248 = vpop.f32.mrf.mxu0
  %v1249 = vadd.f32 %v1080, %v1248
  %1250 = vmatmul.bf16.gmra.mxu0 %v619
  %v1251 = vpop.f32.mrf.mxu0
  %v1252 = vadd.f32 %v1083, %v1251
  %v1253 = vpop.f32.mrf.mxu0
  %v1254 = vadd.f32 %v1085, %v1253
  %1255 = vmatmul.bf16.gmra.mxu0 %v623
  %v1256 = vpop.f32.mrf.mxu0
  %v1257 = vadd.f32 %v1088, %v1256
  %v1258 = vpop.f32.mrf.mxu0
  %v1259 = vadd.f32 %v1090, %v1258
  %1260 = vmatmul.bf16.gmra.mxu0 %v627
  %v1261 = vpop.f32.mrf.mxu0
  %v1262 = vadd.f32 %v1093, %v1261
  %v1263 = vpop.f32.mrf.mxu0
  %v1264 = vadd.f32 %v1095, %v1263
  %1265 = vmatmul.bf16.gmra.mxu0 %v631
  %v1266 = vpop.f32.mrf.mxu0
  %v1267 = vadd.f32 %v1098, %v1266
  %v1268 = vpop.f32.mrf.mxu0
  %v1269 = vadd.f32 %v1100, %v1268
  %1270 = vmatmul.bf16.gmra.mxu0 %v635
  %v1271 = vpop.f32.mrf.mxu0
  %v1272 = vadd.f32 %v1103, %v1271
  %v1273 = vpop.f32.mrf.mxu0
  %v1274 = vadd.f32 %v1105, %v1273
  %1275 = vmatmul.bf16.gmra.mxu0 %v639
  %v1276 = vpop.f32.mrf.mxu0
  %v1277 = vadd.f32 %v1108, %v1276
  %v1278 = vpop.f32.mrf.mxu0
  %v1279 = vadd.f32 %v1110, %v1278
  %1280 = vmatmul.bf16.gmra.mxu0 %v643
  %v1281 = vpop.f32.mrf.mxu0
  %v1282 = vadd.f32 %v1113, %v1281
  %v1283 = vpop.f32.mrf.mxu0
  %v1284 = vadd.f32 %v1115, %v1283
  %1285 = vmatmul.bf16.gmra.mxu0 %v647
  %v1286 = vpop.f32.mrf.mxu0
  %v1287 = vadd.f32 %v1118, %v1286
  %v1288 = vpop.f32.mrf.mxu0
  %v1289 = vadd.f32 %v1120, %v1288
  %1290 = vmatmul.bf16.gmra.mxu0 %v651
  %v1291 = vpop.f32.mrf.mxu0
  %v1292 = vadd.f32 %v1123, %v1291
  %v1293 = vpop.f32.mrf.mxu0
  %v1294 = vadd.f32 %v1125, %v1293
  %1295 = vmatmul.bf16.gmra.mxu0 %v655
  %v1296 = vpop.f32.mrf.mxu0
  %v1297 = vadd.f32 %v1128, %v1296
  %v1298 = vpop.f32.mrf.mxu0
  %v1299 = vadd.f32 %v1130, %v1298
  %1300 = vmatmul.bf16.gmra.mxu0 %v659
  %v1301 = vpop.f32.mrf.mxu0
  %v1302 = vadd.f32 %v1133, %v1301
  %v1303 = vpop.f32.mrf.mxu0
  %v1304 = vadd.f32 %v1135, %v1303
  %1305 = vmatmul.bf16.gmra.mxu0 %v663
  %v1306 = vpop.f32.mrf.mxu0
  %v1307 = vadd.f32 %v1138, %v1306
  %v1308 = vpop.f32.mrf.mxu0
  %v1309 = vadd.f32 %v1140, %v1308
  %1310 = vmatmul.bf16.gmra.mxu0 %v667
  %v1311 = vpop.f32.mrf.mxu0
  %v1312 = vadd.f32 %v1143, %v1311
  %v1313 = vpop.f32.mrf.mxu0
  %v1314 = vadd.f32 %v1145, %v1313
  %1315 = vmatmul.bf16.gmra.mxu0 %v671
  %v1316 = vpop.f32.mrf.mxu0
  %v1317 = vadd.f32 %v1148, %v1316
  %v1318 = vpop.f32.mrf.mxu0
  %v1319 = vadd.f32 %v1150, %v1318
  %1320 = vmatmul.bf16.gmra.mxu0 %v675
  %v1321 = vpop.f32.mrf.mxu0
  %v1322 = vadd.f32 %v1153, %v1321
  %v1323 = vpop.f32.mrf.mxu0
  %v1324 = vadd.f32 %v1155, %v1323
  %1325 = vmatmul.bf16.gmra.mxu0 %v679
  %v1326 = vpop.f32.mrf.mxu0
  %v1327 = vadd.f32 %v1158, %v1326
  %v1328 = vpop.f32.mrf.mxu0
  %v1329 = vadd.f32 %v1160, %v1328
  %1330 = vmatmul.bf16.gmra.mxu0 %v683
  %v1331 = vpop.f32.mrf.mxu0
  %v1332 = vadd.f32 %v1163, %v1331
  %v1333 = vpop.f32.mrf.mxu0
  %v1334 = vadd.f32 %v1165, %v1333
  %1335 = vmatmul.bf16.gmra.mxu0 %v687
  %v1336 = vpop.f32.mrf.mxu0
  %v1337 = vadd.f32 %v1168, %v1336
  %v1338 = vpop.f32.mrf.mxu0
  %v1339 = vadd.f32 %v1170, %v1338
  %1340 = vmatmul.bf16.gmra.mxu0 %v691
  %v1341 = vpop.f32.mrf.mxu0
  %v1342 = vadd.f32 %v1173, %v1341
  %v1343 = vpop.f32.mrf.mxu0
  %v1344 = vadd.f32 %v1175, %v1343
  %1345 = vmatmul.bf16.gmra.mxu0 %v695
  %v1346 = vpop.f32.mrf.mxu0
  %v1347 = vadd.f32 %v1178, %v1346
  %v1348 = vpop.f32.mrf.mxu0
  %v1349 = vadd.f32 %v1180, %v1348
  %1350 = vmatmul.bf16.gmra.mxu0 %v699
  %v1351 = vpop.f32.mrf.mxu0
  %v1352 = vadd.f32 %v1183, %v1351
  %v1353 = vpop.f32.mrf.mxu0
  %v1354 = vadd.f32 %v1185, %v1353
  %1355 = vmatmul.bf16.gmra.mxu0 %v703
  %v1356 = vpop.f32.mrf.mxu0
  %v1357 = vadd.f32 %v1188, %v1356
  %v1358 = vpop.f32.mrf.mxu0
  %v1359 = vadd.f32 %v1190, %v1358
  %1360 = vmatmul.bf16.gmra.mxu0 %v707
  %v1361 = vpop.f32.mrf.mxu0
  %v1362 = vadd.f32 %v1193, %v1361
  %v1363 = vpop.f32.mrf.mxu0
  %v1364 = vadd.f32 %v1195, %v1363
  %1365 = vmatmul.bf16.gmra.mxu0 %v711
  %v1366 = vpop.f32.mrf.mxu0
  %v1367 = vadd.f32 %v1198, %v1366
  %v1368 = vpop.f32.mrf.mxu0
  %v1369 = vadd.f32 %v1200, %v1368
  %1370 = vmatmul.bf16.gmra.mxu0 %v715
  %v1371 = vpop.f32.mrf.mxu0
  %v1372 = vadd.f32 %v1203, %v1371
  %v1373 = vpop.f32.mrf.mxu0
  %v1374 = vadd.f32 %v1205, %v1373
  %1375 = vdwg.mxu0
  %1376 = vmatpush.bf16.msra.mxu0 %v997
  %1377 = vmatpush.bf16.msra.mxu0 %v996
  %1378 = vmatpush.bf16.msra.mxu0 %v995
  %1379 = vmatpush.bf16.msra.mxu0 %v994
  %1380 = vmatpush.bf16.msra.mxu0 %v993
  %1381 = vmatpush.bf16.msra.mxu0 %v992
  %1382 = vmatpush.bf16.msra.mxu0 %v991
  %1383 = vmatpush.bf16.msra.mxu0 %v990
  %1384 = vmatmul.bf16.gmra.mxu0 %v592
  %v1385 = vpop.f32.mrf.mxu0
  %v1386 = vadd.f32 %v1217, %v1385
  %v1387 = vpop.f32.mrf.mxu0
  %v1388 = vadd.f32 %v1219, %v1387
  %1389 = vmatmul.bf16.gmra.mxu0 %v596
  %v1390 = vpop.f32.mrf.mxu0
  %v1391 = vadd.f32 %v1222, %v1390
  %v1392 = vpop.f32.mrf.mxu0
  %v1393 = vadd.f32 %v1224, %v1392
  %1394 = vmatmul.bf16.gmra.mxu0 %v600
  %v1395 = vpop.f32.mrf.mxu0
  %v1396 = vadd.f32 %v1227, %v1395
  %v1397 = vpop.f32.mrf.mxu0
  %v1398 = vadd.f32 %v1229, %v1397
  %1399 = vmatmul.bf16.gmra.mxu0 %v604
  %v1400 = vpop.f32.mrf.mxu0
  %v1401 = vadd.f32 %v1232, %v1400
  %v1402 = vpop.f32.mrf.mxu0
  %v1403 = vadd.f32 %v1234, %v1402
  %1404 = vmatmul.bf16.gmra.mxu0 %v608
  %v1405 = vpop.f32.mrf.mxu0
  %v1406 = vadd.f32 %v1237, %v1405
  %v1407 = vpop.f32.mrf.mxu0
  %v1408 = vadd.f32 %v1239, %v1407
  %1409 = vmatmul.bf16.gmra.mxu0 %v612
  %v1410 = vpop.f32.mrf.mxu0
  %v1411 = vadd.f32 %v1242, %v1410
  %v1412 = vpop.f32.mrf.mxu0
  %v1413 = vadd.f32 %v1244, %v1412
  %1414 = vmatmul.bf16.gmra.mxu0 %v616
  %v1415 = vpop.f32.mrf.mxu0
  %v1416 = vadd.f32 %v1247, %v1415
  %v1417 = vpop.f32.mrf.mxu0
  %v1418 = vadd.f32 %v1249, %v1417
  %1419 = vmatmul.bf16.gmra.mxu0 %v620
  %v1420 = vpop.f32.mrf.mxu0
  %v1421 = vadd.f32 %v1252, %v1420
  %v1422 = vpop.f32.mrf.mxu0
  %v1423 = vadd.f32 %v1254, %v1422
  %1424 = vmatmul.bf16.gmra.mxu0 %v624
  %v1425 = vpop.f32.mrf.mxu0
  %v1426 = vadd.f32 %v1257, %v1425
  %v1427 = vpop.f32.mrf.mxu0
  %v1428 = vadd.f32 %v1259, %v1427
  %1429 = vmatmul.bf16.gmra.mxu0 %v628
  %v1430 = vpop.f32.mrf.mxu0
  %v1431 = vadd.f32 %v1262, %v1430
  %v1432 = vpop.f32.mrf.mxu0
  %v1433 = vadd.f32 %v1264, %v1432
  %1434 = vmatmul.bf16.gmra.mxu0 %v632
  %v1435 = vpop.f32.mrf.mxu0
  %v1436 = vadd.f32 %v1267, %v1435
  %v1437 = vpop.f32.mrf.mxu0
  %v1438 = vadd.f32 %v1269, %v1437
  %1439 = vmatmul.bf16.gmra.mxu0 %v636
  %v1440 = vpop.f32.mrf.mxu0
  %v1441 = vadd.f32 %v1272, %v1440
  %v1442 = vpop.f32.mrf.mxu0
  %v1443 = vadd.f32 %v1274, %v1442
  %1444 = vmatmul.bf16.gmra.mxu0 %v640
  %v1445 = vpop.f32.mrf.mxu0
  %v1446 = vadd.f32 %v1277, %v1445
  %v1447 = vpop.f32.mrf.mxu0
  %v1448 = vadd.f32 %v1279, %v1447
  %1449 = vmatmul.bf16.gmra.mxu0 %v644
  %v1450 = vpop.f32.mrf.mxu0
  %v1451 = vadd.f32 %v1282, %v1450
  %v1452 = vpop.f32.mrf.mxu0
  %v1453 = vadd.f32 %v1284, %v1452
  %1454 = vmatmul.bf16.gmra.mxu0 %v648
  %v1455 = vpop.f32.mrf.mxu0
  %v1456 = vadd.f32 %v1287, %v1455
  %v1457 = vpop.f32.mrf.mxu0
  %v1458 = vadd.f32 %v1289, %v1457
  %1459 = vmatmul.bf16.gmra.mxu0 %v652
  %v1460 = vpop.f32.mrf.mxu0
  %v1461 = vadd.f32 %v1292, %v1460
  %v1462 = vpop.f32.mrf.mxu0
  %v1463 = vadd.f32 %v1294, %v1462
  %1464 = vmatmul.bf16.gmra.mxu0 %v656
  %v1465 = vpop.f32.mrf.mxu0
  %v1466 = vadd.f32 %v1297, %v1465
  %v1467 = vpop.f32.mrf.mxu0
  %v1468 = vadd.f32 %v1299, %v1467
  %1469 = vmatmul.bf16.gmra.mxu0 %v660
  %v1470 = vpop.f32.mrf.mxu0
  %v1471 = vadd.f32 %v1302, %v1470
  %v1472 = vpop.f32.mrf.mxu0
  %v1473 = vadd.f32 %v1304, %v1472
  %1474 = vmatmul.bf16.gmra.mxu0 %v664
  %v1475 = vpop.f32.mrf.mxu0
  %v1476 = vadd.f32 %v1307, %v1475
  %v1477 = vpop.f32.mrf.mxu0
  %v1478 = vadd.f32 %v1309, %v1477
  %1479 = vmatmul.bf16.gmra.mxu0 %v668
  %v1480 = vpop.f32.mrf.mxu0
  %v1481 = vadd.f32 %v1312, %v1480
  %v1482 = vpop.f32.mrf.mxu0
  %v1483 = vadd.f32 %v1314, %v1482
  %1484 = vmatmul.bf16.gmra.mxu0 %v672
  %v1485 = vpop.f32.mrf.mxu0
  %v1486 = vadd.f32 %v1317, %v1485
  %v1487 = vpop.f32.mrf.mxu0
  %v1488 = vadd.f32 %v1319, %v1487
  %1489 = vmatmul.bf16.gmra.mxu0 %v676
  %v1490 = vpop.f32.mrf.mxu0
  %v1491 = vadd.f32 %v1322, %v1490
  %v1492 = vpop.f32.mrf.mxu0
  %v1493 = vadd.f32 %v1324, %v1492
  %1494 = vmatmul.bf16.gmra.mxu0 %v680
  %v1495 = vpop.f32.mrf.mxu0
  %v1496 = vadd.f32 %v1327, %v1495
  %v1497 = vpop.f32.mrf.mxu0
  %v1498 = vadd.f32 %v1329, %v1497
  %1499 = vmatmul.bf16.gmra.mxu0 %v684
  %v1500 = vpop.f32.mrf.mxu0
  %v1501 = vadd.f32 %v1332, %v1500
  %v1502 = vpop.f32.mrf.mxu0
  %v1503 = vadd.f32 %v1334, %v1502
  %1504 = vmatmul.bf16.gmra.mxu0 %v688
  %v1505 = vpop.f32.mrf.mxu0
  %v1506 = vadd.f32 %v1337, %v1505
  %v1507 = vpop.f32.mrf.mxu0
  %v1508 = vadd.f32 %v1339, %v1507
  %1509 = vmatmul.bf16.gmra.mxu0 %v692
  %v1510 = vpop.f32.mrf.mxu0
  %v1511 = vadd.f32 %v1342, %v1510
  %v1512 = vpop.f32.mrf.mxu0
  %v1513 = vadd.f32 %v1344, %v1512
  %1514 = vmatmul.bf16.gmra.mxu0 %v696
  %v1515 = vpop.f32.mrf.mxu0
  %v1516 = vadd.f32 %v1347, %v1515
  %v1517 = vpop.f32.mrf.mxu0
  %v1518 = vadd.f32 %v1349, %v1517
  %1519 = vmatmul.bf16.gmra.mxu0 %v700
  %v1520 = vpop.f32.mrf.mxu0
  %v1521 = vadd.f32 %v1352, %v1520
  %v1522 = vpop.f32.mrf.mxu0
  %v1523 = vadd.f32 %v1354, %v1522
  %1524 = vmatmul.bf16.gmra.mxu0 %v704
  %v1525 = vpop.f32.mrf.mxu0
  %v1526 = vadd.f32 %v1357, %v1525
  %v1527 = vpop.f32.mrf.mxu0
  %v1528 = vadd.f32 %v1359, %v1527
  %1529 = vmatmul.bf16.gmra.mxu0 %v708
  %v1530 = vpop.f32.mrf.mxu0
  %v1531 = vadd.f32 %v1362, %v1530
  %v1532 = vpop.f32.mrf.mxu0
  %v1533 = vadd.f32 %v1364, %v1532
  %1534 = vmatmul.bf16.gmra.mxu0 %v712
  %v1535 = vpop.f32.mrf.mxu0
  %v1536 = vadd.f32 %v1367, %v1535
  %v1537 = vpop.f32.mrf.mxu0
  %v1538 = vadd.f32 %v1369, %v1537
  %1539 = vmatmul.bf16.gmra.mxu0 %v716
  %v1540 = vpop.f32.mrf.mxu0
  %v1541 = vadd.f32 %v1372, %v1540
  %v1542 = vpop.f32.mrf.mxu0
  %v1543 = vadd.f32 %v1374, %v1542
  %1544 = vdwg.mxu0
  %1545 = vmatpush.bf16.msra.mxu0 %v1005
  %1546 = vmatpush.bf16.msra.mxu0 %v1004
  %1547 = vmatpush.bf16.msra.mxu0 %v1003
  %1548 = vmatpush.bf16.msra.mxu0 %v1002
  %1549 = vmatpush.bf16.msra.mxu0 %v1001
  %1550 = vmatpush.bf16.msra.mxu0 %v1000
  %1551 = vmatpush.bf16.msra.mxu0 %v999
  %1552 = vmatpush.bf16.msra.mxu0 %v998
  %1553 = vmatmul.bf16.gmra.mxu0 %v593
  %v1554 = vpop.f32.mrf.mxu0
  %v1555 = vadd.f32 %v1386, %v1554
  %v1556 = vpop.f32.mrf.mxu0
  %v1557 = vadd.f32 %v1388, %v1556
  %1558 = vmatmul.bf16.gmra.mxu0 %v597
  %v1559 = vpop.f32.mrf.mxu0
  %v1560 = vadd.f32 %v1391, %v1559
  %v1561 = vpop.f32.mrf.mxu0
  %v1562 = vadd.f32 %v1393, %v1561
  %1563 = vmatmul.bf16.gmra.mxu0 %v601
  %v1564 = vpop.f32.mrf.mxu0
  %v1565 = vadd.f32 %v1396, %v1564
  %v1566 = vpop.f32.mrf.mxu0
  %v1567 = vadd.f32 %v1398, %v1566
  %1568 = vmatmul.bf16.gmra.mxu0 %v605
  %v1569 = vpop.f32.mrf.mxu0
  %v1570 = vadd.f32 %v1401, %v1569
  %v1571 = vpop.f32.mrf.mxu0
  %v1572 = vadd.f32 %v1403, %v1571
  %1573 = vmatmul.bf16.gmra.mxu0 %v609
  %v1574 = vpop.f32.mrf.mxu0
  %v1575 = vadd.f32 %v1406, %v1574
  %v1576 = vpop.f32.mrf.mxu0
  %v1577 = vadd.f32 %v1408, %v1576
  %1578 = vmatmul.bf16.gmra.mxu0 %v613
  %v1579 = vpop.f32.mrf.mxu0
  %v1580 = vadd.f32 %v1411, %v1579
  %v1581 = vpop.f32.mrf.mxu0
  %v1582 = vadd.f32 %v1413, %v1581
  %1583 = vmatmul.bf16.gmra.mxu0 %v617
  %v1584 = vpop.f32.mrf.mxu0
  %v1585 = vadd.f32 %v1416, %v1584
  %v1586 = vpop.f32.mrf.mxu0
  %v1587 = vadd.f32 %v1418, %v1586
  %1588 = vmatmul.bf16.gmra.mxu0 %v621
  %v1589 = vpop.f32.mrf.mxu0
  %v1590 = vadd.f32 %v1421, %v1589
  %v1591 = vpop.f32.mrf.mxu0
  %v1592 = vadd.f32 %v1423, %v1591
  %1593 = vmatmul.bf16.gmra.mxu0 %v625
  %v1594 = vpop.f32.mrf.mxu0
  %v1595 = vadd.f32 %v1426, %v1594
  %v1596 = vpop.f32.mrf.mxu0
  %v1597 = vadd.f32 %v1428, %v1596
  %1598 = vmatmul.bf16.gmra.mxu0 %v629
  %v1599 = vpop.f32.mrf.mxu0
  %v1600 = vadd.f32 %v1431, %v1599
  %v1601 = vpop.f32.mrf.mxu0
  %v1602 = vadd.f32 %v1433, %v1601
  %1603 = vmatmul.bf16.gmra.mxu0 %v633
  %v1604 = vpop.f32.mrf.mxu0
  %v1605 = vadd.f32 %v1436, %v1604
  %v1606 = vpop.f32.mrf.mxu0
  %v1607 = vadd.f32 %v1438, %v1606
  %1608 = vmatmul.bf16.gmra.mxu0 %v637
  %v1609 = vpop.f32.mrf.mxu0
  %v1610 = vadd.f32 %v1441, %v1609
  %v1611 = vpop.f32.mrf.mxu0
  %v1612 = vadd.f32 %v1443, %v1611
  %1613 = vmatmul.bf16.gmra.mxu0 %v641
  %v1614 = vpop.f32.mrf.mxu0
  %v1615 = vadd.f32 %v1446, %v1614
  %v1616 = vpop.f32.mrf.mxu0
  %v1617 = vadd.f32 %v1448, %v1616
  %1618 = vmatmul.bf16.gmra.mxu0 %v645
  %v1619 = vpop.f32.mrf.mxu0
  %v1620 = vadd.f32 %v1451, %v1619
  %v1621 = vpop.f32.mrf.mxu0
  %v1622 = vadd.f32 %v1453, %v1621
  %1623 = vmatmul.bf16.gmra.mxu0 %v649
  %v1624 = vpop.f32.mrf.mxu0
  %v1625 = vadd.f32 %v1456, %v1624
  %v1626 = vpop.f32.mrf.mxu0
  %v1627 = vadd.f32 %v1458, %v1626
  %1628 = vmatmul.bf16.gmra.mxu0 %v653
  %v1629 = vpop.f32.mrf.mxu0
  %v1630 = vadd.f32 %v1461, %v1629
  %v1631 = vpop.f32.mrf.mxu0
  %v1632 = vadd.f32 %v1463, %v1631
  %1633 = vmatmul.bf16.gmra.mxu0 %v657
  %v1634 = vpop.f32.mrf.mxu0
  %v1635 = vadd.f32 %v1466, %v1634
  %v1636 = vpop.f32.mrf.mxu0
  %v1637 = vadd.f32 %v1468, %v1636
  %1638 = vmatmul.bf16.gmra.mxu0 %v661
  %v1639 = vpop.f32.mrf.mxu0
  %v1640 = vadd.f32 %v1471, %v1639
  %v1641 = vpop.f32.mrf.mxu0
  %v1642 = vadd.f32 %v1473, %v1641
  %1643 = vmatmul.bf16.gmra.mxu0 %v665
  %v1644 = vpop.f32.mrf.mxu0
  %v1645 = vadd.f32 %v1476, %v1644
  %v1646 = vpop.f32.mrf.mxu0
  %v1647 = vadd.f32 %v1478, %v1646
  %1648 = vmatmul.bf16.gmra.mxu0 %v669
  %v1649 = vpop.f32.mrf.mxu0
  %v1650 = vadd.f32 %v1481, %v1649
  %v1651 = vpop.f32.mrf.mxu0
  %v1652 = vadd.f32 %v1483, %v1651
  %1653 = vmatmul.bf16.gmra.mxu0 %v673
  %v1654 = vpop.f32.mrf.mxu0
  %v1655 = vadd.f32 %v1486, %v1654
  %v1656 = vpop.f32.mrf.mxu0
  %v1657 = vadd.f32 %v1488, %v1656
  %1658 = vmatmul.bf16.gmra.mxu0 %v677
  %v1659 = vpop.f32.mrf.mxu0
  %v1660 = vadd.f32 %v1491, %v1659
  %v1661 = vpop.f32.mrf.mxu0
  %v1662 = vadd.f32 %v1493, %v1661
  %1663 = vmatmul.bf16.gmra.mxu0 %v681
  %v1664 = vpop.f32.mrf.mxu0
  %v1665 = vadd.f32 %v1496, %v1664
  %v1666 = vpop.f32.mrf.mxu0
  %v1667 = vadd.f32 %v1498, %v1666
  %1668 = vmatmul.bf16.gmra.mxu0 %v685
  %v1669 = vpop.f32.mrf.mxu0
  %v1670 = vadd.f32 %v1501, %v1669
  %v1671 = vpop.f32.mrf.mxu0
  %v1672 = vadd.f32 %v1503, %v1671
  %1673 = vmatmul.bf16.gmra.mxu0 %v689
  %v1674 = vpop.f32.mrf.mxu0
  %v1675 = vadd.f32 %v1506, %v1674
  %v1676 = vpop.f32.mrf.mxu0
  %v1677 = vadd.f32 %v1508, %v1676
  %1678 = vmatmul.bf16.gmra.mxu0 %v693
  %v1679 = vpop.f32.mrf.mxu0
  %v1680 = vadd.f32 %v1511, %v1679
  %v1681 = vpop.f32.mrf.mxu0
  %v1682 = vadd.f32 %v1513, %v1681
  %1683 = vmatmul.bf16.gmra.mxu0 %v697
  %v1684 = vpop.f32.mrf.mxu0
  %v1685 = vadd.f32 %v1516, %v1684
  %v1686 = vpop.f32.mrf.mxu0
  %v1687 = vadd.f32 %v1518, %v1686
  %1688 = vmatmul.bf16.gmra.mxu0 %v701
  %v1689 = vpop.f32.mrf.mxu0
  %v1690 = vadd.f32 %v1521, %v1689
  %v1691 = vpop.f32.mrf.mxu0
  %v1692 = vadd.f32 %v1523, %v1691
  %1693 = vmatmul.bf16.gmra.mxu0 %v705
  %v1694 = vpop.f32.mrf.mxu0
  %v1695 = vadd.f32 %v1526, %v1694
  %v1696 = vpop.f32.mrf.mxu0
  %v1697 = vadd.f32 %v1528, %v1696
  %1698 = vmatmul.bf16.gmra.mxu0 %v709
  %v1699 = vpop.f32.mrf.mxu0
  %v1700 = vadd.f32 %v1531, %v1699
  %v1701 = vpop.f32.mrf.mxu0
  %v1702 = vadd.f32 %v1533, %v1701
  %1703 = vmatmul.bf16.gmra.mxu0 %v713
  %v1704 = vpop.f32.mrf.mxu0
  %v1705 = vadd.f32 %v1536, %v1704
  %v1706 = vpop.f32.mrf.mxu0
  %v1707 = vadd.f32 %v1538, %v1706
  %1708 = vmatmul.bf16.gmra.mxu0 %v717
  %v1709 = vpop.f32.mrf.mxu0
  %v1710 = vadd.f32 %v1541, %v1709
  %v1711 = vpop.f32.mrf.mxu0
  %v1712 = vadd.f32 %v1543, %v1711
  %1713 = vdwg.mxu0
  %s1714 = scalar_lea.vmem %s0, 1024
  %v1715 = vld [vmem:[%s1714] sm:$0xff]
  %v1716 = vld [vmem:[%s1714 + $0x8] sm:$0xff]
  %v1717 = vld [vmem:[%s1714 + $0x10] sm:$0xff]
  %v1718 = vld [vmem:[%s1714 + $0x18] sm:$0xff]
  %v1719 = vld [vmem:[%s1714 + $0x20] sm:$0xff]
  %v1720 = vld [vmem:[%s1714 + $0x28] sm:$0xff]
  %v1721 = vld [vmem:[%s1714 + $0x30] sm:$0xff]
  %v1722 = vld [vmem:[%s1714 + $0x38] sm:$0xff]
  %v1723 = vld [vmem:[%s1714 + $0x40] sm:$0xff]
  %v1724 = vld [vmem:[%s1714 + $0x48] sm:$0xff]
  %v1725 = vld [vmem:[%s1714 + $0x50] sm:$0xff]
  %v1726 = vld [vmem:[%s1714 + $0x58] sm:$0xff]
  %v1727 = vld [vmem:[%s1714 + $0x60] sm:$0xff]
  %v1728 = vld [vmem:[%s1714 + $0x68] sm:$0xff]
  %v1729 = vld [vmem:[%s1714 + $0x70] sm:$0xff]
  %v1730 = vld [vmem:[%s1714 + $0x78] sm:$0xff]
  %v1731 = vld [vmem:[%s1714 + $0x80] sm:$0xff]
  %v1732 = vld [vmem:[%s1714 + $0x88] sm:$0xff]
  %v1733 = vld [vmem:[%s1714 + $0x90] sm:$0xff]
  %v1734 = vld [vmem:[%s1714 + $0x98] sm:$0xff]
  %v1735 = vld [vmem:[%s1714 + $0xa0] sm:$0xff]
  %v1736 = vld [vmem:[%s1714 + $0xa8] sm:$0xff]
  %v1737 = vld [vmem:[%s1714 + $0xb0] sm:$0xff]
  %v1738 = vld [vmem:[%s1714 + $0xb8] sm:$0xff]
  %v1739 = vld [vmem:[%s1714 + $0xc0] sm:$0xff]
  %v1740 = vld [vmem:[%s1714 + $0xc8] sm:$0xff]
  %v1741 = vld [vmem:[%s1714 + $0xd0] sm:$0xff]
  %v1742 = vld [vmem:[%s1714 + $0xd8] sm:$0xff]
  %v1743 = vld [vmem:[%s1714 + $0xe0] sm:$0xff]
  %v1744 = vld [vmem:[%s1714 + $0xe8] sm:$0xff]
  %v1745 = vld [vmem:[%s1714 + $0xf0] sm:$0xff]
  %v1746 = vld [vmem:[%s1714 + $0xf8] sm:$0xff]
  %v1747 = vld [vmem:[%s1714 + $0x100] sm:$0xff]
  %v1748 = vld [vmem:[%s1714 + $0x108] sm:$0xff]
  %v1749 = vld [vmem:[%s1714 + $0x110] sm:$0xff]
  %v1750 = vld [vmem:[%s1714 + $0x118] sm:$0xff]
  %v1751 = vld [vmem:[%s1714 + $0x120] sm:$0xff]
  %v1752 = vld [vmem:[%s1714 + $0x128] sm:$0xff]
  %v1753 = vld [vmem:[%s1714 + $0x130] sm:$0xff]
  %v1754 = vld [vmem:[%s1714 + $0x138] sm:$0xff]
  %v1755 = vld [vmem:[%s1714 + $0x140] sm:$0xff]
  %v1756 = vld [vmem:[%s1714 + $0x148] sm:$0xff]
  %v1757 = vld [vmem:[%s1714 + $0x150] sm:$0xff]
  %v1758 = vld [vmem:[%s1714 + $0x158] sm:$0xff]
  %v1759 = vld [vmem:[%s1714 + $0x160] sm:$0xff]
  %v1760 = vld [vmem:[%s1714 + $0x168] sm:$0xff]
  %v1761 = vld [vmem:[%s1714 + $0x170] sm:$0xff]
  %v1762 = vld [vmem:[%s1714 + $0x178] sm:$0xff]
  %v1763 = vld [vmem:[%s1714 + $0x180] sm:$0xff]
  %v1764 = vld [vmem:[%s1714 + $0x188] sm:$0xff]
  %v1765 = vld [vmem:[%s1714 + $0x190] sm:$0xff]
  %v1766 = vld [vmem:[%s1714 + $0x198] sm:$0xff]
  %v1767 = vld [vmem:[%s1714 + $0x1a0] sm:$0xff]
  %v1768 = vld [vmem:[%s1714 + $0x1a8] sm:$0xff]
  %v1769 = vld [vmem:[%s1714 + $0x1b0] sm:$0xff]
  %v1770 = vld [vmem:[%s1714 + $0x1b8] sm:$0xff]
  %v1771 = vld [vmem:[%s1714 + $0x1c0] sm:$0xff]
  %v1772 = vld [vmem:[%s1714 + $0x1c8] sm:$0xff]
  %v1773 = vld [vmem:[%s1714 + $0x1d0] sm:$0xff]
  %v1774 = vld [vmem:[%s1714 + $0x1d8] sm:$0xff]
  %v1775 = vld [vmem:[%s1714 + $0x1e0] sm:$0xff]
  %v1776 = vld [vmem:[%s1714 + $0x1e8] sm:$0xff]
  %v1777 = vld [vmem:[%s1714 + $0x1f0] sm:$0xff]
  %v1778 = vld [vmem:[%s1714 + $0x1f8] sm:$0xff]
  %v1779 = vld [vmem:[%s1714 + $0x200] sm:$0xff]
  %v1780 = vld [vmem:[%s1714 + $0x208] sm:$0xff]
  %v1781 = vld [vmem:[%s1714 + $0x210] sm:$0xff]
  %v1782 = vld [vmem:[%s1714 + $0x218] sm:$0xff]
  %v1783 = vld [vmem:[%s1714 + $0x220] sm:$0xff]
  %v1784 = vld [vmem:[%s1714 + $0x228] sm:$0xff]
  %v1785 = vld [vmem:[%s1714 + $0x230] sm:$0xff]
  %v1786 = vld [vmem:[%s1714 + $0x238] sm:$0xff]
  %v1787 = vld [vmem:[%s1714 + $0x240] sm:$0xff]
  %v1788 = vld [vmem:[%s1714 + $0x248] sm:$0xff]
  %v1789 = vld [vmem:[%s1714 + $0x250] sm:$0xff]
  %v1790 = vld [vmem:[%s1714 + $0x258] sm:$0xff]
  %v1791 = vld [vmem:[%s1714 + $0x260] sm:$0xff]
  %v1792 = vld [vmem:[%s1714 + $0x268] sm:$0xff]
  %v1793 = vld [vmem:[%s1714 + $0x270] sm:$0xff]
  %v1794 = vld [vmem:[%s1714 + $0x278] sm:$0xff]
  %v1795 = vld [vmem:[%s1714 + $0x280] sm:$0xff]
  %v1796 = vld [vmem:[%s1714 + $0x288] sm:$0xff]
  %v1797 = vld [vmem:[%s1714 + $0x290] sm:$0xff]
  %v1798 = vld [vmem:[%s1714 + $0x298] sm:$0xff]
  %v1799 = vld [vmem:[%s1714 + $0x2a0] sm:$0xff]
  %v1800 = vld [vmem:[%s1714 + $0x2a8] sm:$0xff]
  %v1801 = vld [vmem:[%s1714 + $0x2b0] sm:$0xff]
  %v1802 = vld [vmem:[%s1714 + $0x2b8] sm:$0xff]
  %v1803 = vld [vmem:[%s1714 + $0x2c0] sm:$0xff]
  %v1804 = vld [vmem:[%s1714 + $0x2c8] sm:$0xff]
  %v1805 = vld [vmem:[%s1714 + $0x2d0] sm:$0xff]
  %v1806 = vld [vmem:[%s1714 + $0x2d8] sm:$0xff]
  %v1807 = vld [vmem:[%s1714 + $0x2e0] sm:$0xff]
  %v1808 = vld [vmem:[%s1714 + $0x2e8] sm:$0xff]
  %v1809 = vld [vmem:[%s1714 + $0x2f0] sm:$0xff]
  %v1810 = vld [vmem:[%s1714 + $0x2f8] sm:$0xff]
  %v1811 = vld [vmem:[%s1714 + $0x300] sm:$0xff]
  %v1812 = vld [vmem:[%s1714 + $0x308] sm:$0xff]
  %v1813 = vld [vmem:[%s1714 + $0x310] sm:$0xff]
  %v1814 = vld [vmem:[%s1714 + $0x318] sm:$0xff]
  %v1815 = vld [vmem:[%s1714 + $0x320] sm:$0xff]
  %v1816 = vld [vmem:[%s1714 + $0x328] sm:$0xff]
  %v1817 = vld [vmem:[%s1714 + $0x330] sm:$0xff]
  %v1818 = vld [vmem:[%s1714 + $0x338] sm:$0xff]
  %v1819 = vld [vmem:[%s1714 + $0x340] sm:$0xff]
  %v1820 = vld [vmem:[%s1714 + $0x348] sm:$0xff]
  %v1821 = vld [vmem:[%s1714 + $0x350] sm:$0xff]
  %v1822 = vld [vmem:[%s1714 + $0x358] sm:$0xff]
  %v1823 = vld [vmem:[%s1714 + $0x360] sm:$0xff]
  %v1824 = vld [vmem:[%s1714 + $0x368] sm:$0xff]
  %v1825 = vld [vmem:[%s1714 + $0x370] sm:$0xff]
  %v1826 = vld [vmem:[%s1714 + $0x378] sm:$0xff]
  %v1827 = vld [vmem:[%s1714 + $0x380] sm:$0xff]
  %v1828 = vld [vmem:[%s1714 + $0x388] sm:$0xff]
  %v1829 = vld [vmem:[%s1714 + $0x390] sm:$0xff]
  %v1830 = vld [vmem:[%s1714 + $0x398] sm:$0xff]
  %v1831 = vld [vmem:[%s1714 + $0x3a0] sm:$0xff]
  %v1832 = vld [vmem:[%s1714 + $0x3a8] sm:$0xff]
  %v1833 = vld [vmem:[%s1714 + $0x3b0] sm:$0xff]
  %v1834 = vld [vmem:[%s1714 + $0x3b8] sm:$0xff]
  %v1835 = vld [vmem:[%s1714 + $0x3c0] sm:$0xff]
  %v1836 = vld [vmem:[%s1714 + $0x3c8] sm:$0xff]
  %v1837 = vld [vmem:[%s1714 + $0x3d0] sm:$0xff]
  %v1838 = vld [vmem:[%s1714 + $0x3d8] sm:$0xff]
  %v1839 = vld [vmem:[%s1714 + $0x3e0] sm:$0xff]
  %v1840 = vld [vmem:[%s1714 + $0x3e8] sm:$0xff]
  %v1841 = vld [vmem:[%s1714 + $0x3f0] sm:$0xff]
  %v1842 = vld [vmem:[%s1714 + $0x3f8] sm:$0xff]
  %v1971 = vunpack.c.l.b16 %v1715
  %v1972 = vunpack.c.h.b16 %v1715
  %v1973 = vunpack.c.l.b16 %v1716
  %v1974 = vunpack.c.h.b16 %v1716
  %v1975 = vunpack.c.l.b16 %v1717
  %v1976 = vunpack.c.h.b16 %v1717
  %v1977 = vunpack.c.l.b16 %v1718
  %v1978 = vunpack.c.h.b16 %v1718
  %v1979 = vunpack.c.l.b16 %v1719
  %v1980 = vunpack.c.h.b16 %v1719
  %v1981 = vunpack.c.l.b16 %v1720
  %v1982 = vunpack.c.h.b16 %v1720
  %v1983 = vunpack.c.l.b16 %v1721
  %v1984 = vunpack.c.h.b16 %v1721
  %v1985 = vunpack.c.l.b16 %v1722
  %v1986 = vunpack.c.h.b16 %v1722
  %v1987 = vunpack.c.l.b16 %v1723
  %v1988 = vunpack.c.h.b16 %v1723
  %v1989 = vunpack.c.l.b16 %v1724
  %v1990 = vunpack.c.h.b16 %v1724
  %v1991 = vunpack.c.l.b16 %v1725
  %v1992 = vunpack.c.h.b16 %v1725
  %v1993 = vunpack.c.l.b16 %v1726
  %v1994 = vunpack.c.h.b16 %v1726
  %v1995 = vunpack.c.l.b16 %v1727
  %v1996 = vunpack.c.h.b16 %v1727
  %v1997 = vunpack.c.l.b16 %v1728
  %v1998 = vunpack.c.h.b16 %v1728
  %v1999 = vunpack.c.l.b16 %v1729
  %v2000 = vunpack.c.h.b16 %v1729
  %v2001 = vunpack.c.l.b16 %v1730
  %v2002 = vunpack.c.h.b16 %v1730
  %v2003 = vunpack.c.l.b16 %v1731
  %v2004 = vunpack.c.h.b16 %v1731
  %v2005 = vunpack.c.l.b16 %v1732
  %v2006 = vunpack.c.h.b16 %v1732
  %v2007 = vunpack.c.l.b16 %v1733
  %v2008 = vunpack.c.h.b16 %v1733
  %v2009 = vunpack.c.l.b16 %v1734
  %v2010 = vunpack.c.h.b16 %v1734
  %v2011 = vunpack.c.l.b16 %v1735
  %v2012 = vunpack.c.h.b16 %v1735
  %v2013 = vunpack.c.l.b16 %v1736
  %v2014 = vunpack.c.h.b16 %v1736
  %v2015 = vunpack.c.l.b16 %v1737
  %v2016 = vunpack.c.h.b16 %v1737
  %v2017 = vunpack.c.l.b16 %v1738
  %v2018 = vunpack.c.h.b16 %v1738
  %v2019 = vunpack.c.l.b16 %v1739
  %v2020 = vunpack.c.h.b16 %v1739
  %v2021 = vunpack.c.l.b16 %v1740
  %v2022 = vunpack.c.h.b16 %v1740
  %v2023 = vunpack.c.l.b16 %v1741
  %v2024 = vunpack.c.h.b16 %v1741
  %v2025 = vunpack.c.l.b16 %v1742
  %v2026 = vunpack.c.h.b16 %v1742
  %v2027 = vunpack.c.l.b16 %v1743
  %v2028 = vunpack.c.h.b16 %v1743
  %v2029 = vunpack.c.l.b16 %v1744
  %v2030 = vunpack.c.h.b16 %v1744
  %v2031 = vunpack.c.l.b16 %v1745
  %v2032 = vunpack.c.h.b16 %v1745
  %v2033 = vunpack.c.l.b16 %v1746
  %v2034 = vunpack.c.h.b16 %v1746
  %v2035 = vunpack.c.l.b16 %v1747
  %v2036 = vunpack.c.h.b16 %v1747
  %v2037 = vunpack.c.l.b16 %v1748
  %v2038 = vunpack.c.h.b16 %v1748
  %v2039 = vunpack.c.l.b16 %v1749
  %v2040 = vunpack.c.h.b16 %v1749
  %v2041 = vunpack.c.l.b16 %v1750
  %v2042 = vunpack.c.h.b16 %v1750
  %v2043 = vunpack.c.l.b16 %v1751
  %v2044 = vunpack.c.h.b16 %v1751
  %v2045 = vunpack.c.l.b16 %v1752
  %v2046 = vunpack.c.h.b16 %v1752
  %v2047 = vunpack.c.l.b16 %v1753
  %v2048 = vunpack.c.h.b16 %v1753
  %v2049 = vunpack.c.l.b16 %v1754
  %v2050 = vunpack.c.h.b16 %v1754
  %v2051 = vunpack.c.l.b16 %v1755
  %v2052 = vunpack.c.h.b16 %v1755
  %v2053 = vunpack.c.l.b16 %v1756
  %v2054 = vunpack.c.h.b16 %v1756
  %v2055 = vunpack.c.l.b16 %v1757
  %v2056 = vunpack.c.h.b16 %v1757
  %v2057 = vunpack.c.l.b16 %v1758
  %v2058 = vunpack.c.h.b16 %v1758
  %v2059 = vunpack.c.l.b16 %v1759
  %v2060 = vunpack.c.h.b16 %v1759
  %v2061 = vunpack.c.l.b16 %v1760
  %v2062 = vunpack.c.h.b16 %v1760
  %v2063 = vunpack.c.l.b16 %v1761
  %v2064 = vunpack.c.h.b16 %v1761
  %v2065 = vunpack.c.l.b16 %v1762
  %v2066 = vunpack.c.h.b16 %v1762
  %v2067 = vunpack.c.l.b16 %v1763
  %v2068 = vunpack.c.h.b16 %v1763
  %v2069 = vunpack.c.l.b16 %v1764
  %v2070 = vunpack.c.h.b16 %v1764
  %v2071 = vunpack.c.l.b16 %v1765
  %v2072 = vunpack.c.h.b16 %v1765
  %v2073 = vunpack.c.l.b16 %v1766
  %v2074 = vunpack.c.h.b16 %v1766
  %v2075 = vunpack.c.l.b16 %v1767
  %v2076 = vunpack.c.h.b16 %v1767
  %v2077 = vunpack.c.l.b16 %v1768
  %v2078 = vunpack.c.h.b16 %v1768
  %v2079 = vunpack.c.l.b16 %v1769
  %v2080 = vunpack.c.h.b16 %v1769
  %v2081 = vunpack.c.l.b16 %v1770
  %v2082 = vunpack.c.h.b16 %v1770
  %v2083 = vunpack.c.l.b16 %v1771
  %v2084 = vunpack.c.h.b16 %v1771
  %v2085 = vunpack.c.l.b16 %v1772
  %v2086 = vunpack.c.h.b16 %v1772
  %v2087 = vunpack.c.l.b16 %v1773
  %v2088 = vunpack.c.h.b16 %v1773
  %v2089 = vunpack.c.l.b16 %v1774
  %v2090 = vunpack.c.h.b16 %v1774
  %v2091 = vunpack.c.l.b16 %v1775
  %v2092 = vunpack.c.h.b16 %v1775
  %v2093 = vunpack.c.l.b16 %v1776
  %v2094 = vunpack.c.h.b16 %v1776
  %v2095 = vunpack.c.l.b16 %v1777
  %v2096 = vunpack.c.h.b16 %v1777
  %v2097 = vunpack.c.l.b16 %v1778
  %v2098 = vunpack.c.h.b16 %v1778
  %v2099 = vunpack.c.l.b16 %v1779
  %v2100 = vunpack.c.h.b16 %v1779
  %v2101 = vunpack.c.l.b16 %v1780
  %v2102 = vunpack.c.h.b16 %v1780
  %v2103 = vunpack.c.l.b16 %v1781
  %v2104 = vunpack.c.h.b16 %v1781
  %v2105 = vunpack.c.l.b16 %v1782
  %v2106 = vunpack.c.h.b16 %v1782
  %v2107 = vunpack.c.l.b16 %v1783
  %v2108 = vunpack.c.h.b16 %v1783
  %v2109 = vunpack.c.l.b16 %v1784
  %v2110 = vunpack.c.h.b16 %v1784
  %v2111 = vunpack.c.l.b16 %v1785
  %v2112 = vunpack.c.h.b16 %v1785
  %v2113 = vunpack.c.l.b16 %v1786
  %v2114 = vunpack.c.h.b16 %v1786
  %v2115 = vunpack.c.l.b16 %v1787
  %v2116 = vunpack.c.h.b16 %v1787
  %v2117 = vunpack.c.l.b16 %v1788
  %v2118 = vunpack.c.h.b16 %v1788
  %v2119 = vunpack.c.l.b16 %v1789
  %v2120 = vunpack.c.h.b16 %v1789
  %v2121 = vunpack.c.l.b16 %v1790
  %v2122 = vunpack.c.h.b16 %v1790
  %v2123 = vunpack.c.l.b16 %v1791
  %v2124 = vunpack.c.h.b16 %v1791
  %v2125 = vunpack.c.l.b16 %v1792
  %v2126 = vunpack.c.h.b16 %v1792
  %v2127 = vunpack.c.l.b16 %v1793
  %v2128 = vunpack.c.h.b16 %v1793
  %v2129 = vunpack.c.l.b16 %v1794
  %v2130 = vunpack.c.h.b16 %v1794
  %v2131 = vunpack.c.l.b16 %v1795
  %v2132 = vunpack.c.h.b16 %v1795
  %v2133 = vunpack.c.l.b16 %v1796
  %v2134 = vunpack.c.h.b16 %v1796
  %v2135 = vunpack.c.l.b16 %v1797
  %v2136 = vunpack.c.h.b16 %v1797
  %v2137 = vunpack.c.l.b16 %v1798
  %v2138 = vunpack.c.h.b16 %v1798
  %v2139 = vunpack.c.l.b16 %v1799
  %v2140 = vunpack.c.h.b16 %v1799
  %v2141 = vunpack.c.l.b16 %v1800
  %v2142 = vunpack.c.h.b16 %v1800
  %v2143 = vunpack.c.l.b16 %v1801
  %v2144 = vunpack.c.h.b16 %v1801
  %v2145 = vunpack.c.l.b16 %v1802
  %v2146 = vunpack.c.h.b16 %v1802
  %v2147 = vunpack.c.l.b16 %v1803
  %v2148 = vunpack.c.h.b16 %v1803
  %v2149 = vunpack.c.l.b16 %v1804
  %v2150 = vunpack.c.h.b16 %v1804
  %v2151 = vunpack.c.l.b16 %v1805
  %v2152 = vunpack.c.h.b16 %v1805
  %v2153 = vunpack.c.l.b16 %v1806
  %v2154 = vunpack.c.h.b16 %v1806
  %v2155 = vunpack.c.l.b16 %v1807
  %v2156 = vunpack.c.h.b16 %v1807
  %v2157 = vunpack.c.l.b16 %v1808
  %v2158 = vunpack.c.h.b16 %v1808
  %v2159 = vunpack.c.l.b16 %v1809
  %v2160 = vunpack.c.h.b16 %v1809
  %v2161 = vunpack.c.l.b16 %v1810
  %v2162 = vunpack.c.h.b16 %v1810
  %v2163 = vunpack.c.l.b16 %v1811
  %v2164 = vunpack.c.h.b16 %v1811
  %v2165 = vunpack.c.l.b16 %v1812
  %v2166 = vunpack.c.h.b16 %v1812
  %v2167 = vunpack.c.l.b16 %v1813
  %v2168 = vunpack.c.h.b16 %v1813
  %v2169 = vunpack.c.l.b16 %v1814
  %v2170 = vunpack.c.h.b16 %v1814
  %v2171 = vunpack.c.l.b16 %v1815
  %v2172 = vunpack.c.h.b16 %v1815
  %v2173 = vunpack.c.l.b16 %v1816
  %v2174 = vunpack.c.h.b16 %v1816
  %v2175 = vunpack.c.l.b16 %v1817
  %v2176 = vunpack.c.h.b16 %v1817
  %v2177 = vunpack.c.l.b16 %v1818
  %v2178 = vunpack.c.h.b16 %v1818
  %v2179 = vunpack.c.l.b16 %v1819
  %v2180 = vunpack.c.h.b16 %v1819
  %v2181 = vunpack.c.l.b16 %v1820
  %v2182 = vunpack.c.h.b16 %v1820
  %v2183 = vunpack.c.l.b16 %v1821
  %v2184 = vunpack.c.h.b16 %v1821
  %v2185 = vunpack.c.l.b16 %v1822
  %v2186 = vunpack.c.h.b16 %v1822
  %v2187 = vunpack.c.l.b16 %v1823
  %v2188 = vunpack.c.h.b16 %v1823
  %v2189 = vunpack.c.l.b16 %v1824
  %v2190 = vunpack.c.h.b16 %v1824
  %v2191 = vunpack.c.l.b16 %v1825
  %v2192 = vunpack.c.h.b16 %v1825
  %v2193 = vunpack.c.l.b16 %v1826
  %v2194 = vunpack.c.h.b16 %v1826
  %v2195 = vunpack.c.l.b16 %v1827
  %v2196 = vunpack.c.h.b16 %v1827
  %v2197 = vunpack.c.l.b16 %v1828
  %v2198 = vunpack.c.h.b16 %v1828
  %v2199 = vunpack.c.l.b16 %v1829
  %v2200 = vunpack.c.h.b16 %v1829
  %v2201 = vunpack.c.l.b16 %v1830
  %v2202 = vunpack.c.h.b16 %v1830
  %v2203 = vunpack.c.l.b16 %v1831
  %v2204 = vunpack.c.h.b16 %v1831
  %v2205 = vunpack.c.l.b16 %v1832
  %v2206 = vunpack.c.h.b16 %v1832
  %v2207 = vunpack.c.l.b16 %v1833
  %v2208 = vunpack.c.h.b16 %v1833
  %v2209 = vunpack.c.l.b16 %v1834
  %v2210 = vunpack.c.h.b16 %v1834
  %v2211 = vunpack.c.l.b16 %v1835
  %v2212 = vunpack.c.h.b16 %v1835
  %v2213 = vunpack.c.l.b16 %v1836
  %v2214 = vunpack.c.h.b16 %v1836
  %v2215 = vunpack.c.l.b16 %v1837
  %v2216 = vunpack.c.h.b16 %v1837
  %v2217 = vunpack.c.l.b16 %v1838
  %v2218 = vunpack.c.h.b16 %v1838
  %v2219 = vunpack.c.l.b16 %v1839
  %v2220 = vunpack.c.h.b16 %v1839
  %v2221 = vunpack.c.l.b16 %v1840
  %v2222 = vunpack.c.h.b16 %v1840
  %v2223 = vunpack.c.l.b16 %v1841
  %v2224 = vunpack.c.h.b16 %v1841
  %v2225 = vunpack.c.l.b16 %v1842
  %v2226 = vunpack.c.h.b16 %v1842
  %v2227 = vpack.c.b16 %v1975, %v1971
  %v2228 = vpack.c.b16 %v1976, %v1972
  %v2229 = vpack.c.b16 %v1977, %v1973
  %v2230 = vpack.c.b16 %v1978, %v1974
  %v2231 = vpack.c.b16 %v1983, %v1979
  %v2232 = vpack.c.b16 %v1984, %v1980
  %v2233 = vpack.c.b16 %v1985, %v1981
  %v2234 = vpack.c.b16 %v1986, %v1982
  %v2235 = vpack.c.b16 %v1991, %v1987
  %v2236 = vpack.c.b16 %v1992, %v1988
  %v2237 = vpack.c.b16 %v1993, %v1989
  %v2238 = vpack.c.b16 %v1994, %v1990
  %v2239 = vpack.c.b16 %v1999, %v1995
  %v2240 = vpack.c.b16 %v2000, %v1996
  %v2241 = vpack.c.b16 %v2001, %v1997
  %v2242 = vpack.c.b16 %v2002, %v1998
  %v2243 = vpack.c.b16 %v2007, %v2003
  %v2244 = vpack.c.b16 %v2008, %v2004
  %v2245 = vpack.c.b16 %v2009, %v2005
  %v2246 = vpack.c.b16 %v2010, %v2006
  %v2247 = vpack.c.b16 %v2015, %v2011
  %v2248 = vpack.c.b16 %v2016, %v2012
  %v2249 = vpack.c.b16 %v2017, %v2013
  %v2250 = vpack.c.b16 %v2018, %v2014
  %v2251 = vpack.c.b16 %v2023, %v2019
  %v2252 = vpack.c.b16 %v2024, %v2020
  %v2253 = vpack.c.b16 %v2025, %v2021
  %v2254 = vpack.c.b16 %v2026, %v2022
  %v2255 = vpack.c.b16 %v2031, %v2027
  %v2256 = vpack.c.b16 %v2032, %v2028
  %v2257 = vpack.c.b16 %v2033, %v2029
  %v2258 = vpack.c.b16 %v2034, %v2030
  %v2259 = vpack.c.b16 %v2039, %v2035
  %v2260 = vpack.c.b16 %v2040, %v2036
  %v2261 = vpack.c.b16 %v2041, %v2037
  %v2262 = vpack.c.b16 %v2042, %v2038
  %v2263 = vpack.c.b16 %v2047, %v2043
  %v2264 = vpack.c.b16 %v2048, %v2044
  %v2265 = vpack.c.b16 %v2049, %v2045
  %v2266 = vpack.c.b16 %v2050, %v2046
  %v2267 = vpack.c.b16 %v2055, %v2051
  %v2268 = vpack.c.b16 %v2056, %v2052
  %v2269 = vpack.c.b16 %v2057, %v2053
  %v2270 = vpack.c.b16 %v2058, %v2054
  %v2271 = vpack.c.b16 %v2063, %v2059
  %v2272 = vpack.c.b16 %v2064, %v2060
  %v2273 = vpack.c.b16 %v2065, %v2061
  %v2274 = vpack.c.b16 %v2066, %v2062
  %v2275 = vpack.c.b16 %v2071, %v2067
  %v2276 = vpack.c.b16 %v2072, %v2068
  %v2277 = vpack.c.b16 %v2073, %v2069
  %v2278 = vpack.c.b16 %v2074, %v2070
  %v2279 = vpack.c.b16 %v2079, %v2075
  %v2280 = vpack.c.b16 %v2080, %v2076
  %v2281 = vpack.c.b16 %v2081, %v2077
  %v2282 = vpack.c.b16 %v2082, %v2078
  %v2283 = vpack.c.b16 %v2087, %v2083
  %v2284 = vpack.c.b16 %v2088, %v2084
  %v2285 = vpack.c.b16 %v2089, %v2085
  %v2286 = vpack.c.b16 %v2090, %v2086
  %v2287 = vpack.c.b16 %v2095, %v2091
  %v2288 = vpack.c.b16 %v2096, %v2092
  %v2289 = vpack.c.b16 %v2097, %v2093
  %v2290 = vpack.c.b16 %v2098, %v2094
  %v2291 = vpack.c.b16 %v2103, %v2099
  %v2292 = vpack.c.b16 %v2104, %v2100
  %v2293 = vpack.c.b16 %v2105, %v2101
  %v2294 = vpack.c.b16 %v2106, %v2102
  %v2295 = vpack.c.b16 %v2111, %v2107
  %v2296 = vpack.c.b16 %v2112, %v2108
  %v2297 = vpack.c.b16 %v2113, %v2109
  %v2298 = vpack.c.b16 %v2114, %v2110
  %v2299 = vpack.c.b16 %v2119, %v2115
  %v2300 = vpack.c.b16 %v2120, %v2116
  %v2301 = vpack.c.b16 %v2121, %v2117
  %v2302 = vpack.c.b16 %v2122, %v2118
  %v2303 = vpack.c.b16 %v2127, %v2123
  %v2304 = vpack.c.b16 %v2128, %v2124
  %v2305 = vpack.c.b16 %v2129, %v2125
  %v2306 = vpack.c.b16 %v2130, %v2126
  %v2307 = vpack.c.b16 %v2135, %v2131
  %v2308 = vpack.c.b16 %v2136, %v2132
  %v2309 = vpack.c.b16 %v2137, %v2133
  %v2310 = vpack.c.b16 %v2138, %v2134
  %v2311 = vpack.c.b16 %v2143, %v2139
  %v2312 = vpack.c.b16 %v2144, %v2140
  %v2313 = vpack.c.b16 %v2145, %v2141
  %v2314 = vpack.c.b16 %v2146, %v2142
  %v2315 = vpack.c.b16 %v2151, %v2147
  %v2316 = vpack.c.b16 %v2152, %v2148
  %v2317 = vpack.c.b16 %v2153, %v2149
  %v2318 = vpack.c.b16 %v2154, %v2150
  %v2319 = vpack.c.b16 %v2159, %v2155
  %v2320 = vpack.c.b16 %v2160, %v2156
  %v2321 = vpack.c.b16 %v2161, %v2157
  %v2322 = vpack.c.b16 %v2162, %v2158
  %v2323 = vpack.c.b16 %v2167, %v2163
  %v2324 = vpack.c.b16 %v2168, %v2164
  %v2325 = vpack.c.b16 %v2169, %v2165
  %v2326 = vpack.c.b16 %v2170, %v2166
  %v2327 = vpack.c.b16 %v2175, %v2171
  %v2328 = vpack.c.b16 %v2176, %v2172
  %v2329 = vpack.c.b16 %v2177, %v2173
  %v2330 = vpack.c.b16 %v2178, %v2174
  %v2331 = vpack.c.b16 %v2183, %v2179
  %v2332 = vpack.c.b16 %v2184, %v2180
  %v2333 = vpack.c.b16 %v2185, %v2181
  %v2334 = vpack.c.b16 %v2186, %v2182
  %v2335 = vpack.c.b16 %v2191, %v2187
  %v2336 = vpack.c.b16 %v2192, %v2188
  %v2337 = vpack.c.b16 %v2193, %v2189
  %v2338 = vpack.c.b16 %v2194, %v2190
  %v2339 = vpack.c.b16 %v2199, %v2195
  %v2340 = vpack.c.b16 %v2200, %v2196
  %v2341 = vpack.c.b16 %v2201, %v2197
  %v2342 = vpack.c.b16 %v2202, %v2198
  %v2343 = vpack.c.b16 %v2207, %v2203
  %v2344 = vpack.c.b16 %v2208, %v2204
  %v2345 = vpack.c.b16 %v2209, %v2205
  %v2346 = vpack.c.b16 %v2210, %v2206
  %v2347 = vpack.c.b16 %v2215, %v2211
  %v2348 = vpack.c.b16 %v2216, %v2212
  %v2349 = vpack.c.b16 %v2217, %v2213
  %v2350 = vpack.c.b16 %v2218, %v2214
  %v2351 = vpack.c.b16 %v2223, %v2219
  %v2352 = vpack.c.b16 %v2224, %v2220
  %v2353 = vpack.c.b16 %v2225, %v2221
  %v2354 = vpack.c.b16 %v2226, %v2222
  %2483 = vmatpush.bf16.msra.mxu0 %v981
  %2484 = vmatpush.bf16.msra.mxu0 %v980
  %2485 = vmatpush.bf16.msra.mxu0 %v979
  %2486 = vmatpush.bf16.msra.mxu0 %v978
  %2487 = vmatpush.bf16.msra.mxu0 %v977
  %2488 = vmatpush.bf16.msra.mxu0 %v976
  %2489 = vmatpush.bf16.msra.mxu0 %v975
  %2490 = vmatpush.bf16.msra.mxu0 %v974
  %2491 = vmatmul.bf16.gmra.mxu0 %v2227
  %v2492 = vpop.f32.mrf.mxu0
  %v2493 = vadd.f32 0.0, %v2492
  %v2494 = vpop.f32.mrf.mxu0
  %v2495 = vadd.f32 0.0, %v2494
  %2496 = vmatmul.bf16.gmra.mxu0 %v2231
  %v2497 = vpop.f32.mrf.mxu0
  %v2498 = vadd.f32 0.0, %v2497
  %v2499 = vpop.f32.mrf.mxu0
  %v2500 = vadd.f32 0.0, %v2499
  %2501 = vmatmul.bf16.gmra.mxu0 %v2235
  %v2502 = vpop.f32.mrf.mxu0
  %v2503 = vadd.f32 0.0, %v2502
  %v2504 = vpop.f32.mrf.mxu0
  %v2505 = vadd.f32 0.0, %v2504
  %2506 = vmatmul.bf16.gmra.mxu0 %v2239
  %v2507 = vpop.f32.mrf.mxu0
  %v2508 = vadd.f32 0.0, %v2507
  %v2509 = vpop.f32.mrf.mxu0
  %v2510 = vadd.f32 0.0, %v2509
  %2511 = vmatmul.bf16.gmra.mxu0 %v2243
  %v2512 = vpop.f32.mrf.mxu0
  %v2513 = vadd.f32 0.0, %v2512
  %v2514 = vpop.f32.mrf.mxu0
  %v2515 = vadd.f32 0.0, %v2514
  %2516 = vmatmul.bf16.gmra.mxu0 %v2247
  %v2517 = vpop.f32.mrf.mxu0
  %v2518 = vadd.f32 0.0, %v2517
  %v2519 = vpop.f32.mrf.mxu0
  %v2520 = vadd.f32 0.0, %v2519
  %2521 = vmatmul.bf16.gmra.mxu0 %v2251
  %v2522 = vpop.f32.mrf.mxu0
  %v2523 = vadd.f32 0.0, %v2522
  %v2524 = vpop.f32.mrf.mxu0
  %v2525 = vadd.f32 0.0, %v2524
  %2526 = vmatmul.bf16.gmra.mxu0 %v2255
  %v2527 = vpop.f32.mrf.mxu0
  %v2528 = vadd.f32 0.0, %v2527
  %v2529 = vpop.f32.mrf.mxu0
  %v2530 = vadd.f32 0.0, %v2529
  %2531 = vmatmul.bf16.gmra.mxu0 %v2259
  %v2532 = vpop.f32.mrf.mxu0
  %v2533 = vadd.f32 0.0, %v2532
  %v2534 = vpop.f32.mrf.mxu0
  %v2535 = vadd.f32 0.0, %v2534
  %2536 = vmatmul.bf16.gmra.mxu0 %v2263
  %v2537 = vpop.f32.mrf.mxu0
  %v2538 = vadd.f32 0.0, %v2537
  %v2539 = vpop.f32.mrf.mxu0
  %v2540 = vadd.f32 0.0, %v2539
  %2541 = vmatmul.bf16.gmra.mxu0 %v2267
  %v2542 = vpop.f32.mrf.mxu0
  %v2543 = vadd.f32 0.0, %v2542
  %v2544 = vpop.f32.mrf.mxu0
  %v2545 = vadd.f32 0.0, %v2544
  %2546 = vmatmul.bf16.gmra.mxu0 %v2271
  %v2547 = vpop.f32.mrf.mxu0
  %v2548 = vadd.f32 0.0, %v2547
  %v2549 = vpop.f32.mrf.mxu0
  %v2550 = vadd.f32 0.0, %v2549
  %2551 = vmatmul.bf16.gmra.mxu0 %v2275
  %v2552 = vpop.f32.mrf.mxu0
  %v2553 = vadd.f32 0.0, %v2552
  %v2554 = vpop.f32.mrf.mxu0
  %v2555 = vadd.f32 0.0, %v2554
  %2556 = vmatmul.bf16.gmra.mxu0 %v2279
  %v2557 = vpop.f32.mrf.mxu0
  %v2558 = vadd.f32 0.0, %v2557
  %v2559 = vpop.f32.mrf.mxu0
  %v2560 = vadd.f32 0.0, %v2559
  %2561 = vmatmul.bf16.gmra.mxu0 %v2283
  %v2562 = vpop.f32.mrf.mxu0
  %v2563 = vadd.f32 0.0, %v2562
  %v2564 = vpop.f32.mrf.mxu0
  %v2565 = vadd.f32 0.0, %v2564
  %2566 = vmatmul.bf16.gmra.mxu0 %v2287
  %v2567 = vpop.f32.mrf.mxu0
  %v2568 = vadd.f32 0.0, %v2567
  %v2569 = vpop.f32.mrf.mxu0
  %v2570 = vadd.f32 0.0, %v2569
  %2571 = vmatmul.bf16.gmra.mxu0 %v2291
  %v2572 = vpop.f32.mrf.mxu0
  %v2573 = vadd.f32 0.0, %v2572
  %v2574 = vpop.f32.mrf.mxu0
  %v2575 = vadd.f32 0.0, %v2574
  %2576 = vmatmul.bf16.gmra.mxu0 %v2295
  %v2577 = vpop.f32.mrf.mxu0
  %v2578 = vadd.f32 0.0, %v2577
  %v2579 = vpop.f32.mrf.mxu0
  %v2580 = vadd.f32 0.0, %v2579
  %2581 = vmatmul.bf16.gmra.mxu0 %v2299
  %v2582 = vpop.f32.mrf.mxu0
  %v2583 = vadd.f32 0.0, %v2582
  %v2584 = vpop.f32.mrf.mxu0
  %v2585 = vadd.f32 0.0, %v2584
  %2586 = vmatmul.bf16.gmra.mxu0 %v2303
  %v2587 = vpop.f32.mrf.mxu0
  %v2588 = vadd.f32 0.0, %v2587
  %v2589 = vpop.f32.mrf.mxu0
  %v2590 = vadd.f32 0.0, %v2589
  %2591 = vmatmul.bf16.gmra.mxu0 %v2307
  %v2592 = vpop.f32.mrf.mxu0
  %v2593 = vadd.f32 0.0, %v2592
  %v2594 = vpop.f32.mrf.mxu0
  %v2595 = vadd.f32 0.0, %v2594
  %2596 = vmatmul.bf16.gmra.mxu0 %v2311
  %v2597 = vpop.f32.mrf.mxu0
  %v2598 = vadd.f32 0.0, %v2597
  %v2599 = vpop.f32.mrf.mxu0
  %v2600 = vadd.f32 0.0, %v2599
  %2601 = vmatmul.bf16.gmra.mxu0 %v2315
  %v2602 = vpop.f32.mrf.mxu0
  %v2603 = vadd.f32 0.0, %v2602
  %v2604 = vpop.f32.mrf.mxu0
  %v2605 = vadd.f32 0.0, %v2604
  %2606 = vmatmul.bf16.gmra.mxu0 %v2319
  %v2607 = vpop.f32.mrf.mxu0
  %v2608 = vadd.f32 0.0, %v2607
  %v2609 = vpop.f32.mrf.mxu0
  %v2610 = vadd.f32 0.0, %v2609
  %2611 = vmatmul.bf16.gmra.mxu0 %v2323
  %v2612 = vpop.f32.mrf.mxu0
  %v2613 = vadd.f32 0.0, %v2612
  %v2614 = vpop.f32.mrf.mxu0
  %v2615 = vadd.f32 0.0, %v2614
  %2616 = vmatmul.bf16.gmra.mxu0 %v2327
  %v2617 = vpop.f32.mrf.mxu0
  %v2618 = vadd.f32 0.0, %v2617
  %v2619 = vpop.f32.mrf.mxu0
  %v2620 = vadd.f32 0.0, %v2619
  %2621 = vmatmul.bf16.gmra.mxu0 %v2331
  %v2622 = vpop.f32.mrf.mxu0
  %v2623 = vadd.f32 0.0, %v2622
  %v2624 = vpop.f32.mrf.mxu0
  %v2625 = vadd.f32 0.0, %v2624
  %2626 = vmatmul.bf16.gmra.mxu0 %v2335
  %v2627 = vpop.f32.mrf.mxu0
  %v2628 = vadd.f32 0.0, %v2627
  %v2629 = vpop.f32.mrf.mxu0
  %v2630 = vadd.f32 0.0, %v2629
  %2631 = vmatmul.bf16.gmra.mxu0 %v2339
  %v2632 = vpop.f32.mrf.mxu0
  %v2633 = vadd.f32 0.0, %v2632
  %v2634 = vpop.f32.mrf.mxu0
  %v2635 = vadd.f32 0.0, %v2634
  %2636 = vmatmul.bf16.gmra.mxu0 %v2343
  %v2637 = vpop.f32.mrf.mxu0
  %v2638 = vadd.f32 0.0, %v2637
  %v2639 = vpop.f32.mrf.mxu0
  %v2640 = vadd.f32 0.0, %v2639
  %2641 = vmatmul.bf16.gmra.mxu0 %v2347
  %v2642 = vpop.f32.mrf.mxu0
  %v2643 = vadd.f32 0.0, %v2642
  %v2644 = vpop.f32.mrf.mxu0
  %v2645 = vadd.f32 0.0, %v2644
  %2646 = vmatmul.bf16.gmra.mxu0 %v2351
  %v2647 = vpop.f32.mrf.mxu0
  %v2648 = vadd.f32 0.0, %v2647
  %v2649 = vpop.f32.mrf.mxu0
  %v2650 = vadd.f32 0.0, %v2649
  %2651 = vdwg.mxu0
  %2652 = vmatpush.bf16.msra.mxu0 %v989
  %2653 = vmatpush.bf16.msra.mxu0 %v988
  %2654 = vmatpush.bf16.msra.mxu0 %v987
  %2655 = vmatpush.bf16.msra.mxu0 %v986
  %2656 = vmatpush.bf16.msra.mxu0 %v985
  %2657 = vmatpush.bf16.msra.mxu0 %v984
  %2658 = vmatpush.bf16.msra.mxu0 %v983
  %2659 = vmatpush.bf16.msra.mxu0 %v982
  %2660 = vmatmul.bf16.gmra.mxu0 %v2228
  %v2661 = vpop.f32.mrf.mxu0
  %v2662 = vadd.f32 %v2493, %v2661
  %v2663 = vpop.f32.mrf.mxu0
  %v2664 = vadd.f32 %v2495, %v2663
  %2665 = vmatmul.bf16.gmra.mxu0 %v2232
  %v2666 = vpop.f32.mrf.mxu0
  %v2667 = vadd.f32 %v2498, %v2666
  %v2668 = vpop.f32.mrf.mxu0
  %v2669 = vadd.f32 %v2500, %v2668
  %2670 = vmatmul.bf16.gmra.mxu0 %v2236
  %v2671 = vpop.f32.mrf.mxu0
  %v2672 = vadd.f32 %v2503, %v2671
  %v2673 = vpop.f32.mrf.mxu0
  %v2674 = vadd.f32 %v2505, %v2673
  %2675 = vmatmul.bf16.gmra.mxu0 %v2240
  %v2676 = vpop.f32.mrf.mxu0
  %v2677 = vadd.f32 %v2508, %v2676
  %v2678 = vpop.f32.mrf.mxu0
  %v2679 = vadd.f32 %v2510, %v2678
  %2680 = vmatmul.bf16.gmra.mxu0 %v2244
  %v2681 = vpop.f32.mrf.mxu0
  %v2682 = vadd.f32 %v2513, %v2681
  %v2683 = vpop.f32.mrf.mxu0
  %v2684 = vadd.f32 %v2515, %v2683
  %2685 = vmatmul.bf16.gmra.mxu0 %v2248
  %v2686 = vpop.f32.mrf.mxu0
  %v2687 = vadd.f32 %v2518, %v2686
  %v2688 = vpop.f32.mrf.mxu0
  %v2689 = vadd.f32 %v2520, %v2688
  %2690 = vmatmul.bf16.gmra.mxu0 %v2252
  %v2691 = vpop.f32.mrf.mxu0
  %v2692 = vadd.f32 %v2523, %v2691
  %v2693 = vpop.f32.mrf.mxu0
  %v2694 = vadd.f32 %v2525, %v2693
  %2695 = vmatmul.bf16.gmra.mxu0 %v2256
  %v2696 = vpop.f32.mrf.mxu0
  %v2697 = vadd.f32 %v2528, %v2696
  %v2698 = vpop.f32.mrf.mxu0
  %v2699 = vadd.f32 %v2530, %v2698
  %2700 = vmatmul.bf16.gmra.mxu0 %v2260
  %v2701 = vpop.f32.mrf.mxu0
  %v2702 = vadd.f32 %v2533, %v2701
  %v2703 = vpop.f32.mrf.mxu0
  %v2704 = vadd.f32 %v2535, %v2703
  %2705 = vmatmul.bf16.gmra.mxu0 %v2264
  %v2706 = vpop.f32.mrf.mxu0
  %v2707 = vadd.f32 %v2538, %v2706
  %v2708 = vpop.f32.mrf.mxu0
  %v2709 = vadd.f32 %v2540, %v2708
  %2710 = vmatmul.bf16.gmra.mxu0 %v2268
  %v2711 = vpop.f32.mrf.mxu0
  %v2712 = vadd.f32 %v2543, %v2711
  %v2713 = vpop.f32.mrf.mxu0
  %v2714 = vadd.f32 %v2545, %v2713
  %2715 = vmatmul.bf16.gmra.mxu0 %v2272
  %v2716 = vpop.f32.mrf.mxu0
  %v2717 = vadd.f32 %v2548, %v2716
  %v2718 = vpop.f32.mrf.mxu0
  %v2719 = vadd.f32 %v2550, %v2718
  %2720 = vmatmul.bf16.gmra.mxu0 %v2276
  %v2721 = vpop.f32.mrf.mxu0
  %v2722 = vadd.f32 %v2553, %v2721
  %v2723 = vpop.f32.mrf.mxu0
  %v2724 = vadd.f32 %v2555, %v2723
  %2725 = vmatmul.bf16.gmra.mxu0 %v2280
  %v2726 = vpop.f32.mrf.mxu0
  %v2727 = vadd.f32 %v2558, %v2726
  %v2728 = vpop.f32.mrf.mxu0
  %v2729 = vadd.f32 %v2560, %v2728
  %2730 = vmatmul.bf16.gmra.mxu0 %v2284
  %v2731 = vpop.f32.mrf.mxu0
  %v2732 = vadd.f32 %v2563, %v2731
  %v2733 = vpop.f32.mrf.mxu0
  %v2734 = vadd.f32 %v2565, %v2733
  %2735 = vmatmul.bf16.gmra.mxu0 %v2288
  %v2736 = vpop.f32.mrf.mxu0
  %v2737 = vadd.f32 %v2568, %v2736
  %v2738 = vpop.f32.mrf.mxu0
  %v2739 = vadd.f32 %v2570, %v2738
  %2740 = vmatmul.bf16.gmra.mxu0 %v2292
  %v2741 = vpop.f32.mrf.mxu0
  %v2742 = vadd.f32 %v2573, %v2741
  %v2743 = vpop.f32.mrf.mxu0
  %v2744 = vadd.f32 %v2575, %v2743
  %2745 = vmatmul.bf16.gmra.mxu0 %v2296
  %v2746 = vpop.f32.mrf.mxu0
  %v2747 = vadd.f32 %v2578, %v2746
  %v2748 = vpop.f32.mrf.mxu0
  %v2749 = vadd.f32 %v2580, %v2748
  %2750 = vmatmul.bf16.gmra.mxu0 %v2300
  %v2751 = vpop.f32.mrf.mxu0
  %v2752 = vadd.f32 %v2583, %v2751
  %v2753 = vpop.f32.mrf.mxu0
  %v2754 = vadd.f32 %v2585, %v2753
  %2755 = vmatmul.bf16.gmra.mxu0 %v2304
  %v2756 = vpop.f32.mrf.mxu0
  %v2757 = vadd.f32 %v2588, %v2756
  %v2758 = vpop.f32.mrf.mxu0
  %v2759 = vadd.f32 %v2590, %v2758
  %2760 = vmatmul.bf16.gmra.mxu0 %v2308
  %v2761 = vpop.f32.mrf.mxu0
  %v2762 = vadd.f32 %v2593, %v2761
  %v2763 = vpop.f32.mrf.mxu0
  %v2764 = vadd.f32 %v2595, %v2763
  %2765 = vmatmul.bf16.gmra.mxu0 %v2312
  %v2766 = vpop.f32.mrf.mxu0
  %v2767 = vadd.f32 %v2598, %v2766
  %v2768 = vpop.f32.mrf.mxu0
  %v2769 = vadd.f32 %v2600, %v2768
  %2770 = vmatmul.bf16.gmra.mxu0 %v2316
  %v2771 = vpop.f32.mrf.mxu0
  %v2772 = vadd.f32 %v2603, %v2771
  %v2773 = vpop.f32.mrf.mxu0
  %v2774 = vadd.f32 %v2605, %v2773
  %2775 = vmatmul.bf16.gmra.mxu0 %v2320
  %v2776 = vpop.f32.mrf.mxu0
  %v2777 = vadd.f32 %v2608, %v2776
  %v2778 = vpop.f32.mrf.mxu0
  %v2779 = vadd.f32 %v2610, %v2778
  %2780 = vmatmul.bf16.gmra.mxu0 %v2324
  %v2781 = vpop.f32.mrf.mxu0
  %v2782 = vadd.f32 %v2613, %v2781
  %v2783 = vpop.f32.mrf.mxu0
  %v2784 = vadd.f32 %v2615, %v2783
  %2785 = vmatmul.bf16.gmra.mxu0 %v2328
  %v2786 = vpop.f32.mrf.mxu0
  %v2787 = vadd.f32 %v2618, %v2786
  %v2788 = vpop.f32.mrf.mxu0
  %v2789 = vadd.f32 %v2620, %v2788
  %2790 = vmatmul.bf16.gmra.mxu0 %v2332
  %v2791 = vpop.f32.mrf.mxu0
  %v2792 = vadd.f32 %v2623, %v2791
  %v2793 = vpop.f32.mrf.mxu0
  %v2794 = vadd.f32 %v2625, %v2793
  %2795 = vmatmul.bf16.gmra.mxu0 %v2336
  %v2796 = vpop.f32.mrf.mxu0
  %v2797 = vadd.f32 %v2628, %v2796
  %v2798 = vpop.f32.mrf.mxu0
  %v2799 = vadd.f32 %v2630, %v2798
  %2800 = vmatmul.bf16.gmra.mxu0 %v2340
  %v2801 = vpop.f32.mrf.mxu0
  %v2802 = vadd.f32 %v2633, %v2801
  %v2803 = vpop.f32.mrf.mxu0
  %v2804 = vadd.f32 %v2635, %v2803
  %2805 = vmatmul.bf16.gmra.mxu0 %v2344
  %v2806 = vpop.f32.mrf.mxu0
  %v2807 = vadd.f32 %v2638, %v2806
  %v2808 = vpop.f32.mrf.mxu0
  %v2809 = vadd.f32 %v2640, %v2808
  %2810 = vmatmul.bf16.gmra.mxu0 %v2348
  %v2811 = vpop.f32.mrf.mxu0
  %v2812 = vadd.f32 %v2643, %v2811
  %v2813 = vpop.f32.mrf.mxu0
  %v2814 = vadd.f32 %v2645, %v2813
  %2815 = vmatmul.bf16.gmra.mxu0 %v2352
  %v2816 = vpop.f32.mrf.mxu0
  %v2817 = vadd.f32 %v2648, %v2816
  %v2818 = vpop.f32.mrf.mxu0
  %v2819 = vadd.f32 %v2650, %v2818
  %2820 = vdwg.mxu0
  %2821 = vmatpush.bf16.msra.mxu0 %v997
  %2822 = vmatpush.bf16.msra.mxu0 %v996
  %2823 = vmatpush.bf16.msra.mxu0 %v995
  %2824 = vmatpush.bf16.msra.mxu0 %v994
  %2825 = vmatpush.bf16.msra.mxu0 %v993
  %2826 = vmatpush.bf16.msra.mxu0 %v992
  %2827 = vmatpush.bf16.msra.mxu0 %v991
  %2828 = vmatpush.bf16.msra.mxu0 %v990
  %2829 = vmatmul.bf16.gmra.mxu0 %v2229
  %v2830 = vpop.f32.mrf.mxu0
  %v2831 = vadd.f32 %v2662, %v2830
  %v2832 = vpop.f32.mrf.mxu0
  %v2833 = vadd.f32 %v2664, %v2832
  %2834 = vmatmul.bf16.gmra.mxu0 %v2233
  %v2835 = vpop.f32.mrf.mxu0
  %v2836 = vadd.f32 %v2667, %v2835
  %v2837 = vpop.f32.mrf.mxu0
  %v2838 = vadd.f32 %v2669, %v2837
  %2839 = vmatmul.bf16.gmra.mxu0 %v2237
  %v2840 = vpop.f32.mrf.mxu0
  %v2841 = vadd.f32 %v2672, %v2840
  %v2842 = vpop.f32.mrf.mxu0
  %v2843 = vadd.f32 %v2674, %v2842
  %2844 = vmatmul.bf16.gmra.mxu0 %v2241
  %v2845 = vpop.f32.mrf.mxu0
  %v2846 = vadd.f32 %v2677, %v2845
  %v2847 = vpop.f32.mrf.mxu0
  %v2848 = vadd.f32 %v2679, %v2847
  %2849 = vmatmul.bf16.gmra.mxu0 %v2245
  %v2850 = vpop.f32.mrf.mxu0
  %v2851 = vadd.f32 %v2682, %v2850
  %v2852 = vpop.f32.mrf.mxu0
  %v2853 = vadd.f32 %v2684, %v2852
  %2854 = vmatmul.bf16.gmra.mxu0 %v2249
  %v2855 = vpop.f32.mrf.mxu0
  %v2856 = vadd.f32 %v2687, %v2855
  %v2857 = vpop.f32.mrf.mxu0
  %v2858 = vadd.f32 %v2689, %v2857
  %2859 = vmatmul.bf16.gmra.mxu0 %v2253
  %v2860 = vpop.f32.mrf.mxu0
  %v2861 = vadd.f32 %v2692, %v2860
  %v2862 = vpop.f32.mrf.mxu0
  %v2863 = vadd.f32 %v2694, %v2862
  %2864 = vmatmul.bf16.gmra.mxu0 %v2257
  %v2865 = vpop.f32.mrf.mxu0
  %v2866 = vadd.f32 %v2697, %v2865
  %v2867 = vpop.f32.mrf.mxu0
  %v2868 = vadd.f32 %v2699, %v2867
  %2869 = vmatmul.bf16.gmra.mxu0 %v2261
  %v2870 = vpop.f32.mrf.mxu0
  %v2871 = vadd.f32 %v2702, %v2870
  %v2872 = vpop.f32.mrf.mxu0
  %v2873 = vadd.f32 %v2704, %v2872
  %2874 = vmatmul.bf16.gmra.mxu0 %v2265
  %v2875 = vpop.f32.mrf.mxu0
  %v2876 = vadd.f32 %v2707, %v2875
  %v2877 = vpop.f32.mrf.mxu0
  %v2878 = vadd.f32 %v2709, %v2877
  %2879 = vmatmul.bf16.gmra.mxu0 %v2269
  %v2880 = vpop.f32.mrf.mxu0
  %v2881 = vadd.f32 %v2712, %v2880
  %v2882 = vpop.f32.mrf.mxu0
  %v2883 = vadd.f32 %v2714, %v2882
  %2884 = vmatmul.bf16.gmra.mxu0 %v2273
  %v2885 = vpop.f32.mrf.mxu0
  %v2886 = vadd.f32 %v2717, %v2885
  %v2887 = vpop.f32.mrf.mxu0
  %v2888 = vadd.f32 %v2719, %v2887
  %2889 = vmatmul.bf16.gmra.mxu0 %v2277
  %v2890 = vpop.f32.mrf.mxu0
  %v2891 = vadd.f32 %v2722, %v2890
  %v2892 = vpop.f32.mrf.mxu0
  %v2893 = vadd.f32 %v2724, %v2892
  %2894 = vmatmul.bf16.gmra.mxu0 %v2281
  %v2895 = vpop.f32.mrf.mxu0
  %v2896 = vadd.f32 %v2727, %v2895
  %v2897 = vpop.f32.mrf.mxu0
  %v2898 = vadd.f32 %v2729, %v2897
  %2899 = vmatmul.bf16.gmra.mxu0 %v2285
  %v2900 = vpop.f32.mrf.mxu0
  %v2901 = vadd.f32 %v2732, %v2900
  %v2902 = vpop.f32.mrf.mxu0
  %v2903 = vadd.f32 %v2734, %v2902
  %2904 = vmatmul.bf16.gmra.mxu0 %v2289
  %v2905 = vpop.f32.mrf.mxu0
  %v2906 = vadd.f32 %v2737, %v2905
  %v2907 = vpop.f32.mrf.mxu0
  %v2908 = vadd.f32 %v2739, %v2907
  %2909 = vmatmul.bf16.gmra.mxu0 %v2293
  %v2910 = vpop.f32.mrf.mxu0
  %v2911 = vadd.f32 %v2742, %v2910
  %v2912 = vpop.f32.mrf.mxu0
  %v2913 = vadd.f32 %v2744, %v2912
  %2914 = vmatmul.bf16.gmra.mxu0 %v2297
  %v2915 = vpop.f32.mrf.mxu0
  %v2916 = vadd.f32 %v2747, %v2915
  %v2917 = vpop.f32.mrf.mxu0
  %v2918 = vadd.f32 %v2749, %v2917
  %2919 = vmatmul.bf16.gmra.mxu0 %v2301
  %v2920 = vpop.f32.mrf.mxu0
  %v2921 = vadd.f32 %v2752, %v2920
  %v2922 = vpop.f32.mrf.mxu0
  %v2923 = vadd.f32 %v2754, %v2922
  %2924 = vmatmul.bf16.gmra.mxu0 %v2305
  %v2925 = vpop.f32.mrf.mxu0
  %v2926 = vadd.f32 %v2757, %v2925
  %v2927 = vpop.f32.mrf.mxu0
  %v2928 = vadd.f32 %v2759, %v2927
  %2929 = vmatmul.bf16.gmra.mxu0 %v2309
  %v2930 = vpop.f32.mrf.mxu0
  %v2931 = vadd.f32 %v2762, %v2930
  %v2932 = vpop.f32.mrf.mxu0
  %v2933 = vadd.f32 %v2764, %v2932
  %2934 = vmatmul.bf16.gmra.mxu0 %v2313
  %v2935 = vpop.f32.mrf.mxu0
  %v2936 = vadd.f32 %v2767, %v2935
  %v2937 = vpop.f32.mrf.mxu0
  %v2938 = vadd.f32 %v2769, %v2937
  %2939 = vmatmul.bf16.gmra.mxu0 %v2317
  %v2940 = vpop.f32.mrf.mxu0
  %v2941 = vadd.f32 %v2772, %v2940
  %v2942 = vpop.f32.mrf.mxu0
  %v2943 = vadd.f32 %v2774, %v2942
  %2944 = vmatmul.bf16.gmra.mxu0 %v2321
  %v2945 = vpop.f32.mrf.mxu0
  %v2946 = vadd.f32 %v2777, %v2945
  %v2947 = vpop.f32.mrf.mxu0
  %v2948 = vadd.f32 %v2779, %v2947
  %2949 = vmatmul.bf16.gmra.mxu0 %v2325
  %v2950 = vpop.f32.mrf.mxu0
  %v2951 = vadd.f32 %v2782, %v2950
  %v2952 = vpop.f32.mrf.mxu0
  %v2953 = vadd.f32 %v2784, %v2952
  %2954 = vmatmul.bf16.gmra.mxu0 %v2329
  %v2955 = vpop.f32.mrf.mxu0
  %v2956 = vadd.f32 %v2787, %v2955
  %v2957 = vpop.f32.mrf.mxu0
  %v2958 = vadd.f32 %v2789, %v2957
  %2959 = vmatmul.bf16.gmra.mxu0 %v2333
  %v2960 = vpop.f32.mrf.mxu0
  %v2961 = vadd.f32 %v2792, %v2960
  %v2962 = vpop.f32.mrf.mxu0
  %v2963 = vadd.f32 %v2794, %v2962
  %2964 = vmatmul.bf16.gmra.mxu0 %v2337
  %v2965 = vpop.f32.mrf.mxu0
  %v2966 = vadd.f32 %v2797, %v2965
  %v2967 = vpop.f32.mrf.mxu0
  %v2968 = vadd.f32 %v2799, %v2967
  %2969 = vmatmul.bf16.gmra.mxu0 %v2341
  %v2970 = vpop.f32.mrf.mxu0
  %v2971 = vadd.f32 %v2802, %v2970
  %v2972 = vpop.f32.mrf.mxu0
  %v2973 = vadd.f32 %v2804, %v2972
  %2974 = vmatmul.bf16.gmra.mxu0 %v2345
  %v2975 = vpop.f32.mrf.mxu0
  %v2976 = vadd.f32 %v2807, %v2975
  %v2977 = vpop.f32.mrf.mxu0
  %v2978 = vadd.f32 %v2809, %v2977
  %2979 = vmatmul.bf16.gmra.mxu0 %v2349
  %v2980 = vpop.f32.mrf.mxu0
  %v2981 = vadd.f32 %v2812, %v2980
  %v2982 = vpop.f32.mrf.mxu0
  %v2983 = vadd.f32 %v2814, %v2982
  %2984 = vmatmul.bf16.gmra.mxu0 %v2353
  %v2985 = vpop.f32.mrf.mxu0
  %v2986 = vadd.f32 %v2817, %v2985
  %v2987 = vpop.f32.mrf.mxu0
  %v2988 = vadd.f32 %v2819, %v2987
  %2989 = vdwg.mxu0
  %2990 = vmatpush.bf16.msra.mxu0 %v1005
  %2991 = vmatpush.bf16.msra.mxu0 %v1004
  %2992 = vmatpush.bf16.msra.mxu0 %v1003
  %2993 = vmatpush.bf16.msra.mxu0 %v1002
  %2994 = vmatpush.bf16.msra.mxu0 %v1001
  %2995 = vmatpush.bf16.msra.mxu0 %v1000
  %2996 = vmatpush.bf16.msra.mxu0 %v999
  %2997 = vmatpush.bf16.msra.mxu0 %v998
  %2998 = vmatmul.bf16.gmra.mxu0 %v2230
  %v2999 = vpop.f32.mrf.mxu0
  %v3000 = vadd.f32 %v2831, %v2999
  %v3001 = vpop.f32.mrf.mxu0
  %v3002 = vadd.f32 %v2833, %v3001
  %3003 = vmatmul.bf16.gmra.mxu0 %v2234
  %v3004 = vpop.f32.mrf.mxu0
  %v3005 = vadd.f32 %v2836, %v3004
  %v3006 = vpop.f32.mrf.mxu0
  %v3007 = vadd.f32 %v2838, %v3006
  %3008 = vmatmul.bf16.gmra.mxu0 %v2238
  %v3009 = vpop.f32.mrf.mxu0
  %v3010 = vadd.f32 %v2841, %v3009
  %v3011 = vpop.f32.mrf.mxu0
  %v3012 = vadd.f32 %v2843, %v3011
  %3013 = vmatmul.bf16.gmra.mxu0 %v2242
  %v3014 = vpop.f32.mrf.mxu0
  %v3015 = vadd.f32 %v2846, %v3014
  %v3016 = vpop.f32.mrf.mxu0
  %v3017 = vadd.f32 %v2848, %v3016
  %3018 = vmatmul.bf16.gmra.mxu0 %v2246
  %v3019 = vpop.f32.mrf.mxu0
  %v3020 = vadd.f32 %v2851, %v3019
  %v3021 = vpop.f32.mrf.mxu0
  %v3022 = vadd.f32 %v2853, %v3021
  %3023 = vmatmul.bf16.gmra.mxu0 %v2250
  %v3024 = vpop.f32.mrf.mxu0
  %v3025 = vadd.f32 %v2856, %v3024
  %v3026 = vpop.f32.mrf.mxu0
  %v3027 = vadd.f32 %v2858, %v3026
  %3028 = vmatmul.bf16.gmra.mxu0 %v2254
  %v3029 = vpop.f32.mrf.mxu0
  %v3030 = vadd.f32 %v2861, %v3029
  %v3031 = vpop.f32.mrf.mxu0
  %v3032 = vadd.f32 %v2863, %v3031
  %3033 = vmatmul.bf16.gmra.mxu0 %v2258
  %v3034 = vpop.f32.mrf.mxu0
  %v3035 = vadd.f32 %v2866, %v3034
  %v3036 = vpop.f32.mrf.mxu0
  %v3037 = vadd.f32 %v2868, %v3036
  %3038 = vmatmul.bf16.gmra.mxu0 %v2262
  %v3039 = vpop.f32.mrf.mxu0
  %v3040 = vadd.f32 %v2871, %v3039
  %v3041 = vpop.f32.mrf.mxu0
  %v3042 = vadd.f32 %v2873, %v3041
  %3043 = vmatmul.bf16.gmra.mxu0 %v2266
  %v3044 = vpop.f32.mrf.mxu0
  %v3045 = vadd.f32 %v2876, %v3044
  %v3046 = vpop.f32.mrf.mxu0
  %v3047 = vadd.f32 %v2878, %v3046
  %3048 = vmatmul.bf16.gmra.mxu0 %v2270
  %v3049 = vpop.f32.mrf.mxu0
  %v3050 = vadd.f32 %v2881, %v3049
  %v3051 = vpop.f32.mrf.mxu0
  %v3052 = vadd.f32 %v2883, %v3051
  %3053 = vmatmul.bf16.gmra.mxu0 %v2274
  %v3054 = vpop.f32.mrf.mxu0
  %v3055 = vadd.f32 %v2886, %v3054
  %v3056 = vpop.f32.mrf.mxu0
  %v3057 = vadd.f32 %v2888, %v3056
  %3058 = vmatmul.bf16.gmra.mxu0 %v2278
  %v3059 = vpop.f32.mrf.mxu0
  %v3060 = vadd.f32 %v2891, %v3059
  %v3061 = vpop.f32.mrf.mxu0
  %v3062 = vadd.f32 %v2893, %v3061
  %3063 = vmatmul.bf16.gmra.mxu0 %v2282
  %v3064 = vpop.f32.mrf.mxu0
  %v3065 = vadd.f32 %v2896, %v3064
  %v3066 = vpop.f32.mrf.mxu0
  %v3067 = vadd.f32 %v2898, %v3066
  %3068 = vmatmul.bf16.gmra.mxu0 %v2286
  %v3069 = vpop.f32.mrf.mxu0
  %v3070 = vadd.f32 %v2901, %v3069
  %v3071 = vpop.f32.mrf.mxu0
  %v3072 = vadd.f32 %v2903, %v3071
  %3073 = vmatmul.bf16.gmra.mxu0 %v2290
  %v3074 = vpop.f32.mrf.mxu0
  %v3075 = vadd.f32 %v2906, %v3074
  %v3076 = vpop.f32.mrf.mxu0
  %v3077 = vadd.f32 %v2908, %v3076
  %3078 = vmatmul.bf16.gmra.mxu0 %v2294
  %v3079 = vpop.f32.mrf.mxu0
  %v3080 = vadd.f32 %v2911, %v3079
  %v3081 = vpop.f32.mrf.mxu0
  %v3082 = vadd.f32 %v2913, %v3081
  %3083 = vmatmul.bf16.gmra.mxu0 %v2298
  %v3084 = vpop.f32.mrf.mxu0
  %v3085 = vadd.f32 %v2916, %v3084
  %v3086 = vpop.f32.mrf.mxu0
  %v3087 = vadd.f32 %v2918, %v3086
  %3088 = vmatmul.bf16.gmra.mxu0 %v2302
  %v3089 = vpop.f32.mrf.mxu0
  %v3090 = vadd.f32 %v2921, %v3089
  %v3091 = vpop.f32.mrf.mxu0
  %v3092 = vadd.f32 %v2923, %v3091
  %3093 = vmatmul.bf16.gmra.mxu0 %v2306
  %v3094 = vpop.f32.mrf.mxu0
  %v3095 = vadd.f32 %v2926, %v3094
  %v3096 = vpop.f32.mrf.mxu0
  %v3097 = vadd.f32 %v2928, %v3096
  %3098 = vmatmul.bf16.gmra.mxu0 %v2310
  %v3099 = vpop.f32.mrf.mxu0
  %v3100 = vadd.f32 %v2931, %v3099
  %v3101 = vpop.f32.mrf.mxu0
  %v3102 = vadd.f32 %v2933, %v3101
  %3103 = vmatmul.bf16.gmra.mxu0 %v2314
  %v3104 = vpop.f32.mrf.mxu0
  %v3105 = vadd.f32 %v2936, %v3104
  %v3106 = vpop.f32.mrf.mxu0
  %v3107 = vadd.f32 %v2938, %v3106
  %3108 = vmatmul.bf16.gmra.mxu0 %v2318
  %v3109 = vpop.f32.mrf.mxu0
  %v3110 = vadd.f32 %v2941, %v3109
  %v3111 = vpop.f32.mrf.mxu0
  %v3112 = vadd.f32 %v2943, %v3111
  %3113 = vmatmul.bf16.gmra.mxu0 %v2322
  %v3114 = vpop.f32.mrf.mxu0
  %v3115 = vadd.f32 %v2946, %v3114
  %v3116 = vpop.f32.mrf.mxu0
  %v3117 = vadd.f32 %v2948, %v3116
  %3118 = vmatmul.bf16.gmra.mxu0 %v2326
  %v3119 = vpop.f32.mrf.mxu0
  %v3120 = vadd.f32 %v2951, %v3119
  %v3121 = vpop.f32.mrf.mxu0
  %v3122 = vadd.f32 %v2953, %v3121
  %3123 = vmatmul.bf16.gmra.mxu0 %v2330
  %v3124 = vpop.f32.mrf.mxu0
  %v3125 = vadd.f32 %v2956, %v3124
  %v3126 = vpop.f32.mrf.mxu0
  %v3127 = vadd.f32 %v2958, %v3126
  %3128 = vmatmul.bf16.gmra.mxu0 %v2334
  %v3129 = vpop.f32.mrf.mxu0
  %v3130 = vadd.f32 %v2961, %v3129
  %v3131 = vpop.f32.mrf.mxu0
  %v3132 = vadd.f32 %v2963, %v3131
  %3133 = vmatmul.bf16.gmra.mxu0 %v2338
  %v3134 = vpop.f32.mrf.mxu0
  %v3135 = vadd.f32 %v2966, %v3134
  %v3136 = vpop.f32.mrf.mxu0
  %v3137 = vadd.f32 %v2968, %v3136
  %3138 = vmatmul.bf16.gmra.mxu0 %v2342
  %v3139 = vpop.f32.mrf.mxu0
  %v3140 = vadd.f32 %v2971, %v3139
  %v3141 = vpop.f32.mrf.mxu0
  %v3142 = vadd.f32 %v2973, %v3141
  %3143 = vmatmul.bf16.gmra.mxu0 %v2346
  %v3144 = vpop.f32.mrf.mxu0
  %v3145 = vadd.f32 %v2976, %v3144
  %v3146 = vpop.f32.mrf.mxu0
  %v3147 = vadd.f32 %v2978, %v3146
  %3148 = vmatmul.bf16.gmra.mxu0 %v2350
  %v3149 = vpop.f32.mrf.mxu0
  %v3150 = vadd.f32 %v2981, %v3149
  %v3151 = vpop.f32.mrf.mxu0
  %v3152 = vadd.f32 %v2983, %v3151
  %3153 = vmatmul.bf16.gmra.mxu0 %v2354
  %v3154 = vpop.f32.mrf.mxu0
  %v3155 = vadd.f32 %v2986, %v3154
  %v3156 = vpop.f32.mrf.mxu0
  %v3157 = vadd.f32 %v2988, %v3156
  %3158 = vdwg.mxu0
  %v3159 = vmax.f32 %v1555, %v3000
  %v3160 = vmax.f32 %v1557, %v3002
  %v3161 = vmax.f32 %v1560, %v3005
  %v3162 = vmax.f32 %v1562, %v3007
  %v3163 = vmax.f32 %v1565, %v3010
  %v3164 = vmax.f32 %v1567, %v3012
  %v3165 = vmax.f32 %v1570, %v3015
  %v3166 = vmax.f32 %v1572, %v3017
  %v3167 = vmax.f32 %v1575, %v3020
  %v3168 = vmax.f32 %v1577, %v3022
  %v3169 = vmax.f32 %v1580, %v3025
  %v3170 = vmax.f32 %v1582, %v3027
  %v3171 = vmax.f32 %v1585, %v3030
  %v3172 = vmax.f32 %v1587, %v3032
  %v3173 = vmax.f32 %v1590, %v3035
  %v3174 = vmax.f32 %v1592, %v3037
  %v3175 = vmax.f32 %v1595, %v3040
  %v3176 = vmax.f32 %v1597, %v3042
  %v3177 = vmax.f32 %v1600, %v3045
  %v3178 = vmax.f32 %v1602, %v3047
  %v3179 = vmax.f32 %v1605, %v3050
  %v3180 = vmax.f32 %v1607, %v3052
  %v3181 = vmax.f32 %v1610, %v3055
  %v3182 = vmax.f32 %v1612, %v3057
  %v3183 = vmax.f32 %v1615, %v3060
  %v3184 = vmax.f32 %v1617, %v3062
  %v3185 = vmax.f32 %v1620, %v3065
  %v3186 = vmax.f32 %v1622, %v3067
  %v3187 = vmax.f32 %v1625, %v3070
  %v3188 = vmax.f32 %v1627, %v3072
  %v3189 = vmax.f32 %v1630, %v3075
  %v3190 = vmax.f32 %v1632, %v3077
  %v3191 = vmax.f32 %v1635, %v3080
  %v3192 = vmax.f32 %v1637, %v3082
  %v3193 = vmax.f32 %v1640, %v3085
  %v3194 = vmax.f32 %v1642, %v3087
  %v3195 = vmax.f32 %v1645, %v3090
  %v3196 = vmax.f32 %v1647, %v3092
  %v3197 = vmax.f32 %v1650, %v3095
  %v3198 = vmax.f32 %v1652, %v3097
  %v3199 = vmax.f32 %v1655, %v3100
  %v3200 = vmax.f32 %v1657, %v3102
  %v3201 = vmax.f32 %v1660, %v3105
  %v3202 = vmax.f32 %v1662, %v3107
  %v3203 = vmax.f32 %v1665, %v3110
  %v3204 = vmax.f32 %v1667, %v3112
  %v3205 = vmax.f32 %v1670, %v3115
  %v3206 = vmax.f32 %v1672, %v3117
  %v3207 = vmax.f32 %v1675, %v3120
  %v3208 = vmax.f32 %v1677, %v3122
  %v3209 = vmax.f32 %v1680, %v3125
  %v3210 = vmax.f32 %v1682, %v3127
  %v3211 = vmax.f32 %v1685, %v3130
  %v3212 = vmax.f32 %v1687, %v3132
  %v3213 = vmax.f32 %v1690, %v3135
  %v3214 = vmax.f32 %v1692, %v3137
  %v3215 = vmax.f32 %v1695, %v3140
  %v3216 = vmax.f32 %v1697, %v3142
  %v3217 = vmax.f32 %v1700, %v3145
  %v3218 = vmax.f32 %v1702, %v3147
  %v3219 = vmax.f32 %v1705, %v3150
  %v3220 = vmax.f32 %v1707, %v3152
  %v3221 = vmax.f32 %v1710, %v3155
  %v3222 = vmax.f32 %v1712, %v3157
  %s3223 = scalar_lea.vmem %s0, 2048
  %v3224 = vld [vmem:[%s3223] sm:$0xff]
  %v3225 = vld [vmem:[%s3223 + $0x8] sm:$0xff]
  %v3226 = vld [vmem:[%s3223 + $0x10] sm:$0xff]
  %v3227 = vld [vmem:[%s3223 + $0x18] sm:$0xff]
  %v3228 = vld [vmem:[%s3223 + $0x20] sm:$0xff]
  %v3229 = vld [vmem:[%s3223 + $0x28] sm:$0xff]
  %v3230 = vld [vmem:[%s3223 + $0x30] sm:$0xff]
  %v3231 = vld [vmem:[%s3223 + $0x38] sm:$0xff]
  %v3232 = vld [vmem:[%s3223 + $0x40] sm:$0xff]
  %v3233 = vld [vmem:[%s3223 + $0x48] sm:$0xff]
  %v3234 = vld [vmem:[%s3223 + $0x50] sm:$0xff]
  %v3235 = vld [vmem:[%s3223 + $0x58] sm:$0xff]
  %v3236 = vld [vmem:[%s3223 + $0x60] sm:$0xff]
  %v3237 = vld [vmem:[%s3223 + $0x68] sm:$0xff]
  %v3238 = vld [vmem:[%s3223 + $0x70] sm:$0xff]
  %v3239 = vld [vmem:[%s3223 + $0x78] sm:$0xff]
  %v3240 = vld [vmem:[%s3223 + $0x80] sm:$0xff]
  %v3241 = vld [vmem:[%s3223 + $0x88] sm:$0xff]
  %v3242 = vld [vmem:[%s3223 + $0x90] sm:$0xff]
  %v3243 = vld [vmem:[%s3223 + $0x98] sm:$0xff]
  %v3244 = vld [vmem:[%s3223 + $0xa0] sm:$0xff]
  %v3245 = vld [vmem:[%s3223 + $0xa8] sm:$0xff]
  %v3246 = vld [vmem:[%s3223 + $0xb0] sm:$0xff]
  %v3247 = vld [vmem:[%s3223 + $0xb8] sm:$0xff]
  %v3248 = vld [vmem:[%s3223 + $0xc0] sm:$0xff]
  %v3249 = vld [vmem:[%s3223 + $0xc8] sm:$0xff]
  %v3250 = vld [vmem:[%s3223 + $0xd0] sm:$0xff]
  %v3251 = vld [vmem:[%s3223 + $0xd8] sm:$0xff]
  %v3252 = vld [vmem:[%s3223 + $0xe0] sm:$0xff]
  %v3253 = vld [vmem:[%s3223 + $0xe8] sm:$0xff]
  %v3254 = vld [vmem:[%s3223 + $0xf0] sm:$0xff]
  %v3255 = vld [vmem:[%s3223 + $0xf8] sm:$0xff]
  %v3256 = vld [vmem:[%s3223 + $0x100] sm:$0xff]
  %v3257 = vld [vmem:[%s3223 + $0x108] sm:$0xff]
  %v3258 = vld [vmem:[%s3223 + $0x110] sm:$0xff]
  %v3259 = vld [vmem:[%s3223 + $0x118] sm:$0xff]
  %v3260 = vld [vmem:[%s3223 + $0x120] sm:$0xff]
  %v3261 = vld [vmem:[%s3223 + $0x128] sm:$0xff]
  %v3262 = vld [vmem:[%s3223 + $0x130] sm:$0xff]
  %v3263 = vld [vmem:[%s3223 + $0x138] sm:$0xff]
  %v3264 = vld [vmem:[%s3223 + $0x140] sm:$0xff]
  %v3265 = vld [vmem:[%s3223 + $0x148] sm:$0xff]
  %v3266 = vld [vmem:[%s3223 + $0x150] sm:$0xff]
  %v3267 = vld [vmem:[%s3223 + $0x158] sm:$0xff]
  %v3268 = vld [vmem:[%s3223 + $0x160] sm:$0xff]
  %v3269 = vld [vmem:[%s3223 + $0x168] sm:$0xff]
  %v3270 = vld [vmem:[%s3223 + $0x170] sm:$0xff]
  %v3271 = vld [vmem:[%s3223 + $0x178] sm:$0xff]
  %v3272 = vld [vmem:[%s3223 + $0x180] sm:$0xff]
  %v3273 = vld [vmem:[%s3223 + $0x188] sm:$0xff]
  %v3274 = vld [vmem:[%s3223 + $0x190] sm:$0xff]
  %v3275 = vld [vmem:[%s3223 + $0x198] sm:$0xff]
  %v3276 = vld [vmem:[%s3223 + $0x1a0] sm:$0xff]
  %v3277 = vld [vmem:[%s3223 + $0x1a8] sm:$0xff]
  %v3278 = vld [vmem:[%s3223 + $0x1b0] sm:$0xff]
  %v3279 = vld [vmem:[%s3223 + $0x1b8] sm:$0xff]
  %v3280 = vld [vmem:[%s3223 + $0x1c0] sm:$0xff]
  %v3281 = vld [vmem:[%s3223 + $0x1c8] sm:$0xff]
  %v3282 = vld [vmem:[%s3223 + $0x1d0] sm:$0xff]
  %v3283 = vld [vmem:[%s3223 + $0x1d8] sm:$0xff]
  %v3284 = vld [vmem:[%s3223 + $0x1e0] sm:$0xff]
  %v3285 = vld [vmem:[%s3223 + $0x1e8] sm:$0xff]
  %v3286 = vld [vmem:[%s3223 + $0x1f0] sm:$0xff]
  %v3287 = vld [vmem:[%s3223 + $0x1f8] sm:$0xff]
  %v3288 = vld [vmem:[%s3223 + $0x200] sm:$0xff]
  %v3289 = vld [vmem:[%s3223 + $0x208] sm:$0xff]
  %v3290 = vld [vmem:[%s3223 + $0x210] sm:$0xff]
  %v3291 = vld [vmem:[%s3223 + $0x218] sm:$0xff]
  %v3292 = vld [vmem:[%s3223 + $0x220] sm:$0xff]
  %v3293 = vld [vmem:[%s3223 + $0x228] sm:$0xff]
  %v3294 = vld [vmem:[%s3223 + $0x230] sm:$0xff]
  %v3295 = vld [vmem:[%s3223 + $0x238] sm:$0xff]
  %v3296 = vld [vmem:[%s3223 + $0x240] sm:$0xff]
  %v3297 = vld [vmem:[%s3223 + $0x248] sm:$0xff]
  %v3298 = vld [vmem:[%s3223 + $0x250] sm:$0xff]
  %v3299 = vld [vmem:[%s3223 + $0x258] sm:$0xff]
  %v3300 = vld [vmem:[%s3223 + $0x260] sm:$0xff]
  %v3301 = vld [vmem:[%s3223 + $0x268] sm:$0xff]
  %v3302 = vld [vmem:[%s3223 + $0x270] sm:$0xff]
  %v3303 = vld [vmem:[%s3223 + $0x278] sm:$0xff]
  %v3304 = vld [vmem:[%s3223 + $0x280] sm:$0xff]
  %v3305 = vld [vmem:[%s3223 + $0x288] sm:$0xff]
  %v3306 = vld [vmem:[%s3223 + $0x290] sm:$0xff]
  %v3307 = vld [vmem:[%s3223 + $0x298] sm:$0xff]
  %v3308 = vld [vmem:[%s3223 + $0x2a0] sm:$0xff]
  %v3309 = vld [vmem:[%s3223 + $0x2a8] sm:$0xff]
  %v3310 = vld [vmem:[%s3223 + $0x2b0] sm:$0xff]
  %v3311 = vld [vmem:[%s3223 + $0x2b8] sm:$0xff]
  %v3312 = vld [vmem:[%s3223 + $0x2c0] sm:$0xff]
  %v3313 = vld [vmem:[%s3223 + $0x2c8] sm:$0xff]
  %v3314 = vld [vmem:[%s3223 + $0x2d0] sm:$0xff]
  %v3315 = vld [vmem:[%s3223 + $0x2d8] sm:$0xff]
  %v3316 = vld [vmem:[%s3223 + $0x2e0] sm:$0xff]
  %v3317 = vld [vmem:[%s3223 + $0x2e8] sm:$0xff]
  %v3318 = vld [vmem:[%s3223 + $0x2f0] sm:$0xff]
  %v3319 = vld [vmem:[%s3223 + $0x2f8] sm:$0xff]
  %v3320 = vld [vmem:[%s3223 + $0x300] sm:$0xff]
  %v3321 = vld [vmem:[%s3223 + $0x308] sm:$0xff]
  %v3322 = vld [vmem:[%s3223 + $0x310] sm:$0xff]
  %v3323 = vld [vmem:[%s3223 + $0x318] sm:$0xff]
  %v3324 = vld [vmem:[%s3223 + $0x320] sm:$0xff]
  %v3325 = vld [vmem:[%s3223 + $0x328] sm:$0xff]
  %v3326 = vld [vmem:[%s3223 + $0x330] sm:$0xff]
  %v3327 = vld [vmem:[%s3223 + $0x338] sm:$0xff]
  %v3328 = vld [vmem:[%s3223 + $0x340] sm:$0xff]
  %v3329 = vld [vmem:[%s3223 + $0x348] sm:$0xff]
  %v3330 = vld [vmem:[%s3223 + $0x350] sm:$0xff]
  %v3331 = vld [vmem:[%s3223 + $0x358] sm:$0xff]
  %v3332 = vld [vmem:[%s3223 + $0x360] sm:$0xff]
  %v3333 = vld [vmem:[%s3223 + $0x368] sm:$0xff]
  %v3334 = vld [vmem:[%s3223 + $0x370] sm:$0xff]
  %v3335 = vld [vmem:[%s3223 + $0x378] sm:$0xff]
  %v3336 = vld [vmem:[%s3223 + $0x380] sm:$0xff]
  %v3337 = vld [vmem:[%s3223 + $0x388] sm:$0xff]
  %v3338 = vld [vmem:[%s3223 + $0x390] sm:$0xff]
  %v3339 = vld [vmem:[%s3223 + $0x398] sm:$0xff]
  %v3340 = vld [vmem:[%s3223 + $0x3a0] sm:$0xff]
  %v3341 = vld [vmem:[%s3223 + $0x3a8] sm:$0xff]
  %v3342 = vld [vmem:[%s3223 + $0x3b0] sm:$0xff]
  %v3343 = vld [vmem:[%s3223 + $0x3b8] sm:$0xff]
  %v3344 = vld [vmem:[%s3223 + $0x3c0] sm:$0xff]
  %v3345 = vld [vmem:[%s3223 + $0x3c8] sm:$0xff]
  %v3346 = vld [vmem:[%s3223 + $0x3d0] sm:$0xff]
  %v3347 = vld [vmem:[%s3223 + $0x3d8] sm:$0xff]
  %v3348 = vld [vmem:[%s3223 + $0x3e0] sm:$0xff]
  %v3349 = vld [vmem:[%s3223 + $0x3e8] sm:$0xff]
  %v3350 = vld [vmem:[%s3223 + $0x3f0] sm:$0xff]
  %v3351 = vld [vmem:[%s3223 + $0x3f8] sm:$0xff]
  %v3480 = vunpack.c.l.b16 %v3224
  %v3481 = vunpack.c.h.b16 %v3224
  %v3482 = vunpack.c.l.b16 %v3225
  %v3483 = vunpack.c.h.b16 %v3225
  %v3484 = vunpack.c.l.b16 %v3226
  %v3485 = vunpack.c.h.b16 %v3226
  %v3486 = vunpack.c.l.b16 %v3227
  %v3487 = vunpack.c.h.b16 %v3227
  %v3488 = vunpack.c.l.b16 %v3228
  %v3489 = vunpack.c.h.b16 %v3228
  %v3490 = vunpack.c.l.b16 %v3229
  %v3491 = vunpack.c.h.b16 %v3229
  %v3492 = vunpack.c.l.b16 %v3230
  %v3493 = vunpack.c.h.b16 %v3230
  %v3494 = vunpack.c.l.b16 %v3231
  %v3495 = vunpack.c.h.b16 %v3231
  %v3496 = vunpack.c.l.b16 %v3232
  %v3497 = vunpack.c.h.b16 %v3232
  %v3498 = vunpack.c.l.b16 %v3233
  %v3499 = vunpack.c.h.b16 %v3233
  %v3500 = vunpack.c.l.b16 %v3234
  %v3501 = vunpack.c.h.b16 %v3234
  %v3502 = vunpack.c.l.b16 %v3235
  %v3503 = vunpack.c.h.b16 %v3235
  %v3504 = vunpack.c.l.b16 %v3236
  %v3505 = vunpack.c.h.b16 %v3236
  %v3506 = vunpack.c.l.b16 %v3237
  %v3507 = vunpack.c.h.b16 %v3237
  %v3508 = vunpack.c.l.b16 %v3238
  %v3509 = vunpack.c.h.b16 %v3238
  %v3510 = vunpack.c.l.b16 %v3239
  %v3511 = vunpack.c.h.b16 %v3239
  %v3512 = vunpack.c.l.b16 %v3240
  %v3513 = vunpack.c.h.b16 %v3240
  %v3514 = vunpack.c.l.b16 %v3241
  %v3515 = vunpack.c.h.b16 %v3241
  %v3516 = vunpack.c.l.b16 %v3242
  %v3517 = vunpack.c.h.b16 %v3242
  %v3518 = vunpack.c.l.b16 %v3243
  %v3519 = vunpack.c.h.b16 %v3243
  %v3520 = vunpack.c.l.b16 %v3244
  %v3521 = vunpack.c.h.b16 %v3244
  %v3522 = vunpack.c.l.b16 %v3245
  %v3523 = vunpack.c.h.b16 %v3245
  %v3524 = vunpack.c.l.b16 %v3246
  %v3525 = vunpack.c.h.b16 %v3246
  %v3526 = vunpack.c.l.b16 %v3247
  %v3527 = vunpack.c.h.b16 %v3247
  %v3528 = vunpack.c.l.b16 %v3248
  %v3529 = vunpack.c.h.b16 %v3248
  %v3530 = vunpack.c.l.b16 %v3249
  %v3531 = vunpack.c.h.b16 %v3249
  %v3532 = vunpack.c.l.b16 %v3250
  %v3533 = vunpack.c.h.b16 %v3250
  %v3534 = vunpack.c.l.b16 %v3251
  %v3535 = vunpack.c.h.b16 %v3251
  %v3536 = vunpack.c.l.b16 %v3252
  %v3537 = vunpack.c.h.b16 %v3252
  %v3538 = vunpack.c.l.b16 %v3253
  %v3539 = vunpack.c.h.b16 %v3253
  %v3540 = vunpack.c.l.b16 %v3254
  %v3541 = vunpack.c.h.b16 %v3254
  %v3542 = vunpack.c.l.b16 %v3255
  %v3543 = vunpack.c.h.b16 %v3255
  %v3544 = vunpack.c.l.b16 %v3256
  %v3545 = vunpack.c.h.b16 %v3256
  %v3546 = vunpack.c.l.b16 %v3257
  %v3547 = vunpack.c.h.b16 %v3257
  %v3548 = vunpack.c.l.b16 %v3258
  %v3549 = vunpack.c.h.b16 %v3258
  %v3550 = vunpack.c.l.b16 %v3259
  %v3551 = vunpack.c.h.b16 %v3259
  %v3552 = vunpack.c.l.b16 %v3260
  %v3553 = vunpack.c.h.b16 %v3260
  %v3554 = vunpack.c.l.b16 %v3261
  %v3555 = vunpack.c.h.b16 %v3261
  %v3556 = vunpack.c.l.b16 %v3262
  %v3557 = vunpack.c.h.b16 %v3262
  %v3558 = vunpack.c.l.b16 %v3263
  %v3559 = vunpack.c.h.b16 %v3263
  %v3560 = vunpack.c.l.b16 %v3264
  %v3561 = vunpack.c.h.b16 %v3264
  %v3562 = vunpack.c.l.b16 %v3265
  %v3563 = vunpack.c.h.b16 %v3265
  %v3564 = vunpack.c.l.b16 %v3266
  %v3565 = vunpack.c.h.b16 %v3266
  %v3566 = vunpack.c.l.b16 %v3267
  %v3567 = vunpack.c.h.b16 %v3267
  %v3568 = vunpack.c.l.b16 %v3268
  %v3569 = vunpack.c.h.b16 %v3268
  %v3570 = vunpack.c.l.b16 %v3269
  %v3571 = vunpack.c.h.b16 %v3269
  %v3572 = vunpack.c.l.b16 %v3270
  %v3573 = vunpack.c.h.b16 %v3270
  %v3574 = vunpack.c.l.b16 %v3271
  %v3575 = vunpack.c.h.b16 %v3271
  %v3576 = vunpack.c.l.b16 %v3272
  %v3577 = vunpack.c.h.b16 %v3272
  %v3578 = vunpack.c.l.b16 %v3273
  %v3579 = vunpack.c.h.b16 %v3273
  %v3580 = vunpack.c.l.b16 %v3274
  %v3581 = vunpack.c.h.b16 %v3274
  %v3582 = vunpack.c.l.b16 %v3275
  %v3583 = vunpack.c.h.b16 %v3275
  %v3584 = vunpack.c.l.b16 %v3276
  %v3585 = vunpack.c.h.b16 %v3276
  %v3586 = vunpack.c.l.b16 %v3277
  %v3587 = vunpack.c.h.b16 %v3277
  %v3588 = vunpack.c.l.b16 %v3278
  %v3589 = vunpack.c.h.b16 %v3278
  %v3590 = vunpack.c.l.b16 %v3279
  %v3591 = vunpack.c.h.b16 %v3279
  %v3592 = vunpack.c.l.b16 %v3280
  %v3593 = vunpack.c.h.b16 %v3280
  %v3594 = vunpack.c.l.b16 %v3281
  %v3595 = vunpack.c.h.b16 %v3281
  %v3596 = vunpack.c.l.b16 %v3282
  %v3597 = vunpack.c.h.b16 %v3282
  %v3598 = vunpack.c.l.b16 %v3283
  %v3599 = vunpack.c.h.b16 %v3283
  %v3600 = vunpack.c.l.b16 %v3284
  %v3601 = vunpack.c.h.b16 %v3284
  %v3602 = vunpack.c.l.b16 %v3285
  %v3603 = vunpack.c.h.b16 %v3285
  %v3604 = vunpack.c.l.b16 %v3286
  %v3605 = vunpack.c.h.b16 %v3286
  %v3606 = vunpack.c.l.b16 %v3287
  %v3607 = vunpack.c.h.b16 %v3287
  %v3608 = vunpack.c.l.b16 %v3288
  %v3609 = vunpack.c.h.b16 %v3288
  %v3610 = vunpack.c.l.b16 %v3289
  %v3611 = vunpack.c.h.b16 %v3289
  %v3612 = vunpack.c.l.b16 %v3290
  %v3613 = vunpack.c.h.b16 %v3290
  %v3614 = vunpack.c.l.b16 %v3291
  %v3615 = vunpack.c.h.b16 %v3291
  %v3616 = vunpack.c.l.b16 %v3292
  %v3617 = vunpack.c.h.b16 %v3292
  %v3618 = vunpack.c.l.b16 %v3293
  %v3619 = vunpack.c.h.b16 %v3293
  %v3620 = vunpack.c.l.b16 %v3294
  %v3621 = vunpack.c.h.b16 %v3294
  %v3622 = vunpack.c.l.b16 %v3295
  %v3623 = vunpack.c.h.b16 %v3295
  %v3624 = vunpack.c.l.b16 %v3296
  %v3625 = vunpack.c.h.b16 %v3296
  %v3626 = vunpack.c.l.b16 %v3297
  %v3627 = vunpack.c.h.b16 %v3297
  %v3628 = vunpack.c.l.b16 %v3298
  %v3629 = vunpack.c.h.b16 %v3298
  %v3630 = vunpack.c.l.b16 %v3299
  %v3631 = vunpack.c.h.b16 %v3299
  %v3632 = vunpack.c.l.b16 %v3300
  %v3633 = vunpack.c.h.b16 %v3300
  %v3634 = vunpack.c.l.b16 %v3301
  %v3635 = vunpack.c.h.b16 %v3301
  %v3636 = vunpack.c.l.b16 %v3302
  %v3637 = vunpack.c.h.b16 %v3302
  %v3638 = vunpack.c.l.b16 %v3303
  %v3639 = vunpack.c.h.b16 %v3303
  %v3640 = vunpack.c.l.b16 %v3304
  %v3641 = vunpack.c.h.b16 %v3304
  %v3642 = vunpack.c.l.b16 %v3305
  %v3643 = vunpack.c.h.b16 %v3305
  %v3644 = vunpack.c.l.b16 %v3306
  %v3645 = vunpack.c.h.b16 %v3306
  %v3646 = vunpack.c.l.b16 %v3307
  %v3647 = vunpack.c.h.b16 %v3307
  %v3648 = vunpack.c.l.b16 %v3308
  %v3649 = vunpack.c.h.b16 %v3308
  %v3650 = vunpack.c.l.b16 %v3309
  %v3651 = vunpack.c.h.b16 %v3309
  %v3652 = vunpack.c.l.b16 %v3310
  %v3653 = vunpack.c.h.b16 %v3310
  %v3654 = vunpack.c.l.b16 %v3311
  %v3655 = vunpack.c.h.b16 %v3311
  %v3656 = vunpack.c.l.b16 %v3312
  %v3657 = vunpack.c.h.b16 %v3312
  %v3658 = vunpack.c.l.b16 %v3313
  %v3659 = vunpack.c.h.b16 %v3313
  %v3660 = vunpack.c.l.b16 %v3314
  %v3661 = vunpack.c.h.b16 %v3314
  %v3662 = vunpack.c.l.b16 %v3315
  %v3663 = vunpack.c.h.b16 %v3315
  %v3664 = vunpack.c.l.b16 %v3316
  %v3665 = vunpack.c.h.b16 %v3316
  %v3666 = vunpack.c.l.b16 %v3317
  %v3667 = vunpack.c.h.b16 %v3317
  %v3668 = vunpack.c.l.b16 %v3318
  %v3669 = vunpack.c.h.b16 %v3318
  %v3670 = vunpack.c.l.b16 %v3319
  %v3671 = vunpack.c.h.b16 %v3319
  %v3672 = vunpack.c.l.b16 %v3320
  %v3673 = vunpack.c.h.b16 %v3320
  %v3674 = vunpack.c.l.b16 %v3321
  %v3675 = vunpack.c.h.b16 %v3321
  %v3676 = vunpack.c.l.b16 %v3322
  %v3677 = vunpack.c.h.b16 %v3322
  %v3678 = vunpack.c.l.b16 %v3323
  %v3679 = vunpack.c.h.b16 %v3323
  %v3680 = vunpack.c.l.b16 %v3324
  %v3681 = vunpack.c.h.b16 %v3324
  %v3682 = vunpack.c.l.b16 %v3325
  %v3683 = vunpack.c.h.b16 %v3325
  %v3684 = vunpack.c.l.b16 %v3326
  %v3685 = vunpack.c.h.b16 %v3326
  %v3686 = vunpack.c.l.b16 %v3327
  %v3687 = vunpack.c.h.b16 %v3327
  %v3688 = vunpack.c.l.b16 %v3328
  %v3689 = vunpack.c.h.b16 %v3328
  %v3690 = vunpack.c.l.b16 %v3329
  %v3691 = vunpack.c.h.b16 %v3329
  %v3692 = vunpack.c.l.b16 %v3330
  %v3693 = vunpack.c.h.b16 %v3330
  %v3694 = vunpack.c.l.b16 %v3331
  %v3695 = vunpack.c.h.b16 %v3331
  %v3696 = vunpack.c.l.b16 %v3332
  %v3697 = vunpack.c.h.b16 %v3332
  %v3698 = vunpack.c.l.b16 %v3333
  %v3699 = vunpack.c.h.b16 %v3333
  %v3700 = vunpack.c.l.b16 %v3334
  %v3701 = vunpack.c.h.b16 %v3334
  %v3702 = vunpack.c.l.b16 %v3335
  %v3703 = vunpack.c.h.b16 %v3335
  %v3704 = vunpack.c.l.b16 %v3336
  %v3705 = vunpack.c.h.b16 %v3336
  %v3706 = vunpack.c.l.b16 %v3337
  %v3707 = vunpack.c.h.b16 %v3337
  %v3708 = vunpack.c.l.b16 %v3338
  %v3709 = vunpack.c.h.b16 %v3338
  %v3710 = vunpack.c.l.b16 %v3339
  %v3711 = vunpack.c.h.b16 %v3339
  %v3712 = vunpack.c.l.b16 %v3340
  %v3713 = vunpack.c.h.b16 %v3340
  %v3714 = vunpack.c.l.b16 %v3341
  %v3715 = vunpack.c.h.b16 %v3341
  %v3716 = vunpack.c.l.b16 %v3342
  %v3717 = vunpack.c.h.b16 %v3342
  %v3718 = vunpack.c.l.b16 %v3343
  %v3719 = vunpack.c.h.b16 %v3343
  %v3720 = vunpack.c.l.b16 %v3344
  %v3721 = vunpack.c.h.b16 %v3344
  %v3722 = vunpack.c.l.b16 %v3345
  %v3723 = vunpack.c.h.b16 %v3345
  %v3724 = vunpack.c.l.b16 %v3346
  %v3725 = vunpack.c.h.b16 %v3346
  %v3726 = vunpack.c.l.b16 %v3347
  %v3727 = vunpack.c.h.b16 %v3347
  %v3728 = vunpack.c.l.b16 %v3348
  %v3729 = vunpack.c.h.b16 %v3348
  %v3730 = vunpack.c.l.b16 %v3349
  %v3731 = vunpack.c.h.b16 %v3349
  %v3732 = vunpack.c.l.b16 %v3350
  %v3733 = vunpack.c.h.b16 %v3350
  %v3734 = vunpack.c.l.b16 %v3351
  %v3735 = vunpack.c.h.b16 %v3351
  %v3736 = vpack.c.b16 %v3484, %v3480
  %v3737 = vpack.c.b16 %v3485, %v3481
  %v3738 = vpack.c.b16 %v3486, %v3482
  %v3739 = vpack.c.b16 %v3487, %v3483
  %v3740 = vpack.c.b16 %v3492, %v3488
  %v3741 = vpack.c.b16 %v3493, %v3489
  %v3742 = vpack.c.b16 %v3494, %v3490
  %v3743 = vpack.c.b16 %v3495, %v3491
  %v3744 = vpack.c.b16 %v3500, %v3496
  %v3745 = vpack.c.b16 %v3501, %v3497
  %v3746 = vpack.c.b16 %v3502, %v3498
  %v3747 = vpack.c.b16 %v3503, %v3499
  %v3748 = vpack.c.b16 %v3508, %v3504
  %v3749 = vpack.c.b16 %v3509, %v3505
  %v3750 = vpack.c.b16 %v3510, %v3506
  %v3751 = vpack.c.b16 %v3511, %v3507
  %v3752 = vpack.c.b16 %v3516, %v3512
  %v3753 = vpack.c.b16 %v3517, %v3513
  %v3754 = vpack.c.b16 %v3518, %v3514
  %v3755 = vpack.c.b16 %v3519, %v3515
  %v3756 = vpack.c.b16 %v3524, %v3520
  %v3757 = vpack.c.b16 %v3525, %v3521
  %v3758 = vpack.c.b16 %v3526, %v3522
  %v3759 = vpack.c.b16 %v3527, %v3523
  %v3760 = vpack.c.b16 %v3532, %v3528
  %v3761 = vpack.c.b16 %v3533, %v3529
  %v3762 = vpack.c.b16 %v3534, %v3530
  %v3763 = vpack.c.b16 %v3535, %v3531
  %v3764 = vpack.c.b16 %v3540, %v3536
  %v3765 = vpack.c.b16 %v3541, %v3537
  %v3766 = vpack.c.b16 %v3542, %v3538
  %v3767 = vpack.c.b16 %v3543, %v3539
  %v3768 = vpack.c.b16 %v3548, %v3544
  %v3769 = vpack.c.b16 %v3549, %v3545
  %v3770 = vpack.c.b16 %v3550, %v3546
  %v3771 = vpack.c.b16 %v3551, %v3547
  %v3772 = vpack.c.b16 %v3556, %v3552
  %v3773 = vpack.c.b16 %v3557, %v3553
  %v3774 = vpack.c.b16 %v3558, %v3554
  %v3775 = vpack.c.b16 %v3559, %v3555
  %v3776 = vpack.c.b16 %v3564, %v3560
  %v3777 = vpack.c.b16 %v3565, %v3561
  %v3778 = vpack.c.b16 %v3566, %v3562
  %v3779 = vpack.c.b16 %v3567, %v3563
  %v3780 = vpack.c.b16 %v3572, %v3568
  %v3781 = vpack.c.b16 %v3573, %v3569
  %v3782 = vpack.c.b16 %v3574, %v3570
  %v3783 = vpack.c.b16 %v3575, %v3571
  %v3784 = vpack.c.b16 %v3580, %v3576
  %v3785 = vpack.c.b16 %v3581, %v3577
  %v3786 = vpack.c.b16 %v3582, %v3578
  %v3787 = vpack.c.b16 %v3583, %v3579
  %v3788 = vpack.c.b16 %v3588, %v3584
  %v3789 = vpack.c.b16 %v3589, %v3585
  %v3790 = vpack.c.b16 %v3590, %v3586
  %v3791 = vpack.c.b16 %v3591, %v3587
  %v3792 = vpack.c.b16 %v3596, %v3592
  %v3793 = vpack.c.b16 %v3597, %v3593
  %v3794 = vpack.c.b16 %v3598, %v3594
  %v3795 = vpack.c.b16 %v3599, %v3595
  %v3796 = vpack.c.b16 %v3604, %v3600
  %v3797 = vpack.c.b16 %v3605, %v3601
  %v3798 = vpack.c.b16 %v3606, %v3602
  %v3799 = vpack.c.b16 %v3607, %v3603
  %v3800 = vpack.c.b16 %v3612, %v3608
  %v3801 = vpack.c.b16 %v3613, %v3609
  %v3802 = vpack.c.b16 %v3614, %v3610
  %v3803 = vpack.c.b16 %v3615, %v3611
  %v3804 = vpack.c.b16 %v3620, %v3616
  %v3805 = vpack.c.b16 %v3621, %v3617
  %v3806 = vpack.c.b16 %v3622, %v3618
  %v3807 = vpack.c.b16 %v3623, %v3619
  %v3808 = vpack.c.b16 %v3628, %v3624
  %v3809 = vpack.c.b16 %v3629, %v3625
  %v3810 = vpack.c.b16 %v3630, %v3626
  %v3811 = vpack.c.b16 %v3631, %v3627
  %v3812 = vpack.c.b16 %v3636, %v3632
  %v3813 = vpack.c.b16 %v3637, %v3633
  %v3814 = vpack.c.b16 %v3638, %v3634
  %v3815 = vpack.c.b16 %v3639, %v3635
  %v3816 = vpack.c.b16 %v3644, %v3640
  %v3817 = vpack.c.b16 %v3645, %v3641
  %v3818 = vpack.c.b16 %v3646, %v3642
  %v3819 = vpack.c.b16 %v3647, %v3643
  %v3820 = vpack.c.b16 %v3652, %v3648
  %v3821 = vpack.c.b16 %v3653, %v3649
  %v3822 = vpack.c.b16 %v3654, %v3650
  %v3823 = vpack.c.b16 %v3655, %v3651
  %v3824 = vpack.c.b16 %v3660, %v3656
  %v3825 = vpack.c.b16 %v3661, %v3657
  %v3826 = vpack.c.b16 %v3662, %v3658
  %v3827 = vpack.c.b16 %v3663, %v3659
  %v3828 = vpack.c.b16 %v3668, %v3664
  %v3829 = vpack.c.b16 %v3669, %v3665
  %v3830 = vpack.c.b16 %v3670, %v3666
  %v3831 = vpack.c.b16 %v3671, %v3667
  %v3832 = vpack.c.b16 %v3676, %v3672
  %v3833 = vpack.c.b16 %v3677, %v3673
  %v3834 = vpack.c.b16 %v3678, %v3674
  %v3835 = vpack.c.b16 %v3679, %v3675
  %v3836 = vpack.c.b16 %v3684, %v3680
  %v3837 = vpack.c.b16 %v3685, %v3681
  %v3838 = vpack.c.b16 %v3686, %v3682
  %v3839 = vpack.c.b16 %v3687, %v3683
  %v3840 = vpack.c.b16 %v3692, %v3688
  %v3841 = vpack.c.b16 %v3693, %v3689
  %v3842 = vpack.c.b16 %v3694, %v3690
  %v3843 = vpack.c.b16 %v3695, %v3691
  %v3844 = vpack.c.b16 %v3700, %v3696
  %v3845 = vpack.c.b16 %v3701, %v3697
  %v3846 = vpack.c.b16 %v3702, %v3698
  %v3847 = vpack.c.b16 %v3703, %v3699
  %v3848 = vpack.c.b16 %v3708, %v3704
  %v3849 = vpack.c.b16 %v3709, %v3705
  %v3850 = vpack.c.b16 %v3710, %v3706
  %v3851 = vpack.c.b16 %v3711, %v3707
  %v3852 = vpack.c.b16 %v3716, %v3712
  %v3853 = vpack.c.b16 %v3717, %v3713
  %v3854 = vpack.c.b16 %v3718, %v3714
  %v3855 = vpack.c.b16 %v3719, %v3715
  %v3856 = vpack.c.b16 %v3724, %v3720
  %v3857 = vpack.c.b16 %v3725, %v3721
  %v3858 = vpack.c.b16 %v3726, %v3722
  %v3859 = vpack.c.b16 %v3727, %v3723
  %v3860 = vpack.c.b16 %v3732, %v3728
  %v3861 = vpack.c.b16 %v3733, %v3729
  %v3862 = vpack.c.b16 %v3734, %v3730
  %v3863 = vpack.c.b16 %v3735, %v3731
  %3992 = vmatpush.bf16.msra.mxu0 %v981
  %3993 = vmatpush.bf16.msra.mxu0 %v980
  %3994 = vmatpush.bf16.msra.mxu0 %v979
  %3995 = vmatpush.bf16.msra.mxu0 %v978
  %3996 = vmatpush.bf16.msra.mxu0 %v977
  %3997 = vmatpush.bf16.msra.mxu0 %v976
  %3998 = vmatpush.bf16.msra.mxu0 %v975
  %3999 = vmatpush.bf16.msra.mxu0 %v974
  %4000 = vmatmul.bf16.gmra.mxu0 %v3736
  %v4001 = vpop.f32.mrf.mxu0
  %v4002 = vadd.f32 0.0, %v4001
  %v4003 = vpop.f32.mrf.mxu0
  %v4004 = vadd.f32 0.0, %v4003
  %4005 = vmatmul.bf16.gmra.mxu0 %v3740
  %v4006 = vpop.f32.mrf.mxu0
  %v4007 = vadd.f32 0.0, %v4006
  %v4008 = vpop.f32.mrf.mxu0
  %v4009 = vadd.f32 0.0, %v4008
  %4010 = vmatmul.bf16.gmra.mxu0 %v3744
  %v4011 = vpop.f32.mrf.mxu0
  %v4012 = vadd.f32 0.0, %v4011
  %v4013 = vpop.f32.mrf.mxu0
  %v4014 = vadd.f32 0.0, %v4013
  %4015 = vmatmul.bf16.gmra.mxu0 %v3748
  %v4016 = vpop.f32.mrf.mxu0
  %v4017 = vadd.f32 0.0, %v4016
  %v4018 = vpop.f32.mrf.mxu0
  %v4019 = vadd.f32 0.0, %v4018
  %4020 = vmatmul.bf16.gmra.mxu0 %v3752
  %v4021 = vpop.f32.mrf.mxu0
  %v4022 = vadd.f32 0.0, %v4021
  %v4023 = vpop.f32.mrf.mxu0
  %v4024 = vadd.f32 0.0, %v4023
  %4025 = vmatmul.bf16.gmra.mxu0 %v3756
  %v4026 = vpop.f32.mrf.mxu0
  %v4027 = vadd.f32 0.0, %v4026
  %v4028 = vpop.f32.mrf.mxu0
  %v4029 = vadd.f32 0.0, %v4028
  %4030 = vmatmul.bf16.gmra.mxu0 %v3760
  %v4031 = vpop.f32.mrf.mxu0
  %v4032 = vadd.f32 0.0, %v4031
  %v4033 = vpop.f32.mrf.mxu0
  %v4034 = vadd.f32 0.0, %v4033
  %4035 = vmatmul.bf16.gmra.mxu0 %v3764
  %v4036 = vpop.f32.mrf.mxu0
  %v4037 = vadd.f32 0.0, %v4036
  %v4038 = vpop.f32.mrf.mxu0
  %v4039 = vadd.f32 0.0, %v4038
  %4040 = vmatmul.bf16.gmra.mxu0 %v3768
  %v4041 = vpop.f32.mrf.mxu0
  %v4042 = vadd.f32 0.0, %v4041
  %v4043 = vpop.f32.mrf.mxu0
  %v4044 = vadd.f32 0.0, %v4043
  %4045 = vmatmul.bf16.gmra.mxu0 %v3772
  %v4046 = vpop.f32.mrf.mxu0
  %v4047 = vadd.f32 0.0, %v4046
  %v4048 = vpop.f32.mrf.mxu0
  %v4049 = vadd.f32 0.0, %v4048
  %4050 = vmatmul.bf16.gmra.mxu0 %v3776
  %v4051 = vpop.f32.mrf.mxu0
  %v4052 = vadd.f32 0.0, %v4051
  %v4053 = vpop.f32.mrf.mxu0
  %v4054 = vadd.f32 0.0, %v4053
  %4055 = vmatmul.bf16.gmra.mxu0 %v3780
  %v4056 = vpop.f32.mrf.mxu0
  %v4057 = vadd.f32 0.0, %v4056
  %v4058 = vpop.f32.mrf.mxu0
  %v4059 = vadd.f32 0.0, %v4058
  %4060 = vmatmul.bf16.gmra.mxu0 %v3784
  %v4061 = vpop.f32.mrf.mxu0
  %v4062 = vadd.f32 0.0, %v4061
  %v4063 = vpop.f32.mrf.mxu0
  %v4064 = vadd.f32 0.0, %v4063
  %4065 = vmatmul.bf16.gmra.mxu0 %v3788
  %v4066 = vpop.f32.mrf.mxu0
  %v4067 = vadd.f32 0.0, %v4066
  %v4068 = vpop.f32.mrf.mxu0
  %v4069 = vadd.f32 0.0, %v4068
  %4070 = vmatmul.bf16.gmra.mxu0 %v3792
  %v4071 = vpop.f32.mrf.mxu0
  %v4072 = vadd.f32 0.0, %v4071
  %v4073 = vpop.f32.mrf.mxu0
  %v4074 = vadd.f32 0.0, %v4073
  %4075 = vmatmul.bf16.gmra.mxu0 %v3796
  %v4076 = vpop.f32.mrf.mxu0
  %v4077 = vadd.f32 0.0, %v4076
  %v4078 = vpop.f32.mrf.mxu0
  %v4079 = vadd.f32 0.0, %v4078
  %4080 = vmatmul.bf16.gmra.mxu0 %v3800
  %v4081 = vpop.f32.mrf.mxu0
  %v4082 = vadd.f32 0.0, %v4081
  %v4083 = vpop.f32.mrf.mxu0
  %v4084 = vadd.f32 0.0, %v4083
  %4085 = vmatmul.bf16.gmra.mxu0 %v3804
  %v4086 = vpop.f32.mrf.mxu0
  %v4087 = vadd.f32 0.0, %v4086
  %v4088 = vpop.f32.mrf.mxu0
  %v4089 = vadd.f32 0.0, %v4088
  %4090 = vmatmul.bf16.gmra.mxu0 %v3808
  %v4091 = vpop.f32.mrf.mxu0
  %v4092 = vadd.f32 0.0, %v4091
  %v4093 = vpop.f32.mrf.mxu0
  %v4094 = vadd.f32 0.0, %v4093
  %4095 = vmatmul.bf16.gmra.mxu0 %v3812
  %v4096 = vpop.f32.mrf.mxu0
  %v4097 = vadd.f32 0.0, %v4096
  %v4098 = vpop.f32.mrf.mxu0
  %v4099 = vadd.f32 0.0, %v4098
  %4100 = vmatmul.bf16.gmra.mxu0 %v3816
  %v4101 = vpop.f32.mrf.mxu0
  %v4102 = vadd.f32 0.0, %v4101
  %v4103 = vpop.f32.mrf.mxu0
  %v4104 = vadd.f32 0.0, %v4103
  %4105 = vmatmul.bf16.gmra.mxu0 %v3820
  %v4106 = vpop.f32.mrf.mxu0
  %v4107 = vadd.f32 0.0, %v4106
  %v4108 = vpop.f32.mrf.mxu0
  %v4109 = vadd.f32 0.0, %v4108
  %4110 = vmatmul.bf16.gmra.mxu0 %v3824
  %v4111 = vpop.f32.mrf.mxu0
  %v4112 = vadd.f32 0.0, %v4111
  %v4113 = vpop.f32.mrf.mxu0
  %v4114 = vadd.f32 0.0, %v4113
  %4115 = vmatmul.bf16.gmra.mxu0 %v3828
  %v4116 = vpop.f32.mrf.mxu0
  %v4117 = vadd.f32 0.0, %v4116
  %v4118 = vpop.f32.mrf.mxu0
  %v4119 = vadd.f32 0.0, %v4118
  %4120 = vmatmul.bf16.gmra.mxu0 %v3832
  %v4121 = vpop.f32.mrf.mxu0
  %v4122 = vadd.f32 0.0, %v4121
  %v4123 = vpop.f32.mrf.mxu0
  %v4124 = vadd.f32 0.0, %v4123
  %4125 = vmatmul.bf16.gmra.mxu0 %v3836
  %v4126 = vpop.f32.mrf.mxu0
  %v4127 = vadd.f32 0.0, %v4126
  %v4128 = vpop.f32.mrf.mxu0
  %v4129 = vadd.f32 0.0, %v4128
  %4130 = vmatmul.bf16.gmra.mxu0 %v3840
  %v4131 = vpop.f32.mrf.mxu0
  %v4132 = vadd.f32 0.0, %v4131
  %v4133 = vpop.f32.mrf.mxu0
  %v4134 = vadd.f32 0.0, %v4133
  %4135 = vmatmul.bf16.gmra.mxu0 %v3844
  %v4136 = vpop.f32.mrf.mxu0
  %v4137 = vadd.f32 0.0, %v4136
  %v4138 = vpop.f32.mrf.mxu0
  %v4139 = vadd.f32 0.0, %v4138
  %4140 = vmatmul.bf16.gmra.mxu0 %v3848
  %v4141 = vpop.f32.mrf.mxu0
  %v4142 = vadd.f32 0.0, %v4141
  %v4143 = vpop.f32.mrf.mxu0
  %v4144 = vadd.f32 0.0, %v4143
  %4145 = vmatmul.bf16.gmra.mxu0 %v3852
  %v4146 = vpop.f32.mrf.mxu0
  %v4147 = vadd.f32 0.0, %v4146
  %v4148 = vpop.f32.mrf.mxu0
  %v4149 = vadd.f32 0.0, %v4148
  %4150 = vmatmul.bf16.gmra.mxu0 %v3856
  %v4151 = vpop.f32.mrf.mxu0
  %v4152 = vadd.f32 0.0, %v4151
  %v4153 = vpop.f32.mrf.mxu0
  %v4154 = vadd.f32 0.0, %v4153
  %4155 = vmatmul.bf16.gmra.mxu0 %v3860
  %v4156 = vpop.f32.mrf.mxu0
  %v4157 = vadd.f32 0.0, %v4156
  %v4158 = vpop.f32.mrf.mxu0
  %v4159 = vadd.f32 0.0, %v4158
  %4160 = vdwg.mxu0
  %4161 = vmatpush.bf16.msra.mxu0 %v989
  %4162 = vmatpush.bf16.msra.mxu0 %v988
  %4163 = vmatpush.bf16.msra.mxu0 %v987
  %4164 = vmatpush.bf16.msra.mxu0 %v986
  %4165 = vmatpush.bf16.msra.mxu0 %v985
  %4166 = vmatpush.bf16.msra.mxu0 %v984
  %4167 = vmatpush.bf16.msra.mxu0 %v983
  %4168 = vmatpush.bf16.msra.mxu0 %v982
  %4169 = vmatmul.bf16.gmra.mxu0 %v3737
  %v4170 = vpop.f32.mrf.mxu0
  %v4171 = vadd.f32 %v4002, %v4170
  %v4172 = vpop.f32.mrf.mxu0
  %v4173 = vadd.f32 %v4004, %v4172
  %4174 = vmatmul.bf16.gmra.mxu0 %v3741
  %v4175 = vpop.f32.mrf.mxu0
  %v4176 = vadd.f32 %v4007, %v4175
  %v4177 = vpop.f32.mrf.mxu0
  %v4178 = vadd.f32 %v4009, %v4177
  %4179 = vmatmul.bf16.gmra.mxu0 %v3745
  %v4180 = vpop.f32.mrf.mxu0
  %v4181 = vadd.f32 %v4012, %v4180
  %v4182 = vpop.f32.mrf.mxu0
  %v4183 = vadd.f32 %v4014, %v4182
  %4184 = vmatmul.bf16.gmra.mxu0 %v3749
  %v4185 = vpop.f32.mrf.mxu0
  %v4186 = vadd.f32 %v4017, %v4185
  %v4187 = vpop.f32.mrf.mxu0
  %v4188 = vadd.f32 %v4019, %v4187
  %4189 = vmatmul.bf16.gmra.mxu0 %v3753
  %v4190 = vpop.f32.mrf.mxu0
  %v4191 = vadd.f32 %v4022, %v4190
  %v4192 = vpop.f32.mrf.mxu0
  %v4193 = vadd.f32 %v4024, %v4192
  %4194 = vmatmul.bf16.gmra.mxu0 %v3757
  %v4195 = vpop.f32.mrf.mxu0
  %v4196 = vadd.f32 %v4027, %v4195
  %v4197 = vpop.f32.mrf.mxu0
  %v4198 = vadd.f32 %v4029, %v4197
  %4199 = vmatmul.bf16.gmra.mxu0 %v3761
  %v4200 = vpop.f32.mrf.mxu0
  %v4201 = vadd.f32 %v4032, %v4200
  %v4202 = vpop.f32.mrf.mxu0
  %v4203 = vadd.f32 %v4034, %v4202
  %4204 = vmatmul.bf16.gmra.mxu0 %v3765
  %v4205 = vpop.f32.mrf.mxu0
  %v4206 = vadd.f32 %v4037, %v4205
  %v4207 = vpop.f32.mrf.mxu0
  %v4208 = vadd.f32 %v4039, %v4207
  %4209 = vmatmul.bf16.gmra.mxu0 %v3769
  %v4210 = vpop.f32.mrf.mxu0
  %v4211 = vadd.f32 %v4042, %v4210
  %v4212 = vpop.f32.mrf.mxu0
  %v4213 = vadd.f32 %v4044, %v4212
  %4214 = vmatmul.bf16.gmra.mxu0 %v3773
  %v4215 = vpop.f32.mrf.mxu0
  %v4216 = vadd.f32 %v4047, %v4215
  %v4217 = vpop.f32.mrf.mxu0
  %v4218 = vadd.f32 %v4049, %v4217
  %4219 = vmatmul.bf16.gmra.mxu0 %v3777
  %v4220 = vpop.f32.mrf.mxu0
  %v4221 = vadd.f32 %v4052, %v4220
  %v4222 = vpop.f32.mrf.mxu0
  %v4223 = vadd.f32 %v4054, %v4222
  %4224 = vmatmul.bf16.gmra.mxu0 %v3781
  %v4225 = vpop.f32.mrf.mxu0
  %v4226 = vadd.f32 %v4057, %v4225
  %v4227 = vpop.f32.mrf.mxu0
  %v4228 = vadd.f32 %v4059, %v4227
  %4229 = vmatmul.bf16.gmra.mxu0 %v3785
  %v4230 = vpop.f32.mrf.mxu0
  %v4231 = vadd.f32 %v4062, %v4230
  %v4232 = vpop.f32.mrf.mxu0
  %v4233 = vadd.f32 %v4064, %v4232
  %4234 = vmatmul.bf16.gmra.mxu0 %v3789
  %v4235 = vpop.f32.mrf.mxu0
  %v4236 = vadd.f32 %v4067, %v4235
  %v4237 = vpop.f32.mrf.mxu0
  %v4238 = vadd.f32 %v4069, %v4237
  %4239 = vmatmul.bf16.gmra.mxu0 %v3793
  %v4240 = vpop.f32.mrf.mxu0
  %v4241 = vadd.f32 %v4072, %v4240
  %v4242 = vpop.f32.mrf.mxu0
  %v4243 = vadd.f32 %v4074, %v4242
  %4244 = vmatmul.bf16.gmra.mxu0 %v3797
  %v4245 = vpop.f32.mrf.mxu0
  %v4246 = vadd.f32 %v4077, %v4245
  %v4247 = vpop.f32.mrf.mxu0
  %v4248 = vadd.f32 %v4079, %v4247
  %4249 = vmatmul.bf16.gmra.mxu0 %v3801
  %v4250 = vpop.f32.mrf.mxu0
  %v4251 = vadd.f32 %v4082, %v4250
  %v4252 = vpop.f32.mrf.mxu0
  %v4253 = vadd.f32 %v4084, %v4252
  %4254 = vmatmul.bf16.gmra.mxu0 %v3805
  %v4255 = vpop.f32.mrf.mxu0
  %v4256 = vadd.f32 %v4087, %v4255
  %v4257 = vpop.f32.mrf.mxu0
  %v4258 = vadd.f32 %v4089, %v4257
  %4259 = vmatmul.bf16.gmra.mxu0 %v3809
  %v4260 = vpop.f32.mrf.mxu0
  %v4261 = vadd.f32 %v4092, %v4260
  %v4262 = vpop.f32.mrf.mxu0
  %v4263 = vadd.f32 %v4094, %v4262
  %4264 = vmatmul.bf16.gmra.mxu0 %v3813
  %v4265 = vpop.f32.mrf.mxu0
  %v4266 = vadd.f32 %v4097, %v4265
  %v4267 = vpop.f32.mrf.mxu0
  %v4268 = vadd.f32 %v4099, %v4267
  %4269 = vmatmul.bf16.gmra.mxu0 %v3817
  %v4270 = vpop.f32.mrf.mxu0
  %v4271 = vadd.f32 %v4102, %v4270
  %v4272 = vpop.f32.mrf.mxu0
  %v4273 = vadd.f32 %v4104, %v4272
  %4274 = vmatmul.bf16.gmra.mxu0 %v3821
  %v4275 = vpop.f32.mrf.mxu0
  %v4276 = vadd.f32 %v4107, %v4275
  %v4277 = vpop.f32.mrf.mxu0
  %v4278 = vadd.f32 %v4109, %v4277
  %4279 = vmatmul.bf16.gmra.mxu0 %v3825
  %v4280 = vpop.f32.mrf.mxu0
  %v4281 = vadd.f32 %v4112, %v4280
  %v4282 = vpop.f32.mrf.mxu0
  %v4283 = vadd.f32 %v4114, %v4282
  %4284 = vmatmul.bf16.gmra.mxu0 %v3829
  %v4285 = vpop.f32.mrf.mxu0
  %v4286 = vadd.f32 %v4117, %v4285
  %v4287 = vpop.f32.mrf.mxu0
  %v4288 = vadd.f32 %v4119, %v4287
  %4289 = vmatmul.bf16.gmra.mxu0 %v3833
  %v4290 = vpop.f32.mrf.mxu0
  %v4291 = vadd.f32 %v4122, %v4290
  %v4292 = vpop.f32.mrf.mxu0
  %v4293 = vadd.f32 %v4124, %v4292
  %4294 = vmatmul.bf16.gmra.mxu0 %v3837
  %v4295 = vpop.f32.mrf.mxu0
  %v4296 = vadd.f32 %v4127, %v4295
  %v4297 = vpop.f32.mrf.mxu0
  %v4298 = vadd.f32 %v4129, %v4297
  %4299 = vmatmul.bf16.gmra.mxu0 %v3841
  %v4300 = vpop.f32.mrf.mxu0
  %v4301 = vadd.f32 %v4132, %v4300
  %v4302 = vpop.f32.mrf.mxu0
  %v4303 = vadd.f32 %v4134, %v4302
  %4304 = vmatmul.bf16.gmra.mxu0 %v3845
  %v4305 = vpop.f32.mrf.mxu0
  %v4306 = vadd.f32 %v4137, %v4305
  %v4307 = vpop.f32.mrf.mxu0
  %v4308 = vadd.f32 %v4139, %v4307
  %4309 = vmatmul.bf16.gmra.mxu0 %v3849
  %v4310 = vpop.f32.mrf.mxu0
  %v4311 = vadd.f32 %v4142, %v4310
  %v4312 = vpop.f32.mrf.mxu0
  %v4313 = vadd.f32 %v4144, %v4312
  %4314 = vmatmul.bf16.gmra.mxu0 %v3853
  %v4315 = vpop.f32.mrf.mxu0
  %v4316 = vadd.f32 %v4147, %v4315
  %v4317 = vpop.f32.mrf.mxu0
  %v4318 = vadd.f32 %v4149, %v4317
  %4319 = vmatmul.bf16.gmra.mxu0 %v3857
  %v4320 = vpop.f32.mrf.mxu0
  %v4321 = vadd.f32 %v4152, %v4320
  %v4322 = vpop.f32.mrf.mxu0
  %v4323 = vadd.f32 %v4154, %v4322
  %4324 = vmatmul.bf16.gmra.mxu0 %v3861
  %v4325 = vpop.f32.mrf.mxu0
  %v4326 = vadd.f32 %v4157, %v4325
  %v4327 = vpop.f32.mrf.mxu0
  %v4328 = vadd.f32 %v4159, %v4327
  %4329 = vdwg.mxu0
  %4330 = vmatpush.bf16.msra.mxu0 %v997
  %4331 = vmatpush.bf16.msra.mxu0 %v996
  %4332 = vmatpush.bf16.msra.mxu0 %v995
  %4333 = vmatpush.bf16.msra.mxu0 %v994
  %4334 = vmatpush.bf16.msra.mxu0 %v993
  %4335 = vmatpush.bf16.msra.mxu0 %v992
  %4336 = vmatpush.bf16.msra.mxu0 %v991
  %4337 = vmatpush.bf16.msra.mxu0 %v990
  %4338 = vmatmul.bf16.gmra.mxu0 %v3738
  %v4339 = vpop.f32.mrf.mxu0
  %v4340 = vadd.f32 %v4171, %v4339
  %v4341 = vpop.f32.mrf.mxu0
  %v4342 = vadd.f32 %v4173, %v4341
  %4343 = vmatmul.bf16.gmra.mxu0 %v3742
  %v4344 = vpop.f32.mrf.mxu0
  %v4345 = vadd.f32 %v4176, %v4344
  %v4346 = vpop.f32.mrf.mxu0
  %v4347 = vadd.f32 %v4178, %v4346
  %4348 = vmatmul.bf16.gmra.mxu0 %v3746
  %v4349 = vpop.f32.mrf.mxu0
  %v4350 = vadd.f32 %v4181, %v4349
  %v4351 = vpop.f32.mrf.mxu0
  %v4352 = vadd.f32 %v4183, %v4351
  %4353 = vmatmul.bf16.gmra.mxu0 %v3750
  %v4354 = vpop.f32.mrf.mxu0
  %v4355 = vadd.f32 %v4186, %v4354
  %v4356 = vpop.f32.mrf.mxu0
  %v4357 = vadd.f32 %v4188, %v4356
  %4358 = vmatmul.bf16.gmra.mxu0 %v3754
  %v4359 = vpop.f32.mrf.mxu0
  %v4360 = vadd.f32 %v4191, %v4359
  %v4361 = vpop.f32.mrf.mxu0
  %v4362 = vadd.f32 %v4193, %v4361
  %4363 = vmatmul.bf16.gmra.mxu0 %v3758
  %v4364 = vpop.f32.mrf.mxu0
  %v4365 = vadd.f32 %v4196, %v4364
  %v4366 = vpop.f32.mrf.mxu0
  %v4367 = vadd.f32 %v4198, %v4366
  %4368 = vmatmul.bf16.gmra.mxu0 %v3762
  %v4369 = vpop.f32.mrf.mxu0
  %v4370 = vadd.f32 %v4201, %v4369
  %v4371 = vpop.f32.mrf.mxu0
  %v4372 = vadd.f32 %v4203, %v4371
  %4373 = vmatmul.bf16.gmra.mxu0 %v3766
  %v4374 = vpop.f32.mrf.mxu0
  %v4375 = vadd.f32 %v4206, %v4374
  %v4376 = vpop.f32.mrf.mxu0
  %v4377 = vadd.f32 %v4208, %v4376
  %4378 = vmatmul.bf16.gmra.mxu0 %v3770
  %v4379 = vpop.f32.mrf.mxu0
  %v4380 = vadd.f32 %v4211, %v4379
  %v4381 = vpop.f32.mrf.mxu0
  %v4382 = vadd.f32 %v4213, %v4381
  %4383 = vmatmul.bf16.gmra.mxu0 %v3774
  %v4384 = vpop.f32.mrf.mxu0
  %v4385 = vadd.f32 %v4216, %v4384
  %v4386 = vpop.f32.mrf.mxu0
  %v4387 = vadd.f32 %v4218, %v4386
  %4388 = vmatmul.bf16.gmra.mxu0 %v3778
  %v4389 = vpop.f32.mrf.mxu0
  %v4390 = vadd.f32 %v4221, %v4389
  %v4391 = vpop.f32.mrf.mxu0
  %v4392 = vadd.f32 %v4223, %v4391
  %4393 = vmatmul.bf16.gmra.mxu0 %v3782
  %v4394 = vpop.f32.mrf.mxu0
  %v4395 = vadd.f32 %v4226, %v4394
  %v4396 = vpop.f32.mrf.mxu0
  %v4397 = vadd.f32 %v4228, %v4396
  %4398 = vmatmul.bf16.gmra.mxu0 %v3786
  %v4399 = vpop.f32.mrf.mxu0
  %v4400 = vadd.f32 %v4231, %v4399
  %v4401 = vpop.f32.mrf.mxu0
  %v4402 = vadd.f32 %v4233, %v4401
  %4403 = vmatmul.bf16.gmra.mxu0 %v3790
  %v4404 = vpop.f32.mrf.mxu0
  %v4405 = vadd.f32 %v4236, %v4404
  %v4406 = vpop.f32.mrf.mxu0
  %v4407 = vadd.f32 %v4238, %v4406
  %4408 = vmatmul.bf16.gmra.mxu0 %v3794
  %v4409 = vpop.f32.mrf.mxu0
  %v4410 = vadd.f32 %v4241, %v4409
  %v4411 = vpop.f32.mrf.mxu0
  %v4412 = vadd.f32 %v4243, %v4411
  %4413 = vmatmul.bf16.gmra.mxu0 %v3798
  %v4414 = vpop.f32.mrf.mxu0
  %v4415 = vadd.f32 %v4246, %v4414
  %v4416 = vpop.f32.mrf.mxu0
  %v4417 = vadd.f32 %v4248, %v4416
  %4418 = vmatmul.bf16.gmra.mxu0 %v3802
  %v4419 = vpop.f32.mrf.mxu0
  %v4420 = vadd.f32 %v4251, %v4419
  %v4421 = vpop.f32.mrf.mxu0
  %v4422 = vadd.f32 %v4253, %v4421
  %4423 = vmatmul.bf16.gmra.mxu0 %v3806
  %v4424 = vpop.f32.mrf.mxu0
  %v4425 = vadd.f32 %v4256, %v4424
  %v4426 = vpop.f32.mrf.mxu0
  %v4427 = vadd.f32 %v4258, %v4426
  %4428 = vmatmul.bf16.gmra.mxu0 %v3810
  %v4429 = vpop.f32.mrf.mxu0
  %v4430 = vadd.f32 %v4261, %v4429
  %v4431 = vpop.f32.mrf.mxu0
  %v4432 = vadd.f32 %v4263, %v4431
  %4433 = vmatmul.bf16.gmra.mxu0 %v3814
  %v4434 = vpop.f32.mrf.mxu0
  %v4435 = vadd.f32 %v4266, %v4434
  %v4436 = vpop.f32.mrf.mxu0
  %v4437 = vadd.f32 %v4268, %v4436
  %4438 = vmatmul.bf16.gmra.mxu0 %v3818
  %v4439 = vpop.f32.mrf.mxu0
  %v4440 = vadd.f32 %v4271, %v4439
  %v4441 = vpop.f32.mrf.mxu0
  %v4442 = vadd.f32 %v4273, %v4441
  %4443 = vmatmul.bf16.gmra.mxu0 %v3822
  %v4444 = vpop.f32.mrf.mxu0
  %v4445 = vadd.f32 %v4276, %v4444
  %v4446 = vpop.f32.mrf.mxu0
  %v4447 = vadd.f32 %v4278, %v4446
  %4448 = vmatmul.bf16.gmra.mxu0 %v3826
  %v4449 = vpop.f32.mrf.mxu0
  %v4450 = vadd.f32 %v4281, %v4449
  %v4451 = vpop.f32.mrf.mxu0
  %v4452 = vadd.f32 %v4283, %v4451
  %4453 = vmatmul.bf16.gmra.mxu0 %v3830
  %v4454 = vpop.f32.mrf.mxu0
  %v4455 = vadd.f32 %v4286, %v4454
  %v4456 = vpop.f32.mrf.mxu0
  %v4457 = vadd.f32 %v4288, %v4456
  %4458 = vmatmul.bf16.gmra.mxu0 %v3834
  %v4459 = vpop.f32.mrf.mxu0
  %v4460 = vadd.f32 %v4291, %v4459
  %v4461 = vpop.f32.mrf.mxu0
  %v4462 = vadd.f32 %v4293, %v4461
  %4463 = vmatmul.bf16.gmra.mxu0 %v3838
  %v4464 = vpop.f32.mrf.mxu0
  %v4465 = vadd.f32 %v4296, %v4464
  %v4466 = vpop.f32.mrf.mxu0
  %v4467 = vadd.f32 %v4298, %v4466
  %4468 = vmatmul.bf16.gmra.mxu0 %v3842
  %v4469 = vpop.f32.mrf.mxu0
  %v4470 = vadd.f32 %v4301, %v4469
  %v4471 = vpop.f32.mrf.mxu0
  %v4472 = vadd.f32 %v4303, %v4471
  %4473 = vmatmul.bf16.gmra.mxu0 %v3846
  %v4474 = vpop.f32.mrf.mxu0
  %v4475 = vadd.f32 %v4306, %v4474
  %v4476 = vpop.f32.mrf.mxu0
  %v4477 = vadd.f32 %v4308, %v4476
  %4478 = vmatmul.bf16.gmra.mxu0 %v3850
  %v4479 = vpop.f32.mrf.mxu0
  %v4480 = vadd.f32 %v4311, %v4479
  %v4481 = vpop.f32.mrf.mxu0
  %v4482 = vadd.f32 %v4313, %v4481
  %4483 = vmatmul.bf16.gmra.mxu0 %v3854
  %v4484 = vpop.f32.mrf.mxu0
  %v4485 = vadd.f32 %v4316, %v4484
  %v4486 = vpop.f32.mrf.mxu0
  %v4487 = vadd.f32 %v4318, %v4486
  %4488 = vmatmul.bf16.gmra.mxu0 %v3858
  %v4489 = vpop.f32.mrf.mxu0
  %v4490 = vadd.f32 %v4321, %v4489
  %v4491 = vpop.f32.mrf.mxu0
  %v4492 = vadd.f32 %v4323, %v4491
  %4493 = vmatmul.bf16.gmra.mxu0 %v3862
  %v4494 = vpop.f32.mrf.mxu0
  %v4495 = vadd.f32 %v4326, %v4494
  %v4496 = vpop.f32.mrf.mxu0
  %v4497 = vadd.f32 %v4328, %v4496
  %4498 = vdwg.mxu0
  %4499 = vmatpush.bf16.msra.mxu0 %v1005
  %4500 = vmatpush.bf16.msra.mxu0 %v1004
  %4501 = vmatpush.bf16.msra.mxu0 %v1003
  %4502 = vmatpush.bf16.msra.mxu0 %v1002
  %4503 = vmatpush.bf16.msra.mxu0 %v1001
  %4504 = vmatpush.bf16.msra.mxu0 %v1000
  %4505 = vmatpush.bf16.msra.mxu0 %v999
  %4506 = vmatpush.bf16.msra.mxu0 %v998
  %4507 = vmatmul.bf16.gmra.mxu0 %v3739
  %v4508 = vpop.f32.mrf.mxu0
  %v4509 = vadd.f32 %v4340, %v4508
  %v4510 = vpop.f32.mrf.mxu0
  %v4511 = vadd.f32 %v4342, %v4510
  %4512 = vmatmul.bf16.gmra.mxu0 %v3743
  %v4513 = vpop.f32.mrf.mxu0
  %v4514 = vadd.f32 %v4345, %v4513
  %v4515 = vpop.f32.mrf.mxu0
  %v4516 = vadd.f32 %v4347, %v4515
  %4517 = vmatmul.bf16.gmra.mxu0 %v3747
  %v4518 = vpop.f32.mrf.mxu0
  %v4519 = vadd.f32 %v4350, %v4518
  %v4520 = vpop.f32.mrf.mxu0
  %v4521 = vadd.f32 %v4352, %v4520
  %4522 = vmatmul.bf16.gmra.mxu0 %v3751
  %v4523 = vpop.f32.mrf.mxu0
  %v4524 = vadd.f32 %v4355, %v4523
  %v4525 = vpop.f32.mrf.mxu0
  %v4526 = vadd.f32 %v4357, %v4525
  %4527 = vmatmul.bf16.gmra.mxu0 %v3755
  %v4528 = vpop.f32.mrf.mxu0
  %v4529 = vadd.f32 %v4360, %v4528
  %v4530 = vpop.f32.mrf.mxu0
  %v4531 = vadd.f32 %v4362, %v4530
  %4532 = vmatmul.bf16.gmra.mxu0 %v3759
  %v4533 = vpop.f32.mrf.mxu0
  %v4534 = vadd.f32 %v4365, %v4533
  %v4535 = vpop.f32.mrf.mxu0
  %v4536 = vadd.f32 %v4367, %v4535
  %4537 = vmatmul.bf16.gmra.mxu0 %v3763
  %v4538 = vpop.f32.mrf.mxu0
  %v4539 = vadd.f32 %v4370, %v4538
  %v4540 = vpop.f32.mrf.mxu0
  %v4541 = vadd.f32 %v4372, %v4540
  %4542 = vmatmul.bf16.gmra.mxu0 %v3767
  %v4543 = vpop.f32.mrf.mxu0
  %v4544 = vadd.f32 %v4375, %v4543
  %v4545 = vpop.f32.mrf.mxu0
  %v4546 = vadd.f32 %v4377, %v4545
  %4547 = vmatmul.bf16.gmra.mxu0 %v3771
  %v4548 = vpop.f32.mrf.mxu0
  %v4549 = vadd.f32 %v4380, %v4548
  %v4550 = vpop.f32.mrf.mxu0
  %v4551 = vadd.f32 %v4382, %v4550
  %4552 = vmatmul.bf16.gmra.mxu0 %v3775
  %v4553 = vpop.f32.mrf.mxu0
  %v4554 = vadd.f32 %v4385, %v4553
  %v4555 = vpop.f32.mrf.mxu0
  %v4556 = vadd.f32 %v4387, %v4555
  %4557 = vmatmul.bf16.gmra.mxu0 %v3779
  %v4558 = vpop.f32.mrf.mxu0
  %v4559 = vadd.f32 %v4390, %v4558
  %v4560 = vpop.f32.mrf.mxu0
  %v4561 = vadd.f32 %v4392, %v4560
  %4562 = vmatmul.bf16.gmra.mxu0 %v3783
  %v4563 = vpop.f32.mrf.mxu0
  %v4564 = vadd.f32 %v4395, %v4563
  %v4565 = vpop.f32.mrf.mxu0
  %v4566 = vadd.f32 %v4397, %v4565
  %4567 = vmatmul.bf16.gmra.mxu0 %v3787
  %v4568 = vpop.f32.mrf.mxu0
  %v4569 = vadd.f32 %v4400, %v4568
  %v4570 = vpop.f32.mrf.mxu0
  %v4571 = vadd.f32 %v4402, %v4570
  %4572 = vmatmul.bf16.gmra.mxu0 %v3791
  %v4573 = vpop.f32.mrf.mxu0
  %v4574 = vadd.f32 %v4405, %v4573
  %v4575 = vpop.f32.mrf.mxu0
  %v4576 = vadd.f32 %v4407, %v4575
  %4577 = vmatmul.bf16.gmra.mxu0 %v3795
  %v4578 = vpop.f32.mrf.mxu0
  %v4579 = vadd.f32 %v4410, %v4578
  %v4580 = vpop.f32.mrf.mxu0
  %v4581 = vadd.f32 %v4412, %v4580
  %4582 = vmatmul.bf16.gmra.mxu0 %v3799
  %v4583 = vpop.f32.mrf.mxu0
  %v4584 = vadd.f32 %v4415, %v4583
  %v4585 = vpop.f32.mrf.mxu0
  %v4586 = vadd.f32 %v4417, %v4585
  %4587 = vmatmul.bf16.gmra.mxu0 %v3803
  %v4588 = vpop.f32.mrf.mxu0
  %v4589 = vadd.f32 %v4420, %v4588
  %v4590 = vpop.f32.mrf.mxu0
  %v4591 = vadd.f32 %v4422, %v4590
  %4592 = vmatmul.bf16.gmra.mxu0 %v3807
  %v4593 = vpop.f32.mrf.mxu0
  %v4594 = vadd.f32 %v4425, %v4593
  %v4595 = vpop.f32.mrf.mxu0
  %v4596 = vadd.f32 %v4427, %v4595
  %4597 = vmatmul.bf16.gmra.mxu0 %v3811
  %v4598 = vpop.f32.mrf.mxu0
  %v4599 = vadd.f32 %v4430, %v4598
  %v4600 = vpop.f32.mrf.mxu0
  %v4601 = vadd.f32 %v4432, %v4600
  %4602 = vmatmul.bf16.gmra.mxu0 %v3815
  %v4603 = vpop.f32.mrf.mxu0
  %v4604 = vadd.f32 %v4435, %v4603
  %v4605 = vpop.f32.mrf.mxu0
  %v4606 = vadd.f32 %v4437, %v4605
  %4607 = vmatmul.bf16.gmra.mxu0 %v3819
  %v4608 = vpop.f32.mrf.mxu0
  %v4609 = vadd.f32 %v4440, %v4608
  %v4610 = vpop.f32.mrf.mxu0
  %v4611 = vadd.f32 %v4442, %v4610
  %4612 = vmatmul.bf16.gmra.mxu0 %v3823
  %v4613 = vpop.f32.mrf.mxu0
  %v4614 = vadd.f32 %v4445, %v4613
  %v4615 = vpop.f32.mrf.mxu0
  %v4616 = vadd.f32 %v4447, %v4615
  %4617 = vmatmul.bf16.gmra.mxu0 %v3827
  %v4618 = vpop.f32.mrf.mxu0
  %v4619 = vadd.f32 %v4450, %v4618
  %v4620 = vpop.f32.mrf.mxu0
  %v4621 = vadd.f32 %v4452, %v4620
  %4622 = vmatmul.bf16.gmra.mxu0 %v3831
  %v4623 = vpop.f32.mrf.mxu0
  %v4624 = vadd.f32 %v4455, %v4623
  %v4625 = vpop.f32.mrf.mxu0
  %v4626 = vadd.f32 %v4457, %v4625
  %4627 = vmatmul.bf16.gmra.mxu0 %v3835
  %v4628 = vpop.f32.mrf.mxu0
  %v4629 = vadd.f32 %v4460, %v4628
  %v4630 = vpop.f32.mrf.mxu0
  %v4631 = vadd.f32 %v4462, %v4630
  %4632 = vmatmul.bf16.gmra.mxu0 %v3839
  %v4633 = vpop.f32.mrf.mxu0
  %v4634 = vadd.f32 %v4465, %v4633
  %v4635 = vpop.f32.mrf.mxu0
  %v4636 = vadd.f32 %v4467, %v4635
  %4637 = vmatmul.bf16.gmra.mxu0 %v3843
  %v4638 = vpop.f32.mrf.mxu0
  %v4639 = vadd.f32 %v4470, %v4638
  %v4640 = vpop.f32.mrf.mxu0
  %v4641 = vadd.f32 %v4472, %v4640
  %4642 = vmatmul.bf16.gmra.mxu0 %v3847
  %v4643 = vpop.f32.mrf.mxu0
  %v4644 = vadd.f32 %v4475, %v4643
  %v4645 = vpop.f32.mrf.mxu0
  %v4646 = vadd.f32 %v4477, %v4645
  %4647 = vmatmul.bf16.gmra.mxu0 %v3851
  %v4648 = vpop.f32.mrf.mxu0
  %v4649 = vadd.f32 %v4480, %v4648
  %v4650 = vpop.f32.mrf.mxu0
  %v4651 = vadd.f32 %v4482, %v4650
  %4652 = vmatmul.bf16.gmra.mxu0 %v3855
  %v4653 = vpop.f32.mrf.mxu0
  %v4654 = vadd.f32 %v4485, %v4653
  %v4655 = vpop.f32.mrf.mxu0
  %v4656 = vadd.f32 %v4487, %v4655
  %4657 = vmatmul.bf16.gmra.mxu0 %v3859
  %v4658 = vpop.f32.mrf.mxu0
  %v4659 = vadd.f32 %v4490, %v4658
  %v4660 = vpop.f32.mrf.mxu0
  %v4661 = vadd.f32 %v4492, %v4660
  %4662 = vmatmul.bf16.gmra.mxu0 %v3863
  %v4663 = vpop.f32.mrf.mxu0
  %v4664 = vadd.f32 %v4495, %v4663
  %v4665 = vpop.f32.mrf.mxu0
  %v4666 = vadd.f32 %v4497, %v4665
  %4667 = vdwg.mxu0
  %v4668 = vmax.f32 %v3159, %v4509
  %v4669 = vmax.f32 %v3160, %v4511
  %v4670 = vmax.f32 %v3161, %v4514
  %v4671 = vmax.f32 %v3162, %v4516
  %v4672 = vmax.f32 %v3163, %v4519
  %v4673 = vmax.f32 %v3164, %v4521
  %v4674 = vmax.f32 %v3165, %v4524
  %v4675 = vmax.f32 %v3166, %v4526
  %v4676 = vmax.f32 %v3167, %v4529
  %v4677 = vmax.f32 %v3168, %v4531
  %v4678 = vmax.f32 %v3169, %v4534
  %v4679 = vmax.f32 %v3170, %v4536
  %v4680 = vmax.f32 %v3171, %v4539
  %v4681 = vmax.f32 %v3172, %v4541
  %v4682 = vmax.f32 %v3173, %v4544
  %v4683 = vmax.f32 %v3174, %v4546
  %v4684 = vmax.f32 %v3175, %v4549
  %v4685 = vmax.f32 %v3176, %v4551
  %v4686 = vmax.f32 %v3177, %v4554
  %v4687 = vmax.f32 %v3178, %v4556
  %v4688 = vmax.f32 %v3179, %v4559
  %v4689 = vmax.f32 %v3180, %v4561
  %v4690 = vmax.f32 %v3181, %v4564
  %v4691 = vmax.f32 %v3182, %v4566
  %v4692 = vmax.f32 %v3183, %v4569
  %v4693 = vmax.f32 %v3184, %v4571
  %v4694 = vmax.f32 %v3185, %v4574
  %v4695 = vmax.f32 %v3186, %v4576
  %v4696 = vmax.f32 %v3187, %v4579
  %v4697 = vmax.f32 %v3188, %v4581
  %v4698 = vmax.f32 %v3189, %v4584
  %v4699 = vmax.f32 %v3190, %v4586
  %v4700 = vmax.f32 %v3191, %v4589
  %v4701 = vmax.f32 %v3192, %v4591
  %v4702 = vmax.f32 %v3193, %v4594
  %v4703 = vmax.f32 %v3194, %v4596
  %v4704 = vmax.f32 %v3195, %v4599
  %v4705 = vmax.f32 %v3196, %v4601
  %v4706 = vmax.f32 %v3197, %v4604
  %v4707 = vmax.f32 %v3198, %v4606
  %v4708 = vmax.f32 %v3199, %v4609
  %v4709 = vmax.f32 %v3200, %v4611
  %v4710 = vmax.f32 %v3201, %v4614
  %v4711 = vmax.f32 %v3202, %v4616
  %v4712 = vmax.f32 %v3203, %v4619
  %v4713 = vmax.f32 %v3204, %v4621
  %v4714 = vmax.f32 %v3205, %v4624
  %v4715 = vmax.f32 %v3206, %v4626
  %v4716 = vmax.f32 %v3207, %v4629
  %v4717 = vmax.f32 %v3208, %v4631
  %v4718 = vmax.f32 %v3209, %v4634
  %v4719 = vmax.f32 %v3210, %v4636
  %v4720 = vmax.f32 %v3211, %v4639
  %v4721 = vmax.f32 %v3212, %v4641
  %v4722 = vmax.f32 %v3213, %v4644
  %v4723 = vmax.f32 %v3214, %v4646
  %v4724 = vmax.f32 %v3215, %v4649
  %v4725 = vmax.f32 %v3216, %v4651
  %v4726 = vmax.f32 %v3217, %v4654
  %v4727 = vmax.f32 %v3218, %v4656
  %v4728 = vmax.f32 %v3219, %v4659
  %v4729 = vmax.f32 %v3220, %v4661
  %v4730 = vmax.f32 %v3221, %v4664
  %v4731 = vmax.f32 %v3222, %v4666
  %s4732 = scalar_lea.vmem %s0, 3072
  %v4733 = vld [vmem:[%s4732] sm:$0xff]
  %v4734 = vld [vmem:[%s4732 + $0x8] sm:$0xff]
  %v4735 = vld [vmem:[%s4732 + $0x10] sm:$0xff]
  %v4736 = vld [vmem:[%s4732 + $0x18] sm:$0xff]
  %v4737 = vld [vmem:[%s4732 + $0x20] sm:$0xff]
  %v4738 = vld [vmem:[%s4732 + $0x28] sm:$0xff]
  %v4739 = vld [vmem:[%s4732 + $0x30] sm:$0xff]
  %v4740 = vld [vmem:[%s4732 + $0x38] sm:$0xff]
  %v4741 = vld [vmem:[%s4732 + $0x40] sm:$0xff]
  %v4742 = vld [vmem:[%s4732 + $0x48] sm:$0xff]
  %v4743 = vld [vmem:[%s4732 + $0x50] sm:$0xff]
  %v4744 = vld [vmem:[%s4732 + $0x58] sm:$0xff]
  %v4745 = vld [vmem:[%s4732 + $0x60] sm:$0xff]
  %v4746 = vld [vmem:[%s4732 + $0x68] sm:$0xff]
  %v4747 = vld [vmem:[%s4732 + $0x70] sm:$0xff]
  %v4748 = vld [vmem:[%s4732 + $0x78] sm:$0xff]
  %v4749 = vld [vmem:[%s4732 + $0x80] sm:$0xff]
  %v4750 = vld [vmem:[%s4732 + $0x88] sm:$0xff]
  %v4751 = vld [vmem:[%s4732 + $0x90] sm:$0xff]
  %v4752 = vld [vmem:[%s4732 + $0x98] sm:$0xff]
  %v4753 = vld [vmem:[%s4732 + $0xa0] sm:$0xff]
  %v4754 = vld [vmem:[%s4732 + $0xa8] sm:$0xff]
  %v4755 = vld [vmem:[%s4732 + $0xb0] sm:$0xff]
  %v4756 = vld [vmem:[%s4732 + $0xb8] sm:$0xff]
  %v4757 = vld [vmem:[%s4732 + $0xc0] sm:$0xff]
  %v4758 = vld [vmem:[%s4732 + $0xc8] sm:$0xff]
  %v4759 = vld [vmem:[%s4732 + $0xd0] sm:$0xff]
  %v4760 = vld [vmem:[%s4732 + $0xd8] sm:$0xff]
  %v4761 = vld [vmem:[%s4732 + $0xe0] sm:$0xff]
  %v4762 = vld [vmem:[%s4732 + $0xe8] sm:$0xff]
  %v4763 = vld [vmem:[%s4732 + $0xf0] sm:$0xff]
  %v4764 = vld [vmem:[%s4732 + $0xf8] sm:$0xff]
  %v4765 = vld [vmem:[%s4732 + $0x100] sm:$0xff]
  %v4766 = vld [vmem:[%s4732 + $0x108] sm:$0xff]
  %v4767 = vld [vmem:[%s4732 + $0x110] sm:$0xff]
  %v4768 = vld [vmem:[%s4732 + $0x118] sm:$0xff]
  %v4769 = vld [vmem:[%s4732 + $0x120] sm:$0xff]
  %v4770 = vld [vmem:[%s4732 + $0x128] sm:$0xff]
  %v4771 = vld [vmem:[%s4732 + $0x130] sm:$0xff]
  %v4772 = vld [vmem:[%s4732 + $0x138] sm:$0xff]
  %v4773 = vld [vmem:[%s4732 + $0x140] sm:$0xff]
  %v4774 = vld [vmem:[%s4732 + $0x148] sm:$0xff]
  %v4775 = vld [vmem:[%s4732 + $0x150] sm:$0xff]
  %v4776 = vld [vmem:[%s4732 + $0x158] sm:$0xff]
  %v4777 = vld [vmem:[%s4732 + $0x160] sm:$0xff]
  %v4778 = vld [vmem:[%s4732 + $0x168] sm:$0xff]
  %v4779 = vld [vmem:[%s4732 + $0x170] sm:$0xff]
  %v4780 = vld [vmem:[%s4732 + $0x178] sm:$0xff]
  %v4781 = vld [vmem:[%s4732 + $0x180] sm:$0xff]
  %v4782 = vld [vmem:[%s4732 + $0x188] sm:$0xff]
  %v4783 = vld [vmem:[%s4732 + $0x190] sm:$0xff]
  %v4784 = vld [vmem:[%s4732 + $0x198] sm:$0xff]
  %v4785 = vld [vmem:[%s4732 + $0x1a0] sm:$0xff]
  %v4786 = vld [vmem:[%s4732 + $0x1a8] sm:$0xff]
  %v4787 = vld [vmem:[%s4732 + $0x1b0] sm:$0xff]
  %v4788 = vld [vmem:[%s4732 + $0x1b8] sm:$0xff]
  %v4789 = vld [vmem:[%s4732 + $0x1c0] sm:$0xff]
  %v4790 = vld [vmem:[%s4732 + $0x1c8] sm:$0xff]
  %v4791 = vld [vmem:[%s4732 + $0x1d0] sm:$0xff]
  %v4792 = vld [vmem:[%s4732 + $0x1d8] sm:$0xff]
  %v4793 = vld [vmem:[%s4732 + $0x1e0] sm:$0xff]
  %v4794 = vld [vmem:[%s4732 + $0x1e8] sm:$0xff]
  %v4795 = vld [vmem:[%s4732 + $0x1f0] sm:$0xff]
  %v4796 = vld [vmem:[%s4732 + $0x1f8] sm:$0xff]
  %v4797 = vld [vmem:[%s4732 + $0x200] sm:$0xff]
  %v4798 = vld [vmem:[%s4732 + $0x208] sm:$0xff]
  %v4799 = vld [vmem:[%s4732 + $0x210] sm:$0xff]
  %v4800 = vld [vmem:[%s4732 + $0x218] sm:$0xff]
  %v4801 = vld [vmem:[%s4732 + $0x220] sm:$0xff]
  %v4802 = vld [vmem:[%s4732 + $0x228] sm:$0xff]
  %v4803 = vld [vmem:[%s4732 + $0x230] sm:$0xff]
  %v4804 = vld [vmem:[%s4732 + $0x238] sm:$0xff]
  %v4805 = vld [vmem:[%s4732 + $0x240] sm:$0xff]
  %v4806 = vld [vmem:[%s4732 + $0x248] sm:$0xff]
  %v4807 = vld [vmem:[%s4732 + $0x250] sm:$0xff]
  %v4808 = vld [vmem:[%s4732 + $0x258] sm:$0xff]
  %v4809 = vld [vmem:[%s4732 + $0x260] sm:$0xff]
  %v4810 = vld [vmem:[%s4732 + $0x268] sm:$0xff]
  %v4811 = vld [vmem:[%s4732 + $0x270] sm:$0xff]
  %v4812 = vld [vmem:[%s4732 + $0x278] sm:$0xff]
  %v4813 = vld [vmem:[%s4732 + $0x280] sm:$0xff]
  %v4814 = vld [vmem:[%s4732 + $0x288] sm:$0xff]
  %v4815 = vld [vmem:[%s4732 + $0x290] sm:$0xff]
  %v4816 = vld [vmem:[%s4732 + $0x298] sm:$0xff]
  %v4817 = vld [vmem:[%s4732 + $0x2a0] sm:$0xff]
  %v4818 = vld [vmem:[%s4732 + $0x2a8] sm:$0xff]
  %v4819 = vld [vmem:[%s4732 + $0x2b0] sm:$0xff]
  %v4820 = vld [vmem:[%s4732 + $0x2b8] sm:$0xff]
  %v4821 = vld [vmem:[%s4732 + $0x2c0] sm:$0xff]
  %v4822 = vld [vmem:[%s4732 + $0x2c8] sm:$0xff]
  %v4823 = vld [vmem:[%s4732 + $0x2d0] sm:$0xff]
  %v4824 = vld [vmem:[%s4732 + $0x2d8] sm:$0xff]
  %v4825 = vld [vmem:[%s4732 + $0x2e0] sm:$0xff]
  %v4826 = vld [vmem:[%s4732 + $0x2e8] sm:$0xff]
  %v4827 = vld [vmem:[%s4732 + $0x2f0] sm:$0xff]
  %v4828 = vld [vmem:[%s4732 + $0x2f8] sm:$0xff]
  %v4829 = vld [vmem:[%s4732 + $0x300] sm:$0xff]
  %v4830 = vld [vmem:[%s4732 + $0x308] sm:$0xff]
  %v4831 = vld [vmem:[%s4732 + $0x310] sm:$0xff]
  %v4832 = vld [vmem:[%s4732 + $0x318] sm:$0xff]
  %v4833 = vld [vmem:[%s4732 + $0x320] sm:$0xff]
  %v4834 = vld [vmem:[%s4732 + $0x328] sm:$0xff]
  %v4835 = vld [vmem:[%s4732 + $0x330] sm:$0xff]
  %v4836 = vld [vmem:[%s4732 + $0x338] sm:$0xff]
  %v4837 = vld [vmem:[%s4732 + $0x340] sm:$0xff]
  %v4838 = vld [vmem:[%s4732 + $0x348] sm:$0xff]
  %v4839 = vld [vmem:[%s4732 + $0x350] sm:$0xff]
  %v4840 = vld [vmem:[%s4732 + $0x358] sm:$0xff]
  %v4841 = vld [vmem:[%s4732 + $0x360] sm:$0xff]
  %v4842 = vld [vmem:[%s4732 + $0x368] sm:$0xff]
  %v4843 = vld [vmem:[%s4732 + $0x370] sm:$0xff]
  %v4844 = vld [vmem:[%s4732 + $0x378] sm:$0xff]
  %v4845 = vld [vmem:[%s4732 + $0x380] sm:$0xff]
  %v4846 = vld [vmem:[%s4732 + $0x388] sm:$0xff]
  %v4847 = vld [vmem:[%s4732 + $0x390] sm:$0xff]
  %v4848 = vld [vmem:[%s4732 + $0x398] sm:$0xff]
  %v4849 = vld [vmem:[%s4732 + $0x3a0] sm:$0xff]
  %v4850 = vld [vmem:[%s4732 + $0x3a8] sm:$0xff]
  %v4851 = vld [vmem:[%s4732 + $0x3b0] sm:$0xff]
  %v4852 = vld [vmem:[%s4732 + $0x3b8] sm:$0xff]
  %v4853 = vld [vmem:[%s4732 + $0x3c0] sm:$0xff]
  %v4854 = vld [vmem:[%s4732 + $0x3c8] sm:$0xff]
  %v4855 = vld [vmem:[%s4732 + $0x3d0] sm:$0xff]
  %v4856 = vld [vmem:[%s4732 + $0x3d8] sm:$0xff]
  %v4857 = vld [vmem:[%s4732 + $0x3e0] sm:$0xff]
  %v4858 = vld [vmem:[%s4732 + $0x3e8] sm:$0xff]
  %v4859 = vld [vmem:[%s4732 + $0x3f0] sm:$0xff]
  %v4860 = vld [vmem:[%s4732 + $0x3f8] sm:$0xff]
  %v4989 = vunpack.c.l.b16 %v4733
  %v4990 = vunpack.c.h.b16 %v4733
  %v4991 = vunpack.c.l.b16 %v4734
  %v4992 = vunpack.c.h.b16 %v4734
  %v4993 = vunpack.c.l.b16 %v4735
  %v4994 = vunpack.c.h.b16 %v4735
  %v4995 = vunpack.c.l.b16 %v4736
  %v4996 = vunpack.c.h.b16 %v4736
  %v4997 = vunpack.c.l.b16 %v4737
  %v4998 = vunpack.c.h.b16 %v4737
  %v4999 = vunpack.c.l.b16 %v4738
  %v5000 = vunpack.c.h.b16 %v4738
  %v5001 = vunpack.c.l.b16 %v4739
  %v5002 = vunpack.c.h.b16 %v4739
  %v5003 = vunpack.c.l.b16 %v4740
  %v5004 = vunpack.c.h.b16 %v4740
  %v5005 = vunpack.c.l.b16 %v4741
  %v5006 = vunpack.c.h.b16 %v4741
  %v5007 = vunpack.c.l.b16 %v4742
  %v5008 = vunpack.c.h.b16 %v4742
  %v5009 = vunpack.c.l.b16 %v4743
  %v5010 = vunpack.c.h.b16 %v4743
  %v5011 = vunpack.c.l.b16 %v4744
  %v5012 = vunpack.c.h.b16 %v4744
  %v5013 = vunpack.c.l.b16 %v4745
  %v5014 = vunpack.c.h.b16 %v4745
  %v5015 = vunpack.c.l.b16 %v4746
  %v5016 = vunpack.c.h.b16 %v4746
  %v5017 = vunpack.c.l.b16 %v4747
  %v5018 = vunpack.c.h.b16 %v4747
  %v5019 = vunpack.c.l.b16 %v4748
  %v5020 = vunpack.c.h.b16 %v4748
  %v5021 = vunpack.c.l.b16 %v4749
  %v5022 = vunpack.c.h.b16 %v4749
  %v5023 = vunpack.c.l.b16 %v4750
  %v5024 = vunpack.c.h.b16 %v4750
  %v5025 = vunpack.c.l.b16 %v4751
  %v5026 = vunpack.c.h.b16 %v4751
  %v5027 = vunpack.c.l.b16 %v4752
  %v5028 = vunpack.c.h.b16 %v4752
  %v5029 = vunpack.c.l.b16 %v4753
  %v5030 = vunpack.c.h.b16 %v4753
  %v5031 = vunpack.c.l.b16 %v4754
  %v5032 = vunpack.c.h.b16 %v4754
  %v5033 = vunpack.c.l.b16 %v4755
  %v5034 = vunpack.c.h.b16 %v4755
  %v5035 = vunpack.c.l.b16 %v4756
  %v5036 = vunpack.c.h.b16 %v4756
  %v5037 = vunpack.c.l.b16 %v4757
  %v5038 = vunpack.c.h.b16 %v4757
  %v5039 = vunpack.c.l.b16 %v4758
  %v5040 = vunpack.c.h.b16 %v4758
  %v5041 = vunpack.c.l.b16 %v4759
  %v5042 = vunpack.c.h.b16 %v4759
  %v5043 = vunpack.c.l.b16 %v4760
  %v5044 = vunpack.c.h.b16 %v4760
  %v5045 = vunpack.c.l.b16 %v4761
  %v5046 = vunpack.c.h.b16 %v4761
  %v5047 = vunpack.c.l.b16 %v4762
  %v5048 = vunpack.c.h.b16 %v4762
  %v5049 = vunpack.c.l.b16 %v4763
  %v5050 = vunpack.c.h.b16 %v4763
  %v5051 = vunpack.c.l.b16 %v4764
  %v5052 = vunpack.c.h.b16 %v4764
  %v5053 = vunpack.c.l.b16 %v4765
  %v5054 = vunpack.c.h.b16 %v4765
  %v5055 = vunpack.c.l.b16 %v4766
  %v5056 = vunpack.c.h.b16 %v4766
  %v5057 = vunpack.c.l.b16 %v4767
  %v5058 = vunpack.c.h.b16 %v4767
  %v5059 = vunpack.c.l.b16 %v4768
  %v5060 = vunpack.c.h.b16 %v4768
  %v5061 = vunpack.c.l.b16 %v4769
  %v5062 = vunpack.c.h.b16 %v4769
  %v5063 = vunpack.c.l.b16 %v4770
  %v5064 = vunpack.c.h.b16 %v4770
  %v5065 = vunpack.c.l.b16 %v4771
  %v5066 = vunpack.c.h.b16 %v4771
  %v5067 = vunpack.c.l.b16 %v4772
  %v5068 = vunpack.c.h.b16 %v4772
  %v5069 = vunpack.c.l.b16 %v4773
  %v5070 = vunpack.c.h.b16 %v4773
  %v5071 = vunpack.c.l.b16 %v4774
  %v5072 = vunpack.c.h.b16 %v4774
  %v5073 = vunpack.c.l.b16 %v4775
  %v5074 = vunpack.c.h.b16 %v4775
  %v5075 = vunpack.c.l.b16 %v4776
  %v5076 = vunpack.c.h.b16 %v4776
  %v5077 = vunpack.c.l.b16 %v4777
  %v5078 = vunpack.c.h.b16 %v4777
  %v5079 = vunpack.c.l.b16 %v4778
  %v5080 = vunpack.c.h.b16 %v4778
  %v5081 = vunpack.c.l.b16 %v4779
  %v5082 = vunpack.c.h.b16 %v4779
  %v5083 = vunpack.c.l.b16 %v4780
  %v5084 = vunpack.c.h.b16 %v4780
  %v5085 = vunpack.c.l.b16 %v4781
  %v5086 = vunpack.c.h.b16 %v4781
  %v5087 = vunpack.c.l.b16 %v4782
  %v5088 = vunpack.c.h.b16 %v4782
  %v5089 = vunpack.c.l.b16 %v4783
  %v5090 = vunpack.c.h.b16 %v4783
  %v5091 = vunpack.c.l.b16 %v4784
  %v5092 = vunpack.c.h.b16 %v4784
  %v5093 = vunpack.c.l.b16 %v4785
  %v5094 = vunpack.c.h.b16 %v4785
  %v5095 = vunpack.c.l.b16 %v4786
  %v5096 = vunpack.c.h.b16 %v4786
  %v5097 = vunpack.c.l.b16 %v4787
  %v5098 = vunpack.c.h.b16 %v4787
  %v5099 = vunpack.c.l.b16 %v4788
  %v5100 = vunpack.c.h.b16 %v4788
  %v5101 = vunpack.c.l.b16 %v4789
  %v5102 = vunpack.c.h.b16 %v4789
  %v5103 = vunpack.c.l.b16 %v4790
  %v5104 = vunpack.c.h.b16 %v4790
  %v5105 = vunpack.c.l.b16 %v4791
  %v5106 = vunpack.c.h.b16 %v4791
  %v5107 = vunpack.c.l.b16 %v4792
  %v5108 = vunpack.c.h.b16 %v4792
  %v5109 = vunpack.c.l.b16 %v4793
  %v5110 = vunpack.c.h.b16 %v4793
  %v5111 = vunpack.c.l.b16 %v4794
  %v5112 = vunpack.c.h.b16 %v4794
  %v5113 = vunpack.c.l.b16 %v4795
  %v5114 = vunpack.c.h.b16 %v4795
  %v5115 = vunpack.c.l.b16 %v4796
  %v5116 = vunpack.c.h.b16 %v4796
  %v5117 = vunpack.c.l.b16 %v4797
  %v5118 = vunpack.c.h.b16 %v4797
  %v5119 = vunpack.c.l.b16 %v4798
  %v5120 = vunpack.c.h.b16 %v4798
  %v5121 = vunpack.c.l.b16 %v4799
  %v5122 = vunpack.c.h.b16 %v4799
  %v5123 = vunpack.c.l.b16 %v4800
  %v5124 = vunpack.c.h.b16 %v4800
  %v5125 = vunpack.c.l.b16 %v4801
  %v5126 = vunpack.c.h.b16 %v4801
  %v5127 = vunpack.c.l.b16 %v4802
  %v5128 = vunpack.c.h.b16 %v4802
  %v5129 = vunpack.c.l.b16 %v4803
  %v5130 = vunpack.c.h.b16 %v4803
  %v5131 = vunpack.c.l.b16 %v4804
  %v5132 = vunpack.c.h.b16 %v4804
  %v5133 = vunpack.c.l.b16 %v4805
  %v5134 = vunpack.c.h.b16 %v4805
  %v5135 = vunpack.c.l.b16 %v4806
  %v5136 = vunpack.c.h.b16 %v4806
  %v5137 = vunpack.c.l.b16 %v4807
  %v5138 = vunpack.c.h.b16 %v4807
  %v5139 = vunpack.c.l.b16 %v4808
  %v5140 = vunpack.c.h.b16 %v4808
  %v5141 = vunpack.c.l.b16 %v4809
  %v5142 = vunpack.c.h.b16 %v4809
  %v5143 = vunpack.c.l.b16 %v4810
  %v5144 = vunpack.c.h.b16 %v4810
  %v5145 = vunpack.c.l.b16 %v4811
  %v5146 = vunpack.c.h.b16 %v4811
  %v5147 = vunpack.c.l.b16 %v4812
  %v5148 = vunpack.c.h.b16 %v4812
  %v5149 = vunpack.c.l.b16 %v4813
  %v5150 = vunpack.c.h.b16 %v4813
  %v5151 = vunpack.c.l.b16 %v4814
  %v5152 = vunpack.c.h.b16 %v4814
  %v5153 = vunpack.c.l.b16 %v4815
  %v5154 = vunpack.c.h.b16 %v4815
  %v5155 = vunpack.c.l.b16 %v4816
  %v5156 = vunpack.c.h.b16 %v4816
  %v5157 = vunpack.c.l.b16 %v4817
  %v5158 = vunpack.c.h.b16 %v4817
  %v5159 = vunpack.c.l.b16 %v4818
  %v5160 = vunpack.c.h.b16 %v4818
  %v5161 = vunpack.c.l.b16 %v4819
  %v5162 = vunpack.c.h.b16 %v4819
  %v5163 = vunpack.c.l.b16 %v4820
  %v5164 = vunpack.c.h.b16 %v4820
  %v5165 = vunpack.c.l.b16 %v4821
  %v5166 = vunpack.c.h.b16 %v4821
  %v5167 = vunpack.c.l.b16 %v4822
  %v5168 = vunpack.c.h.b16 %v4822
  %v5169 = vunpack.c.l.b16 %v4823
  %v5170 = vunpack.c.h.b16 %v4823
  %v5171 = vunpack.c.l.b16 %v4824
  %v5172 = vunpack.c.h.b16 %v4824
  %v5173 = vunpack.c.l.b16 %v4825
  %v5174 = vunpack.c.h.b16 %v4825
  %v5175 = vunpack.c.l.b16 %v4826
  %v5176 = vunpack.c.h.b16 %v4826
  %v5177 = vunpack.c.l.b16 %v4827
  %v5178 = vunpack.c.h.b16 %v4827
  %v5179 = vunpack.c.l.b16 %v4828
  %v5180 = vunpack.c.h.b16 %v4828
  %v5181 = vunpack.c.l.b16 %v4829
  %v5182 = vunpack.c.h.b16 %v4829
  %v5183 = vunpack.c.l.b16 %v4830
  %v5184 = vunpack.c.h.b16 %v4830
  %v5185 = vunpack.c.l.b16 %v4831
  %v5186 = vunpack.c.h.b16 %v4831
  %v5187 = vunpack.c.l.b16 %v4832
  %v5188 = vunpack.c.h.b16 %v4832
  %v5189 = vunpack.c.l.b16 %v4833
  %v5190 = vunpack.c.h.b16 %v4833
  %v5191 = vunpack.c.l.b16 %v4834
  %v5192 = vunpack.c.h.b16 %v4834
  %v5193 = vunpack.c.l.b16 %v4835
  %v5194 = vunpack.c.h.b16 %v4835
  %v5195 = vunpack.c.l.b16 %v4836
  %v5196 = vunpack.c.h.b16 %v4836
  %v5197 = vunpack.c.l.b16 %v4837
  %v5198 = vunpack.c.h.b16 %v4837
  %v5199 = vunpack.c.l.b16 %v4838
  %v5200 = vunpack.c.h.b16 %v4838
  %v5201 = vunpack.c.l.b16 %v4839
  %v5202 = vunpack.c.h.b16 %v4839
  %v5203 = vunpack.c.l.b16 %v4840
  %v5204 = vunpack.c.h.b16 %v4840
  %v5205 = vunpack.c.l.b16 %v4841
  %v5206 = vunpack.c.h.b16 %v4841
  %v5207 = vunpack.c.l.b16 %v4842
  %v5208 = vunpack.c.h.b16 %v4842
  %v5209 = vunpack.c.l.b16 %v4843
  %v5210 = vunpack.c.h.b16 %v4843
  %v5211 = vunpack.c.l.b16 %v4844
  %v5212 = vunpack.c.h.b16 %v4844
  %v5213 = vunpack.c.l.b16 %v4845
  %v5214 = vunpack.c.h.b16 %v4845
  %v5215 = vunpack.c.l.b16 %v4846
  %v5216 = vunpack.c.h.b16 %v4846
  %v5217 = vunpack.c.l.b16 %v4847
  %v5218 = vunpack.c.h.b16 %v4847
  %v5219 = vunpack.c.l.b16 %v4848
  %v5220 = vunpack.c.h.b16 %v4848
  %v5221 = vunpack.c.l.b16 %v4849
  %v5222 = vunpack.c.h.b16 %v4849
  %v5223 = vunpack.c.l.b16 %v4850
  %v5224 = vunpack.c.h.b16 %v4850
  %v5225 = vunpack.c.l.b16 %v4851
  %v5226 = vunpack.c.h.b16 %v4851
  %v5227 = vunpack.c.l.b16 %v4852
  %v5228 = vunpack.c.h.b16 %v4852
  %v5229 = vunpack.c.l.b16 %v4853
  %v5230 = vunpack.c.h.b16 %v4853
  %v5231 = vunpack.c.l.b16 %v4854
  %v5232 = vunpack.c.h.b16 %v4854
  %v5233 = vunpack.c.l.b16 %v4855
  %v5234 = vunpack.c.h.b16 %v4855
  %v5235 = vunpack.c.l.b16 %v4856
  %v5236 = vunpack.c.h.b16 %v4856
  %v5237 = vunpack.c.l.b16 %v4857
  %v5238 = vunpack.c.h.b16 %v4857
  %v5239 = vunpack.c.l.b16 %v4858
  %v5240 = vunpack.c.h.b16 %v4858
  %v5241 = vunpack.c.l.b16 %v4859
  %v5242 = vunpack.c.h.b16 %v4859
  %v5243 = vunpack.c.l.b16 %v4860
  %v5244 = vunpack.c.h.b16 %v4860
  %v5245 = vpack.c.b16 %v4993, %v4989
  %v5246 = vpack.c.b16 %v4994, %v4990
  %v5247 = vpack.c.b16 %v4995, %v4991
  %v5248 = vpack.c.b16 %v4996, %v4992
  %v5249 = vpack.c.b16 %v5001, %v4997
  %v5250 = vpack.c.b16 %v5002, %v4998
  %v5251 = vpack.c.b16 %v5003, %v4999
  %v5252 = vpack.c.b16 %v5004, %v5000
  %v5253 = vpack.c.b16 %v5009, %v5005
  %v5254 = vpack.c.b16 %v5010, %v5006
  %v5255 = vpack.c.b16 %v5011, %v5007
  %v5256 = vpack.c.b16 %v5012, %v5008
  %v5257 = vpack.c.b16 %v5017, %v5013
  %v5258 = vpack.c.b16 %v5018, %v5014
  %v5259 = vpack.c.b16 %v5019, %v5015
  %v5260 = vpack.c.b16 %v5020, %v5016
  %v5261 = vpack.c.b16 %v5025, %v5021
  %v5262 = vpack.c.b16 %v5026, %v5022
  %v5263 = vpack.c.b16 %v5027, %v5023
  %v5264 = vpack.c.b16 %v5028, %v5024
  %v5265 = vpack.c.b16 %v5033, %v5029
  %v5266 = vpack.c.b16 %v5034, %v5030
  %v5267 = vpack.c.b16 %v5035, %v5031
  %v5268 = vpack.c.b16 %v5036, %v5032
  %v5269 = vpack.c.b16 %v5041, %v5037
  %v5270 = vpack.c.b16 %v5042, %v5038
  %v5271 = vpack.c.b16 %v5043, %v5039
  %v5272 = vpack.c.b16 %v5044, %v5040
  %v5273 = vpack.c.b16 %v5049, %v5045
  %v5274 = vpack.c.b16 %v5050, %v5046
  %v5275 = vpack.c.b16 %v5051, %v5047
  %v5276 = vpack.c.b16 %v5052, %v5048
  %v5277 = vpack.c.b16 %v5057, %v5053
  %v5278 = vpack.c.b16 %v5058, %v5054
  %v5279 = vpack.c.b16 %v5059, %v5055
  %v5280 = vpack.c.b16 %v5060, %v5056
  %v5281 = vpack.c.b16 %v5065, %v5061
  %v5282 = vpack.c.b16 %v5066, %v5062
  %v5283 = vpack.c.b16 %v5067, %v5063
  %v5284 = vpack.c.b16 %v5068, %v5064
  %v5285 = vpack.c.b16 %v5073, %v5069
  %v5286 = vpack.c.b16 %v5074, %v5070
  %v5287 = vpack.c.b16 %v5075, %v5071
  %v5288 = vpack.c.b16 %v5076, %v5072
  %v5289 = vpack.c.b16 %v5081, %v5077
  %v5290 = vpack.c.b16 %v5082, %v5078
  %v5291 = vpack.c.b16 %v5083, %v5079
  %v5292 = vpack.c.b16 %v5084, %v5080
  %v5293 = vpack.c.b16 %v5089, %v5085
  %v5294 = vpack.c.b16 %v5090, %v5086
  %v5295 = vpack.c.b16 %v5091, %v5087
  %v5296 = vpack.c.b16 %v5092, %v5088
  %v5297 = vpack.c.b16 %v5097, %v5093
  %v5298 = vpack.c.b16 %v5098, %v5094
  %v5299 = vpack.c.b16 %v5099, %v5095
  %v5300 = vpack.c.b16 %v5100, %v5096
  %v5301 = vpack.c.b16 %v5105, %v5101
  %v5302 = vpack.c.b16 %v5106, %v5102
  %v5303 = vpack.c.b16 %v5107, %v5103
  %v5304 = vpack.c.b16 %v5108, %v5104
  %v5305 = vpack.c.b16 %v5113, %v5109
  %v5306 = vpack.c.b16 %v5114, %v5110
  %v5307 = vpack.c.b16 %v5115, %v5111
  %v5308 = vpack.c.b16 %v5116, %v5112
  %v5309 = vpack.c.b16 %v5121, %v5117
  %v5310 = vpack.c.b16 %v5122, %v5118
  %v5311 = vpack.c.b16 %v5123, %v5119
  %v5312 = vpack.c.b16 %v5124, %v5120
  %v5313 = vpack.c.b16 %v5129, %v5125
  %v5314 = vpack.c.b16 %v5130, %v5126
  %v5315 = vpack.c.b16 %v5131, %v5127
  %v5316 = vpack.c.b16 %v5132, %v5128
  %v5317 = vpack.c.b16 %v5137, %v5133
  %v5318 = vpack.c.b16 %v5138, %v5134
  %v5319 = vpack.c.b16 %v5139, %v5135
  %v5320 = vpack.c.b16 %v5140, %v5136
  %v5321 = vpack.c.b16 %v5145, %v5141
  %v5322 = vpack.c.b16 %v5146, %v5142
  %v5323 = vpack.c.b16 %v5147, %v5143
  %v5324 = vpack.c.b16 %v5148, %v5144
  %v5325 = vpack.c.b16 %v5153, %v5149
  %v5326 = vpack.c.b16 %v5154, %v5150
  %v5327 = vpack.c.b16 %v5155, %v5151
  %v5328 = vpack.c.b16 %v5156, %v5152
  %v5329 = vpack.c.b16 %v5161, %v5157
  %v5330 = vpack.c.b16 %v5162, %v5158
  %v5331 = vpack.c.b16 %v5163, %v5159
  %v5332 = vpack.c.b16 %v5164, %v5160
  %v5333 = vpack.c.b16 %v5169, %v5165
  %v5334 = vpack.c.b16 %v5170, %v5166
  %v5335 = vpack.c.b16 %v5171, %v5167
  %v5336 = vpack.c.b16 %v5172, %v5168
  %v5337 = vpack.c.b16 %v5177, %v5173
  %v5338 = vpack.c.b16 %v5178, %v5174
  %v5339 = vpack.c.b16 %v5179, %v5175
  %v5340 = vpack.c.b16 %v5180, %v5176
  %v5341 = vpack.c.b16 %v5185, %v5181
  %v5342 = vpack.c.b16 %v5186, %v5182
  %v5343 = vpack.c.b16 %v5187, %v5183
  %v5344 = vpack.c.b16 %v5188, %v5184
  %v5345 = vpack.c.b16 %v5193, %v5189
  %v5346 = vpack.c.b16 %v5194, %v5190
  %v5347 = vpack.c.b16 %v5195, %v5191
  %v5348 = vpack.c.b16 %v5196, %v5192
  %v5349 = vpack.c.b16 %v5201, %v5197
  %v5350 = vpack.c.b16 %v5202, %v5198
  %v5351 = vpack.c.b16 %v5203, %v5199
  %v5352 = vpack.c.b16 %v5204, %v5200
  %v5353 = vpack.c.b16 %v5209, %v5205
  %v5354 = vpack.c.b16 %v5210, %v5206
  %v5355 = vpack.c.b16 %v5211, %v5207
  %v5356 = vpack.c.b16 %v5212, %v5208
  %v5357 = vpack.c.b16 %v5217, %v5213
  %v5358 = vpack.c.b16 %v5218, %v5214
  %v5359 = vpack.c.b16 %v5219, %v5215
  %v5360 = vpack.c.b16 %v5220, %v5216
  %v5361 = vpack.c.b16 %v5225, %v5221
  %v5362 = vpack.c.b16 %v5226, %v5222
  %v5363 = vpack.c.b16 %v5227, %v5223
  %v5364 = vpack.c.b16 %v5228, %v5224
  %v5365 = vpack.c.b16 %v5233, %v5229
  %v5366 = vpack.c.b16 %v5234, %v5230
  %v5367 = vpack.c.b16 %v5235, %v5231
  %v5368 = vpack.c.b16 %v5236, %v5232
  %v5369 = vpack.c.b16 %v5241, %v5237
  %v5370 = vpack.c.b16 %v5242, %v5238
  %v5371 = vpack.c.b16 %v5243, %v5239
  %v5372 = vpack.c.b16 %v5244, %v5240
  %5501 = vmatpush.bf16.msra.mxu0 %v981
  %5502 = vmatpush.bf16.msra.mxu0 %v980
  %5503 = vmatpush.bf16.msra.mxu0 %v979
  %5504 = vmatpush.bf16.msra.mxu0 %v978
  %5505 = vmatpush.bf16.msra.mxu0 %v977
  %5506 = vmatpush.bf16.msra.mxu0 %v976
  %5507 = vmatpush.bf16.msra.mxu0 %v975
  %5508 = vmatpush.bf16.msra.mxu0 %v974
  %5509 = vmatmul.bf16.gmra.mxu0 %v5245
  %v5510 = vpop.f32.mrf.mxu0
  %v5511 = vadd.f32 0.0, %v5510
  %v5512 = vpop.f32.mrf.mxu0
  %v5513 = vadd.f32 0.0, %v5512
  %5514 = vmatmul.bf16.gmra.mxu0 %v5249
  %v5515 = vpop.f32.mrf.mxu0
  %v5516 = vadd.f32 0.0, %v5515
  %v5517 = vpop.f32.mrf.mxu0
  %v5518 = vadd.f32 0.0, %v5517
  %5519 = vmatmul.bf16.gmra.mxu0 %v5253
  %v5520 = vpop.f32.mrf.mxu0
  %v5521 = vadd.f32 0.0, %v5520
  %v5522 = vpop.f32.mrf.mxu0
  %v5523 = vadd.f32 0.0, %v5522
  %5524 = vmatmul.bf16.gmra.mxu0 %v5257
  %v5525 = vpop.f32.mrf.mxu0
  %v5526 = vadd.f32 0.0, %v5525
  %v5527 = vpop.f32.mrf.mxu0
  %v5528 = vadd.f32 0.0, %v5527
  %5529 = vmatmul.bf16.gmra.mxu0 %v5261
  %v5530 = vpop.f32.mrf.mxu0
  %v5531 = vadd.f32 0.0, %v5530
  %v5532 = vpop.f32.mrf.mxu0
  %v5533 = vadd.f32 0.0, %v5532
  %5534 = vmatmul.bf16.gmra.mxu0 %v5265
  %v5535 = vpop.f32.mrf.mxu0
  %v5536 = vadd.f32 0.0, %v5535
  %v5537 = vpop.f32.mrf.mxu0
  %v5538 = vadd.f32 0.0, %v5537
  %5539 = vmatmul.bf16.gmra.mxu0 %v5269
  %v5540 = vpop.f32.mrf.mxu0
  %v5541 = vadd.f32 0.0, %v5540
  %v5542 = vpop.f32.mrf.mxu0
  %v5543 = vadd.f32 0.0, %v5542
  %5544 = vmatmul.bf16.gmra.mxu0 %v5273
  %v5545 = vpop.f32.mrf.mxu0
  %v5546 = vadd.f32 0.0, %v5545
  %v5547 = vpop.f32.mrf.mxu0
  %v5548 = vadd.f32 0.0, %v5547
  %5549 = vmatmul.bf16.gmra.mxu0 %v5277
  %v5550 = vpop.f32.mrf.mxu0
  %v5551 = vadd.f32 0.0, %v5550
  %v5552 = vpop.f32.mrf.mxu0
  %v5553 = vadd.f32 0.0, %v5552
  %5554 = vmatmul.bf16.gmra.mxu0 %v5281
  %v5555 = vpop.f32.mrf.mxu0
  %v5556 = vadd.f32 0.0, %v5555
  %v5557 = vpop.f32.mrf.mxu0
  %v5558 = vadd.f32 0.0, %v5557
  %5559 = vmatmul.bf16.gmra.mxu0 %v5285
  %v5560 = vpop.f32.mrf.mxu0
  %v5561 = vadd.f32 0.0, %v5560
  %v5562 = vpop.f32.mrf.mxu0
  %v5563 = vadd.f32 0.0, %v5562
  %5564 = vmatmul.bf16.gmra.mxu0 %v5289
  %v5565 = vpop.f32.mrf.mxu0
  %v5566 = vadd.f32 0.0, %v5565
  %v5567 = vpop.f32.mrf.mxu0
  %v5568 = vadd.f32 0.0, %v5567
  %5569 = vmatmul.bf16.gmra.mxu0 %v5293
  %v5570 = vpop.f32.mrf.mxu0
  %v5571 = vadd.f32 0.0, %v5570
  %v5572 = vpop.f32.mrf.mxu0
  %v5573 = vadd.f32 0.0, %v5572
  %5574 = vmatmul.bf16.gmra.mxu0 %v5297
  %v5575 = vpop.f32.mrf.mxu0
  %v5576 = vadd.f32 0.0, %v5575
  %v5577 = vpop.f32.mrf.mxu0
  %v5578 = vadd.f32 0.0, %v5577
  %5579 = vmatmul.bf16.gmra.mxu0 %v5301
  %v5580 = vpop.f32.mrf.mxu0
  %v5581 = vadd.f32 0.0, %v5580
  %v5582 = vpop.f32.mrf.mxu0
  %v5583 = vadd.f32 0.0, %v5582
  %5584 = vmatmul.bf16.gmra.mxu0 %v5305
  %v5585 = vpop.f32.mrf.mxu0
  %v5586 = vadd.f32 0.0, %v5585
  %v5587 = vpop.f32.mrf.mxu0
  %v5588 = vadd.f32 0.0, %v5587
  %5589 = vmatmul.bf16.gmra.mxu0 %v5309
  %v5590 = vpop.f32.mrf.mxu0
  %v5591 = vadd.f32 0.0, %v5590
  %v5592 = vpop.f32.mrf.mxu0
  %v5593 = vadd.f32 0.0, %v5592
  %5594 = vmatmul.bf16.gmra.mxu0 %v5313
  %v5595 = vpop.f32.mrf.mxu0
  %v5596 = vadd.f32 0.0, %v5595
  %v5597 = vpop.f32.mrf.mxu0
  %v5598 = vadd.f32 0.0, %v5597
  %5599 = vmatmul.bf16.gmra.mxu0 %v5317
  %v5600 = vpop.f32.mrf.mxu0
  %v5601 = vadd.f32 0.0, %v5600
  %v5602 = vpop.f32.mrf.mxu0
  %v5603 = vadd.f32 0.0, %v5602
  %5604 = vmatmul.bf16.gmra.mxu0 %v5321
  %v5605 = vpop.f32.mrf.mxu0
  %v5606 = vadd.f32 0.0, %v5605
  %v5607 = vpop.f32.mrf.mxu0
  %v5608 = vadd.f32 0.0, %v5607
  %5609 = vmatmul.bf16.gmra.mxu0 %v5325
  %v5610 = vpop.f32.mrf.mxu0
  %v5611 = vadd.f32 0.0, %v5610
  %v5612 = vpop.f32.mrf.mxu0
  %v5613 = vadd.f32 0.0, %v5612
  %5614 = vmatmul.bf16.gmra.mxu0 %v5329
  %v5615 = vpop.f32.mrf.mxu0
  %v5616 = vadd.f32 0.0, %v5615
  %v5617 = vpop.f32.mrf.mxu0
  %v5618 = vadd.f32 0.0, %v5617
  %5619 = vmatmul.bf16.gmra.mxu0 %v5333
  %v5620 = vpop.f32.mrf.mxu0
  %v5621 = vadd.f32 0.0, %v5620
  %v5622 = vpop.f32.mrf.mxu0
  %v5623 = vadd.f32 0.0, %v5622
  %5624 = vmatmul.bf16.gmra.mxu0 %v5337
  %v5625 = vpop.f32.mrf.mxu0
  %v5626 = vadd.f32 0.0, %v5625
  %v5627 = vpop.f32.mrf.mxu0
  %v5628 = vadd.f32 0.0, %v5627
  %5629 = vmatmul.bf16.gmra.mxu0 %v5341
  %v5630 = vpop.f32.mrf.mxu0
  %v5631 = vadd.f32 0.0, %v5630
  %v5632 = vpop.f32.mrf.mxu0
  %v5633 = vadd.f32 0.0, %v5632
  %5634 = vmatmul.bf16.gmra.mxu0 %v5345
  %v5635 = vpop.f32.mrf.mxu0
  %v5636 = vadd.f32 0.0, %v5635
  %v5637 = vpop.f32.mrf.mxu0
  %v5638 = vadd.f32 0.0, %v5637
  %5639 = vmatmul.bf16.gmra.mxu0 %v5349
  %v5640 = vpop.f32.mrf.mxu0
  %v5641 = vadd.f32 0.0, %v5640
  %v5642 = vpop.f32.mrf.mxu0
  %v5643 = vadd.f32 0.0, %v5642
  %5644 = vmatmul.bf16.gmra.mxu0 %v5353
  %v5645 = vpop.f32.mrf.mxu0
  %v5646 = vadd.f32 0.0, %v5645
  %v5647 = vpop.f32.mrf.mxu0
  %v5648 = vadd.f32 0.0, %v5647
  %5649 = vmatmul.bf16.gmra.mxu0 %v5357
  %v5650 = vpop.f32.mrf.mxu0
  %v5651 = vadd.f32 0.0, %v5650
  %v5652 = vpop.f32.mrf.mxu0
  %v5653 = vadd.f32 0.0, %v5652
  %5654 = vmatmul.bf16.gmra.mxu0 %v5361
  %v5655 = vpop.f32.mrf.mxu0
  %v5656 = vadd.f32 0.0, %v5655
  %v5657 = vpop.f32.mrf.mxu0
  %v5658 = vadd.f32 0.0, %v5657
  %5659 = vmatmul.bf16.gmra.mxu0 %v5365
  %v5660 = vpop.f32.mrf.mxu0
  %v5661 = vadd.f32 0.0, %v5660
  %v5662 = vpop.f32.mrf.mxu0
  %v5663 = vadd.f32 0.0, %v5662
  %5664 = vmatmul.bf16.gmra.mxu0 %v5369
  %v5665 = vpop.f32.mrf.mxu0
  %v5666 = vadd.f32 0.0, %v5665
  %v5667 = vpop.f32.mrf.mxu0
  %v5668 = vadd.f32 0.0, %v5667
  %5669 = vdwg.mxu0
  %5670 = vmatpush.bf16.msra.mxu0 %v989
  %5671 = vmatpush.bf16.msra.mxu0 %v988
  %5672 = vmatpush.bf16.msra.mxu0 %v987
  %5673 = vmatpush.bf16.msra.mxu0 %v986
  %5674 = vmatpush.bf16.msra.mxu0 %v985
  %5675 = vmatpush.bf16.msra.mxu0 %v984
  %5676 = vmatpush.bf16.msra.mxu0 %v983
  %5677 = vmatpush.bf16.msra.mxu0 %v982
  %5678 = vmatmul.bf16.gmra.mxu0 %v5246
  %v5679 = vpop.f32.mrf.mxu0
  %v5680 = vadd.f32 %v5511, %v5679
  %v5681 = vpop.f32.mrf.mxu0
  %v5682 = vadd.f32 %v5513, %v5681
  %5683 = vmatmul.bf16.gmra.mxu0 %v5250
  %v5684 = vpop.f32.mrf.mxu0
  %v5685 = vadd.f32 %v5516, %v5684
  %v5686 = vpop.f32.mrf.mxu0
  %v5687 = vadd.f32 %v5518, %v5686
  %5688 = vmatmul.bf16.gmra.mxu0 %v5254
  %v5689 = vpop.f32.mrf.mxu0
  %v5690 = vadd.f32 %v5521, %v5689
  %v5691 = vpop.f32.mrf.mxu0
  %v5692 = vadd.f32 %v5523, %v5691
  %5693 = vmatmul.bf16.gmra.mxu0 %v5258
  %v5694 = vpop.f32.mrf.mxu0
  %v5695 = vadd.f32 %v5526, %v5694
  %v5696 = vpop.f32.mrf.mxu0
  %v5697 = vadd.f32 %v5528, %v5696
  %5698 = vmatmul.bf16.gmra.mxu0 %v5262
  %v5699 = vpop.f32.mrf.mxu0
  %v5700 = vadd.f32 %v5531, %v5699
  %v5701 = vpop.f32.mrf.mxu0
  %v5702 = vadd.f32 %v5533, %v5701
  %5703 = vmatmul.bf16.gmra.mxu0 %v5266
  %v5704 = vpop.f32.mrf.mxu0
  %v5705 = vadd.f32 %v5536, %v5704
  %v5706 = vpop.f32.mrf.mxu0
  %v5707 = vadd.f32 %v5538, %v5706
  %5708 = vmatmul.bf16.gmra.mxu0 %v5270
  %v5709 = vpop.f32.mrf.mxu0
  %v5710 = vadd.f32 %v5541, %v5709
  %v5711 = vpop.f32.mrf.mxu0
  %v5712 = vadd.f32 %v5543, %v5711
  %5713 = vmatmul.bf16.gmra.mxu0 %v5274
  %v5714 = vpop.f32.mrf.mxu0
  %v5715 = vadd.f32 %v5546, %v5714
  %v5716 = vpop.f32.mrf.mxu0
  %v5717 = vadd.f32 %v5548, %v5716
  %5718 = vmatmul.bf16.gmra.mxu0 %v5278
  %v5719 = vpop.f32.mrf.mxu0
  %v5720 = vadd.f32 %v5551, %v5719
  %v5721 = vpop.f32.mrf.mxu0
  %v5722 = vadd.f32 %v5553, %v5721
  %5723 = vmatmul.bf16.gmra.mxu0 %v5282
  %v5724 = vpop.f32.mrf.mxu0
  %v5725 = vadd.f32 %v5556, %v5724
  %v5726 = vpop.f32.mrf.mxu0
  %v5727 = vadd.f32 %v5558, %v5726
  %5728 = vmatmul.bf16.gmra.mxu0 %v5286
  %v5729 = vpop.f32.mrf.mxu0
  %v5730 = vadd.f32 %v5561, %v5729
  %v5731 = vpop.f32.mrf.mxu0
  %v5732 = vadd.f32 %v5563, %v5731
  %5733 = vmatmul.bf16.gmra.mxu0 %v5290
  %v5734 = vpop.f32.mrf.mxu0
  %v5735 = vadd.f32 %v5566, %v5734
  %v5736 = vpop.f32.mrf.mxu0
  %v5737 = vadd.f32 %v5568, %v5736
  %5738 = vmatmul.bf16.gmra.mxu0 %v5294
  %v5739 = vpop.f32.mrf.mxu0
  %v5740 = vadd.f32 %v5571, %v5739
  %v5741 = vpop.f32.mrf.mxu0
  %v5742 = vadd.f32 %v5573, %v5741
  %5743 = vmatmul.bf16.gmra.mxu0 %v5298
  %v5744 = vpop.f32.mrf.mxu0
  %v5745 = vadd.f32 %v5576, %v5744
  %v5746 = vpop.f32.mrf.mxu0
  %v5747 = vadd.f32 %v5578, %v5746
  %5748 = vmatmul.bf16.gmra.mxu0 %v5302
  %v5749 = vpop.f32.mrf.mxu0
  %v5750 = vadd.f32 %v5581, %v5749
  %v5751 = vpop.f32.mrf.mxu0
  %v5752 = vadd.f32 %v5583, %v5751
  %5753 = vmatmul.bf16.gmra.mxu0 %v5306
  %v5754 = vpop.f32.mrf.mxu0
  %v5755 = vadd.f32 %v5586, %v5754
  %v5756 = vpop.f32.mrf.mxu0
  %v5757 = vadd.f32 %v5588, %v5756
  %5758 = vmatmul.bf16.gmra.mxu0 %v5310
  %v5759 = vpop.f32.mrf.mxu0
  %v5760 = vadd.f32 %v5591, %v5759
  %v5761 = vpop.f32.mrf.mxu0
  %v5762 = vadd.f32 %v5593, %v5761
  %5763 = vmatmul.bf16.gmra.mxu0 %v5314
  %v5764 = vpop.f32.mrf.mxu0
  %v5765 = vadd.f32 %v5596, %v5764
  %v5766 = vpop.f32.mrf.mxu0
  %v5767 = vadd.f32 %v5598, %v5766
  %5768 = vmatmul.bf16.gmra.mxu0 %v5318
  %v5769 = vpop.f32.mrf.mxu0
  %v5770 = vadd.f32 %v5601, %v5769
  %v5771 = vpop.f32.mrf.mxu0
  %v5772 = vadd.f32 %v5603, %v5771
  %5773 = vmatmul.bf16.gmra.mxu0 %v5322
  %v5774 = vpop.f32.mrf.mxu0
  %v5775 = vadd.f32 %v5606, %v5774
  %v5776 = vpop.f32.mrf.mxu0
  %v5777 = vadd.f32 %v5608, %v5776
  %5778 = vmatmul.bf16.gmra.mxu0 %v5326
  %v5779 = vpop.f32.mrf.mxu0
  %v5780 = vadd.f32 %v5611, %v5779
  %v5781 = vpop.f32.mrf.mxu0
  %v5782 = vadd.f32 %v5613, %v5781
  %5783 = vmatmul.bf16.gmra.mxu0 %v5330
  %v5784 = vpop.f32.mrf.mxu0
  %v5785 = vadd.f32 %v5616, %v5784
  %v5786 = vpop.f32.mrf.mxu0
  %v5787 = vadd.f32 %v5618, %v5786
  %5788 = vmatmul.bf16.gmra.mxu0 %v5334
  %v5789 = vpop.f32.mrf.mxu0
  %v5790 = vadd.f32 %v5621, %v5789
  %v5791 = vpop.f32.mrf.mxu0
  %v5792 = vadd.f32 %v5623, %v5791
  %5793 = vmatmul.bf16.gmra.mxu0 %v5338
  %v5794 = vpop.f32.mrf.mxu0
  %v5795 = vadd.f32 %v5626, %v5794
  %v5796 = vpop.f32.mrf.mxu0
  %v5797 = vadd.f32 %v5628, %v5796
  %5798 = vmatmul.bf16.gmra.mxu0 %v5342
  %v5799 = vpop.f32.mrf.mxu0
  %v5800 = vadd.f32 %v5631, %v5799
  %v5801 = vpop.f32.mrf.mxu0
  %v5802 = vadd.f32 %v5633, %v5801
  %5803 = vmatmul.bf16.gmra.mxu0 %v5346
  %v5804 = vpop.f32.mrf.mxu0
  %v5805 = vadd.f32 %v5636, %v5804
  %v5806 = vpop.f32.mrf.mxu0
  %v5807 = vadd.f32 %v5638, %v5806
  %5808 = vmatmul.bf16.gmra.mxu0 %v5350
  %v5809 = vpop.f32.mrf.mxu0
  %v5810 = vadd.f32 %v5641, %v5809
  %v5811 = vpop.f32.mrf.mxu0
  %v5812 = vadd.f32 %v5643, %v5811
  %5813 = vmatmul.bf16.gmra.mxu0 %v5354
  %v5814 = vpop.f32.mrf.mxu0
  %v5815 = vadd.f32 %v5646, %v5814
  %v5816 = vpop.f32.mrf.mxu0
  %v5817 = vadd.f32 %v5648, %v5816
  %5818 = vmatmul.bf16.gmra.mxu0 %v5358
  %v5819 = vpop.f32.mrf.mxu0
  %v5820 = vadd.f32 %v5651, %v5819
  %v5821 = vpop.f32.mrf.mxu0
  %v5822 = vadd.f32 %v5653, %v5821
  %5823 = vmatmul.bf16.gmra.mxu0 %v5362
  %v5824 = vpop.f32.mrf.mxu0
  %v5825 = vadd.f32 %v5656, %v5824
  %v5826 = vpop.f32.mrf.mxu0
  %v5827 = vadd.f32 %v5658, %v5826
  %5828 = vmatmul.bf16.gmra.mxu0 %v5366
  %v5829 = vpop.f32.mrf.mxu0
  %v5830 = vadd.f32 %v5661, %v5829
  %v5831 = vpop.f32.mrf.mxu0
  %v5832 = vadd.f32 %v5663, %v5831
  %5833 = vmatmul.bf16.gmra.mxu0 %v5370
  %v5834 = vpop.f32.mrf.mxu0
  %v5835 = vadd.f32 %v5666, %v5834
  %v5836 = vpop.f32.mrf.mxu0
  %v5837 = vadd.f32 %v5668, %v5836
  %5838 = vdwg.mxu0
  %5839 = vmatpush.bf16.msra.mxu0 %v997
  %5840 = vmatpush.bf16.msra.mxu0 %v996
  %5841 = vmatpush.bf16.msra.mxu0 %v995
  %5842 = vmatpush.bf16.msra.mxu0 %v994
  %5843 = vmatpush.bf16.msra.mxu0 %v993
  %5844 = vmatpush.bf16.msra.mxu0 %v992
  %5845 = vmatpush.bf16.msra.mxu0 %v991
  %5846 = vmatpush.bf16.msra.mxu0 %v990
  %5847 = vmatmul.bf16.gmra.mxu0 %v5247
  %v5848 = vpop.f32.mrf.mxu0
  %v5849 = vadd.f32 %v5680, %v5848
  %v5850 = vpop.f32.mrf.mxu0
  %v5851 = vadd.f32 %v5682, %v5850
  %5852 = vmatmul.bf16.gmra.mxu0 %v5251
  %v5853 = vpop.f32.mrf.mxu0
  %v5854 = vadd.f32 %v5685, %v5853
  %v5855 = vpop.f32.mrf.mxu0
  %v5856 = vadd.f32 %v5687, %v5855
  %5857 = vmatmul.bf16.gmra.mxu0 %v5255
  %v5858 = vpop.f32.mrf.mxu0
  %v5859 = vadd.f32 %v5690, %v5858
  %v5860 = vpop.f32.mrf.mxu0
  %v5861 = vadd.f32 %v5692, %v5860
  %5862 = vmatmul.bf16.gmra.mxu0 %v5259
  %v5863 = vpop.f32.mrf.mxu0
  %v5864 = vadd.f32 %v5695, %v5863
  %v5865 = vpop.f32.mrf.mxu0
  %v5866 = vadd.f32 %v5697, %v5865
  %5867 = vmatmul.bf16.gmra.mxu0 %v5263
  %v5868 = vpop.f32.mrf.mxu0
  %v5869 = vadd.f32 %v5700, %v5868
  %v5870 = vpop.f32.mrf.mxu0
  %v5871 = vadd.f32 %v5702, %v5870
  %5872 = vmatmul.bf16.gmra.mxu0 %v5267
  %v5873 = vpop.f32.mrf.mxu0
  %v5874 = vadd.f32 %v5705, %v5873
  %v5875 = vpop.f32.mrf.mxu0
  %v5876 = vadd.f32 %v5707, %v5875
  %5877 = vmatmul.bf16.gmra.mxu0 %v5271
  %v5878 = vpop.f32.mrf.mxu0
  %v5879 = vadd.f32 %v5710, %v5878
  %v5880 = vpop.f32.mrf.mxu0
  %v5881 = vadd.f32 %v5712, %v5880
  %5882 = vmatmul.bf16.gmra.mxu0 %v5275
  %v5883 = vpop.f32.mrf.mxu0
  %v5884 = vadd.f32 %v5715, %v5883
  %v5885 = vpop.f32.mrf.mxu0
  %v5886 = vadd.f32 %v5717, %v5885
  %5887 = vmatmul.bf16.gmra.mxu0 %v5279
  %v5888 = vpop.f32.mrf.mxu0
  %v5889 = vadd.f32 %v5720, %v5888
  %v5890 = vpop.f32.mrf.mxu0
  %v5891 = vadd.f32 %v5722, %v5890
  %5892 = vmatmul.bf16.gmra.mxu0 %v5283
  %v5893 = vpop.f32.mrf.mxu0
  %v5894 = vadd.f32 %v5725, %v5893
  %v5895 = vpop.f32.mrf.mxu0
  %v5896 = vadd.f32 %v5727, %v5895
  %5897 = vmatmul.bf16.gmra.mxu0 %v5287
  %v5898 = vpop.f32.mrf.mxu0
  %v5899 = vadd.f32 %v5730, %v5898
  %v5900 = vpop.f32.mrf.mxu0
  %v5901 = vadd.f32 %v5732, %v5900
  %5902 = vmatmul.bf16.gmra.mxu0 %v5291
  %v5903 = vpop.f32.mrf.mxu0
  %v5904 = vadd.f32 %v5735, %v5903
  %v5905 = vpop.f32.mrf.mxu0
  %v5906 = vadd.f32 %v5737, %v5905
  %5907 = vmatmul.bf16.gmra.mxu0 %v5295
  %v5908 = vpop.f32.mrf.mxu0
  %v5909 = vadd.f32 %v5740, %v5908
  %v5910 = vpop.f32.mrf.mxu0
  %v5911 = vadd.f32 %v5742, %v5910
  %5912 = vmatmul.bf16.gmra.mxu0 %v5299
  %v5913 = vpop.f32.mrf.mxu0
  %v5914 = vadd.f32 %v5745, %v5913
  %v5915 = vpop.f32.mrf.mxu0
  %v5916 = vadd.f32 %v5747, %v5915
  %5917 = vmatmul.bf16.gmra.mxu0 %v5303
  %v5918 = vpop.f32.mrf.mxu0
  %v5919 = vadd.f32 %v5750, %v5918
  %v5920 = vpop.f32.mrf.mxu0
  %v5921 = vadd.f32 %v5752, %v5920
  %5922 = vmatmul.bf16.gmra.mxu0 %v5307
  %v5923 = vpop.f32.mrf.mxu0
  %v5924 = vadd.f32 %v5755, %v5923
  %v5925 = vpop.f32.mrf.mxu0
  %v5926 = vadd.f32 %v5757, %v5925
  %5927 = vmatmul.bf16.gmra.mxu0 %v5311
  %v5928 = vpop.f32.mrf.mxu0
  %v5929 = vadd.f32 %v5760, %v5928
  %v5930 = vpop.f32.mrf.mxu0
  %v5931 = vadd.f32 %v5762, %v5930
  %5932 = vmatmul.bf16.gmra.mxu0 %v5315
  %v5933 = vpop.f32.mrf.mxu0
  %v5934 = vadd.f32 %v5765, %v5933
  %v5935 = vpop.f32.mrf.mxu0
  %v5936 = vadd.f32 %v5767, %v5935
  %5937 = vmatmul.bf16.gmra.mxu0 %v5319
  %v5938 = vpop.f32.mrf.mxu0
  %v5939 = vadd.f32 %v5770, %v5938
  %v5940 = vpop.f32.mrf.mxu0
  %v5941 = vadd.f32 %v5772, %v5940
  %5942 = vmatmul.bf16.gmra.mxu0 %v5323
  %v5943 = vpop.f32.mrf.mxu0
  %v5944 = vadd.f32 %v5775, %v5943
  %v5945 = vpop.f32.mrf.mxu0
  %v5946 = vadd.f32 %v5777, %v5945
  %5947 = vmatmul.bf16.gmra.mxu0 %v5327
  %v5948 = vpop.f32.mrf.mxu0
  %v5949 = vadd.f32 %v5780, %v5948
  %v5950 = vpop.f32.mrf.mxu0
  %v5951 = vadd.f32 %v5782, %v5950
  %5952 = vmatmul.bf16.gmra.mxu0 %v5331
  %v5953 = vpop.f32.mrf.mxu0
  %v5954 = vadd.f32 %v5785, %v5953
  %v5955 = vpop.f32.mrf.mxu0
  %v5956 = vadd.f32 %v5787, %v5955
  %5957 = vmatmul.bf16.gmra.mxu0 %v5335
  %v5958 = vpop.f32.mrf.mxu0
  %v5959 = vadd.f32 %v5790, %v5958
  %v5960 = vpop.f32.mrf.mxu0
  %v5961 = vadd.f32 %v5792, %v5960
  %5962 = vmatmul.bf16.gmra.mxu0 %v5339
  %v5963 = vpop.f32.mrf.mxu0
  %v5964 = vadd.f32 %v5795, %v5963
  %v5965 = vpop.f32.mrf.mxu0
  %v5966 = vadd.f32 %v5797, %v5965
  %5967 = vmatmul.bf16.gmra.mxu0 %v5343
  %v5968 = vpop.f32.mrf.mxu0
  %v5969 = vadd.f32 %v5800, %v5968
  %v5970 = vpop.f32.mrf.mxu0
  %v5971 = vadd.f32 %v5802, %v5970
  %5972 = vmatmul.bf16.gmra.mxu0 %v5347
  %v5973 = vpop.f32.mrf.mxu0
  %v5974 = vadd.f32 %v5805, %v5973
  %v5975 = vpop.f32.mrf.mxu0
  %v5976 = vadd.f32 %v5807, %v5975
  %5977 = vmatmul.bf16.gmra.mxu0 %v5351
  %v5978 = vpop.f32.mrf.mxu0
  %v5979 = vadd.f32 %v5810, %v5978
  %v5980 = vpop.f32.mrf.mxu0
  %v5981 = vadd.f32 %v5812, %v5980
  %5982 = vmatmul.bf16.gmra.mxu0 %v5355
  %v5983 = vpop.f32.mrf.mxu0
  %v5984 = vadd.f32 %v5815, %v5983
  %v5985 = vpop.f32.mrf.mxu0
  %v5986 = vadd.f32 %v5817, %v5985
  %5987 = vmatmul.bf16.gmra.mxu0 %v5359
  %v5988 = vpop.f32.mrf.mxu0
  %v5989 = vadd.f32 %v5820, %v5988
  %v5990 = vpop.f32.mrf.mxu0
  %v5991 = vadd.f32 %v5822, %v5990
  %5992 = vmatmul.bf16.gmra.mxu0 %v5363
  %v5993 = vpop.f32.mrf.mxu0
  %v5994 = vadd.f32 %v5825, %v5993
  %v5995 = vpop.f32.mrf.mxu0
  %v5996 = vadd.f32 %v5827, %v5995
  %5997 = vmatmul.bf16.gmra.mxu0 %v5367
  %v5998 = vpop.f32.mrf.mxu0
  %v5999 = vadd.f32 %v5830, %v5998
  %v6000 = vpop.f32.mrf.mxu0
  %v6001 = vadd.f32 %v5832, %v6000
  %6002 = vmatmul.bf16.gmra.mxu0 %v5371
  %v6003 = vpop.f32.mrf.mxu0
  %v6004 = vadd.f32 %v5835, %v6003
  %v6005 = vpop.f32.mrf.mxu0
  %v6006 = vadd.f32 %v5837, %v6005
  %6007 = vdwg.mxu0
  %6008 = vmatpush.bf16.msra.mxu0 %v1005
  %6009 = vmatpush.bf16.msra.mxu0 %v1004
  %6010 = vmatpush.bf16.msra.mxu0 %v1003
  %6011 = vmatpush.bf16.msra.mxu0 %v1002
  %6012 = vmatpush.bf16.msra.mxu0 %v1001
  %6013 = vmatpush.bf16.msra.mxu0 %v1000
  %6014 = vmatpush.bf16.msra.mxu0 %v999
  %6015 = vmatpush.bf16.msra.mxu0 %v998
  %6016 = vmatmul.bf16.gmra.mxu0 %v5248
  %v6017 = vpop.f32.mrf.mxu0
  %v6018 = vadd.f32 %v5849, %v6017
  %v6019 = vpop.f32.mrf.mxu0
  %v6020 = vadd.f32 %v5851, %v6019
  %6021 = vmatmul.bf16.gmra.mxu0 %v5252
  %v6022 = vpop.f32.mrf.mxu0
  %v6023 = vadd.f32 %v5854, %v6022
  %v6024 = vpop.f32.mrf.mxu0
  %v6025 = vadd.f32 %v5856, %v6024
  %6026 = vmatmul.bf16.gmra.mxu0 %v5256
  %v6027 = vpop.f32.mrf.mxu0
  %v6028 = vadd.f32 %v5859, %v6027
  %v6029 = vpop.f32.mrf.mxu0
  %v6030 = vadd.f32 %v5861, %v6029
  %6031 = vmatmul.bf16.gmra.mxu0 %v5260
  %v6032 = vpop.f32.mrf.mxu0
  %v6033 = vadd.f32 %v5864, %v6032
  %v6034 = vpop.f32.mrf.mxu0
  %v6035 = vadd.f32 %v5866, %v6034
  %6036 = vmatmul.bf16.gmra.mxu0 %v5264
  %v6037 = vpop.f32.mrf.mxu0
  %v6038 = vadd.f32 %v5869, %v6037
  %v6039 = vpop.f32.mrf.mxu0
  %v6040 = vadd.f32 %v5871, %v6039
  %6041 = vmatmul.bf16.gmra.mxu0 %v5268
  %v6042 = vpop.f32.mrf.mxu0
  %v6043 = vadd.f32 %v5874, %v6042
  %v6044 = vpop.f32.mrf.mxu0
  %v6045 = vadd.f32 %v5876, %v6044
  %6046 = vmatmul.bf16.gmra.mxu0 %v5272
  %v6047 = vpop.f32.mrf.mxu0
  %v6048 = vadd.f32 %v5879, %v6047
  %v6049 = vpop.f32.mrf.mxu0
  %v6050 = vadd.f32 %v5881, %v6049
  %6051 = vmatmul.bf16.gmra.mxu0 %v5276
  %v6052 = vpop.f32.mrf.mxu0
  %v6053 = vadd.f32 %v5884, %v6052
  %v6054 = vpop.f32.mrf.mxu0
  %v6055 = vadd.f32 %v5886, %v6054
  %6056 = vmatmul.bf16.gmra.mxu0 %v5280
  %v6057 = vpop.f32.mrf.mxu0
  %v6058 = vadd.f32 %v5889, %v6057
  %v6059 = vpop.f32.mrf.mxu0
  %v6060 = vadd.f32 %v5891, %v6059
  %6061 = vmatmul.bf16.gmra.mxu0 %v5284
  %v6062 = vpop.f32.mrf.mxu0
  %v6063 = vadd.f32 %v5894, %v6062
  %v6064 = vpop.f32.mrf.mxu0
  %v6065 = vadd.f32 %v5896, %v6064
  %6066 = vmatmul.bf16.gmra.mxu0 %v5288
  %v6067 = vpop.f32.mrf.mxu0
  %v6068 = vadd.f32 %v5899, %v6067
  %v6069 = vpop.f32.mrf.mxu0
  %v6070 = vadd.f32 %v5901, %v6069
  %6071 = vmatmul.bf16.gmra.mxu0 %v5292
  %v6072 = vpop.f32.mrf.mxu0
  %v6073 = vadd.f32 %v5904, %v6072
  %v6074 = vpop.f32.mrf.mxu0
  %v6075 = vadd.f32 %v5906, %v6074
  %6076 = vmatmul.bf16.gmra.mxu0 %v5296
  %v6077 = vpop.f32.mrf.mxu0
  %v6078 = vadd.f32 %v5909, %v6077
  %v6079 = vpop.f32.mrf.mxu0
  %v6080 = vadd.f32 %v5911, %v6079
  %6081 = vmatmul.bf16.gmra.mxu0 %v5300
  %v6082 = vpop.f32.mrf.mxu0
  %v6083 = vadd.f32 %v5914, %v6082
  %v6084 = vpop.f32.mrf.mxu0
  %v6085 = vadd.f32 %v5916, %v6084
  %6086 = vmatmul.bf16.gmra.mxu0 %v5304
  %v6087 = vpop.f32.mrf.mxu0
  %v6088 = vadd.f32 %v5919, %v6087
  %v6089 = vpop.f32.mrf.mxu0
  %v6090 = vadd.f32 %v5921, %v6089
  %6091 = vmatmul.bf16.gmra.mxu0 %v5308
  %v6092 = vpop.f32.mrf.mxu0
  %v6093 = vadd.f32 %v5924, %v6092
  %v6094 = vpop.f32.mrf.mxu0
  %v6095 = vadd.f32 %v5926, %v6094
  %6096 = vmatmul.bf16.gmra.mxu0 %v5312
  %v6097 = vpop.f32.mrf.mxu0
  %v6098 = vadd.f32 %v5929, %v6097
  %v6099 = vpop.f32.mrf.mxu0
  %v6100 = vadd.f32 %v5931, %v6099
  %6101 = vmatmul.bf16.gmra.mxu0 %v5316
  %v6102 = vpop.f32.mrf.mxu0
  %v6103 = vadd.f32 %v5934, %v6102
  %v6104 = vpop.f32.mrf.mxu0
  %v6105 = vadd.f32 %v5936, %v6104
  %6106 = vmatmul.bf16.gmra.mxu0 %v5320
  %v6107 = vpop.f32.mrf.mxu0
  %v6108 = vadd.f32 %v5939, %v6107
  %v6109 = vpop.f32.mrf.mxu0
  %v6110 = vadd.f32 %v5941, %v6109
  %6111 = vmatmul.bf16.gmra.mxu0 %v5324
  %v6112 = vpop.f32.mrf.mxu0
  %v6113 = vadd.f32 %v5944, %v6112
  %v6114 = vpop.f32.mrf.mxu0
  %v6115 = vadd.f32 %v5946, %v6114
  %6116 = vmatmul.bf16.gmra.mxu0 %v5328
  %v6117 = vpop.f32.mrf.mxu0
  %v6118 = vadd.f32 %v5949, %v6117
  %v6119 = vpop.f32.mrf.mxu0
  %v6120 = vadd.f32 %v5951, %v6119
  %6121 = vmatmul.bf16.gmra.mxu0 %v5332
  %v6122 = vpop.f32.mrf.mxu0
  %v6123 = vadd.f32 %v5954, %v6122
  %v6124 = vpop.f32.mrf.mxu0
  %v6125 = vadd.f32 %v5956, %v6124
  %6126 = vmatmul.bf16.gmra.mxu0 %v5336
  %v6127 = vpop.f32.mrf.mxu0
  %v6128 = vadd.f32 %v5959, %v6127
  %v6129 = vpop.f32.mrf.mxu0
  %v6130 = vadd.f32 %v5961, %v6129
  %6131 = vmatmul.bf16.gmra.mxu0 %v5340
  %v6132 = vpop.f32.mrf.mxu0
  %v6133 = vadd.f32 %v5964, %v6132
  %v6134 = vpop.f32.mrf.mxu0
  %v6135 = vadd.f32 %v5966, %v6134
  %6136 = vmatmul.bf16.gmra.mxu0 %v5344
  %v6137 = vpop.f32.mrf.mxu0
  %v6138 = vadd.f32 %v5969, %v6137
  %v6139 = vpop.f32.mrf.mxu0
  %v6140 = vadd.f32 %v5971, %v6139
  %6141 = vmatmul.bf16.gmra.mxu0 %v5348
  %v6142 = vpop.f32.mrf.mxu0
  %v6143 = vadd.f32 %v5974, %v6142
  %v6144 = vpop.f32.mrf.mxu0
  %v6145 = vadd.f32 %v5976, %v6144
  %6146 = vmatmul.bf16.gmra.mxu0 %v5352
  %v6147 = vpop.f32.mrf.mxu0
  %v6148 = vadd.f32 %v5979, %v6147
  %v6149 = vpop.f32.mrf.mxu0
  %v6150 = vadd.f32 %v5981, %v6149
  %6151 = vmatmul.bf16.gmra.mxu0 %v5356
  %v6152 = vpop.f32.mrf.mxu0
  %v6153 = vadd.f32 %v5984, %v6152
  %v6154 = vpop.f32.mrf.mxu0
  %v6155 = vadd.f32 %v5986, %v6154
  %6156 = vmatmul.bf16.gmra.mxu0 %v5360
  %v6157 = vpop.f32.mrf.mxu0
  %v6158 = vadd.f32 %v5989, %v6157
  %v6159 = vpop.f32.mrf.mxu0
  %v6160 = vadd.f32 %v5991, %v6159
  %6161 = vmatmul.bf16.gmra.mxu0 %v5364
  %v6162 = vpop.f32.mrf.mxu0
  %v6163 = vadd.f32 %v5994, %v6162
  %v6164 = vpop.f32.mrf.mxu0
  %v6165 = vadd.f32 %v5996, %v6164
  %6166 = vmatmul.bf16.gmra.mxu0 %v5368
  %v6167 = vpop.f32.mrf.mxu0
  %v6168 = vadd.f32 %v5999, %v6167
  %v6169 = vpop.f32.mrf.mxu0
  %v6170 = vadd.f32 %v6001, %v6169
  %6171 = vmatmul.bf16.gmra.mxu0 %v5372
  %v6172 = vpop.f32.mrf.mxu0
  %v6173 = vadd.f32 %v6004, %v6172
  %v6174 = vpop.f32.mrf.mxu0
  %v6175 = vadd.f32 %v6006, %v6174
  %6176 = vdwg.mxu0
  %v6177 = vmax.f32 %v4668, %v6018
  %v6178 = vmax.f32 %v4669, %v6020
  %v6179 = vmax.f32 %v4670, %v6023
  %v6180 = vmax.f32 %v4671, %v6025
  %v6181 = vmax.f32 %v4672, %v6028
  %v6182 = vmax.f32 %v4673, %v6030
  %v6183 = vmax.f32 %v4674, %v6033
  %v6184 = vmax.f32 %v4675, %v6035
  %v6185 = vmax.f32 %v4676, %v6038
  %v6186 = vmax.f32 %v4677, %v6040
  %v6187 = vmax.f32 %v4678, %v6043
  %v6188 = vmax.f32 %v4679, %v6045
  %v6189 = vmax.f32 %v4680, %v6048
  %v6190 = vmax.f32 %v4681, %v6050
  %v6191 = vmax.f32 %v4682, %v6053
  %v6192 = vmax.f32 %v4683, %v6055
  %v6193 = vmax.f32 %v4684, %v6058
  %v6194 = vmax.f32 %v4685, %v6060
  %v6195 = vmax.f32 %v4686, %v6063
  %v6196 = vmax.f32 %v4687, %v6065
  %v6197 = vmax.f32 %v4688, %v6068
  %v6198 = vmax.f32 %v4689, %v6070
  %v6199 = vmax.f32 %v4690, %v6073
  %v6200 = vmax.f32 %v4691, %v6075
  %v6201 = vmax.f32 %v4692, %v6078
  %v6202 = vmax.f32 %v4693, %v6080
  %v6203 = vmax.f32 %v4694, %v6083
  %v6204 = vmax.f32 %v4695, %v6085
  %v6205 = vmax.f32 %v4696, %v6088
  %v6206 = vmax.f32 %v4697, %v6090
  %v6207 = vmax.f32 %v4698, %v6093
  %v6208 = vmax.f32 %v4699, %v6095
  %v6209 = vmax.f32 %v4700, %v6098
  %v6210 = vmax.f32 %v4701, %v6100
  %v6211 = vmax.f32 %v4702, %v6103
  %v6212 = vmax.f32 %v4703, %v6105
  %v6213 = vmax.f32 %v4704, %v6108
  %v6214 = vmax.f32 %v4705, %v6110
  %v6215 = vmax.f32 %v4706, %v6113
  %v6216 = vmax.f32 %v4707, %v6115
  %v6217 = vmax.f32 %v4708, %v6118
  %v6218 = vmax.f32 %v4709, %v6120
  %v6219 = vmax.f32 %v4710, %v6123
  %v6220 = vmax.f32 %v4711, %v6125
  %v6221 = vmax.f32 %v4712, %v6128
  %v6222 = vmax.f32 %v4713, %v6130
  %v6223 = vmax.f32 %v4714, %v6133
  %v6224 = vmax.f32 %v4715, %v6135
  %v6225 = vmax.f32 %v4716, %v6138
  %v6226 = vmax.f32 %v4717, %v6140
  %v6227 = vmax.f32 %v4718, %v6143
  %v6228 = vmax.f32 %v4719, %v6145
  %v6229 = vmax.f32 %v4720, %v6148
  %v6230 = vmax.f32 %v4721, %v6150
  %v6231 = vmax.f32 %v4722, %v6153
  %v6232 = vmax.f32 %v4723, %v6155
  %v6233 = vmax.f32 %v4724, %v6158
  %v6234 = vmax.f32 %v4725, %v6160
  %v6235 = vmax.f32 %v4726, %v6163
  %v6236 = vmax.f32 %v4727, %v6165
  %v6237 = vmax.f32 %v4728, %v6168
  %v6238 = vmax.f32 %v4729, %v6170
  %v6239 = vmax.f32 %v4730, %v6173
  %v6240 = vmax.f32 %v4731, %v6175
  %v6241 = vld [vmem:[%s2] sm:$0x1]
  %v6243 = vperm.slane %v6241, 0
  %v6245 = vadd.f32 %v6177, %v6243
  %v6246 = vadd.f32 %v6178, %v6243
  %v6247 = vadd.f32 %v6179, %v6243
  %v6248 = vadd.f32 %v6180, %v6243
  %v6249 = vadd.f32 %v6181, %v6243
  %v6250 = vadd.f32 %v6182, %v6243
  %v6251 = vadd.f32 %v6183, %v6243
  %v6252 = vadd.f32 %v6184, %v6243
  %v6253 = vadd.f32 %v6185, %v6243
  %v6254 = vadd.f32 %v6186, %v6243
  %v6255 = vadd.f32 %v6187, %v6243
  %v6256 = vadd.f32 %v6188, %v6243
  %v6257 = vadd.f32 %v6189, %v6243
  %v6258 = vadd.f32 %v6190, %v6243
  %v6259 = vadd.f32 %v6191, %v6243
  %v6260 = vadd.f32 %v6192, %v6243
  %v6261 = vadd.f32 %v6193, %v6243
  %v6262 = vadd.f32 %v6194, %v6243
  %v6263 = vadd.f32 %v6195, %v6243
  %v6264 = vadd.f32 %v6196, %v6243
  %v6265 = vadd.f32 %v6197, %v6243
  %v6266 = vadd.f32 %v6198, %v6243
  %v6267 = vadd.f32 %v6199, %v6243
  %v6268 = vadd.f32 %v6200, %v6243
  %v6269 = vadd.f32 %v6201, %v6243
  %v6270 = vadd.f32 %v6202, %v6243
  %v6271 = vadd.f32 %v6203, %v6243
  %v6272 = vadd.f32 %v6204, %v6243
  %v6273 = vadd.f32 %v6205, %v6243
  %v6274 = vadd.f32 %v6206, %v6243
  %v6275 = vadd.f32 %v6207, %v6243
  %v6276 = vadd.f32 %v6208, %v6243
  %v6277 = vadd.f32 %v6209, %v6243
  %v6278 = vadd.f32 %v6210, %v6243
  %v6279 = vadd.f32 %v6211, %v6243
  %v6280 = vadd.f32 %v6212, %v6243
  %v6281 = vadd.f32 %v6213, %v6243
  %v6282 = vadd.f32 %v6214, %v6243
  %v6283 = vadd.f32 %v6215, %v6243
  %v6284 = vadd.f32 %v6216, %v6243
  %v6285 = vadd.f32 %v6217, %v6243
  %v6286 = vadd.f32 %v6218, %v6243
  %v6287 = vadd.f32 %v6219, %v6243
  %v6288 = vadd.f32 %v6220, %v6243
  %v6289 = vadd.f32 %v6221, %v6243
  %v6290 = vadd.f32 %v6222, %v6243
  %v6291 = vadd.f32 %v6223, %v6243
  %v6292 = vadd.f32 %v6224, %v6243
  %v6293 = vadd.f32 %v6225, %v6243
  %v6294 = vadd.f32 %v6226, %v6243
  %v6295 = vadd.f32 %v6227, %v6243
  %v6296 = vadd.f32 %v6228, %v6243
  %v6297 = vadd.f32 %v6229, %v6243
  %v6298 = vadd.f32 %v6230, %v6243
  %v6299 = vadd.f32 %v6231, %v6243
  %v6300 = vadd.f32 %v6232, %v6243
  %v6301 = vadd.f32 %v6233, %v6243
  %v6302 = vadd.f32 %v6234, %v6243
  %v6303 = vadd.f32 %v6235, %v6243
  %v6304 = vadd.f32 %v6236, %v6243
  %v6305 = vadd.f32 %v6237, %v6243
  %v6306 = vadd.f32 %v6238, %v6243
  %v6307 = vadd.f32 %v6239, %v6243
  %v6308 = vadd.f32 %v6240, %v6243
  %v6309 = vmax.f32 %v6245, 0.0
  %v6310 = vmax.f32 %v6246, 0.0
  %v6311 = vmax.f32 %v6247, 0.0
  %v6312 = vmax.f32 %v6248, 0.0
  %v6313 = vmax.f32 %v6249, 0.0
  %v6314 = vmax.f32 %v6250, 0.0
  %v6315 = vmax.f32 %v6251, 0.0
  %v6316 = vmax.f32 %v6252, 0.0
  %v6317 = vmax.f32 %v6253, 0.0
  %v6318 = vmax.f32 %v6254, 0.0
  %v6319 = vmax.f32 %v6255, 0.0
  %v6320 = vmax.f32 %v6256, 0.0
  %v6321 = vmax.f32 %v6257, 0.0
  %v6322 = vmax.f32 %v6258, 0.0
  %v6323 = vmax.f32 %v6259, 0.0
  %v6324 = vmax.f32 %v6260, 0.0
  %v6325 = vmax.f32 %v6261, 0.0
  %v6326 = vmax.f32 %v6262, 0.0
  %v6327 = vmax.f32 %v6263, 0.0
  %v6328 = vmax.f32 %v6264, 0.0
  %v6329 = vmax.f32 %v6265, 0.0
  %v6330 = vmax.f32 %v6266, 0.0
  %v6331 = vmax.f32 %v6267, 0.0
  %v6332 = vmax.f32 %v6268, 0.0
  %v6333 = vmax.f32 %v6269, 0.0
  %v6334 = vmax.f32 %v6270, 0.0
  %v6335 = vmax.f32 %v6271, 0.0
  %v6336 = vmax.f32 %v6272, 0.0
  %v6337 = vmax.f32 %v6273, 0.0
  %v6338 = vmax.f32 %v6274, 0.0
  %v6339 = vmax.f32 %v6275, 0.0
  %v6340 = vmax.f32 %v6276, 0.0
  %v6341 = vmax.f32 %v6277, 0.0
  %v6342 = vmax.f32 %v6278, 0.0
  %v6343 = vmax.f32 %v6279, 0.0
  %v6344 = vmax.f32 %v6280, 0.0
  %v6345 = vmax.f32 %v6281, 0.0
  %v6346 = vmax.f32 %v6282, 0.0
  %v6347 = vmax.f32 %v6283, 0.0
  %v6348 = vmax.f32 %v6284, 0.0
  %v6349 = vmax.f32 %v6285, 0.0
  %v6350 = vmax.f32 %v6286, 0.0
  %v6351 = vmax.f32 %v6287, 0.0
  %v6352 = vmax.f32 %v6288, 0.0
  %v6353 = vmax.f32 %v6289, 0.0
  %v6354 = vmax.f32 %v6290, 0.0
  %v6355 = vmax.f32 %v6291, 0.0
  %v6356 = vmax.f32 %v6292, 0.0
  %v6357 = vmax.f32 %v6293, 0.0
  %v6358 = vmax.f32 %v6294, 0.0
  %v6359 = vmax.f32 %v6295, 0.0
  %v6360 = vmax.f32 %v6296, 0.0
  %v6361 = vmax.f32 %v6297, 0.0
  %v6362 = vmax.f32 %v6298, 0.0
  %v6363 = vmax.f32 %v6299, 0.0
  %v6364 = vmax.f32 %v6300, 0.0
  %v6365 = vmax.f32 %v6301, 0.0
  %v6366 = vmax.f32 %v6302, 0.0
  %v6367 = vmax.f32 %v6303, 0.0
  %v6368 = vmax.f32 %v6304, 0.0
  %v6369 = vmax.f32 %v6305, 0.0
  %v6370 = vmax.f32 %v6306, 0.0
  %v6371 = vmax.f32 %v6307, 0.0
  %v6372 = vmax.f32 %v6308, 0.0
  %v6373 = vpack.c.bf16 %v6309, %v6309
  %v6374 = vpack.c.bf16 %v6310, %v6310
  %v6375 = vpack.c.bf16 %v6311, %v6311
  %v6376 = vpack.c.bf16 %v6312, %v6312
  %v6377 = vpack.c.bf16 %v6313, %v6313
  %v6378 = vpack.c.bf16 %v6314, %v6314
  %v6379 = vpack.c.bf16 %v6315, %v6315
  %v6380 = vpack.c.bf16 %v6316, %v6316
  %v6381 = vpack.c.bf16 %v6317, %v6317
  %v6382 = vpack.c.bf16 %v6318, %v6318
  %v6383 = vpack.c.bf16 %v6319, %v6319
  %v6384 = vpack.c.bf16 %v6320, %v6320
  %v6385 = vpack.c.bf16 %v6321, %v6321
  %v6386 = vpack.c.bf16 %v6322, %v6322
  %v6387 = vpack.c.bf16 %v6323, %v6323
  %v6388 = vpack.c.bf16 %v6324, %v6324
  %v6389 = vpack.c.bf16 %v6325, %v6325
  %v6390 = vpack.c.bf16 %v6326, %v6326
  %v6391 = vpack.c.bf16 %v6327, %v6327
  %v6392 = vpack.c.bf16 %v6328, %v6328
  %v6393 = vpack.c.bf16 %v6329, %v6329
  %v6394 = vpack.c.bf16 %v6330, %v6330
  %v6395 = vpack.c.bf16 %v6331, %v6331
  %v6396 = vpack.c.bf16 %v6332, %v6332
  %v6397 = vpack.c.bf16 %v6333, %v6333
  %v6398 = vpack.c.bf16 %v6334, %v6334
  %v6399 = vpack.c.bf16 %v6335, %v6335
  %v6400 = vpack.c.bf16 %v6336, %v6336
  %v6401 = vpack.c.bf16 %v6337, %v6337
  %v6402 = vpack.c.bf16 %v6338, %v6338
  %v6403 = vpack.c.bf16 %v6339, %v6339
  %v6404 = vpack.c.bf16 %v6340, %v6340
  %v6405 = vpack.c.bf16 %v6341, %v6341
  %v6406 = vpack.c.bf16 %v6342, %v6342
  %v6407 = vpack.c.bf16 %v6343, %v6343
  %v6408 = vpack.c.bf16 %v6344, %v6344
  %v6409 = vpack.c.bf16 %v6345, %v6345
  %v6410 = vpack.c.bf16 %v6346, %v6346
  %v6411 = vpack.c.bf16 %v6347, %v6347
  %v6412 = vpack.c.bf16 %v6348, %v6348
  %v6413 = vpack.c.bf16 %v6349, %v6349
  %v6414 = vpack.c.bf16 %v6350, %v6350
  %v6415 = vpack.c.bf16 %v6351, %v6351
  %v6416 = vpack.c.bf16 %v6352, %v6352
  %v6417 = vpack.c.bf16 %v6353, %v6353
  %v6418 = vpack.c.bf16 %v6354, %v6354
  %v6419 = vpack.c.bf16 %v6355, %v6355
  %v6420 = vpack.c.bf16 %v6356, %v6356
  %v6421 = vpack.c.bf16 %v6357, %v6357
  %v6422 = vpack.c.bf16 %v6358, %v6358
  %v6423 = vpack.c.bf16 %v6359, %v6359
  %v6424 = vpack.c.bf16 %v6360, %v6360
  %v6425 = vpack.c.bf16 %v6361, %v6361
  %v6426 = vpack.c.bf16 %v6362, %v6362
  %v6427 = vpack.c.bf16 %v6363, %v6363
  %v6428 = vpack.c.bf16 %v6364, %v6364
  %v6429 = vpack.c.bf16 %v6365, %v6365
  %v6430 = vpack.c.bf16 %v6366, %v6366
  %v6431 = vpack.c.bf16 %v6367, %v6367
  %v6432 = vpack.c.bf16 %v6368, %v6368
  %v6433 = vpack.c.bf16 %v6369, %v6369
  %v6434 = vpack.c.bf16 %v6370, %v6370
  %v6435 = vpack.c.bf16 %v6371, %v6371
  %v6436 = vpack.c.bf16 %v6372, %v6372
  %6437 = vst [vmem:[%s3] sm:$0xf] %v6373
  %6438 = vst [vmem:[%s3 + $0x4] sm:$0xf] %v6374
  %6439 = vst [vmem:[%s3 + $0x8] sm:$0xf] %v6375
  %6440 = vst [vmem:[%s3 + $0xc] sm:$0xf] %v6376
  %6441 = vst [vmem:[%s3 + $0x10] sm:$0xf] %v6377
  %6442 = vst [vmem:[%s3 + $0x14] sm:$0xf] %v6378
  %6443 = vst [vmem:[%s3 + $0x18] sm:$0xf] %v6379
  %6444 = vst [vmem:[%s3 + $0x1c] sm:$0xf] %v6380
  %6445 = vst [vmem:[%s3 + $0x20] sm:$0xf] %v6381
  %6446 = vst [vmem:[%s3 + $0x24] sm:$0xf] %v6382
  %6447 = vst [vmem:[%s3 + $0x28] sm:$0xf] %v6383
  %6448 = vst [vmem:[%s3 + $0x2c] sm:$0xf] %v6384
  %6449 = vst [vmem:[%s3 + $0x30] sm:$0xf] %v6385
  %6450 = vst [vmem:[%s3 + $0x34] sm:$0xf] %v6386
  %6451 = vst [vmem:[%s3 + $0x38] sm:$0xf] %v6387
  %6452 = vst [vmem:[%s3 + $0x3c] sm:$0xf] %v6388
  %6453 = vst [vmem:[%s3 + $0x40] sm:$0xf] %v6389
  %6454 = vst [vmem:[%s3 + $0x44] sm:$0xf] %v6390
  %6455 = vst [vmem:[%s3 + $0x48] sm:$0xf] %v6391
  %6456 = vst [vmem:[%s3 + $0x4c] sm:$0xf] %v6392
  %6457 = vst [vmem:[%s3 + $0x50] sm:$0xf] %v6393
  %6458 = vst [vmem:[%s3 + $0x54] sm:$0xf] %v6394
  %6459 = vst [vmem:[%s3 + $0x58] sm:$0xf] %v6395
  %6460 = vst [vmem:[%s3 + $0x5c] sm:$0xf] %v6396
  %6461 = vst [vmem:[%s3 + $0x60] sm:$0xf] %v6397
  %6462 = vst [vmem:[%s3 + $0x64] sm:$0xf] %v6398
  %6463 = vst [vmem:[%s3 + $0x68] sm:$0xf] %v6399
  %6464 = vst [vmem:[%s3 + $0x6c] sm:$0xf] %v6400
  %6465 = vst [vmem:[%s3 + $0x70] sm:$0xf] %v6401
  %6466 = vst [vmem:[%s3 + $0x74] sm:$0xf] %v6402
  %6467 = vst [vmem:[%s3 + $0x78] sm:$0xf] %v6403
  %6468 = vst [vmem:[%s3 + $0x7c] sm:$0xf] %v6404
  %6469 = vst [vmem:[%s3 + $0x80] sm:$0xf] %v6405
  %6470 = vst [vmem:[%s3 + $0x84] sm:$0xf] %v6406
  %6471 = vst [vmem:[%s3 + $0x88] sm:$0xf] %v6407
  %6472 = vst [vmem:[%s3 + $0x8c] sm:$0xf] %v6408
  %6473 = vst [vmem:[%s3 + $0x90] sm:$0xf] %v6409
  %6474 = vst [vmem:[%s3 + $0x94] sm:$0xf] %v6410
  %6475 = vst [vmem:[%s3 + $0x98] sm:$0xf] %v6411
  %6476 = vst [vmem:[%s3 + $0x9c] sm:$0xf] %v6412
  %6477 = vst [vmem:[%s3 + $0xa0] sm:$0xf] %v6413
  %6478 = vst [vmem:[%s3 + $0xa4] sm:$0xf] %v6414
  %6479 = vst [vmem:[%s3 + $0xa8] sm:$0xf] %v6415
  %6480 = vst [vmem:[%s3 + $0xac] sm:$0xf] %v6416
  %6481 = vst [vmem:[%s3 + $0xb0] sm:$0xf] %v6417
  %6482 = vst [vmem:[%s3 + $0xb4] sm:$0xf] %v6418
  %6483 = vst [vmem:[%s3 + $0xb8] sm:$0xf] %v6419
  %6484 = vst [vmem:[%s3 + $0xbc] sm:$0xf] %v6420
  %6485 = vst [vmem:[%s3 + $0xc0] sm:$0xf] %v6421
  %6486 = vst [vmem:[%s3 + $0xc4] sm:$0xf] %v6422
  %6487 = vst [vmem:[%s3 + $0xc8] sm:$0xf] %v6423
  %6488 = vst [vmem:[%s3 + $0xcc] sm:$0xf] %v6424
  %6489 = vst [vmem:[%s3 + $0xd0] sm:$0xf] %v6425
  %6490 = vst [vmem:[%s3 + $0xd4] sm:$0xf] %v6426
  %6491 = vst [vmem:[%s3 + $0xd8] sm:$0xf] %v6427
  %6492 = vst [vmem:[%s3 + $0xdc] sm:$0xf] %v6428
  %6493 = vst [vmem:[%s3 + $0xe0] sm:$0xf] %v6429
  %6494 = vst [vmem:[%s3 + $0xe4] sm:$0xf] %v6430
  %6495 = vst [vmem:[%s3 + $0xe8] sm:$0xf] %v6431
  %6496 = vst [vmem:[%s3 + $0xec] sm:$0xf] %v6432
  %6497 = vst [vmem:[%s3 + $0xf0] sm:$0xf] %v6433
  %6498 = vst [vmem:[%s3 + $0xf4] sm:$0xf] %v6434
  %6499 = vst [vmem:[%s3 + $0xf8] sm:$0xf] %v6435
  %6500 = vst [vmem:[%s3 + $0xfc] sm:$0xf] %v6436
  // Predicated region
  $region14: #{lane_detection_cnn_forward.6} parent=0 // pred_check
    _
  $region15: #{lane_detection_cnn_forward.6} parent=0 // pred_check_branch
    %6502 = sbr.rel (0) target = $region17
  $region16: #{lane_detection_cnn_forward.6} parent=0 // pred_region
    _
  $region17: #{lane_detection_cnn_forward.6} parent=0 // pred_fallthru
    _
  // Predicated region
  $region18: #{lane_detection_cnn_forward.6} parent=0 // pred_check
    _
  $region19: #{lane_detection_cnn_forward.6} parent=0 // pred_check_branch
    %6504 = sbr.rel (0) target = $region21
  $region20: #{lane_detection_cnn_forward.6} parent=0 // pred_region
    _
  $region21: #{lane_detection_cnn_forward.6} parent=0 // pred_fallthru
    _

// kernel: lane_detection_cnn_forward.7
$region0: #{lane_detection_cnn_forward.7}
  #allocation0 [shape = 'u32[]', space=smem, size = 0x4, offset = 0x4, fixed_abs, tag = 'smem constant byte address 0x4 - core index']
  #allocation1 [shape = 'u32[72,128]{1,0:T(1,128)}', space=vmem, size = 0x9000, scoped, tag = 'internal scratch']
  %s0 = inlined_call_operand.vmem [shape: bf16[4,128,384], index: 0, kind: input, shape index: {}]
  %s1 = inlined_call_operand.vmem [shape: bf16[384,128], index: 1, kind: input, shape index: {}]
  %s2 = inlined_call_operand.vmem [shape: f32[1,128], index: 2, kind: input, shape index: {}]
  %s3 = inlined_call_operand.vmem [shape: bf16[128,128], index: 3, kind: output, shape index: {}]
  %s4 = sld [smem:[#allocation0]]
  $region22: #{lane_detection_cnn_forward.7} parent=0
    _
  %s6 = ssub.s32 1, %s4
  %s7 = scalar_select 0, %s6, %s4
  // Predicated region
  $region2: #{lane_detection_cnn_forward.7} parent=0 // pred_check
    _
  $region3: #{lane_detection_cnn_forward.7} parent=0 // pred_check_branch
    %9 = sbr.rel (0) target = $region5
  $region4: #{lane_detection_cnn_forward.7} parent=0 // pred_region
    _
  $region5: #{lane_detection_cnn_forward.7} parent=0 // pred_fallthru
    _
  // Predicated region
  $region6: #{lane_detection_cnn_forward.7} parent=0 // pred_check
    _
  $region7: #{lane_detection_cnn_forward.7} parent=0 // pred_check_branch
    %11 = sbr.rel (0) target = $region9
  $region8: #{lane_detection_cnn_forward.7} parent=0 // pred_region
    _
  $region9: #{lane_detection_cnn_forward.7} parent=0 // pred_fallthru
    _
  // Predicated region
  $region10: #{lane_detection_cnn_forward.7} parent=0 // pred_check
    _
  $region11: #{lane_detection_cnn_forward.7} parent=0 // pred_check_branch
    %13 = sbr.rel (0) target = $region13
  $region12: #{lane_detection_cnn_forward.7} parent=0 // pred_region
    _
  $region13: #{lane_detection_cnn_forward.7} parent=0 // pred_fallthru
    _
  %v14 = vld [vmem:[%s1] sm:$0xf]
  %v15 = vld [vmem:[%s1 + $0x4] sm:$0xf]
  %v16 = vld [vmem:[%s1 + $0x8] sm:$0xf]
  %v17 = vld [vmem:[%s1 + $0xc] sm:$0xf]
  %v18 = vld [vmem:[%s1 + $0x10] sm:$0xf]
  %v19 = vld [vmem:[%s1 + $0x14] sm:$0xf]
  %v20 = vld [vmem:[%s1 + $0x18] sm:$0xf]
  %v21 = vld [vmem:[%s1 + $0x1c] sm:$0xf]
  %v22 = vld [vmem:[%s1 + $0x20] sm:$0xf]
  %v23 = vld [vmem:[%s1 + $0x24] sm:$0xf]
  %v24 = vld [vmem:[%s1 + $0x28] sm:$0xf]
  %v25 = vld [vmem:[%s1 + $0x2c] sm:$0xf]
  %v26 = vld [vmem:[%s1 + $0x30] sm:$0xf]
  %v27 = vld [vmem:[%s1 + $0x34] sm:$0xf]
  %v28 = vld [vmem:[%s1 + $0x38] sm:$0xf]
  %v29 = vld [vmem:[%s1 + $0x3c] sm:$0xf]
  %v30 = vld [vmem:[%s1 + $0x40] sm:$0xf]
  %v31 = vld [vmem:[%s1 + $0x44] sm:$0xf]
  %v32 = vld [vmem:[%s1 + $0x48] sm:$0xf]
  %v33 = vld [vmem:[%s1 + $0x4c] sm:$0xf]
  %v34 = vld [vmem:[%s1 + $0x50] sm:$0xf]
  %v35 = vld [vmem:[%s1 + $0x54] sm:$0xf]
  %v36 = vld [vmem:[%s1 + $0x58] sm:$0xf]
  %v37 = vld [vmem:[%s1 + $0x5c] sm:$0xf]
  %v38 = vld [vmem:[%s1 + $0x60] sm:$0xf]
  %v39 = vld [vmem:[%s1 + $0x64] sm:$0xf]
  %v40 = vld [vmem:[%s1 + $0x68] sm:$0xf]
  %v41 = vld [vmem:[%s1 + $0x6c] sm:$0xf]
  %v42 = vld [vmem:[%s1 + $0x70] sm:$0xf]
  %v43 = vld [vmem:[%s1 + $0x74] sm:$0xf]
  %v44 = vld [vmem:[%s1 + $0x78] sm:$0xf]
  %v45 = vld [vmem:[%s1 + $0x7c] sm:$0xf]
  %v46 = vld [vmem:[%s1 + $0x80] sm:$0xf]
  %v47 = vld [vmem:[%s1 + $0x84] sm:$0xf]
  %v48 = vld [vmem:[%s1 + $0x88] sm:$0xf]
  %v49 = vld [vmem:[%s1 + $0x8c] sm:$0xf]
  %v50 = vld [vmem:[%s1 + $0x90] sm:$0xf]
  %v51 = vld [vmem:[%s1 + $0x94] sm:$0xf]
  %v52 = vld [vmem:[%s1 + $0x98] sm:$0xf]
  %v53 = vld [vmem:[%s1 + $0x9c] sm:$0xf]
  %v54 = vld [vmem:[%s1 + $0xa0] sm:$0xf]
  %v55 = vld [vmem:[%s1 + $0xa4] sm:$0xf]
  %v56 = vld [vmem:[%s1 + $0xa8] sm:$0xf]
  %v57 = vld [vmem:[%s1 + $0xac] sm:$0xf]
  %v58 = vld [vmem:[%s1 + $0xb0] sm:$0xf]
  %v59 = vld [vmem:[%s1 + $0xb4] sm:$0xf]
  %v60 = vld [vmem:[%s1 + $0xb8] sm:$0xf]
  %v61 = vld [vmem:[%s1 + $0xbc] sm:$0xf]
  %v62 = vld [vmem:[%s0] sm:$0xff]
  %v63 = vld [vmem:[%s0 + $0x8] sm:$0xf]
  %v64 = vld [vmem:[%s0 + $0xc] sm:$0xff]
  %v65 = vld [vmem:[%s0 + $0x14] sm:$0xf]
  %v66 = vld [vmem:[%s0 + $0x18] sm:$0xff]
  %v67 = vld [vmem:[%s0 + $0x20] sm:$0xf]
  %v68 = vld [vmem:[%s0 + $0x24] sm:$0xff]
  %v69 = vld [vmem:[%s0 + $0x2c] sm:$0xf]
  %v70 = vld [vmem:[%s0 + $0x30] sm:$0xff]
  %v71 = vld [vmem:[%s0 + $0x38] sm:$0xf]
  %v72 = vld [vmem:[%s0 + $0x3c] sm:$0xff]
  %v73 = vld [vmem:[%s0 + $0x44] sm:$0xf]
  %v74 = vld [vmem:[%s0 + $0x48] sm:$0xff]
  %v75 = vld [vmem:[%s0 + $0x50] sm:$0xf]
  %v76 = vld [vmem:[%s0 + $0x54] sm:$0xff]
  %v77 = vld [vmem:[%s0 + $0x5c] sm:$0xf]
  %v78 = vld [vmem:[%s0 + $0x60] sm:$0xff]
  %v79 = vld [vmem:[%s0 + $0x68] sm:$0xf]
  %v80 = vld [vmem:[%s0 + $0x6c] sm:$0xff]
  %v81 = vld [vmem:[%s0 + $0x74] sm:$0xf]
  %v82 = vld [vmem:[%s0 + $0x78] sm:$0xff]
  %v83 = vld [vmem:[%s0 + $0x80] sm:$0xf]
  %v84 = vld [vmem:[%s0 + $0x84] sm:$0xff]
  %v85 = vld [vmem:[%s0 + $0x8c] sm:$0xf]
  %v86 = vld [vmem:[%s0 + $0x90] sm:$0xff]
  %v87 = vld [vmem:[%s0 + $0x98] sm:$0xf]
  %v88 = vld [vmem:[%s0 + $0x9c] sm:$0xff]
  %v89 = vld [vmem:[%s0 + $0xa4] sm:$0xf]
  %v90 = vld [vmem:[%s0 + $0xa8] sm:$0xff]
  %v91 = vld [vmem:[%s0 + $0xb0] sm:$0xf]
  %v92 = vld [vmem:[%s0 + $0xb4] sm:$0xff]
  %v93 = vld [vmem:[%s0 + $0xbc] sm:$0xf]
  %v126 = vunpack.c.l.b16 %v62
  %v127 = vunpack.c.h.b16 %v62
  %v128 = vunpack.c.l.b16 %v63
  %v129 = vunpack.c.l.b16 %v64
  %v130 = vunpack.c.h.b16 %v64
  %v131 = vunpack.c.l.b16 %v65
  %v132 = vunpack.c.l.b16 %v66
  %v133 = vunpack.c.h.b16 %v66
  %v134 = vunpack.c.l.b16 %v67
  %v135 = vunpack.c.l.b16 %v68
  %v136 = vunpack.c.h.b16 %v68
  %v137 = vunpack.c.l.b16 %v69
  %v138 = vunpack.c.l.b16 %v70
  %v139 = vunpack.c.h.b16 %v70
  %v140 = vunpack.c.l.b16 %v71
  %v141 = vunpack.c.l.b16 %v72
  %v142 = vunpack.c.h.b16 %v72
  %v143 = vunpack.c.l.b16 %v73
  %v144 = vunpack.c.l.b16 %v74
  %v145 = vunpack.c.h.b16 %v74
  %v146 = vunpack.c.l.b16 %v75
  %v147 = vunpack.c.l.b16 %v76
  %v148 = vunpack.c.h.b16 %v76
  %v149 = vunpack.c.l.b16 %v77
  %v150 = vunpack.c.l.b16 %v78
  %v151 = vunpack.c.h.b16 %v78
  %v152 = vunpack.c.l.b16 %v79
  %v153 = vunpack.c.l.b16 %v80
  %v154 = vunpack.c.h.b16 %v80
  %v155 = vunpack.c.l.b16 %v81
  %v156 = vunpack.c.l.b16 %v82
  %v157 = vunpack.c.h.b16 %v82
  %v158 = vunpack.c.l.b16 %v83
  %v159 = vunpack.c.l.b16 %v84
  %v160 = vunpack.c.h.b16 %v84
  %v161 = vunpack.c.l.b16 %v85
  %v162 = vunpack.c.l.b16 %v86
  %v163 = vunpack.c.h.b16 %v86
  %v164 = vunpack.c.l.b16 %v87
  %v165 = vunpack.c.l.b16 %v88
  %v166 = vunpack.c.h.b16 %v88
  %v167 = vunpack.c.l.b16 %v89
  %v168 = vunpack.c.l.b16 %v90
  %v169 = vunpack.c.h.b16 %v90
  %v170 = vunpack.c.l.b16 %v91
  %v171 = vunpack.c.l.b16 %v92
  %v172 = vunpack.c.h.b16 %v92
  %v173 = vunpack.c.l.b16 %v93
  %v174 = vpack.c.b16 %v129, %v126
  %v175 = vpack.c.b16 %v130, %v127
  %v176 = vpack.c.b16 %v131, %v128
  %v177 = vpack.c.b16 %v135, %v132
  %v178 = vpack.c.b16 %v136, %v133
  %v179 = vpack.c.b16 %v137, %v134
  %v180 = vpack.c.b16 %v141, %v138
  %v181 = vpack.c.b16 %v142, %v139
  %v182 = vpack.c.b16 %v143, %v140
  %v183 = vpack.c.b16 %v147, %v144
  %v184 = vpack.c.b16 %v148, %v145
  %v185 = vpack.c.b16 %v149, %v146
  %v186 = vpack.c.b16 %v153, %v150
  %v187 = vpack.c.b16 %v154, %v151
  %v188 = vpack.c.b16 %v155, %v152
  %v189 = vpack.c.b16 %v159, %v156
  %v190 = vpack.c.b16 %v160, %v157
  %v191 = vpack.c.b16 %v161, %v158
  %v192 = vpack.c.b16 %v165, %v162
  %v193 = vpack.c.b16 %v166, %v163
  %v194 = vpack.c.b16 %v167, %v164
  %v195 = vpack.c.b16 %v171, %v168
  %v196 = vpack.c.b16 %v172, %v169
  %v197 = vpack.c.b16 %v173, %v170
  %v270 = vunpack.c.l.b16 %v14
  %v271 = vunpack.c.l.b16 %v15
  %v272 = vunpack.c.l.b16 %v16
  %v273 = vunpack.c.l.b16 %v17
  %v274 = vunpack.c.l.b16 %v18
  %v275 = vunpack.c.l.b16 %v19
  %v276 = vunpack.c.l.b16 %v20
  %v277 = vunpack.c.l.b16 %v21
  %v278 = vunpack.c.l.b16 %v22
  %v279 = vunpack.c.l.b16 %v23
  %v280 = vunpack.c.l.b16 %v24
  %v281 = vunpack.c.l.b16 %v25
  %v282 = vunpack.c.l.b16 %v26
  %v283 = vunpack.c.l.b16 %v27
  %v284 = vunpack.c.l.b16 %v28
  %v285 = vunpack.c.l.b16 %v29
  %v286 = vunpack.c.l.b16 %v30
  %v287 = vunpack.c.l.b16 %v31
  %v288 = vunpack.c.l.b16 %v32
  %v289 = vunpack.c.l.b16 %v33
  %v290 = vunpack.c.l.b16 %v34
  %v291 = vunpack.c.l.b16 %v35
  %v292 = vunpack.c.l.b16 %v36
  %v293 = vunpack.c.l.b16 %v37
  %v294 = vunpack.c.l.b16 %v38
  %v295 = vunpack.c.l.b16 %v39
  %v296 = vunpack.c.l.b16 %v40
  %v297 = vunpack.c.l.b16 %v41
  %v298 = vunpack.c.l.b16 %v42
  %v299 = vunpack.c.l.b16 %v43
  %v300 = vunpack.c.l.b16 %v44
  %v301 = vunpack.c.l.b16 %v45
  %v302 = vunpack.c.l.b16 %v46
  %v303 = vunpack.c.l.b16 %v47
  %v304 = vunpack.c.l.b16 %v48
  %v305 = vunpack.c.l.b16 %v49
  %v306 = vunpack.c.l.b16 %v50
  %v307 = vunpack.c.l.b16 %v51
  %v308 = vunpack.c.l.b16 %v52
  %v309 = vunpack.c.l.b16 %v53
  %v310 = vunpack.c.l.b16 %v54
  %v311 = vunpack.c.l.b16 %v55
  %v312 = vunpack.c.l.b16 %v56
  %v313 = vunpack.c.l.b16 %v57
  %v314 = vunpack.c.l.b16 %v58
  %v315 = vunpack.c.l.b16 %v59
  %v316 = vunpack.c.l.b16 %v60
  %v317 = vunpack.c.l.b16 %v61
  %v318 = vpack.c.b16 %v271, %v270
  %v319 = vpack.c.b16 %v273, %v272
  %v320 = vpack.c.b16 %v275, %v274
  %v321 = vpack.c.b16 %v277, %v276
  %v322 = vpack.c.b16 %v279, %v278
  %v323 = vpack.c.b16 %v281, %v280
  %v324 = vpack.c.b16 %v283, %v282
  %v325 = vpack.c.b16 %v285, %v284
  %v326 = vpack.c.b16 %v287, %v286
  %v327 = vpack.c.b16 %v289, %v288
  %v328 = vpack.c.b16 %v291, %v290
  %v329 = vpack.c.b16 %v293, %v292
  %v330 = vpack.c.b16 %v295, %v294
  %v331 = vpack.c.b16 %v297, %v296
  %v332 = vpack.c.b16 %v299, %v298
  %v333 = vpack.c.b16 %v301, %v300
  %v334 = vpack.c.b16 %v303, %v302
  %v335 = vpack.c.b16 %v305, %v304
  %v336 = vpack.c.b16 %v307, %v306
  %v337 = vpack.c.b16 %v309, %v308
  %v338 = vpack.c.b16 %v311, %v310
  %v339 = vpack.c.b16 %v313, %v312
  %v340 = vpack.c.b16 %v315, %v314
  %v341 = vpack.c.b16 %v317, %v316
  %366 = vmatpush.bf16.msra.mxu0 %v325
  %367 = vmatpush.bf16.msra.mxu0 %v324
  %368 = vmatpush.bf16.msra.mxu0 %v323
  %369 = vmatpush.bf16.msra.mxu0 %v322
  %370 = vmatpush.bf16.msra.mxu0 %v321
  %371 = vmatpush.bf16.msra.mxu0 %v320
  %372 = vmatpush.bf16.msra.mxu0 %v319
  %373 = vmatpush.bf16.msra.mxu0 %v318
  %374 = vmatmul.bf16.gmra.mxu0 %v174
  %v375 = vpop.f32.mrf.mxu0
  %v376 = vadd.f32 0.0, %v375
  %v377 = vpop.f32.mrf.mxu0
  %v378 = vadd.f32 0.0, %v377
  %379 = vmatmul.bf16.gmra.mxu0 %v177
  %v380 = vpop.f32.mrf.mxu0
  %v381 = vadd.f32 0.0, %v380
  %v382 = vpop.f32.mrf.mxu0
  %v383 = vadd.f32 0.0, %v382
  %384 = vmatmul.bf16.gmra.mxu0 %v180
  %v385 = vpop.f32.mrf.mxu0
  %v386 = vadd.f32 0.0, %v385
  %v387 = vpop.f32.mrf.mxu0
  %v388 = vadd.f32 0.0, %v387
  %389 = vmatmul.bf16.gmra.mxu0 %v183
  %v390 = vpop.f32.mrf.mxu0
  %v391 = vadd.f32 0.0, %v390
  %v392 = vpop.f32.mrf.mxu0
  %v393 = vadd.f32 0.0, %v392
  %394 = vmatmul.bf16.gmra.mxu0 %v186
  %v395 = vpop.f32.mrf.mxu0
  %v396 = vadd.f32 0.0, %v395
  %v397 = vpop.f32.mrf.mxu0
  %v398 = vadd.f32 0.0, %v397
  %399 = vmatmul.bf16.gmra.mxu0 %v189
  %v400 = vpop.f32.mrf.mxu0
  %v401 = vadd.f32 0.0, %v400
  %v402 = vpop.f32.mrf.mxu0
  %v403 = vadd.f32 0.0, %v402
  %404 = vmatmul.bf16.gmra.mxu0 %v192
  %v405 = vpop.f32.mrf.mxu0
  %v406 = vadd.f32 0.0, %v405
  %v407 = vpop.f32.mrf.mxu0
  %v408 = vadd.f32 0.0, %v407
  %409 = vmatmul.bf16.gmra.mxu0 %v195
  %v410 = vpop.f32.mrf.mxu0
  %v411 = vadd.f32 0.0, %v410
  %v412 = vpop.f32.mrf.mxu0
  %v413 = vadd.f32 0.0, %v412
  %414 = vdwg.mxu0
  %415 = vmatpush.bf16.msra.mxu0 %v333
  %416 = vmatpush.bf16.msra.mxu0 %v332
  %417 = vmatpush.bf16.msra.mxu0 %v331
  %418 = vmatpush.bf16.msra.mxu0 %v330
  %419 = vmatpush.bf16.msra.mxu0 %v329
  %420 = vmatpush.bf16.msra.mxu0 %v328
  %421 = vmatpush.bf16.msra.mxu0 %v327
  %422 = vmatpush.bf16.msra.mxu0 %v326
  %423 = vmatmul.bf16.gmra.mxu0 %v175
  %v424 = vpop.f32.mrf.mxu0
  %v425 = vadd.f32 %v376, %v424
  %v426 = vpop.f32.mrf.mxu0
  %v427 = vadd.f32 %v378, %v426
  %428 = vmatmul.bf16.gmra.mxu0 %v178
  %v429 = vpop.f32.mrf.mxu0
  %v430 = vadd.f32 %v381, %v429
  %v431 = vpop.f32.mrf.mxu0
  %v432 = vadd.f32 %v383, %v431
  %433 = vmatmul.bf16.gmra.mxu0 %v181
  %v434 = vpop.f32.mrf.mxu0
  %v435 = vadd.f32 %v386, %v434
  %v436 = vpop.f32.mrf.mxu0
  %v437 = vadd.f32 %v388, %v436
  %438 = vmatmul.bf16.gmra.mxu0 %v184
  %v439 = vpop.f32.mrf.mxu0
  %v440 = vadd.f32 %v391, %v439
  %v441 = vpop.f32.mrf.mxu0
  %v442 = vadd.f32 %v393, %v441
  %443 = vmatmul.bf16.gmra.mxu0 %v187
  %v444 = vpop.f32.mrf.mxu0
  %v445 = vadd.f32 %v396, %v444
  %v446 = vpop.f32.mrf.mxu0
  %v447 = vadd.f32 %v398, %v446
  %448 = vmatmul.bf16.gmra.mxu0 %v190
  %v449 = vpop.f32.mrf.mxu0
  %v450 = vadd.f32 %v401, %v449
  %v451 = vpop.f32.mrf.mxu0
  %v452 = vadd.f32 %v403, %v451
  %453 = vmatmul.bf16.gmra.mxu0 %v193
  %v454 = vpop.f32.mrf.mxu0
  %v455 = vadd.f32 %v406, %v454
  %v456 = vpop.f32.mrf.mxu0
  %v457 = vadd.f32 %v408, %v456
  %458 = vmatmul.bf16.gmra.mxu0 %v196
  %v459 = vpop.f32.mrf.mxu0
  %v460 = vadd.f32 %v411, %v459
  %v461 = vpop.f32.mrf.mxu0
  %v462 = vadd.f32 %v413, %v461
  %463 = vdwg.mxu0
  %464 = vmatpush.bf16.msra.mxu0 %v341
  %465 = vmatpush.bf16.msra.mxu0 %v340
  %466 = vmatpush.bf16.msra.mxu0 %v339
  %467 = vmatpush.bf16.msra.mxu0 %v338
  %468 = vmatpush.bf16.msra.mxu0 %v337
  %469 = vmatpush.bf16.msra.mxu0 %v336
  %470 = vmatpush.bf16.msra.mxu0 %v335
  %471 = vmatpush.bf16.msra.mxu0 %v334
  %472 = vmatmul.bf16.gmra.mxu0 %v176
  %v473 = vpop.f32.mrf.mxu0
  %v474 = vadd.f32 %v425, %v473
  %v475 = vpop.f32.mrf.mxu0
  %v476 = vadd.f32 %v427, %v475
  %477 = vmatmul.bf16.gmra.mxu0 %v179
  %v478 = vpop.f32.mrf.mxu0
  %v479 = vadd.f32 %v430, %v478
  %v480 = vpop.f32.mrf.mxu0
  %v481 = vadd.f32 %v432, %v480
  %482 = vmatmul.bf16.gmra.mxu0 %v182
  %v483 = vpop.f32.mrf.mxu0
  %v484 = vadd.f32 %v435, %v483
  %v485 = vpop.f32.mrf.mxu0
  %v486 = vadd.f32 %v437, %v485
  %487 = vmatmul.bf16.gmra.mxu0 %v185
  %v488 = vpop.f32.mrf.mxu0
  %v489 = vadd.f32 %v440, %v488
  %v490 = vpop.f32.mrf.mxu0
  %v491 = vadd.f32 %v442, %v490
  %492 = vmatmul.bf16.gmra.mxu0 %v188
  %v493 = vpop.f32.mrf.mxu0
  %v494 = vadd.f32 %v445, %v493
  %v495 = vpop.f32.mrf.mxu0
  %v496 = vadd.f32 %v447, %v495
  %497 = vmatmul.bf16.gmra.mxu0 %v191
  %v498 = vpop.f32.mrf.mxu0
  %v499 = vadd.f32 %v450, %v498
  %v500 = vpop.f32.mrf.mxu0
  %v501 = vadd.f32 %v452, %v500
  %502 = vmatmul.bf16.gmra.mxu0 %v194
  %v503 = vpop.f32.mrf.mxu0
  %v504 = vadd.f32 %v455, %v503
  %v505 = vpop.f32.mrf.mxu0
  %v506 = vadd.f32 %v457, %v505
  %507 = vmatmul.bf16.gmra.mxu0 %v197
  %v508 = vpop.f32.mrf.mxu0
  %v509 = vadd.f32 %v460, %v508
  %v510 = vpop.f32.mrf.mxu0
  %v511 = vadd.f32 %v462, %v510
  %512 = vdwg.mxu0
  %s513 = scalar_lea.vmem %s0, 192
  %v514 = vld [vmem:[%s513] sm:$0xff]
  %v515 = vld [vmem:[%s513 + $0x8] sm:$0xf]
  %v516 = vld [vmem:[%s513 + $0xc] sm:$0xff]
  %v517 = vld [vmem:[%s513 + $0x14] sm:$0xf]
  %v518 = vld [vmem:[%s513 + $0x18] sm:$0xff]
  %v519 = vld [vmem:[%s513 + $0x20] sm:$0xf]
  %v520 = vld [vmem:[%s513 + $0x24] sm:$0xff]
  %v521 = vld [vmem:[%s513 + $0x2c] sm:$0xf]
  %v522 = vld [vmem:[%s513 + $0x30] sm:$0xff]
  %v523 = vld [vmem:[%s513 + $0x38] sm:$0xf]
  %v524 = vld [vmem:[%s513 + $0x3c] sm:$0xff]
  %v525 = vld [vmem:[%s513 + $0x44] sm:$0xf]
  %v526 = vld [vmem:[%s513 + $0x48] sm:$0xff]
  %v527 = vld [vmem:[%s513 + $0x50] sm:$0xf]
  %v528 = vld [vmem:[%s513 + $0x54] sm:$0xff]
  %v529 = vld [vmem:[%s513 + $0x5c] sm:$0xf]
  %v530 = vld [vmem:[%s513 + $0x60] sm:$0xff]
  %v531 = vld [vmem:[%s513 + $0x68] sm:$0xf]
  %v532 = vld [vmem:[%s513 + $0x6c] sm:$0xff]
  %v533 = vld [vmem:[%s513 + $0x74] sm:$0xf]
  %v534 = vld [vmem:[%s513 + $0x78] sm:$0xff]
  %v535 = vld [vmem:[%s513 + $0x80] sm:$0xf]
  %v536 = vld [vmem:[%s513 + $0x84] sm:$0xff]
  %v537 = vld [vmem:[%s513 + $0x8c] sm:$0xf]
  %v538 = vld [vmem:[%s513 + $0x90] sm:$0xff]
  %v539 = vld [vmem:[%s513 + $0x98] sm:$0xf]
  %v540 = vld [vmem:[%s513 + $0x9c] sm:$0xff]
  %v541 = vld [vmem:[%s513 + $0xa4] sm:$0xf]
  %v542 = vld [vmem:[%s513 + $0xa8] sm:$0xff]
  %v543 = vld [vmem:[%s513 + $0xb0] sm:$0xf]
  %v544 = vld [vmem:[%s513 + $0xb4] sm:$0xff]
  %v545 = vld [vmem:[%s513 + $0xbc] sm:$0xf]
  %v578 = vunpack.c.l.b16 %v514
  %v579 = vunpack.c.h.b16 %v514
  %v580 = vunpack.c.l.b16 %v515
  %v581 = vunpack.c.l.b16 %v516
  %v582 = vunpack.c.h.b16 %v516
  %v583 = vunpack.c.l.b16 %v517
  %v584 = vunpack.c.l.b16 %v518
  %v585 = vunpack.c.h.b16 %v518
  %v586 = vunpack.c.l.b16 %v519
  %v587 = vunpack.c.l.b16 %v520
  %v588 = vunpack.c.h.b16 %v520
  %v589 = vunpack.c.l.b16 %v521
  %v590 = vunpack.c.l.b16 %v522
  %v591 = vunpack.c.h.b16 %v522
  %v592 = vunpack.c.l.b16 %v523
  %v593 = vunpack.c.l.b16 %v524
  %v594 = vunpack.c.h.b16 %v524
  %v595 = vunpack.c.l.b16 %v525
  %v596 = vunpack.c.l.b16 %v526
  %v597 = vunpack.c.h.b16 %v526
  %v598 = vunpack.c.l.b16 %v527
  %v599 = vunpack.c.l.b16 %v528
  %v600 = vunpack.c.h.b16 %v528
  %v601 = vunpack.c.l.b16 %v529
  %v602 = vunpack.c.l.b16 %v530
  %v603 = vunpack.c.h.b16 %v530
  %v604 = vunpack.c.l.b16 %v531
  %v605 = vunpack.c.l.b16 %v532
  %v606 = vunpack.c.h.b16 %v532
  %v607 = vunpack.c.l.b16 %v533
  %v608 = vunpack.c.l.b16 %v534
  %v609 = vunpack.c.h.b16 %v534
  %v610 = vunpack.c.l.b16 %v535
  %v611 = vunpack.c.l.b16 %v536
  %v612 = vunpack.c.h.b16 %v536
  %v613 = vunpack.c.l.b16 %v537
  %v614 = vunpack.c.l.b16 %v538
  %v615 = vunpack.c.h.b16 %v538
  %v616 = vunpack.c.l.b16 %v539
  %v617 = vunpack.c.l.b16 %v540
  %v618 = vunpack.c.h.b16 %v540
  %v619 = vunpack.c.l.b16 %v541
  %v620 = vunpack.c.l.b16 %v542
  %v621 = vunpack.c.h.b16 %v542
  %v622 = vunpack.c.l.b16 %v543
  %v623 = vunpack.c.l.b16 %v544
  %v624 = vunpack.c.h.b16 %v544
  %v625 = vunpack.c.l.b16 %v545
  %v626 = vpack.c.b16 %v581, %v578
  %v627 = vpack.c.b16 %v582, %v579
  %v628 = vpack.c.b16 %v583, %v580
  %v629 = vpack.c.b16 %v587, %v584
  %v630 = vpack.c.b16 %v588, %v585
  %v631 = vpack.c.b16 %v589, %v586
  %v632 = vpack.c.b16 %v593, %v590
  %v633 = vpack.c.b16 %v594, %v591
  %v634 = vpack.c.b16 %v595, %v592
  %v635 = vpack.c.b16 %v599, %v596
  %v636 = vpack.c.b16 %v600, %v597
  %v637 = vpack.c.b16 %v601, %v598
  %v638 = vpack.c.b16 %v605, %v602
  %v639 = vpack.c.b16 %v606, %v603
  %v640 = vpack.c.b16 %v607, %v604
  %v641 = vpack.c.b16 %v611, %v608
  %v642 = vpack.c.b16 %v612, %v609
  %v643 = vpack.c.b16 %v613, %v610
  %v644 = vpack.c.b16 %v617, %v614
  %v645 = vpack.c.b16 %v618, %v615
  %v646 = vpack.c.b16 %v619, %v616
  %v647 = vpack.c.b16 %v623, %v620
  %v648 = vpack.c.b16 %v624, %v621
  %v649 = vpack.c.b16 %v625, %v622
  %674 = vmatpush.bf16.msra.mxu0 %v325
  %675 = vmatpush.bf16.msra.mxu0 %v324
  %676 = vmatpush.bf16.msra.mxu0 %v323
  %677 = vmatpush.bf16.msra.mxu0 %v322
  %678 = vmatpush.bf16.msra.mxu0 %v321
  %679 = vmatpush.bf16.msra.mxu0 %v320
  %680 = vmatpush.bf16.msra.mxu0 %v319
  %681 = vmatpush.bf16.msra.mxu0 %v318
  %682 = vmatmul.bf16.gmra.mxu0 %v626
  %v683 = vpop.f32.mrf.mxu0
  %v684 = vadd.f32 0.0, %v683
  %v685 = vpop.f32.mrf.mxu0
  %v686 = vadd.f32 0.0, %v685
  %687 = vmatmul.bf16.gmra.mxu0 %v629
  %v688 = vpop.f32.mrf.mxu0
  %v689 = vadd.f32 0.0, %v688
  %v690 = vpop.f32.mrf.mxu0
  %v691 = vadd.f32 0.0, %v690
  %692 = vmatmul.bf16.gmra.mxu0 %v632
  %v693 = vpop.f32.mrf.mxu0
  %v694 = vadd.f32 0.0, %v693
  %v695 = vpop.f32.mrf.mxu0
  %v696 = vadd.f32 0.0, %v695
  %697 = vmatmul.bf16.gmra.mxu0 %v635
  %v698 = vpop.f32.mrf.mxu0
  %v699 = vadd.f32 0.0, %v698
  %v700 = vpop.f32.mrf.mxu0
  %v701 = vadd.f32 0.0, %v700
  %702 = vmatmul.bf16.gmra.mxu0 %v638
  %v703 = vpop.f32.mrf.mxu0
  %v704 = vadd.f32 0.0, %v703
  %v705 = vpop.f32.mrf.mxu0
  %v706 = vadd.f32 0.0, %v705
  %707 = vmatmul.bf16.gmra.mxu0 %v641
  %v708 = vpop.f32.mrf.mxu0
  %v709 = vadd.f32 0.0, %v708
  %v710 = vpop.f32.mrf.mxu0
  %v711 = vadd.f32 0.0, %v710
  %712 = vmatmul.bf16.gmra.mxu0 %v644
  %v713 = vpop.f32.mrf.mxu0
  %v714 = vadd.f32 0.0, %v713
  %v715 = vpop.f32.mrf.mxu0
  %v716 = vadd.f32 0.0, %v715
  %717 = vmatmul.bf16.gmra.mxu0 %v647
  %v718 = vpop.f32.mrf.mxu0
  %v719 = vadd.f32 0.0, %v718
  %v720 = vpop.f32.mrf.mxu0
  %v721 = vadd.f32 0.0, %v720
  %722 = vdwg.mxu0
  %723 = vmatpush.bf16.msra.mxu0 %v333
  %724 = vmatpush.bf16.msra.mxu0 %v332
  %725 = vmatpush.bf16.msra.mxu0 %v331
  %726 = vmatpush.bf16.msra.mxu0 %v330
  %727 = vmatpush.bf16.msra.mxu0 %v329
  %728 = vmatpush.bf16.msra.mxu0 %v328
  %729 = vmatpush.bf16.msra.mxu0 %v327
  %730 = vmatpush.bf16.msra.mxu0 %v326
  %731 = vmatmul.bf16.gmra.mxu0 %v627
  %v732 = vpop.f32.mrf.mxu0
  %v733 = vadd.f32 %v684, %v732
  %v734 = vpop.f32.mrf.mxu0
  %v735 = vadd.f32 %v686, %v734
  %736 = vmatmul.bf16.gmra.mxu0 %v630
  %v737 = vpop.f32.mrf.mxu0
  %v738 = vadd.f32 %v689, %v737
  %v739 = vpop.f32.mrf.mxu0
  %v740 = vadd.f32 %v691, %v739
  %741 = vmatmul.bf16.gmra.mxu0 %v633
  %v742 = vpop.f32.mrf.mxu0
  %v743 = vadd.f32 %v694, %v742
  %v744 = vpop.f32.mrf.mxu0
  %v745 = vadd.f32 %v696, %v744
  %746 = vmatmul.bf16.gmra.mxu0 %v636
  %v747 = vpop.f32.mrf.mxu0
  %v748 = vadd.f32 %v699, %v747
  %v749 = vpop.f32.mrf.mxu0
  %v750 = vadd.f32 %v701, %v749
  %751 = vmatmul.bf16.gmra.mxu0 %v639
  %v752 = vpop.f32.mrf.mxu0
  %v753 = vadd.f32 %v704, %v752
  %v754 = vpop.f32.mrf.mxu0
  %v755 = vadd.f32 %v706, %v754
  %756 = vmatmul.bf16.gmra.mxu0 %v642
  %v757 = vpop.f32.mrf.mxu0
  %v758 = vadd.f32 %v709, %v757
  %v759 = vpop.f32.mrf.mxu0
  %v760 = vadd.f32 %v711, %v759
  %761 = vmatmul.bf16.gmra.mxu0 %v645
  %v762 = vpop.f32.mrf.mxu0
  %v763 = vadd.f32 %v714, %v762
  %v764 = vpop.f32.mrf.mxu0
  %v765 = vadd.f32 %v716, %v764
  %766 = vmatmul.bf16.gmra.mxu0 %v648
  %v767 = vpop.f32.mrf.mxu0
  %v768 = vadd.f32 %v719, %v767
  %v769 = vpop.f32.mrf.mxu0
  %v770 = vadd.f32 %v721, %v769
  %771 = vdwg.mxu0
  %772 = vmatpush.bf16.msra.mxu0 %v341
  %773 = vmatpush.bf16.msra.mxu0 %v340
  %774 = vmatpush.bf16.msra.mxu0 %v339
  %775 = vmatpush.bf16.msra.mxu0 %v338
  %776 = vmatpush.bf16.msra.mxu0 %v337
  %777 = vmatpush.bf16.msra.mxu0 %v336
  %778 = vmatpush.bf16.msra.mxu0 %v335
  %779 = vmatpush.bf16.msra.mxu0 %v334
  %780 = vmatmul.bf16.gmra.mxu0 %v628
  %v781 = vpop.f32.mrf.mxu0
  %v782 = vadd.f32 %v733, %v781
  %v783 = vpop.f32.mrf.mxu0
  %v784 = vadd.f32 %v735, %v783
  %785 = vmatmul.bf16.gmra.mxu0 %v631
  %v786 = vpop.f32.mrf.mxu0
  %v787 = vadd.f32 %v738, %v786
  %v788 = vpop.f32.mrf.mxu0
  %v789 = vadd.f32 %v740, %v788
  %790 = vmatmul.bf16.gmra.mxu0 %v634
  %v791 = vpop.f32.mrf.mxu0
  %v792 = vadd.f32 %v743, %v791
  %v793 = vpop.f32.mrf.mxu0
  %v794 = vadd.f32 %v745, %v793
  %795 = vmatmul.bf16.gmra.mxu0 %v637
  %v796 = vpop.f32.mrf.mxu0
  %v797 = vadd.f32 %v748, %v796
  %v798 = vpop.f32.mrf.mxu0
  %v799 = vadd.f32 %v750, %v798
  %800 = vmatmul.bf16.gmra.mxu0 %v640
  %v801 = vpop.f32.mrf.mxu0
  %v802 = vadd.f32 %v753, %v801
  %v803 = vpop.f32.mrf.mxu0
  %v804 = vadd.f32 %v755, %v803
  %805 = vmatmul.bf16.gmra.mxu0 %v643
  %v806 = vpop.f32.mrf.mxu0
  %v807 = vadd.f32 %v758, %v806
  %v808 = vpop.f32.mrf.mxu0
  %v809 = vadd.f32 %v760, %v808
  %810 = vmatmul.bf16.gmra.mxu0 %v646
  %v811 = vpop.f32.mrf.mxu0
  %v812 = vadd.f32 %v763, %v811
  %v813 = vpop.f32.mrf.mxu0
  %v814 = vadd.f32 %v765, %v813
  %815 = vmatmul.bf16.gmra.mxu0 %v649
  %v816 = vpop.f32.mrf.mxu0
  %v817 = vadd.f32 %v768, %v816
  %v818 = vpop.f32.mrf.mxu0
  %v819 = vadd.f32 %v770, %v818
  %820 = vdwg.mxu0
  %v821 = vmax.f32 %v474, %v782
  %v822 = vmax.f32 %v476, %v784
  %v823 = vmax.f32 %v479, %v787
  %v824 = vmax.f32 %v481, %v789
  %v825 = vmax.f32 %v484, %v792
  %v826 = vmax.f32 %v486, %v794
  %v827 = vmax.f32 %v489, %v797
  %v828 = vmax.f32 %v491, %v799
  %v829 = vmax.f32 %v494, %v802
  %v830 = vmax.f32 %v496, %v804
  %v831 = vmax.f32 %v499, %v807
  %v832 = vmax.f32 %v501, %v809
  %v833 = vmax.f32 %v504, %v812
  %v834 = vmax.f32 %v506, %v814
  %v835 = vmax.f32 %v509, %v817
  %v836 = vmax.f32 %v511, %v819
  %s837 = scalar_lea.vmem %s0, 384
  %v838 = vld [vmem:[%s837] sm:$0xff]
  %v839 = vld [vmem:[%s837 + $0x8] sm:$0xf]
  %v840 = vld [vmem:[%s837 + $0xc] sm:$0xff]
  %v841 = vld [vmem:[%s837 + $0x14] sm:$0xf]
  %v842 = vld [vmem:[%s837 + $0x18] sm:$0xff]
  %v843 = vld [vmem:[%s837 + $0x20] sm:$0xf]
  %v844 = vld [vmem:[%s837 + $0x24] sm:$0xff]
  %v845 = vld [vmem:[%s837 + $0x2c] sm:$0xf]
  %v846 = vld [vmem:[%s837 + $0x30] sm:$0xff]
  %v847 = vld [vmem:[%s837 + $0x38] sm:$0xf]
  %v848 = vld [vmem:[%s837 + $0x3c] sm:$0xff]
  %v849 = vld [vmem:[%s837 + $0x44] sm:$0xf]
  %v850 = vld [vmem:[%s837 + $0x48] sm:$0xff]
  %v851 = vld [vmem:[%s837 + $0x50] sm:$0xf]
  %v852 = vld [vmem:[%s837 + $0x54] sm:$0xff]
  %v853 = vld [vmem:[%s837 + $0x5c] sm:$0xf]
  %v854 = vld [vmem:[%s837 + $0x60] sm:$0xff]
  %v855 = vld [vmem:[%s837 + $0x68] sm:$0xf]
  %v856 = vld [vmem:[%s837 + $0x6c] sm:$0xff]
  %v857 = vld [vmem:[%s837 + $0x74] sm:$0xf]
  %v858 = vld [vmem:[%s837 + $0x78] sm:$0xff]
  %v859 = vld [vmem:[%s837 + $0x80] sm:$0xf]
  %v860 = vld [vmem:[%s837 + $0x84] sm:$0xff]
  %v861 = vld [vmem:[%s837 + $0x8c] sm:$0xf]
  %v862 = vld [vmem:[%s837 + $0x90] sm:$0xff]
  %v863 = vld [vmem:[%s837 + $0x98] sm:$0xf]
  %v864 = vld [vmem:[%s837 + $0x9c] sm:$0xff]
  %v865 = vld [vmem:[%s837 + $0xa4] sm:$0xf]
  %v866 = vld [vmem:[%s837 + $0xa8] sm:$0xff]
  %v867 = vld [vmem:[%s837 + $0xb0] sm:$0xf]
  %v868 = vld [vmem:[%s837 + $0xb4] sm:$0xff]
  %v869 = vld [vmem:[%s837 + $0xbc] sm:$0xf]
  %v902 = vunpack.c.l.b16 %v838
  %v903 = vunpack.c.h.b16 %v838
  %v904 = vunpack.c.l.b16 %v839
  %v905 = vunpack.c.l.b16 %v840
  %v906 = vunpack.c.h.b16 %v840
  %v907 = vunpack.c.l.b16 %v841
  %v908 = vunpack.c.l.b16 %v842
  %v909 = vunpack.c.h.b16 %v842
  %v910 = vunpack.c.l.b16 %v843
  %v911 = vunpack.c.l.b16 %v844
  %v912 = vunpack.c.h.b16 %v844
  %v913 = vunpack.c.l.b16 %v845
  %v914 = vunpack.c.l.b16 %v846
  %v915 = vunpack.c.h.b16 %v846
  %v916 = vunpack.c.l.b16 %v847
  %v917 = vunpack.c.l.b16 %v848
  %v918 = vunpack.c.h.b16 %v848
  %v919 = vunpack.c.l.b16 %v849
  %v920 = vunpack.c.l.b16 %v850
  %v921 = vunpack.c.h.b16 %v850
  %v922 = vunpack.c.l.b16 %v851
  %v923 = vunpack.c.l.b16 %v852
  %v924 = vunpack.c.h.b16 %v852
  %v925 = vunpack.c.l.b16 %v853
  %v926 = vunpack.c.l.b16 %v854
  %v927 = vunpack.c.h.b16 %v854
  %v928 = vunpack.c.l.b16 %v855
  %v929 = vunpack.c.l.b16 %v856
  %v930 = vunpack.c.h.b16 %v856
  %v931 = vunpack.c.l.b16 %v857
  %v932 = vunpack.c.l.b16 %v858
  %v933 = vunpack.c.h.b16 %v858
  %v934 = vunpack.c.l.b16 %v859
  %v935 = vunpack.c.l.b16 %v860
  %v936 = vunpack.c.h.b16 %v860
  %v937 = vunpack.c.l.b16 %v861
  %v938 = vunpack.c.l.b16 %v862
  %v939 = vunpack.c.h.b16 %v862
  %v940 = vunpack.c.l.b16 %v863
  %v941 = vunpack.c.l.b16 %v864
  %v942 = vunpack.c.h.b16 %v864
  %v943 = vunpack.c.l.b16 %v865
  %v944 = vunpack.c.l.b16 %v866
  %v945 = vunpack.c.h.b16 %v866
  %v946 = vunpack.c.l.b16 %v867
  %v947 = vunpack.c.l.b16 %v868
  %v948 = vunpack.c.h.b16 %v868
  %v949 = vunpack.c.l.b16 %v869
  %v950 = vpack.c.b16 %v905, %v902
  %v951 = vpack.c.b16 %v906, %v903
  %v952 = vpack.c.b16 %v907, %v904
  %v953 = vpack.c.b16 %v911, %v908
  %v954 = vpack.c.b16 %v912, %v909
  %v955 = vpack.c.b16 %v913, %v910
  %v956 = vpack.c.b16 %v917, %v914
  %v957 = vpack.c.b16 %v918, %v915
  %v958 = vpack.c.b16 %v919, %v916
  %v959 = vpack.c.b16 %v923, %v920
  %v960 = vpack.c.b16 %v924, %v921
  %v961 = vpack.c.b16 %v925, %v922
  %v962 = vpack.c.b16 %v929, %v926
  %v963 = vpack.c.b16 %v930, %v927
  %v964 = vpack.c.b16 %v931, %v928
  %v965 = vpack.c.b16 %v935, %v932
  %v966 = vpack.c.b16 %v936, %v933
  %v967 = vpack.c.b16 %v937, %v934
  %v968 = vpack.c.b16 %v941, %v938
  %v969 = vpack.c.b16 %v942, %v939
  %v970 = vpack.c.b16 %v943, %v940
  %v971 = vpack.c.b16 %v947, %v944
  %v972 = vpack.c.b16 %v948, %v945
  %v973 = vpack.c.b16 %v949, %v946
  %998 = vmatpush.bf16.msra.mxu0 %v325
  %999 = vmatpush.bf16.msra.mxu0 %v324
  %1000 = vmatpush.bf16.msra.mxu0 %v323
  %1001 = vmatpush.bf16.msra.mxu0 %v322
  %1002 = vmatpush.bf16.msra.mxu0 %v321
  %1003 = vmatpush.bf16.msra.mxu0 %v320
  %1004 = vmatpush.bf16.msra.mxu0 %v319
  %1005 = vmatpush.bf16.msra.mxu0 %v318
  %1006 = vmatmul.bf16.gmra.mxu0 %v950
  %v1007 = vpop.f32.mrf.mxu0
  %v1008 = vadd.f32 0.0, %v1007
  %v1009 = vpop.f32.mrf.mxu0
  %v1010 = vadd.f32 0.0, %v1009
  %1011 = vmatmul.bf16.gmra.mxu0 %v953
  %v1012 = vpop.f32.mrf.mxu0
  %v1013 = vadd.f32 0.0, %v1012
  %v1014 = vpop.f32.mrf.mxu0
  %v1015 = vadd.f32 0.0, %v1014
  %1016 = vmatmul.bf16.gmra.mxu0 %v956
  %v1017 = vpop.f32.mrf.mxu0
  %v1018 = vadd.f32 0.0, %v1017
  %v1019 = vpop.f32.mrf.mxu0
  %v1020 = vadd.f32 0.0, %v1019
  %1021 = vmatmul.bf16.gmra.mxu0 %v959
  %v1022 = vpop.f32.mrf.mxu0
  %v1023 = vadd.f32 0.0, %v1022
  %v1024 = vpop.f32.mrf.mxu0
  %v1025 = vadd.f32 0.0, %v1024
  %1026 = vmatmul.bf16.gmra.mxu0 %v962
  %v1027 = vpop.f32.mrf.mxu0
  %v1028 = vadd.f32 0.0, %v1027
  %v1029 = vpop.f32.mrf.mxu0
  %v1030 = vadd.f32 0.0, %v1029
  %1031 = vmatmul.bf16.gmra.mxu0 %v965
  %v1032 = vpop.f32.mrf.mxu0
  %v1033 = vadd.f32 0.0, %v1032
  %v1034 = vpop.f32.mrf.mxu0
  %v1035 = vadd.f32 0.0, %v1034
  %1036 = vmatmul.bf16.gmra.mxu0 %v968
  %v1037 = vpop.f32.mrf.mxu0
  %v1038 = vadd.f32 0.0, %v1037
  %v1039 = vpop.f32.mrf.mxu0
  %v1040 = vadd.f32 0.0, %v1039
  %1041 = vmatmul.bf16.gmra.mxu0 %v971
  %v1042 = vpop.f32.mrf.mxu0
  %v1043 = vadd.f32 0.0, %v1042
  %v1044 = vpop.f32.mrf.mxu0
  %v1045 = vadd.f32 0.0, %v1044
  %1046 = vdwg.mxu0
  %1047 = vmatpush.bf16.msra.mxu0 %v333
  %1048 = vmatpush.bf16.msra.mxu0 %v332
  %1049 = vmatpush.bf16.msra.mxu0 %v331
  %1050 = vmatpush.bf16.msra.mxu0 %v330
  %1051 = vmatpush.bf16.msra.mxu0 %v329
  %1052 = vmatpush.bf16.msra.mxu0 %v328
  %1053 = vmatpush.bf16.msra.mxu0 %v327
  %1054 = vmatpush.bf16.msra.mxu0 %v326
  %1055 = vmatmul.bf16.gmra.mxu0 %v951
  %v1056 = vpop.f32.mrf.mxu0
  %v1057 = vadd.f32 %v1008, %v1056
  %v1058 = vpop.f32.mrf.mxu0
  %v1059 = vadd.f32 %v1010, %v1058
  %1060 = vmatmul.bf16.gmra.mxu0 %v954
  %v1061 = vpop.f32.mrf.mxu0
  %v1062 = vadd.f32 %v1013, %v1061
  %v1063 = vpop.f32.mrf.mxu0
  %v1064 = vadd.f32 %v1015, %v1063
  %1065 = vmatmul.bf16.gmra.mxu0 %v957
  %v1066 = vpop.f32.mrf.mxu0
  %v1067 = vadd.f32 %v1018, %v1066
  %v1068 = vpop.f32.mrf.mxu0
  %v1069 = vadd.f32 %v1020, %v1068
  %1070 = vmatmul.bf16.gmra.mxu0 %v960
  %v1071 = vpop.f32.mrf.mxu0
  %v1072 = vadd.f32 %v1023, %v1071
  %v1073 = vpop.f32.mrf.mxu0
  %v1074 = vadd.f32 %v1025, %v1073
  %1075 = vmatmul.bf16.gmra.mxu0 %v963
  %v1076 = vpop.f32.mrf.mxu0
  %v1077 = vadd.f32 %v1028, %v1076
  %v1078 = vpop.f32.mrf.mxu0
  %v1079 = vadd.f32 %v1030, %v1078
  %1080 = vmatmul.bf16.gmra.mxu0 %v966
  %v1081 = vpop.f32.mrf.mxu0
  %v1082 = vadd.f32 %v1033, %v1081
  %v1083 = vpop.f32.mrf.mxu0
  %v1084 = vadd.f32 %v1035, %v1083
  %1085 = vmatmul.bf16.gmra.mxu0 %v969
  %v1086 = vpop.f32.mrf.mxu0
  %v1087 = vadd.f32 %v1038, %v1086
  %v1088 = vpop.f32.mrf.mxu0
  %v1089 = vadd.f32 %v1040, %v1088
  %1090 = vmatmul.bf16.gmra.mxu0 %v972
  %v1091 = vpop.f32.mrf.mxu0
  %v1092 = vadd.f32 %v1043, %v1091
  %v1093 = vpop.f32.mrf.mxu0
  %v1094 = vadd.f32 %v1045, %v1093
  %1095 = vdwg.mxu0
  %1096 = vmatpush.bf16.msra.mxu0 %v341
  %1097 = vmatpush.bf16.msra.mxu0 %v340
  %1098 = vmatpush.bf16.msra.mxu0 %v339
  %1099 = vmatpush.bf16.msra.mxu0 %v338
  %1100 = vmatpush.bf16.msra.mxu0 %v337
  %1101 = vmatpush.bf16.msra.mxu0 %v336
  %1102 = vmatpush.bf16.msra.mxu0 %v335
  %1103 = vmatpush.bf16.msra.mxu0 %v334
  %1104 = vmatmul.bf16.gmra.mxu0 %v952
  %v1105 = vpop.f32.mrf.mxu0
  %v1106 = vadd.f32 %v1057, %v1105
  %v1107 = vpop.f32.mrf.mxu0
  %v1108 = vadd.f32 %v1059, %v1107
  %1109 = vmatmul.bf16.gmra.mxu0 %v955
  %v1110 = vpop.f32.mrf.mxu0
  %v1111 = vadd.f32 %v1062, %v1110
  %v1112 = vpop.f32.mrf.mxu0
  %v1113 = vadd.f32 %v1064, %v1112
  %1114 = vmatmul.bf16.gmra.mxu0 %v958
  %v1115 = vpop.f32.mrf.mxu0
  %v1116 = vadd.f32 %v1067, %v1115
  %v1117 = vpop.f32.mrf.mxu0
  %v1118 = vadd.f32 %v1069, %v1117
  %1119 = vmatmul.bf16.gmra.mxu0 %v961
  %v1120 = vpop.f32.mrf.mxu0
  %v1121 = vadd.f32 %v1072, %v1120
  %v1122 = vpop.f32.mrf.mxu0
  %v1123 = vadd.f32 %v1074, %v1122
  %1124 = vmatmul.bf16.gmra.mxu0 %v964
  %v1125 = vpop.f32.mrf.mxu0
  %v1126 = vadd.f32 %v1077, %v1125
  %v1127 = vpop.f32.mrf.mxu0
  %v1128 = vadd.f32 %v1079, %v1127
  %1129 = vmatmul.bf16.gmra.mxu0 %v967
  %v1130 = vpop.f32.mrf.mxu0
  %v1131 = vadd.f32 %v1082, %v1130
  %v1132 = vpop.f32.mrf.mxu0
  %v1133 = vadd.f32 %v1084, %v1132
  %1134 = vmatmul.bf16.gmra.mxu0 %v970
  %v1135 = vpop.f32.mrf.mxu0
  %v1136 = vadd.f32 %v1087, %v1135
  %v1137 = vpop.f32.mrf.mxu0
  %v1138 = vadd.f32 %v1089, %v1137
  %1139 = vmatmul.bf16.gmra.mxu0 %v973
  %v1140 = vpop.f32.mrf.mxu0
  %v1141 = vadd.f32 %v1092, %v1140
  %v1142 = vpop.f32.mrf.mxu0
  %v1143 = vadd.f32 %v1094, %v1142
  %1144 = vdwg.mxu0
  %v1145 = vmax.f32 %v821, %v1106
  %v1146 = vmax.f32 %v822, %v1108
  %v1147 = vmax.f32 %v823, %v1111
  %v1148 = vmax.f32 %v824, %v1113
  %v1149 = vmax.f32 %v825, %v1116
  %v1150 = vmax.f32 %v826, %v1118
  %v1151 = vmax.f32 %v827, %v1121
  %v1152 = vmax.f32 %v828, %v1123
  %v1153 = vmax.f32 %v829, %v1126
  %v1154 = vmax.f32 %v830, %v1128
  %v1155 = vmax.f32 %v831, %v1131
  %v1156 = vmax.f32 %v832, %v1133
  %v1157 = vmax.f32 %v833, %v1136
  %v1158 = vmax.f32 %v834, %v1138
  %v1159 = vmax.f32 %v835, %v1141
  %v1160 = vmax.f32 %v836, %v1143
  %s1161 = scalar_lea.vmem %s0, 576
  %v1162 = vld [vmem:[%s1161] sm:$0xff]
  %v1163 = vld [vmem:[%s1161 + $0x8] sm:$0xf]
  %v1164 = vld [vmem:[%s1161 + $0xc] sm:$0xff]
  %v1165 = vld [vmem:[%s1161 + $0x14] sm:$0xf]
  %v1166 = vld [vmem:[%s1161 + $0x18] sm:$0xff]
  %v1167 = vld [vmem:[%s1161 + $0x20] sm:$0xf]
  %v1168 = vld [vmem:[%s1161 + $0x24] sm:$0xff]
  %v1169 = vld [vmem:[%s1161 + $0x2c] sm:$0xf]
  %v1170 = vld [vmem:[%s1161 + $0x30] sm:$0xff]
  %v1171 = vld [vmem:[%s1161 + $0x38] sm:$0xf]
  %v1172 = vld [vmem:[%s1161 + $0x3c] sm:$0xff]
  %v1173 = vld [vmem:[%s1161 + $0x44] sm:$0xf]
  %v1174 = vld [vmem:[%s1161 + $0x48] sm:$0xff]
  %v1175 = vld [vmem:[%s1161 + $0x50] sm:$0xf]
  %v1176 = vld [vmem:[%s1161 + $0x54] sm:$0xff]
  %v1177 = vld [vmem:[%s1161 + $0x5c] sm:$0xf]
  %v1178 = vld [vmem:[%s1161 + $0x60] sm:$0xff]
  %v1179 = vld [vmem:[%s1161 + $0x68] sm:$0xf]
  %v1180 = vld [vmem:[%s1161 + $0x6c] sm:$0xff]
  %v1181 = vld [vmem:[%s1161 + $0x74] sm:$0xf]
  %v1182 = vld [vmem:[%s1161 + $0x78] sm:$0xff]
  %v1183 = vld [vmem:[%s1161 + $0x80] sm:$0xf]
  %v1184 = vld [vmem:[%s1161 + $0x84] sm:$0xff]
  %v1185 = vld [vmem:[%s1161 + $0x8c] sm:$0xf]
  %v1186 = vld [vmem:[%s1161 + $0x90] sm:$0xff]
  %v1187 = vld [vmem:[%s1161 + $0x98] sm:$0xf]
  %v1188 = vld [vmem:[%s1161 + $0x9c] sm:$0xff]
  %v1189 = vld [vmem:[%s1161 + $0xa4] sm:$0xf]
  %v1190 = vld [vmem:[%s1161 + $0xa8] sm:$0xff]
  %v1191 = vld [vmem:[%s1161 + $0xb0] sm:$0xf]
  %v1192 = vld [vmem:[%s1161 + $0xb4] sm:$0xff]
  %v1193 = vld [vmem:[%s1161 + $0xbc] sm:$0xf]
  %v1226 = vunpack.c.l.b16 %v1162
  %v1227 = vunpack.c.h.b16 %v1162
  %v1228 = vunpack.c.l.b16 %v1163
  %v1229 = vunpack.c.l.b16 %v1164
  %v1230 = vunpack.c.h.b16 %v1164
  %v1231 = vunpack.c.l.b16 %v1165
  %v1232 = vunpack.c.l.b16 %v1166
  %v1233 = vunpack.c.h.b16 %v1166
  %v1234 = vunpack.c.l.b16 %v1167
  %v1235 = vunpack.c.l.b16 %v1168
  %v1236 = vunpack.c.h.b16 %v1168
  %v1237 = vunpack.c.l.b16 %v1169
  %v1238 = vunpack.c.l.b16 %v1170
  %v1239 = vunpack.c.h.b16 %v1170
  %v1240 = vunpack.c.l.b16 %v1171
  %v1241 = vunpack.c.l.b16 %v1172
  %v1242 = vunpack.c.h.b16 %v1172
  %v1243 = vunpack.c.l.b16 %v1173
  %v1244 = vunpack.c.l.b16 %v1174
  %v1245 = vunpack.c.h.b16 %v1174
  %v1246 = vunpack.c.l.b16 %v1175
  %v1247 = vunpack.c.l.b16 %v1176
  %v1248 = vunpack.c.h.b16 %v1176
  %v1249 = vunpack.c.l.b16 %v1177
  %v1250 = vunpack.c.l.b16 %v1178
  %v1251 = vunpack.c.h.b16 %v1178
  %v1252 = vunpack.c.l.b16 %v1179
  %v1253 = vunpack.c.l.b16 %v1180
  %v1254 = vunpack.c.h.b16 %v1180
  %v1255 = vunpack.c.l.b16 %v1181
  %v1256 = vunpack.c.l.b16 %v1182
  %v1257 = vunpack.c.h.b16 %v1182
  %v1258 = vunpack.c.l.b16 %v1183
  %v1259 = vunpack.c.l.b16 %v1184
  %v1260 = vunpack.c.h.b16 %v1184
  %v1261 = vunpack.c.l.b16 %v1185
  %v1262 = vunpack.c.l.b16 %v1186
  %v1263 = vunpack.c.h.b16 %v1186
  %v1264 = vunpack.c.l.b16 %v1187
  %v1265 = vunpack.c.l.b16 %v1188
  %v1266 = vunpack.c.h.b16 %v1188
  %v1267 = vunpack.c.l.b16 %v1189
  %v1268 = vunpack.c.l.b16 %v1190
  %v1269 = vunpack.c.h.b16 %v1190
  %v1270 = vunpack.c.l.b16 %v1191
  %v1271 = vunpack.c.l.b16 %v1192
  %v1272 = vunpack.c.h.b16 %v1192
  %v1273 = vunpack.c.l.b16 %v1193
  %v1274 = vpack.c.b16 %v1229, %v1226
  %v1275 = vpack.c.b16 %v1230, %v1227
  %v1276 = vpack.c.b16 %v1231, %v1228
  %v1277 = vpack.c.b16 %v1235, %v1232
  %v1278 = vpack.c.b16 %v1236, %v1233
  %v1279 = vpack.c.b16 %v1237, %v1234
  %v1280 = vpack.c.b16 %v1241, %v1238
  %v1281 = vpack.c.b16 %v1242, %v1239
  %v1282 = vpack.c.b16 %v1243, %v1240
  %v1283 = vpack.c.b16 %v1247, %v1244
  %v1284 = vpack.c.b16 %v1248, %v1245
  %v1285 = vpack.c.b16 %v1249, %v1246
  %v1286 = vpack.c.b16 %v1253, %v1250
  %v1287 = vpack.c.b16 %v1254, %v1251
  %v1288 = vpack.c.b16 %v1255, %v1252
  %v1289 = vpack.c.b16 %v1259, %v1256
  %v1290 = vpack.c.b16 %v1260, %v1257
  %v1291 = vpack.c.b16 %v1261, %v1258
  %v1292 = vpack.c.b16 %v1265, %v1262
  %v1293 = vpack.c.b16 %v1266, %v1263
  %v1294 = vpack.c.b16 %v1267, %v1264
  %v1295 = vpack.c.b16 %v1271, %v1268
  %v1296 = vpack.c.b16 %v1272, %v1269
  %v1297 = vpack.c.b16 %v1273, %v1270
  %1322 = vmatpush.bf16.msra.mxu0 %v325
  %1323 = vmatpush.bf16.msra.mxu0 %v324
  %1324 = vmatpush.bf16.msra.mxu0 %v323
  %1325 = vmatpush.bf16.msra.mxu0 %v322
  %1326 = vmatpush.bf16.msra.mxu0 %v321
  %1327 = vmatpush.bf16.msra.mxu0 %v320
  %1328 = vmatpush.bf16.msra.mxu0 %v319
  %1329 = vmatpush.bf16.msra.mxu0 %v318
  %1330 = vmatmul.bf16.gmra.mxu0 %v1274
  %v1331 = vpop.f32.mrf.mxu0
  %v1332 = vadd.f32 0.0, %v1331
  %v1333 = vpop.f32.mrf.mxu0
  %v1334 = vadd.f32 0.0, %v1333
  %1335 = vmatmul.bf16.gmra.mxu0 %v1277
  %v1336 = vpop.f32.mrf.mxu0
  %v1337 = vadd.f32 0.0, %v1336
  %v1338 = vpop.f32.mrf.mxu0
  %v1339 = vadd.f32 0.0, %v1338
  %1340 = vmatmul.bf16.gmra.mxu0 %v1280
  %v1341 = vpop.f32.mrf.mxu0
  %v1342 = vadd.f32 0.0, %v1341
  %v1343 = vpop.f32.mrf.mxu0
  %v1344 = vadd.f32 0.0, %v1343
  %1345 = vmatmul.bf16.gmra.mxu0 %v1283
  %v1346 = vpop.f32.mrf.mxu0
  %v1347 = vadd.f32 0.0, %v1346
  %v1348 = vpop.f32.mrf.mxu0
  %v1349 = vadd.f32 0.0, %v1348
  %1350 = vmatmul.bf16.gmra.mxu0 %v1286
  %v1351 = vpop.f32.mrf.mxu0
  %v1352 = vadd.f32 0.0, %v1351
  %v1353 = vpop.f32.mrf.mxu0
  %v1354 = vadd.f32 0.0, %v1353
  %1355 = vmatmul.bf16.gmra.mxu0 %v1289
  %v1356 = vpop.f32.mrf.mxu0
  %v1357 = vadd.f32 0.0, %v1356
  %v1358 = vpop.f32.mrf.mxu0
  %v1359 = vadd.f32 0.0, %v1358
  %1360 = vmatmul.bf16.gmra.mxu0 %v1292
  %v1361 = vpop.f32.mrf.mxu0
  %v1362 = vadd.f32 0.0, %v1361
  %v1363 = vpop.f32.mrf.mxu0
  %v1364 = vadd.f32 0.0, %v1363
  %1365 = vmatmul.bf16.gmra.mxu0 %v1295
  %v1366 = vpop.f32.mrf.mxu0
  %v1367 = vadd.f32 0.0, %v1366
  %v1368 = vpop.f32.mrf.mxu0
  %v1369 = vadd.f32 0.0, %v1368
  %1370 = vdwg.mxu0
  %1371 = vmatpush.bf16.msra.mxu0 %v333
  %1372 = vmatpush.bf16.msra.mxu0 %v332
  %1373 = vmatpush.bf16.msra.mxu0 %v331
  %1374 = vmatpush.bf16.msra.mxu0 %v330
  %1375 = vmatpush.bf16.msra.mxu0 %v329
  %1376 = vmatpush.bf16.msra.mxu0 %v328
  %1377 = vmatpush.bf16.msra.mxu0 %v327
  %1378 = vmatpush.bf16.msra.mxu0 %v326
  %1379 = vmatmul.bf16.gmra.mxu0 %v1275
  %v1380 = vpop.f32.mrf.mxu0
  %v1381 = vadd.f32 %v1332, %v1380
  %v1382 = vpop.f32.mrf.mxu0
  %v1383 = vadd.f32 %v1334, %v1382
  %1384 = vmatmul.bf16.gmra.mxu0 %v1278
  %v1385 = vpop.f32.mrf.mxu0
  %v1386 = vadd.f32 %v1337, %v1385
  %v1387 = vpop.f32.mrf.mxu0
  %v1388 = vadd.f32 %v1339, %v1387
  %1389 = vmatmul.bf16.gmra.mxu0 %v1281
  %v1390 = vpop.f32.mrf.mxu0
  %v1391 = vadd.f32 %v1342, %v1390
  %v1392 = vpop.f32.mrf.mxu0
  %v1393 = vadd.f32 %v1344, %v1392
  %1394 = vmatmul.bf16.gmra.mxu0 %v1284
  %v1395 = vpop.f32.mrf.mxu0
  %v1396 = vadd.f32 %v1347, %v1395
  %v1397 = vpop.f32.mrf.mxu0
  %v1398 = vadd.f32 %v1349, %v1397
  %1399 = vmatmul.bf16.gmra.mxu0 %v1287
  %v1400 = vpop.f32.mrf.mxu0
  %v1401 = vadd.f32 %v1352, %v1400
  %v1402 = vpop.f32.mrf.mxu0
  %v1403 = vadd.f32 %v1354, %v1402
  %1404 = vmatmul.bf16.gmra.mxu0 %v1290
  %v1405 = vpop.f32.mrf.mxu0
  %v1406 = vadd.f32 %v1357, %v1405
  %v1407 = vpop.f32.mrf.mxu0
  %v1408 = vadd.f32 %v1359, %v1407
  %1409 = vmatmul.bf16.gmra.mxu0 %v1293
  %v1410 = vpop.f32.mrf.mxu0
  %v1411 = vadd.f32 %v1362, %v1410
  %v1412 = vpop.f32.mrf.mxu0
  %v1413 = vadd.f32 %v1364, %v1412
  %1414 = vmatmul.bf16.gmra.mxu0 %v1296
  %v1415 = vpop.f32.mrf.mxu0
  %v1416 = vadd.f32 %v1367, %v1415
  %v1417 = vpop.f32.mrf.mxu0
  %v1418 = vadd.f32 %v1369, %v1417
  %1419 = vdwg.mxu0
  %1420 = vmatpush.bf16.msra.mxu0 %v341
  %1421 = vmatpush.bf16.msra.mxu0 %v340
  %1422 = vmatpush.bf16.msra.mxu0 %v339
  %1423 = vmatpush.bf16.msra.mxu0 %v338
  %1424 = vmatpush.bf16.msra.mxu0 %v337
  %1425 = vmatpush.bf16.msra.mxu0 %v336
  %1426 = vmatpush.bf16.msra.mxu0 %v335
  %1427 = vmatpush.bf16.msra.mxu0 %v334
  %1428 = vmatmul.bf16.gmra.mxu0 %v1276
  %v1429 = vpop.f32.mrf.mxu0
  %v1430 = vadd.f32 %v1381, %v1429
  %v1431 = vpop.f32.mrf.mxu0
  %v1432 = vadd.f32 %v1383, %v1431
  %1433 = vmatmul.bf16.gmra.mxu0 %v1279
  %v1434 = vpop.f32.mrf.mxu0
  %v1435 = vadd.f32 %v1386, %v1434
  %v1436 = vpop.f32.mrf.mxu0
  %v1437 = vadd.f32 %v1388, %v1436
  %1438 = vmatmul.bf16.gmra.mxu0 %v1282
  %v1439 = vpop.f32.mrf.mxu0
  %v1440 = vadd.f32 %v1391, %v1439
  %v1441 = vpop.f32.mrf.mxu0
  %v1442 = vadd.f32 %v1393, %v1441
  %1443 = vmatmul.bf16.gmra.mxu0 %v1285
  %v1444 = vpop.f32.mrf.mxu0
  %v1445 = vadd.f32 %v1396, %v1444
  %v1446 = vpop.f32.mrf.mxu0
  %v1447 = vadd.f32 %v1398, %v1446
  %1448 = vmatmul.bf16.gmra.mxu0 %v1288
  %v1449 = vpop.f32.mrf.mxu0
  %v1450 = vadd.f32 %v1401, %v1449
  %v1451 = vpop.f32.mrf.mxu0
  %v1452 = vadd.f32 %v1403, %v1451
  %1453 = vmatmul.bf16.gmra.mxu0 %v1291
  %v1454 = vpop.f32.mrf.mxu0
  %v1455 = vadd.f32 %v1406, %v1454
  %v1456 = vpop.f32.mrf.mxu0
  %v1457 = vadd.f32 %v1408, %v1456
  %1458 = vmatmul.bf16.gmra.mxu0 %v1294
  %v1459 = vpop.f32.mrf.mxu0
  %v1460 = vadd.f32 %v1411, %v1459
  %v1461 = vpop.f32.mrf.mxu0
  %v1462 = vadd.f32 %v1413, %v1461
  %1463 = vmatmul.bf16.gmra.mxu0 %v1297
  %v1464 = vpop.f32.mrf.mxu0
  %v1465 = vadd.f32 %v1416, %v1464
  %v1466 = vpop.f32.mrf.mxu0
  %v1467 = vadd.f32 %v1418, %v1466
  %1468 = vdwg.mxu0
  %v1469 = vmax.f32 %v1145, %v1430
  %v1470 = vmax.f32 %v1146, %v1432
  %v1471 = vmax.f32 %v1147, %v1435
  %v1472 = vmax.f32 %v1148, %v1437
  %v1473 = vmax.f32 %v1149, %v1440
  %v1474 = vmax.f32 %v1150, %v1442
  %v1475 = vmax.f32 %v1151, %v1445
  %v1476 = vmax.f32 %v1152, %v1447
  %v1477 = vmax.f32 %v1153, %v1450
  %v1478 = vmax.f32 %v1154, %v1452
  %v1479 = vmax.f32 %v1155, %v1455
  %v1480 = vmax.f32 %v1156, %v1457
  %v1481 = vmax.f32 %v1157, %v1460
  %v1482 = vmax.f32 %v1158, %v1462
  %v1483 = vmax.f32 %v1159, %v1465
  %v1484 = vmax.f32 %v1160, %v1467
  %v1485 = vld [vmem:[%s2] sm:$0x1]
  %v1487 = vperm.slane %v1485, 0
  %v1489 = vadd.f32 %v1469, %v1487
  %v1490 = vadd.f32 %v1470, %v1487
  %v1491 = vadd.f32 %v1471, %v1487
  %v1492 = vadd.f32 %v1472, %v1487
  %v1493 = vadd.f32 %v1473, %v1487
  %v1494 = vadd.f32 %v1474, %v1487
  %v1495 = vadd.f32 %v1475, %v1487
  %v1496 = vadd.f32 %v1476, %v1487
  %v1497 = vadd.f32 %v1477, %v1487
  %v1498 = vadd.f32 %v1478, %v1487
  %v1499 = vadd.f32 %v1479, %v1487
  %v1500 = vadd.f32 %v1480, %v1487
  %v1501 = vadd.f32 %v1481, %v1487
  %v1502 = vadd.f32 %v1482, %v1487
  %v1503 = vadd.f32 %v1483, %v1487
  %v1504 = vadd.f32 %v1484, %v1487
  %v1505 = vmax.f32 %v1489, 0.0
  %v1506 = vmax.f32 %v1490, 0.0
  %v1507 = vmax.f32 %v1491, 0.0
  %v1508 = vmax.f32 %v1492, 0.0
  %v1509 = vmax.f32 %v1493, 0.0
  %v1510 = vmax.f32 %v1494, 0.0
  %v1511 = vmax.f32 %v1495, 0.0
  %v1512 = vmax.f32 %v1496, 0.0
  %v1513 = vmax.f32 %v1497, 0.0
  %v1514 = vmax.f32 %v1498, 0.0
  %v1515 = vmax.f32 %v1499, 0.0
  %v1516 = vmax.f32 %v1500, 0.0
  %v1517 = vmax.f32 %v1501, 0.0
  %v1518 = vmax.f32 %v1502, 0.0
  %v1519 = vmax.f32 %v1503, 0.0
  %v1520 = vmax.f32 %v1504, 0.0
  %v1521 = vpack.c.bf16 %v1505, %v1505
  %v1522 = vpack.c.bf16 %v1506, %v1506
  %v1523 = vpack.c.bf16 %v1507, %v1507
  %v1524 = vpack.c.bf16 %v1508, %v1508
  %v1525 = vpack.c.bf16 %v1509, %v1509
  %v1526 = vpack.c.bf16 %v1510, %v1510
  %v1527 = vpack.c.bf16 %v1511, %v1511
  %v1528 = vpack.c.bf16 %v1512, %v1512
  %v1529 = vpack.c.bf16 %v1513, %v1513
  %v1530 = vpack.c.bf16 %v1514, %v1514
  %v1531 = vpack.c.bf16 %v1515, %v1515
  %v1532 = vpack.c.bf16 %v1516, %v1516
  %v1533 = vpack.c.bf16 %v1517, %v1517
  %v1534 = vpack.c.bf16 %v1518, %v1518
  %v1535 = vpack.c.bf16 %v1519, %v1519
  %v1536 = vpack.c.bf16 %v1520, %v1520
  %1537 = vst [vmem:[%s3] sm:$0xf] %v1521
  %1538 = vst [vmem:[%s3 + $0x4] sm:$0xf] %v1522
  %1539 = vst [vmem:[%s3 + $0x8] sm:$0xf] %v1523
  %1540 = vst [vmem:[%s3 + $0xc] sm:$0xf] %v1524
  %1541 = vst [vmem:[%s3 + $0x10] sm:$0xf] %v1525
  %1542 = vst [vmem:[%s3 + $0x14] sm:$0xf] %v1526
  %1543 = vst [vmem:[%s3 + $0x18] sm:$0xf] %v1527
  %1544 = vst [vmem:[%s3 + $0x1c] sm:$0xf] %v1528
  %1545 = vst [vmem:[%s3 + $0x20] sm:$0xf] %v1529
  %1546 = vst [vmem:[%s3 + $0x24] sm:$0xf] %v1530
  %1547 = vst [vmem:[%s3 + $0x28] sm:$0xf] %v1531
  %1548 = vst [vmem:[%s3 + $0x2c] sm:$0xf] %v1532
  %1549 = vst [vmem:[%s3 + $0x30] sm:$0xf] %v1533
  %1550 = vst [vmem:[%s3 + $0x34] sm:$0xf] %v1534
  %1551 = vst [vmem:[%s3 + $0x38] sm:$0xf] %v1535
  %1552 = vst [vmem:[%s3 + $0x3c] sm:$0xf] %v1536
  // Predicated region
  $region14: #{lane_detection_cnn_forward.7} parent=0 // pred_check
    _
  $region15: #{lane_detection_cnn_forward.7} parent=0 // pred_check_branch
    %1554 = sbr.rel (0) target = $region17
  $region16: #{lane_detection_cnn_forward.7} parent=0 // pred_region
    _
  $region17: #{lane_detection_cnn_forward.7} parent=0 // pred_fallthru
    _
  // Predicated region
  $region18: #{lane_detection_cnn_forward.7} parent=0 // pred_check
    _
  $region19: #{lane_detection_cnn_forward.7} parent=0 // pred_check_branch
    %1556 = sbr.rel (0) target = $region21
  $region20: #{lane_detection_cnn_forward.7} parent=0 // pred_region
    _
  $region21: #{lane_detection_cnn_forward.7} parent=0 // pred_fallthru
    _

// kernel: lane_detection_cnn_forward.8
$region0: #{lane_detection_cnn_forward.8}
  #allocation0 [shape = 'u32[]', space=smem, size = 0x4, offset = 0x4, fixed_abs, tag = 'smem constant byte address 0x4 - core index']
  #allocation1 [shape = 'u32[72,128]{1,0:T(1,128)}', space=vmem, size = 0x9000, scoped, tag = 'internal scratch']
  %s0 = inlined_call_operand.vmem [shape: bf16[4,32,640], index: 0, kind: input, shape index: {}]
  %s1 = inlined_call_operand.vmem [shape: bf16[640,128], index: 1, kind: input, shape index: {}]
  %s2 = inlined_call_operand.vmem [shape: f32[1,128], index: 2, kind: input, shape index: {}]
  %s3 = inlined_call_operand.vmem [shape: bf16[32,128], index: 3, kind: output, shape index: {}]
  %s4 = sld [smem:[#allocation0]]
  $region22: #{lane_detection_cnn_forward.8} parent=0
    _
  %s6 = ssub.s32 1, %s4
  %s7 = scalar_select 0, %s6, %s4
  // Predicated region
  $region2: #{lane_detection_cnn_forward.8} parent=0 // pred_check
    _
  $region3: #{lane_detection_cnn_forward.8} parent=0 // pred_check_branch
    %9 = sbr.rel (0) target = $region5
  $region4: #{lane_detection_cnn_forward.8} parent=0 // pred_region
    _
  $region5: #{lane_detection_cnn_forward.8} parent=0 // pred_fallthru
    _
  // Predicated region
  $region6: #{lane_detection_cnn_forward.8} parent=0 // pred_check
    _
  $region7: #{lane_detection_cnn_forward.8} parent=0 // pred_check_branch
    %11 = sbr.rel (0) target = $region9
  $region8: #{lane_detection_cnn_forward.8} parent=0 // pred_region
    _
  $region9: #{lane_detection_cnn_forward.8} parent=0 // pred_fallthru
    _
  // Predicated region
  $region10: #{lane_detection_cnn_forward.8} parent=0 // pred_check
    _
  $region11: #{lane_detection_cnn_forward.8} parent=0 // pred_check_branch
    %13 = sbr.rel (0) target = $region13
  $region12: #{lane_detection_cnn_forward.8} parent=0 // pred_region
    _
  $region13: #{lane_detection_cnn_forward.8} parent=0 // pred_fallthru
    _
  %v14 = vld [vmem:[%s1] sm:$0xf]
  %v15 = vld [vmem:[%s1 + $0x4] sm:$0xf]
  %v16 = vld [vmem:[%s1 + $0x8] sm:$0xf]
  %v17 = vld [vmem:[%s1 + $0xc] sm:$0xf]
  %v18 = vld [vmem:[%s1 + $0x10] sm:$0xf]
  %v19 = vld [vmem:[%s1 + $0x14] sm:$0xf]
  %v20 = vld [vmem:[%s1 + $0x18] sm:$0xf]
  %v21 = vld [vmem:[%s1 + $0x1c] sm:$0xf]
  %v22 = vld [vmem:[%s1 + $0x20] sm:$0xf]
  %v23 = vld [vmem:[%s1 + $0x24] sm:$0xf]
  %v24 = vld [vmem:[%s1 + $0x28] sm:$0xf]
  %v25 = vld [vmem:[%s1 + $0x2c] sm:$0xf]
  %v26 = vld [vmem:[%s1 + $0x30] sm:$0xf]
  %v27 = vld [vmem:[%s1 + $0x34] sm:$0xf]
  %v28 = vld [vmem:[%s1 + $0x38] sm:$0xf]
  %v29 = vld [vmem:[%s1 + $0x3c] sm:$0xf]
  %v30 = vld [vmem:[%s1 + $0x40] sm:$0xf]
  %v31 = vld [vmem:[%s1 + $0x44] sm:$0xf]
  %v32 = vld [vmem:[%s1 + $0x48] sm:$0xf]
  %v33 = vld [vmem:[%s1 + $0x4c] sm:$0xf]
  %v34 = vld [vmem:[%s1 + $0x50] sm:$0xf]
  %v35 = vld [vmem:[%s1 + $0x54] sm:$0xf]
  %v36 = vld [vmem:[%s1 + $0x58] sm:$0xf]
  %v37 = vld [vmem:[%s1 + $0x5c] sm:$0xf]
  %v38 = vld [vmem:[%s1 + $0x60] sm:$0xf]
  %v39 = vld [vmem:[%s1 + $0x64] sm:$0xf]
  %v40 = vld [vmem:[%s1 + $0x68] sm:$0xf]
  %v41 = vld [vmem:[%s1 + $0x6c] sm:$0xf]
  %v42 = vld [vmem:[%s1 + $0x70] sm:$0xf]
  %v43 = vld [vmem:[%s1 + $0x74] sm:$0xf]
  %v44 = vld [vmem:[%s1 + $0x78] sm:$0xf]
  %v45 = vld [vmem:[%s1 + $0x7c] sm:$0xf]
  %v46 = vld [vmem:[%s1 + $0x80] sm:$0xf]
  %v47 = vld [vmem:[%s1 + $0x84] sm:$0xf]
  %v48 = vld [vmem:[%s1 + $0x88] sm:$0xf]
  %v49 = vld [vmem:[%s1 + $0x8c] sm:$0xf]
  %v50 = vld [vmem:[%s1 + $0x90] sm:$0xf]
  %v51 = vld [vmem:[%s1 + $0x94] sm:$0xf]
  %v52 = vld [vmem:[%s1 + $0x98] sm:$0xf]
  %v53 = vld [vmem:[%s1 + $0x9c] sm:$0xf]
  %v54 = vld [vmem:[%s1 + $0xa0] sm:$0xf]
  %v55 = vld [vmem:[%s1 + $0xa4] sm:$0xf]
  %v56 = vld [vmem:[%s1 + $0xa8] sm:$0xf]
  %v57 = vld [vmem:[%s1 + $0xac] sm:$0xf]
  %v58 = vld [vmem:[%s1 + $0xb0] sm:$0xf]
  %v59 = vld [vmem:[%s1 + $0xb4] sm:$0xf]
  %v60 = vld [vmem:[%s1 + $0xb8] sm:$0xf]
  %v61 = vld [vmem:[%s1 + $0xbc] sm:$0xf]
  %v62 = vld [vmem:[%s1 + $0xc0] sm:$0xf]
  %v63 = vld [vmem:[%s1 + $0xc4] sm:$0xf]
  %v64 = vld [vmem:[%s1 + $0xc8] sm:$0xf]
  %v65 = vld [vmem:[%s1 + $0xcc] sm:$0xf]
  %v66 = vld [vmem:[%s1 + $0xd0] sm:$0xf]
  %v67 = vld [vmem:[%s1 + $0xd4] sm:$0xf]
  %v68 = vld [vmem:[%s1 + $0xd8] sm:$0xf]
  %v69 = vld [vmem:[%s1 + $0xdc] sm:$0xf]
  %v70 = vld [vmem:[%s1 + $0xe0] sm:$0xf]
  %v71 = vld [vmem:[%s1 + $0xe4] sm:$0xf]
  %v72 = vld [vmem:[%s1 + $0xe8] sm:$0xf]
  %v73 = vld [vmem:[%s1 + $0xec] sm:$0xf]
  %v74 = vld [vmem:[%s1 + $0xf0] sm:$0xf]
  %v75 = vld [vmem:[%s1 + $0xf4] sm:$0xf]
  %v76 = vld [vmem:[%s1 + $0xf8] sm:$0xf]
  %v77 = vld [vmem:[%s1 + $0xfc] sm:$0xf]
  %v78 = vld [vmem:[%s1 + $0x100] sm:$0xf]
  %v79 = vld [vmem:[%s1 + $0x104] sm:$0xf]
  %v80 = vld [vmem:[%s1 + $0x108] sm:$0xf]
  %v81 = vld [vmem:[%s1 + $0x10c] sm:$0xf]
  %v82 = vld [vmem:[%s1 + $0x110] sm:$0xf]
  %v83 = vld [vmem:[%s1 + $0x114] sm:$0xf]
  %v84 = vld [vmem:[%s1 + $0x118] sm:$0xf]
  %v85 = vld [vmem:[%s1 + $0x11c] sm:$0xf]
  %v86 = vld [vmem:[%s1 + $0x120] sm:$0xf]
  %v87 = vld [vmem:[%s1 + $0x124] sm:$0xf]
  %v88 = vld [vmem:[%s1 + $0x128] sm:$0xf]
  %v89 = vld [vmem:[%s1 + $0x12c] sm:$0xf]
  %v90 = vld [vmem:[%s1 + $0x130] sm:$0xf]
  %v91 = vld [vmem:[%s1 + $0x134] sm:$0xf]
  %v92 = vld [vmem:[%s1 + $0x138] sm:$0xf]
  %v93 = vld [vmem:[%s1 + $0x13c] sm:$0xf]
  %v94 = vld [vmem:[%s0] sm:$0xff]
  %v95 = vld [vmem:[%s0 + $0x8] sm:$0xff]
  %v96 = vld [vmem:[%s0 + $0x10] sm:$0xf]
  %v97 = vld [vmem:[%s0 + $0x14] sm:$0xff]
  %v98 = vld [vmem:[%s0 + $0x1c] sm:$0xff]
  %v99 = vld [vmem:[%s0 + $0x24] sm:$0xf]
  %v100 = vld [vmem:[%s0 + $0x28] sm:$0xff]
  %v101 = vld [vmem:[%s0 + $0x30] sm:$0xff]
  %v102 = vld [vmem:[%s0 + $0x38] sm:$0xf]
  %v103 = vld [vmem:[%s0 + $0x3c] sm:$0xff]
  %v104 = vld [vmem:[%s0 + $0x44] sm:$0xff]
  %v105 = vld [vmem:[%s0 + $0x4c] sm:$0xf]
  %v118 = vunpack.c.l.b16 %v94
  %v119 = vunpack.c.h.b16 %v94
  %v120 = vunpack.c.l.b16 %v95
  %v121 = vunpack.c.h.b16 %v95
  %v122 = vunpack.c.l.b16 %v96
  %v123 = vunpack.c.l.b16 %v97
  %v124 = vunpack.c.h.b16 %v97
  %v125 = vunpack.c.l.b16 %v98
  %v126 = vunpack.c.h.b16 %v98
  %v127 = vunpack.c.l.b16 %v99
  %v128 = vunpack.c.l.b16 %v100
  %v129 = vunpack.c.h.b16 %v100
  %v130 = vunpack.c.l.b16 %v101
  %v131 = vunpack.c.h.b16 %v101
  %v132 = vunpack.c.l.b16 %v102
  %v133 = vunpack.c.l.b16 %v103
  %v134 = vunpack.c.h.b16 %v103
  %v135 = vunpack.c.l.b16 %v104
  %v136 = vunpack.c.h.b16 %v104
  %v137 = vunpack.c.l.b16 %v105
  %v138 = vpack.c.b16 %v123, %v118
  %v139 = vpack.c.b16 %v124, %v119
  %v140 = vpack.c.b16 %v125, %v120
  %v141 = vpack.c.b16 %v126, %v121
  %v142 = vpack.c.b16 %v127, %v122
  %v143 = vpack.c.b16 %v133, %v128
  %v144 = vpack.c.b16 %v134, %v129
  %v145 = vpack.c.b16 %v135, %v130
  %v146 = vpack.c.b16 %v136, %v131
  %v147 = vpack.c.b16 %v137, %v132
  %v238 = vunpack.c.l.b16 %v14
  %v239 = vunpack.c.l.b16 %v15
  %v240 = vunpack.c.l.b16 %v16
  %v241 = vunpack.c.l.b16 %v17
  %v242 = vunpack.c.l.b16 %v18
  %v243 = vunpack.c.l.b16 %v19
  %v244 = vunpack.c.l.b16 %v20
  %v245 = vunpack.c.l.b16 %v21
  %v246 = vunpack.c.l.b16 %v22
  %v247 = vunpack.c.l.b16 %v23
  %v248 = vunpack.c.l.b16 %v24
  %v249 = vunpack.c.l.b16 %v25
  %v250 = vunpack.c.l.b16 %v26
  %v251 = vunpack.c.l.b16 %v27
  %v252 = vunpack.c.l.b16 %v28
  %v253 = vunpack.c.l.b16 %v29
  %v254 = vunpack.c.l.b16 %v30
  %v255 = vunpack.c.l.b16 %v31
  %v256 = vunpack.c.l.b16 %v32
  %v257 = vunpack.c.l.b16 %v33
  %v258 = vunpack.c.l.b16 %v34
  %v259 = vunpack.c.l.b16 %v35
  %v260 = vunpack.c.l.b16 %v36
  %v261 = vunpack.c.l.b16 %v37
  %v262 = vunpack.c.l.b16 %v38
  %v263 = vunpack.c.l.b16 %v39
  %v264 = vunpack.c.l.b16 %v40
  %v265 = vunpack.c.l.b16 %v41
  %v266 = vunpack.c.l.b16 %v42
  %v267 = vunpack.c.l.b16 %v43
  %v268 = vunpack.c.l.b16 %v44
  %v269 = vunpack.c.l.b16 %v45
  %v270 = vunpack.c.l.b16 %v46
  %v271 = vunpack.c.l.b16 %v47
  %v272 = vunpack.c.l.b16 %v48
  %v273 = vunpack.c.l.b16 %v49
  %v274 = vunpack.c.l.b16 %v50
  %v275 = vunpack.c.l.b16 %v51
  %v276 = vunpack.c.l.b16 %v52
  %v277 = vunpack.c.l.b16 %v53
  %v278 = vunpack.c.l.b16 %v54
  %v279 = vunpack.c.l.b16 %v55
  %v280 = vunpack.c.l.b16 %v56
  %v281 = vunpack.c.l.b16 %v57
  %v282 = vunpack.c.l.b16 %v58
  %v283 = vunpack.c.l.b16 %v59
  %v284 = vunpack.c.l.b16 %v60
  %v285 = vunpack.c.l.b16 %v61
  %v286 = vunpack.c.l.b16 %v62
  %v287 = vunpack.c.l.b16 %v63
  %v288 = vunpack.c.l.b16 %v64
  %v289 = vunpack.c.l.b16 %v65
  %v290 = vunpack.c.l.b16 %v66
  %v291 = vunpack.c.l.b16 %v67
  %v292 = vunpack.c.l.b16 %v68
  %v293 = vunpack.c.l.b16 %v69
  %v294 = vunpack.c.l.b16 %v70
  %v295 = vunpack.c.l.b16 %v71
  %v296 = vunpack.c.l.b16 %v72
  %v297 = vunpack.c.l.b16 %v73
  %v298 = vunpack.c.l.b16 %v74
  %v299 = vunpack.c.l.b16 %v75
  %v300 = vunpack.c.l.b16 %v76
  %v301 = vunpack.c.l.b16 %v77
  %v302 = vunpack.c.l.b16 %v78
  %v303 = vunpack.c.l.b16 %v79
  %v304 = vunpack.c.l.b16 %v80
  %v305 = vunpack.c.l.b16 %v81
  %v306 = vunpack.c.l.b16 %v82
  %v307 = vunpack.c.l.b16 %v83
  %v308 = vunpack.c.l.b16 %v84
  %v309 = vunpack.c.l.b16 %v85
  %v310 = vunpack.c.l.b16 %v86
  %v311 = vunpack.c.l.b16 %v87
  %v312 = vunpack.c.l.b16 %v88
  %v313 = vunpack.c.l.b16 %v89
  %v314 = vunpack.c.l.b16 %v90
  %v315 = vunpack.c.l.b16 %v91
  %v316 = vunpack.c.l.b16 %v92
  %v317 = vunpack.c.l.b16 %v93
  %v318 = vpack.c.b16 %v239, %v238
  %v319 = vpack.c.b16 %v241, %v240
  %v320 = vpack.c.b16 %v243, %v242
  %v321 = vpack.c.b16 %v245, %v244
  %v322 = vpack.c.b16 %v247, %v246
  %v323 = vpack.c.b16 %v249, %v248
  %v324 = vpack.c.b16 %v251, %v250
  %v325 = vpack.c.b16 %v253, %v252
  %v326 = vpack.c.b16 %v255, %v254
  %v327 = vpack.c.b16 %v257, %v256
  %v328 = vpack.c.b16 %v259, %v258
  %v329 = vpack.c.b16 %v261, %v260
  %v330 = vpack.c.b16 %v263, %v262
  %v331 = vpack.c.b16 %v265, %v264
  %v332 = vpack.c.b16 %v267, %v266
  %v333 = vpack.c.b16 %v269, %v268
  %v334 = vpack.c.b16 %v271, %v270
  %v335 = vpack.c.b16 %v273, %v272
  %v336 = vpack.c.b16 %v275, %v274
  %v337 = vpack.c.b16 %v277, %v276
  %v338 = vpack.c.b16 %v279, %v278
  %v339 = vpack.c.b16 %v281, %v280
  %v340 = vpack.c.b16 %v283, %v282
  %v341 = vpack.c.b16 %v285, %v284
  %v342 = vpack.c.b16 %v287, %v286
  %v343 = vpack.c.b16 %v289, %v288
  %v344 = vpack.c.b16 %v291, %v290
  %v345 = vpack.c.b16 %v293, %v292
  %v346 = vpack.c.b16 %v295, %v294
  %v347 = vpack.c.b16 %v297, %v296
  %v348 = vpack.c.b16 %v299, %v298
  %v349 = vpack.c.b16 %v301, %v300
  %v350 = vpack.c.b16 %v303, %v302
  %v351 = vpack.c.b16 %v305, %v304
  %v352 = vpack.c.b16 %v307, %v306
  %v353 = vpack.c.b16 %v309, %v308
  %v354 = vpack.c.b16 %v311, %v310
  %v355 = vpack.c.b16 %v313, %v312
  %v356 = vpack.c.b16 %v315, %v314
  %v357 = vpack.c.b16 %v317, %v316
  %398 = vmatpush.bf16.msra.mxu0 %v325
  %399 = vmatpush.bf16.msra.mxu0 %v324
  %400 = vmatpush.bf16.msra.mxu0 %v323
  %401 = vmatpush.bf16.msra.mxu0 %v322
  %402 = vmatpush.bf16.msra.mxu0 %v321
  %403 = vmatpush.bf16.msra.mxu0 %v320
  %404 = vmatpush.bf16.msra.mxu0 %v319
  %405 = vmatpush.bf16.msra.mxu0 %v318
  %406 = vmatmul.bf16.gmra.mxu0 %v138
  %v407 = vpop.f32.mrf.mxu0
  %v408 = vadd.f32 0.0, %v407
  %v409 = vpop.f32.mrf.mxu0
  %v410 = vadd.f32 0.0, %v409
  %411 = vmatmul.bf16.gmra.mxu0 %v143
  %v412 = vpop.f32.mrf.mxu0
  %v413 = vadd.f32 0.0, %v412
  %v414 = vpop.f32.mrf.mxu0
  %v415 = vadd.f32 0.0, %v414
  %416 = vdwg.mxu0
  %417 = vmatpush.bf16.msra.mxu0 %v333
  %418 = vmatpush.bf16.msra.mxu0 %v332
  %419 = vmatpush.bf16.msra.mxu0 %v331
  %420 = vmatpush.bf16.msra.mxu0 %v330
  %421 = vmatpush.bf16.msra.mxu0 %v329
  %422 = vmatpush.bf16.msra.mxu0 %v328
  %423 = vmatpush.bf16.msra.mxu0 %v327
  %424 = vmatpush.bf16.msra.mxu0 %v326
  %425 = vmatmul.bf16.gmra.mxu0 %v139
  %v426 = vpop.f32.mrf.mxu0
  %v427 = vadd.f32 %v408, %v426
  %v428 = vpop.f32.mrf.mxu0
  %v429 = vadd.f32 %v410, %v428
  %430 = vmatmul.bf16.gmra.mxu0 %v144
  %v431 = vpop.f32.mrf.mxu0
  %v432 = vadd.f32 %v413, %v431
  %v433 = vpop.f32.mrf.mxu0
  %v434 = vadd.f32 %v415, %v433
  %435 = vdwg.mxu0
  %436 = vmatpush.bf16.msra.mxu0 %v341
  %437 = vmatpush.bf16.msra.mxu0 %v340
  %438 = vmatpush.bf16.msra.mxu0 %v339
  %439 = vmatpush.bf16.msra.mxu0 %v338
  %440 = vmatpush.bf16.msra.mxu0 %v337
  %441 = vmatpush.bf16.msra.mxu0 %v336
  %442 = vmatpush.bf16.msra.mxu0 %v335
  %443 = vmatpush.bf16.msra.mxu0 %v334
  %444 = vmatmul.bf16.gmra.mxu0 %v140
  %v445 = vpop.f32.mrf.mxu0
  %v446 = vadd.f32 %v427, %v445
  %v447 = vpop.f32.mrf.mxu0
  %v448 = vadd.f32 %v429, %v447
  %449 = vmatmul.bf16.gmra.mxu0 %v145
  %v450 = vpop.f32.mrf.mxu0
  %v451 = vadd.f32 %v432, %v450
  %v452 = vpop.f32.mrf.mxu0
  %v453 = vadd.f32 %v434, %v452
  %454 = vdwg.mxu0
  %455 = vmatpush.bf16.msra.mxu0 %v349
  %456 = vmatpush.bf16.msra.mxu0 %v348
  %457 = vmatpush.bf16.msra.mxu0 %v347
  %458 = vmatpush.bf16.msra.mxu0 %v346
  %459 = vmatpush.bf16.msra.mxu0 %v345
  %460 = vmatpush.bf16.msra.mxu0 %v344
  %461 = vmatpush.bf16.msra.mxu0 %v343
  %462 = vmatpush.bf16.msra.mxu0 %v342
  %463 = vmatmul.bf16.gmra.mxu0 %v141
  %v464 = vpop.f32.mrf.mxu0
  %v465 = vadd.f32 %v446, %v464
  %v466 = vpop.f32.mrf.mxu0
  %v467 = vadd.f32 %v448, %v466
  %468 = vmatmul.bf16.gmra.mxu0 %v146
  %v469 = vpop.f32.mrf.mxu0
  %v470 = vadd.f32 %v451, %v469
  %v471 = vpop.f32.mrf.mxu0
  %v472 = vadd.f32 %v453, %v471
  %473 = vdwg.mxu0
  %474 = vmatpush.bf16.msra.mxu0 %v357
  %475 = vmatpush.bf16.msra.mxu0 %v356
  %476 = vmatpush.bf16.msra.mxu0 %v355
  %477 = vmatpush.bf16.msra.mxu0 %v354
  %478 = vmatpush.bf16.msra.mxu0 %v353
  %479 = vmatpush.bf16.msra.mxu0 %v352
  %480 = vmatpush.bf16.msra.mxu0 %v351
  %481 = vmatpush.bf16.msra.mxu0 %v350
  %482 = vmatmul.bf16.gmra.mxu0 %v142
  %v483 = vpop.f32.mrf.mxu0
  %v484 = vadd.f32 %v465, %v483
  %v485 = vpop.f32.mrf.mxu0
  %v486 = vadd.f32 %v467, %v485
  %487 = vmatmul.bf16.gmra.mxu0 %v147
  %v488 = vpop.f32.mrf.mxu0
  %v489 = vadd.f32 %v470, %v488
  %v490 = vpop.f32.mrf.mxu0
  %v491 = vadd.f32 %v472, %v490
  %492 = vdwg.mxu0
  %s493 = scalar_lea.vmem %s0, 80
  %v494 = vld [vmem:[%s493] sm:$0xff]
  %v495 = vld [vmem:[%s493 + $0x8] sm:$0xff]
  %v496 = vld [vmem:[%s493 + $0x10] sm:$0xf]
  %v497 = vld [vmem:[%s493 + $0x14] sm:$0xff]
  %v498 = vld [vmem:[%s493 + $0x1c] sm:$0xff]
  %v499 = vld [vmem:[%s493 + $0x24] sm:$0xf]
  %v500 = vld [vmem:[%s493 + $0x28] sm:$0xff]
  %v501 = vld [vmem:[%s493 + $0x30] sm:$0xff]
  %v502 = vld [vmem:[%s493 + $0x38] sm:$0xf]
  %v503 = vld [vmem:[%s493 + $0x3c] sm:$0xff]
  %v504 = vld [vmem:[%s493 + $0x44] sm:$0xff]
  %v505 = vld [vmem:[%s493 + $0x4c] sm:$0xf]
  %v518 = vunpack.c.l.b16 %v494
  %v519 = vunpack.c.h.b16 %v494
  %v520 = vunpack.c.l.b16 %v495
  %v521 = vunpack.c.h.b16 %v495
  %v522 = vunpack.c.l.b16 %v496
  %v523 = vunpack.c.l.b16 %v497
  %v524 = vunpack.c.h.b16 %v497
  %v525 = vunpack.c.l.b16 %v498
  %v526 = vunpack.c.h.b16 %v498
  %v527 = vunpack.c.l.b16 %v499
  %v528 = vunpack.c.l.b16 %v500
  %v529 = vunpack.c.h.b16 %v500
  %v530 = vunpack.c.l.b16 %v501
  %v531 = vunpack.c.h.b16 %v501
  %v532 = vunpack.c.l.b16 %v502
  %v533 = vunpack.c.l.b16 %v503
  %v534 = vunpack.c.h.b16 %v503
  %v535 = vunpack.c.l.b16 %v504
  %v536 = vunpack.c.h.b16 %v504
  %v537 = vunpack.c.l.b16 %v505
  %v538 = vpack.c.b16 %v523, %v518
  %v539 = vpack.c.b16 %v524, %v519
  %v540 = vpack.c.b16 %v525, %v520
  %v541 = vpack.c.b16 %v526, %v521
  %v542 = vpack.c.b16 %v527, %v522
  %v543 = vpack.c.b16 %v533, %v528
  %v544 = vpack.c.b16 %v534, %v529
  %v545 = vpack.c.b16 %v535, %v530
  %v546 = vpack.c.b16 %v536, %v531
  %v547 = vpack.c.b16 %v537, %v532
  %558 = vmatpush.bf16.msra.mxu0 %v325
  %559 = vmatpush.bf16.msra.mxu0 %v324
  %560 = vmatpush.bf16.msra.mxu0 %v323
  %561 = vmatpush.bf16.msra.mxu0 %v322
  %562 = vmatpush.bf16.msra.mxu0 %v321
  %563 = vmatpush.bf16.msra.mxu0 %v320
  %564 = vmatpush.bf16.msra.mxu0 %v319
  %565 = vmatpush.bf16.msra.mxu0 %v318
  %566 = vmatmul.bf16.gmra.mxu0 %v538
  %v567 = vpop.f32.mrf.mxu0
  %v568 = vadd.f32 0.0, %v567
  %v569 = vpop.f32.mrf.mxu0
  %v570 = vadd.f32 0.0, %v569
  %571 = vmatmul.bf16.gmra.mxu0 %v543
  %v572 = vpop.f32.mrf.mxu0
  %v573 = vadd.f32 0.0, %v572
  %v574 = vpop.f32.mrf.mxu0
  %v575 = vadd.f32 0.0, %v574
  %576 = vdwg.mxu0
  %577 = vmatpush.bf16.msra.mxu0 %v333
  %578 = vmatpush.bf16.msra.mxu0 %v332
  %579 = vmatpush.bf16.msra.mxu0 %v331
  %580 = vmatpush.bf16.msra.mxu0 %v330
  %581 = vmatpush.bf16.msra.mxu0 %v329
  %582 = vmatpush.bf16.msra.mxu0 %v328
  %583 = vmatpush.bf16.msra.mxu0 %v327
  %584 = vmatpush.bf16.msra.mxu0 %v326
  %585 = vmatmul.bf16.gmra.mxu0 %v539
  %v586 = vpop.f32.mrf.mxu0
  %v587 = vadd.f32 %v568, %v586
  %v588 = vpop.f32.mrf.mxu0
  %v589 = vadd.f32 %v570, %v588
  %590 = vmatmul.bf16.gmra.mxu0 %v544
  %v591 = vpop.f32.mrf.mxu0
  %v592 = vadd.f32 %v573, %v591
  %v593 = vpop.f32.mrf.mxu0
  %v594 = vadd.f32 %v575, %v593
  %595 = vdwg.mxu0
  %596 = vmatpush.bf16.msra.mxu0 %v341
  %597 = vmatpush.bf16.msra.mxu0 %v340
  %598 = vmatpush.bf16.msra.mxu0 %v339
  %599 = vmatpush.bf16.msra.mxu0 %v338
  %600 = vmatpush.bf16.msra.mxu0 %v337
  %601 = vmatpush.bf16.msra.mxu0 %v336
  %602 = vmatpush.bf16.msra.mxu0 %v335
  %603 = vmatpush.bf16.msra.mxu0 %v334
  %604 = vmatmul.bf16.gmra.mxu0 %v540
  %v605 = vpop.f32.mrf.mxu0
  %v606 = vadd.f32 %v587, %v605
  %v607 = vpop.f32.mrf.mxu0
  %v608 = vadd.f32 %v589, %v607
  %609 = vmatmul.bf16.gmra.mxu0 %v545
  %v610 = vpop.f32.mrf.mxu0
  %v611 = vadd.f32 %v592, %v610
  %v612 = vpop.f32.mrf.mxu0
  %v613 = vadd.f32 %v594, %v612
  %614 = vdwg.mxu0
  %615 = vmatpush.bf16.msra.mxu0 %v349
  %616 = vmatpush.bf16.msra.mxu0 %v348
  %617 = vmatpush.bf16.msra.mxu0 %v347
  %618 = vmatpush.bf16.msra.mxu0 %v346
  %619 = vmatpush.bf16.msra.mxu0 %v345
  %620 = vmatpush.bf16.msra.mxu0 %v344
  %621 = vmatpush.bf16.msra.mxu0 %v343
  %622 = vmatpush.bf16.msra.mxu0 %v342
  %623 = vmatmul.bf16.gmra.mxu0 %v541
  %v624 = vpop.f32.mrf.mxu0
  %v625 = vadd.f32 %v606, %v624
  %v626 = vpop.f32.mrf.mxu0
  %v627 = vadd.f32 %v608, %v626
  %628 = vmatmul.bf16.gmra.mxu0 %v546
  %v629 = vpop.f32.mrf.mxu0
  %v630 = vadd.f32 %v611, %v629
  %v631 = vpop.f32.mrf.mxu0
  %v632 = vadd.f32 %v613, %v631
  %633 = vdwg.mxu0
  %634 = vmatpush.bf16.msra.mxu0 %v357
  %635 = vmatpush.bf16.msra.mxu0 %v356
  %636 = vmatpush.bf16.msra.mxu0 %v355
  %637 = vmatpush.bf16.msra.mxu0 %v354
  %638 = vmatpush.bf16.msra.mxu0 %v353
  %639 = vmatpush.bf16.msra.mxu0 %v352
  %640 = vmatpush.bf16.msra.mxu0 %v351
  %641 = vmatpush.bf16.msra.mxu0 %v350
  %642 = vmatmul.bf16.gmra.mxu0 %v542
  %v643 = vpop.f32.mrf.mxu0
  %v644 = vadd.f32 %v625, %v643
  %v645 = vpop.f32.mrf.mxu0
  %v646 = vadd.f32 %v627, %v645
  %647 = vmatmul.bf16.gmra.mxu0 %v547
  %v648 = vpop.f32.mrf.mxu0
  %v649 = vadd.f32 %v630, %v648
  %v650 = vpop.f32.mrf.mxu0
  %v651 = vadd.f32 %v632, %v650
  %652 = vdwg.mxu0
  %v653 = vmax.f32 %v484, %v644
  %v654 = vmax.f32 %v486, %v646
  %v655 = vmax.f32 %v489, %v649
  %v656 = vmax.f32 %v491, %v651
  %s657 = scalar_lea.vmem %s0, 160
  %v658 = vld [vmem:[%s657] sm:$0xff]
  %v659 = vld [vmem:[%s657 + $0x8] sm:$0xff]
  %v660 = vld [vmem:[%s657 + $0x10] sm:$0xf]
  %v661 = vld [vmem:[%s657 + $0x14] sm:$0xff]
  %v662 = vld [vmem:[%s657 + $0x1c] sm:$0xff]
  %v663 = vld [vmem:[%s657 + $0x24] sm:$0xf]
  %v664 = vld [vmem:[%s657 + $0x28] sm:$0xff]
  %v665 = vld [vmem:[%s657 + $0x30] sm:$0xff]
  %v666 = vld [vmem:[%s657 + $0x38] sm:$0xf]
  %v667 = vld [vmem:[%s657 + $0x3c] sm:$0xff]
  %v668 = vld [vmem:[%s657 + $0x44] sm:$0xff]
  %v669 = vld [vmem:[%s657 + $0x4c] sm:$0xf]
  %v682 = vunpack.c.l.b16 %v658
  %v683 = vunpack.c.h.b16 %v658
  %v684 = vunpack.c.l.b16 %v659
  %v685 = vunpack.c.h.b16 %v659
  %v686 = vunpack.c.l.b16 %v660
  %v687 = vunpack.c.l.b16 %v661
  %v688 = vunpack.c.h.b16 %v661
  %v689 = vunpack.c.l.b16 %v662
  %v690 = vunpack.c.h.b16 %v662
  %v691 = vunpack.c.l.b16 %v663
  %v692 = vunpack.c.l.b16 %v664
  %v693 = vunpack.c.h.b16 %v664
  %v694 = vunpack.c.l.b16 %v665
  %v695 = vunpack.c.h.b16 %v665
  %v696 = vunpack.c.l.b16 %v666
  %v697 = vunpack.c.l.b16 %v667
  %v698 = vunpack.c.h.b16 %v667
  %v699 = vunpack.c.l.b16 %v668
  %v700 = vunpack.c.h.b16 %v668
  %v701 = vunpack.c.l.b16 %v669
  %v702 = vpack.c.b16 %v687, %v682
  %v703 = vpack.c.b16 %v688, %v683
  %v704 = vpack.c.b16 %v689, %v684
  %v705 = vpack.c.b16 %v690, %v685
  %v706 = vpack.c.b16 %v691, %v686
  %v707 = vpack.c.b16 %v697, %v692
  %v708 = vpack.c.b16 %v698, %v693
  %v709 = vpack.c.b16 %v699, %v694
  %v710 = vpack.c.b16 %v700, %v695
  %v711 = vpack.c.b16 %v701, %v696
  %722 = vmatpush.bf16.msra.mxu0 %v325
  %723 = vmatpush.bf16.msra.mxu0 %v324
  %724 = vmatpush.bf16.msra.mxu0 %v323
  %725 = vmatpush.bf16.msra.mxu0 %v322
  %726 = vmatpush.bf16.msra.mxu0 %v321
  %727 = vmatpush.bf16.msra.mxu0 %v320
  %728 = vmatpush.bf16.msra.mxu0 %v319
  %729 = vmatpush.bf16.msra.mxu0 %v318
  %730 = vmatmul.bf16.gmra.mxu0 %v702
  %v731 = vpop.f32.mrf.mxu0
  %v732 = vadd.f32 0.0, %v731
  %v733 = vpop.f32.mrf.mxu0
  %v734 = vadd.f32 0.0, %v733
  %735 = vmatmul.bf16.gmra.mxu0 %v707
  %v736 = vpop.f32.mrf.mxu0
  %v737 = vadd.f32 0.0, %v736
  %v738 = vpop.f32.mrf.mxu0
  %v739 = vadd.f32 0.0, %v738
  %740 = vdwg.mxu0
  %741 = vmatpush.bf16.msra.mxu0 %v333
  %742 = vmatpush.bf16.msra.mxu0 %v332
  %743 = vmatpush.bf16.msra.mxu0 %v331
  %744 = vmatpush.bf16.msra.mxu0 %v330
  %745 = vmatpush.bf16.msra.mxu0 %v329
  %746 = vmatpush.bf16.msra.mxu0 %v328
  %747 = vmatpush.bf16.msra.mxu0 %v327
  %748 = vmatpush.bf16.msra.mxu0 %v326
  %749 = vmatmul.bf16.gmra.mxu0 %v703
  %v750 = vpop.f32.mrf.mxu0
  %v751 = vadd.f32 %v732, %v750
  %v752 = vpop.f32.mrf.mxu0
  %v753 = vadd.f32 %v734, %v752
  %754 = vmatmul.bf16.gmra.mxu0 %v708
  %v755 = vpop.f32.mrf.mxu0
  %v756 = vadd.f32 %v737, %v755
  %v757 = vpop.f32.mrf.mxu0
  %v758 = vadd.f32 %v739, %v757
  %759 = vdwg.mxu0
  %760 = vmatpush.bf16.msra.mxu0 %v341
  %761 = vmatpush.bf16.msra.mxu0 %v340
  %762 = vmatpush.bf16.msra.mxu0 %v339
  %763 = vmatpush.bf16.msra.mxu0 %v338
  %764 = vmatpush.bf16.msra.mxu0 %v337
  %765 = vmatpush.bf16.msra.mxu0 %v336
  %766 = vmatpush.bf16.msra.mxu0 %v335
  %767 = vmatpush.bf16.msra.mxu0 %v334
  %768 = vmatmul.bf16.gmra.mxu0 %v704
  %v769 = vpop.f32.mrf.mxu0
  %v770 = vadd.f32 %v751, %v769
  %v771 = vpop.f32.mrf.mxu0
  %v772 = vadd.f32 %v753, %v771
  %773 = vmatmul.bf16.gmra.mxu0 %v709
  %v774 = vpop.f32.mrf.mxu0
  %v775 = vadd.f32 %v756, %v774
  %v776 = vpop.f32.mrf.mxu0
  %v777 = vadd.f32 %v758, %v776
  %778 = vdwg.mxu0
  %779 = vmatpush.bf16.msra.mxu0 %v349
  %780 = vmatpush.bf16.msra.mxu0 %v348
  %781 = vmatpush.bf16.msra.mxu0 %v347
  %782 = vmatpush.bf16.msra.mxu0 %v346
  %783 = vmatpush.bf16.msra.mxu0 %v345
  %784 = vmatpush.bf16.msra.mxu0 %v344
  %785 = vmatpush.bf16.msra.mxu0 %v343
  %786 = vmatpush.bf16.msra.mxu0 %v342
  %787 = vmatmul.bf16.gmra.mxu0 %v705
  %v788 = vpop.f32.mrf.mxu0
  %v789 = vadd.f32 %v770, %v788
  %v790 = vpop.f32.mrf.mxu0
  %v791 = vadd.f32 %v772, %v790
  %792 = vmatmul.bf16.gmra.mxu0 %v710
  %v793 = vpop.f32.mrf.mxu0
  %v794 = vadd.f32 %v775, %v793
  %v795 = vpop.f32.mrf.mxu0
  %v796 = vadd.f32 %v777, %v795
  %797 = vdwg.mxu0
  %798 = vmatpush.bf16.msra.mxu0 %v357
  %799 = vmatpush.bf16.msra.mxu0 %v356
  %800 = vmatpush.bf16.msra.mxu0 %v355
  %801 = vmatpush.bf16.msra.mxu0 %v354
  %802 = vmatpush.bf16.msra.mxu0 %v353
  %803 = vmatpush.bf16.msra.mxu0 %v352
  %804 = vmatpush.bf16.msra.mxu0 %v351
  %805 = vmatpush.bf16.msra.mxu0 %v350
  %806 = vmatmul.bf16.gmra.mxu0 %v706
  %v807 = vpop.f32.mrf.mxu0
  %v808 = vadd.f32 %v789, %v807
  %v809 = vpop.f32.mrf.mxu0
  %v810 = vadd.f32 %v791, %v809
  %811 = vmatmul.bf16.gmra.mxu0 %v711
  %v812 = vpop.f32.mrf.mxu0
  %v813 = vadd.f32 %v794, %v812
  %v814 = vpop.f32.mrf.mxu0
  %v815 = vadd.f32 %v796, %v814
  %816 = vdwg.mxu0
  %v817 = vmax.f32 %v653, %v808
  %v818 = vmax.f32 %v654, %v810
  %v819 = vmax.f32 %v655, %v813
  %v820 = vmax.f32 %v656, %v815
  %s821 = scalar_lea.vmem %s0, 240
  %v822 = vld [vmem:[%s821] sm:$0xff]
  %v823 = vld [vmem:[%s821 + $0x8] sm:$0xff]
  %v824 = vld [vmem:[%s821 + $0x10] sm:$0xf]
  %v825 = vld [vmem:[%s821 + $0x14] sm:$0xff]
  %v826 = vld [vmem:[%s821 + $0x1c] sm:$0xff]
  %v827 = vld [vmem:[%s821 + $0x24] sm:$0xf]
  %v828 = vld [vmem:[%s821 + $0x28] sm:$0xff]
  %v829 = vld [vmem:[%s821 + $0x30] sm:$0xff]
  %v830 = vld [vmem:[%s821 + $0x38] sm:$0xf]
  %v831 = vld [vmem:[%s821 + $0x3c] sm:$0xff]
  %v832 = vld [vmem:[%s821 + $0x44] sm:$0xff]
  %v833 = vld [vmem:[%s821 + $0x4c] sm:$0xf]
  %v846 = vunpack.c.l.b16 %v822
  %v847 = vunpack.c.h.b16 %v822
  %v848 = vunpack.c.l.b16 %v823
  %v849 = vunpack.c.h.b16 %v823
  %v850 = vunpack.c.l.b16 %v824
  %v851 = vunpack.c.l.b16 %v825
  %v852 = vunpack.c.h.b16 %v825
  %v853 = vunpack.c.l.b16 %v826
  %v854 = vunpack.c.h.b16 %v826
  %v855 = vunpack.c.l.b16 %v827
  %v856 = vunpack.c.l.b16 %v828
  %v857 = vunpack.c.h.b16 %v828
  %v858 = vunpack.c.l.b16 %v829
  %v859 = vunpack.c.h.b16 %v829
  %v860 = vunpack.c.l.b16 %v830
  %v861 = vunpack.c.l.b16 %v831
  %v862 = vunpack.c.h.b16 %v831
  %v863 = vunpack.c.l.b16 %v832
  %v864 = vunpack.c.h.b16 %v832
  %v865 = vunpack.c.l.b16 %v833
  %v866 = vpack.c.b16 %v851, %v846
  %v867 = vpack.c.b16 %v852, %v847
  %v868 = vpack.c.b16 %v853, %v848
  %v869 = vpack.c.b16 %v854, %v849
  %v870 = vpack.c.b16 %v855, %v850
  %v871 = vpack.c.b16 %v861, %v856
  %v872 = vpack.c.b16 %v862, %v857
  %v873 = vpack.c.b16 %v863, %v858
  %v874 = vpack.c.b16 %v864, %v859
  %v875 = vpack.c.b16 %v865, %v860
  %886 = vmatpush.bf16.msra.mxu0 %v325
  %887 = vmatpush.bf16.msra.mxu0 %v324
  %888 = vmatpush.bf16.msra.mxu0 %v323
  %889 = vmatpush.bf16.msra.mxu0 %v322
  %890 = vmatpush.bf16.msra.mxu0 %v321
  %891 = vmatpush.bf16.msra.mxu0 %v320
  %892 = vmatpush.bf16.msra.mxu0 %v319
  %893 = vmatpush.bf16.msra.mxu0 %v318
  %894 = vmatmul.bf16.gmra.mxu0 %v866
  %v895 = vpop.f32.mrf.mxu0
  %v896 = vadd.f32 0.0, %v895
  %v897 = vpop.f32.mrf.mxu0
  %v898 = vadd.f32 0.0, %v897
  %899 = vmatmul.bf16.gmra.mxu0 %v871
  %v900 = vpop.f32.mrf.mxu0
  %v901 = vadd.f32 0.0, %v900
  %v902 = vpop.f32.mrf.mxu0
  %v903 = vadd.f32 0.0, %v902
  %904 = vdwg.mxu0
  %905 = vmatpush.bf16.msra.mxu0 %v333
  %906 = vmatpush.bf16.msra.mxu0 %v332
  %907 = vmatpush.bf16.msra.mxu0 %v331
  %908 = vmatpush.bf16.msra.mxu0 %v330
  %909 = vmatpush.bf16.msra.mxu0 %v329
  %910 = vmatpush.bf16.msra.mxu0 %v328
  %911 = vmatpush.bf16.msra.mxu0 %v327
  %912 = vmatpush.bf16.msra.mxu0 %v326
  %913 = vmatmul.bf16.gmra.mxu0 %v867
  %v914 = vpop.f32.mrf.mxu0
  %v915 = vadd.f32 %v896, %v914
  %v916 = vpop.f32.mrf.mxu0
  %v917 = vadd.f32 %v898, %v916
  %918 = vmatmul.bf16.gmra.mxu0 %v872
  %v919 = vpop.f32.mrf.mxu0
  %v920 = vadd.f32 %v901, %v919
  %v921 = vpop.f32.mrf.mxu0
  %v922 = vadd.f32 %v903, %v921
  %923 = vdwg.mxu0
  %924 = vmatpush.bf16.msra.mxu0 %v341
  %925 = vmatpush.bf16.msra.mxu0 %v340
  %926 = vmatpush.bf16.msra.mxu0 %v339
  %927 = vmatpush.bf16.msra.mxu0 %v338
  %928 = vmatpush.bf16.msra.mxu0 %v337
  %929 = vmatpush.bf16.msra.mxu0 %v336
  %930 = vmatpush.bf16.msra.mxu0 %v335
  %931 = vmatpush.bf16.msra.mxu0 %v334
  %932 = vmatmul.bf16.gmra.mxu0 %v868
  %v933 = vpop.f32.mrf.mxu0
  %v934 = vadd.f32 %v915, %v933
  %v935 = vpop.f32.mrf.mxu0
  %v936 = vadd.f32 %v917, %v935
  %937 = vmatmul.bf16.gmra.mxu0 %v873
  %v938 = vpop.f32.mrf.mxu0
  %v939 = vadd.f32 %v920, %v938
  %v940 = vpop.f32.mrf.mxu0
  %v941 = vadd.f32 %v922, %v940
  %942 = vdwg.mxu0
  %943 = vmatpush.bf16.msra.mxu0 %v349
  %944 = vmatpush.bf16.msra.mxu0 %v348
  %945 = vmatpush.bf16.msra.mxu0 %v347
  %946 = vmatpush.bf16.msra.mxu0 %v346
  %947 = vmatpush.bf16.msra.mxu0 %v345
  %948 = vmatpush.bf16.msra.mxu0 %v344
  %949 = vmatpush.bf16.msra.mxu0 %v343
  %950 = vmatpush.bf16.msra.mxu0 %v342
  %951 = vmatmul.bf16.gmra.mxu0 %v869
  %v952 = vpop.f32.mrf.mxu0
  %v953 = vadd.f32 %v934, %v952
  %v954 = vpop.f32.mrf.mxu0
  %v955 = vadd.f32 %v936, %v954
  %956 = vmatmul.bf16.gmra.mxu0 %v874
  %v957 = vpop.f32.mrf.mxu0
  %v958 = vadd.f32 %v939, %v957
  %v959 = vpop.f32.mrf.mxu0
  %v960 = vadd.f32 %v941, %v959
  %961 = vdwg.mxu0
  %962 = vmatpush.bf16.msra.mxu0 %v357
  %963 = vmatpush.bf16.msra.mxu0 %v356
  %964 = vmatpush.bf16.msra.mxu0 %v355
  %965 = vmatpush.bf16.msra.mxu0 %v354
  %966 = vmatpush.bf16.msra.mxu0 %v353
  %967 = vmatpush.bf16.msra.mxu0 %v352
  %968 = vmatpush.bf16.msra.mxu0 %v351
  %969 = vmatpush.bf16.msra.mxu0 %v350
  %970 = vmatmul.bf16.gmra.mxu0 %v870
  %v971 = vpop.f32.mrf.mxu0
  %v972 = vadd.f32 %v953, %v971
  %v973 = vpop.f32.mrf.mxu0
  %v974 = vadd.f32 %v955, %v973
  %975 = vmatmul.bf16.gmra.mxu0 %v875
  %v976 = vpop.f32.mrf.mxu0
  %v977 = vadd.f32 %v958, %v976
  %v978 = vpop.f32.mrf.mxu0
  %v979 = vadd.f32 %v960, %v978
  %980 = vdwg.mxu0
  %v981 = vmax.f32 %v817, %v972
  %v982 = vmax.f32 %v818, %v974
  %v983 = vmax.f32 %v819, %v977
  %v984 = vmax.f32 %v820, %v979
  %v985 = vld [vmem:[%s2] sm:$0x1]
  %v987 = vperm.slane %v985, 0
  %v989 = vadd.f32 %v981, %v987
  %v990 = vadd.f32 %v982, %v987
  %v991 = vadd.f32 %v983, %v987
  %v992 = vadd.f32 %v984, %v987
  %v993 = vmax.f32 %v989, 0.0
  %v994 = vmax.f32 %v990, 0.0
  %v995 = vmax.f32 %v991, 0.0
  %v996 = vmax.f32 %v992, 0.0
  %v997 = vpack.c.bf16 %v993, %v993
  %v998 = vpack.c.bf16 %v994, %v994
  %v999 = vpack.c.bf16 %v995, %v995
  %v1000 = vpack.c.bf16 %v996, %v996
  %1001 = vst [vmem:[%s3] sm:$0xf] %v997
  %1002 = vst [vmem:[%s3 + $0x4] sm:$0xf] %v998
  %1003 = vst [vmem:[%s3 + $0x8] sm:$0xf] %v999
  %1004 = vst [vmem:[%s3 + $0xc] sm:$0xf] %v1000
  // Predicated region
  $region14: #{lane_detection_cnn_forward.8} parent=0 // pred_check
    _
  $region15: #{lane_detection_cnn_forward.8} parent=0 // pred_check_branch
    %1006 = sbr.rel (0) target = $region17
  $region16: #{lane_detection_cnn_forward.8} parent=0 // pred_region
    _
  $region17: #{lane_detection_cnn_forward.8} parent=0 // pred_fallthru
    _
  // Predicated region
  $region18: #{lane_detection_cnn_forward.8} parent=0 // pred_check
    _
  $region19: #{lane_detection_cnn_forward.8} parent=0 // pred_check_branch
    %1008 = sbr.rel (0) target = $region21
  $region20: #{lane_detection_cnn_forward.8} parent=0 // pred_region
    _
  $region21: #{lane_detection_cnn_forward.8} parent=0 // pred_fallthru
    _

// kernel: lane_detection_cnn_forward.9
$region0: #{lane_detection_cnn_forward.9}
  #allocation0 [shape = 'u32[]', space=smem, size = 0x4, offset = 0x4, fixed_abs, tag = 'smem constant byte address 0x4 - core index']
  #allocation1 [shape = 'u32[72,128]{1,0:T(1,128)}', space=vmem, size = 0x9000, scoped, tag = 'internal scratch']
  %s0 = inlined_call_operand.vmem [shape: bf16[4,8,1152], index: 0, kind: input, shape index: {}]
  %s1 = inlined_call_operand.vmem [shape: bf16[1152,256], index: 1, kind: input, shape index: {}]
  %s2 = inlined_call_operand.vmem [shape: f32[1,256], index: 2, kind: input, shape index: {}]
  %s3 = inlined_call_operand.vmem [shape: f32[8,256], index: 3, kind: output, shape index: {}]
  %s4 = sld [smem:[#allocation0]]
  $region22: #{lane_detection_cnn_forward.9} parent=0
    _
  %s6 = ssub.s32 1, %s4
  %s7 = scalar_select 0, %s6, %s4
  // Predicated region
  $region2: #{lane_detection_cnn_forward.9} parent=0 // pred_check
    _
  $region3: #{lane_detection_cnn_forward.9} parent=0 // pred_check_branch
    %9 = sbr.rel (0) target = $region5
  $region4: #{lane_detection_cnn_forward.9} parent=0 // pred_region
    _
  $region5: #{lane_detection_cnn_forward.9} parent=0 // pred_fallthru
    _
  // Predicated region
  $region6: #{lane_detection_cnn_forward.9} parent=0 // pred_check
    _
  $region7: #{lane_detection_cnn_forward.9} parent=0 // pred_check_branch
    %11 = sbr.rel (0) target = $region9
  $region8: #{lane_detection_cnn_forward.9} parent=0 // pred_region
    _
  $region9: #{lane_detection_cnn_forward.9} parent=0 // pred_fallthru
    _
  // Predicated region
  $region10: #{lane_detection_cnn_forward.9} parent=0 // pred_check
    _
  $region11: #{lane_detection_cnn_forward.9} parent=0 // pred_check_branch
    %13 = sbr.rel (0) target = $region13
  $region12: #{lane_detection_cnn_forward.9} parent=0 // pred_region
    _
  $region13: #{lane_detection_cnn_forward.9} parent=0 // pred_fallthru
    _
  %v14 = vld [vmem:[%s1] sm:$0xff]
  %v15 = vld [vmem:[%s1 + $0x8] sm:$0xff]
  %v16 = vld [vmem:[%s1 + $0x10] sm:$0xff]
  %v17 = vld [vmem:[%s1 + $0x18] sm:$0xff]
  %v18 = vld [vmem:[%s1 + $0x20] sm:$0xff]
  %v19 = vld [vmem:[%s1 + $0x28] sm:$0xff]
  %v20 = vld [vmem:[%s1 + $0x30] sm:$0xff]
  %v21 = vld [vmem:[%s1 + $0x38] sm:$0xff]
  %v22 = vld [vmem:[%s1 + $0x40] sm:$0xff]
  %v23 = vld [vmem:[%s1 + $0x48] sm:$0xff]
  %v24 = vld [vmem:[%s1 + $0x50] sm:$0xff]
  %v25 = vld [vmem:[%s1 + $0x58] sm:$0xff]
  %v26 = vld [vmem:[%s1 + $0x60] sm:$0xff]
  %v27 = vld [vmem:[%s1 + $0x68] sm:$0xff]
  %v28 = vld [vmem:[%s1 + $0x70] sm:$0xff]
  %v29 = vld [vmem:[%s1 + $0x78] sm:$0xff]
  %v30 = vld [vmem:[%s1 + $0x80] sm:$0xff]
  %v31 = vld [vmem:[%s1 + $0x88] sm:$0xff]
  %v32 = vld [vmem:[%s1 + $0x90] sm:$0xff]
  %v33 = vld [vmem:[%s1 + $0x98] sm:$0xff]
  %v34 = vld [vmem:[%s1 + $0xa0] sm:$0xff]
  %v35 = vld [vmem:[%s1 + $0xa8] sm:$0xff]
  %v36 = vld [vmem:[%s1 + $0xb0] sm:$0xff]
  %v37 = vld [vmem:[%s1 + $0xb8] sm:$0xff]
  %v38 = vld [vmem:[%s1 + $0xc0] sm:$0xff]
  %v39 = vld [vmem:[%s1 + $0xc8] sm:$0xff]
  %v40 = vld [vmem:[%s1 + $0xd0] sm:$0xff]
  %v41 = vld [vmem:[%s1 + $0xd8] sm:$0xff]
  %v42 = vld [vmem:[%s1 + $0xe0] sm:$0xff]
  %v43 = vld [vmem:[%s1 + $0xe8] sm:$0xff]
  %v44 = vld [vmem:[%s1 + $0xf0] sm:$0xff]
  %v45 = vld [vmem:[%s1 + $0xf8] sm:$0xff]
  %v46 = vld [vmem:[%s1 + $0x100] sm:$0xff]
  %v47 = vld [vmem:[%s1 + $0x108] sm:$0xff]
  %v48 = vld [vmem:[%s1 + $0x110] sm:$0xff]
  %v49 = vld [vmem:[%s1 + $0x118] sm:$0xff]
  %v50 = vld [vmem:[%s1 + $0x120] sm:$0xff]
  %v51 = vld [vmem:[%s1 + $0x128] sm:$0xff]
  %v52 = vld [vmem:[%s1 + $0x130] sm:$0xff]
  %v53 = vld [vmem:[%s1 + $0x138] sm:$0xff]
  %v54 = vld [vmem:[%s1 + $0x140] sm:$0xff]
  %v55 = vld [vmem:[%s1 + $0x148] sm:$0xff]
  %v56 = vld [vmem:[%s1 + $0x150] sm:$0xff]
  %v57 = vld [vmem:[%s1 + $0x158] sm:$0xff]
  %v58 = vld [vmem:[%s1 + $0x160] sm:$0xff]
  %v59 = vld [vmem:[%s1 + $0x168] sm:$0xff]
  %v60 = vld [vmem:[%s1 + $0x170] sm:$0xff]
  %v61 = vld [vmem:[%s1 + $0x178] sm:$0xff]
  %v62 = vld [vmem:[%s1 + $0x180] sm:$0xff]
  %v63 = vld [vmem:[%s1 + $0x188] sm:$0xff]
  %v64 = vld [vmem:[%s1 + $0x190] sm:$0xff]
  %v65 = vld [vmem:[%s1 + $0x198] sm:$0xff]
  %v66 = vld [vmem:[%s1 + $0x1a0] sm:$0xff]
  %v67 = vld [vmem:[%s1 + $0x1a8] sm:$0xff]
  %v68 = vld [vmem:[%s1 + $0x1b0] sm:$0xff]
  %v69 = vld [vmem:[%s1 + $0x1b8] sm:$0xff]
  %v70 = vld [vmem:[%s1 + $0x1c0] sm:$0xff]
  %v71 = vld [vmem:[%s1 + $0x1c8] sm:$0xff]
  %v72 = vld [vmem:[%s1 + $0x1d0] sm:$0xff]
  %v73 = vld [vmem:[%s1 + $0x1d8] sm:$0xff]
  %v74 = vld [vmem:[%s1 + $0x1e0] sm:$0xff]
  %v75 = vld [vmem:[%s1 + $0x1e8] sm:$0xff]
  %v76 = vld [vmem:[%s1 + $0x1f0] sm:$0xff]
  %v77 = vld [vmem:[%s1 + $0x1f8] sm:$0xff]
  %v78 = vld [vmem:[%s1 + $0x200] sm:$0xff]
  %v79 = vld [vmem:[%s1 + $0x208] sm:$0xff]
  %v80 = vld [vmem:[%s1 + $0x210] sm:$0xff]
  %v81 = vld [vmem:[%s1 + $0x218] sm:$0xff]
  %v82 = vld [vmem:[%s1 + $0x220] sm:$0xff]
  %v83 = vld [vmem:[%s1 + $0x228] sm:$0xff]
  %v84 = vld [vmem:[%s1 + $0x230] sm:$0xff]
  %v85 = vld [vmem:[%s1 + $0x238] sm:$0xff]
  %v86 = vld [vmem:[%s1 + $0x240] sm:$0xff]
  %v87 = vld [vmem:[%s1 + $0x248] sm:$0xff]
  %v88 = vld [vmem:[%s1 + $0x250] sm:$0xff]
  %v89 = vld [vmem:[%s1 + $0x258] sm:$0xff]
  %v90 = vld [vmem:[%s1 + $0x260] sm:$0xff]
  %v91 = vld [vmem:[%s1 + $0x268] sm:$0xff]
  %v92 = vld [vmem:[%s1 + $0x270] sm:$0xff]
  %v93 = vld [vmem:[%s1 + $0x278] sm:$0xff]
  %v94 = vld [vmem:[%s1 + $0x280] sm:$0xff]
  %v95 = vld [vmem:[%s1 + $0x288] sm:$0xff]
  %v96 = vld [vmem:[%s1 + $0x290] sm:$0xff]
  %v97 = vld [vmem:[%s1 + $0x298] sm:$0xff]
  %v98 = vld [vmem:[%s1 + $0x2a0] sm:$0xff]
  %v99 = vld [vmem:[%s1 + $0x2a8] sm:$0xff]
  %v100 = vld [vmem:[%s1 + $0x2b0] sm:$0xff]
  %v101 = vld [vmem:[%s1 + $0x2b8] sm:$0xff]
  %v102 = vld [vmem:[%s1 + $0x2c0] sm:$0xff]
  %v103 = vld [vmem:[%s1 + $0x2c8] sm:$0xff]
  %v104 = vld [vmem:[%s1 + $0x2d0] sm:$0xff]
  %v105 = vld [vmem:[%s1 + $0x2d8] sm:$0xff]
  %v106 = vld [vmem:[%s1 + $0x2e0] sm:$0xff]
  %v107 = vld [vmem:[%s1 + $0x2e8] sm:$0xff]
  %v108 = vld [vmem:[%s1 + $0x2f0] sm:$0xff]
  %v109 = vld [vmem:[%s1 + $0x2f8] sm:$0xff]
  %v110 = vld [vmem:[%s1 + $0x300] sm:$0xff]
  %v111 = vld [vmem:[%s1 + $0x308] sm:$0xff]
  %v112 = vld [vmem:[%s1 + $0x310] sm:$0xff]
  %v113 = vld [vmem:[%s1 + $0x318] sm:$0xff]
  %v114 = vld [vmem:[%s1 + $0x320] sm:$0xff]
  %v115 = vld [vmem:[%s1 + $0x328] sm:$0xff]
  %v116 = vld [vmem:[%s1 + $0x330] sm:$0xff]
  %v117 = vld [vmem:[%s1 + $0x338] sm:$0xff]
  %v118 = vld [vmem:[%s1 + $0x340] sm:$0xff]
  %v119 = vld [vmem:[%s1 + $0x348] sm:$0xff]
  %v120 = vld [vmem:[%s1 + $0x350] sm:$0xff]
  %v121 = vld [vmem:[%s1 + $0x358] sm:$0xff]
  %v122 = vld [vmem:[%s1 + $0x360] sm:$0xff]
  %v123 = vld [vmem:[%s1 + $0x368] sm:$0xff]
  %v124 = vld [vmem:[%s1 + $0x370] sm:$0xff]
  %v125 = vld [vmem:[%s1 + $0x378] sm:$0xff]
  %v126 = vld [vmem:[%s1 + $0x380] sm:$0xff]
  %v127 = vld [vmem:[%s1 + $0x388] sm:$0xff]
  %v128 = vld [vmem:[%s1 + $0x390] sm:$0xff]
  %v129 = vld [vmem:[%s1 + $0x398] sm:$0xff]
  %v130 = vld [vmem:[%s1 + $0x3a0] sm:$0xff]
  %v131 = vld [vmem:[%s1 + $0x3a8] sm:$0xff]
  %v132 = vld [vmem:[%s1 + $0x3b0] sm:$0xff]
  %v133 = vld [vmem:[%s1 + $0x3b8] sm:$0xff]
  %v134 = vld [vmem:[%s1 + $0x3c0] sm:$0xff]
  %v135 = vld [vmem:[%s1 + $0x3c8] sm:$0xff]
  %v136 = vld [vmem:[%s1 + $0x3d0] sm:$0xff]
  %v137 = vld [vmem:[%s1 + $0x3d8] sm:$0xff]
  %v138 = vld [vmem:[%s1 + $0x3e0] sm:$0xff]
  %v139 = vld [vmem:[%s1 + $0x3e8] sm:$0xff]
  %v140 = vld [vmem:[%s1 + $0x3f0] sm:$0xff]
  %v141 = vld [vmem:[%s1 + $0x3f8] sm:$0xff]
  %v142 = vld [vmem:[%s1 + $0x400] sm:$0xff]
  %v143 = vld [vmem:[%s1 + $0x408] sm:$0xff]
  %v144 = vld [vmem:[%s1 + $0x410] sm:$0xff]
  %v145 = vld [vmem:[%s1 + $0x418] sm:$0xff]
  %v146 = vld [vmem:[%s1 + $0x420] sm:$0xff]
  %v147 = vld [vmem:[%s1 + $0x428] sm:$0xff]
  %v148 = vld [vmem:[%s1 + $0x430] sm:$0xff]
  %v149 = vld [vmem:[%s1 + $0x438] sm:$0xff]
  %v150 = vld [vmem:[%s1 + $0x440] sm:$0xff]
  %v151 = vld [vmem:[%s1 + $0x448] sm:$0xff]
  %v152 = vld [vmem:[%s1 + $0x450] sm:$0xff]
  %v153 = vld [vmem:[%s1 + $0x458] sm:$0xff]
  %v154 = vld [vmem:[%s1 + $0x460] sm:$0xff]
  %v155 = vld [vmem:[%s1 + $0x468] sm:$0xff]
  %v156 = vld [vmem:[%s1 + $0x470] sm:$0xff]
  %v157 = vld [vmem:[%s1 + $0x478] sm:$0xff]
  %v158 = vld [vmem:[%s0] sm:$0xff]
  %v159 = vld [vmem:[%s0 + $0x8] sm:$0xff]
  %v160 = vld [vmem:[%s0 + $0x10] sm:$0xff]
  %v161 = vld [vmem:[%s0 + $0x18] sm:$0xff]
  %v162 = vld [vmem:[%s0 + $0x20] sm:$0xf]
  %v168 = vunpack.c.l.b16 %v158
  %v169 = vunpack.c.h.b16 %v158
  %v170 = vunpack.c.l.b16 %v159
  %v171 = vunpack.c.h.b16 %v159
  %v172 = vunpack.c.l.b16 %v160
  %v173 = vunpack.c.h.b16 %v160
  %v174 = vunpack.c.l.b16 %v161
  %v175 = vunpack.c.h.b16 %v161
  %v176 = vunpack.c.l.b16 %v162
  %v177 = vpack.c.b16 %v168, %v168
  %v178 = vpack.c.b16 %v169, %v169
  %v179 = vpack.c.b16 %v170, %v170
  %v180 = vpack.c.b16 %v171, %v171
  %v181 = vpack.c.b16 %v172, %v172
  %v182 = vpack.c.b16 %v173, %v173
  %v183 = vpack.c.b16 %v174, %v174
  %v184 = vpack.c.b16 %v175, %v175
  %v185 = vpack.c.b16 %v176, %v176
  %v339 = vunpack.c.l.b16 %v14
  %v340 = vunpack.c.h.b16 %v14
  %v341 = vunpack.c.l.b16 %v15
  %v342 = vunpack.c.h.b16 %v15
  %v343 = vunpack.c.l.b16 %v16
  %v344 = vunpack.c.h.b16 %v16
  %v345 = vunpack.c.l.b16 %v17
  %v346 = vunpack.c.h.b16 %v17
  %v347 = vunpack.c.l.b16 %v18
  %v348 = vunpack.c.h.b16 %v18
  %v349 = vunpack.c.l.b16 %v19
  %v350 = vunpack.c.h.b16 %v19
  %v351 = vunpack.c.l.b16 %v20
  %v352 = vunpack.c.h.b16 %v20
  %v353 = vunpack.c.l.b16 %v21
  %v354 = vunpack.c.h.b16 %v21
  %v355 = vunpack.c.l.b16 %v22
  %v356 = vunpack.c.h.b16 %v22
  %v357 = vunpack.c.l.b16 %v23
  %v358 = vunpack.c.h.b16 %v23
  %v359 = vunpack.c.l.b16 %v24
  %v360 = vunpack.c.h.b16 %v24
  %v361 = vunpack.c.l.b16 %v25
  %v362 = vunpack.c.h.b16 %v25
  %v363 = vunpack.c.l.b16 %v26
  %v364 = vunpack.c.h.b16 %v26
  %v365 = vunpack.c.l.b16 %v27
  %v366 = vunpack.c.h.b16 %v27
  %v367 = vunpack.c.l.b16 %v28
  %v368 = vunpack.c.h.b16 %v28
  %v369 = vunpack.c.l.b16 %v29
  %v370 = vunpack.c.h.b16 %v29
  %v371 = vunpack.c.l.b16 %v30
  %v372 = vunpack.c.h.b16 %v30
  %v373 = vunpack.c.l.b16 %v31
  %v374 = vunpack.c.h.b16 %v31
  %v375 = vunpack.c.l.b16 %v32
  %v376 = vunpack.c.h.b16 %v32
  %v377 = vunpack.c.l.b16 %v33
  %v378 = vunpack.c.h.b16 %v33
  %v379 = vunpack.c.l.b16 %v34
  %v380 = vunpack.c.h.b16 %v34
  %v381 = vunpack.c.l.b16 %v35
  %v382 = vunpack.c.h.b16 %v35
  %v383 = vunpack.c.l.b16 %v36
  %v384 = vunpack.c.h.b16 %v36
  %v385 = vunpack.c.l.b16 %v37
  %v386 = vunpack.c.h.b16 %v37
  %v387 = vunpack.c.l.b16 %v38
  %v388 = vunpack.c.h.b16 %v38
  %v389 = vunpack.c.l.b16 %v39
  %v390 = vunpack.c.h.b16 %v39
  %v391 = vunpack.c.l.b16 %v40
  %v392 = vunpack.c.h.b16 %v40
  %v393 = vunpack.c.l.b16 %v41
  %v394 = vunpack.c.h.b16 %v41
  %v395 = vunpack.c.l.b16 %v42
  %v396 = vunpack.c.h.b16 %v42
  %v397 = vunpack.c.l.b16 %v43
  %v398 = vunpack.c.h.b16 %v43
  %v399 = vunpack.c.l.b16 %v44
  %v400 = vunpack.c.h.b16 %v44
  %v401 = vunpack.c.l.b16 %v45
  %v402 = vunpack.c.h.b16 %v45
  %v403 = vunpack.c.l.b16 %v46
  %v404 = vunpack.c.h.b16 %v46
  %v405 = vunpack.c.l.b16 %v47
  %v406 = vunpack.c.h.b16 %v47
  %v407 = vunpack.c.l.b16 %v48
  %v408 = vunpack.c.h.b16 %v48
  %v409 = vunpack.c.l.b16 %v49
  %v410 = vunpack.c.h.b16 %v49
  %v411 = vunpack.c.l.b16 %v50
  %v412 = vunpack.c.h.b16 %v50
  %v413 = vunpack.c.l.b16 %v51
  %v414 = vunpack.c.h.b16 %v51
  %v415 = vunpack.c.l.b16 %v52
  %v416 = vunpack.c.h.b16 %v52
  %v417 = vunpack.c.l.b16 %v53
  %v418 = vunpack.c.h.b16 %v53
  %v419 = vunpack.c.l.b16 %v54
  %v420 = vunpack.c.h.b16 %v54
  %v421 = vunpack.c.l.b16 %v55
  %v422 = vunpack.c.h.b16 %v55
  %v423 = vunpack.c.l.b16 %v56
  %v424 = vunpack.c.h.b16 %v56
  %v425 = vunpack.c.l.b16 %v57
  %v426 = vunpack.c.h.b16 %v57
  %v427 = vunpack.c.l.b16 %v58
  %v428 = vunpack.c.h.b16 %v58
  %v429 = vunpack.c.l.b16 %v59
  %v430 = vunpack.c.h.b16 %v59
  %v431 = vunpack.c.l.b16 %v60
  %v432 = vunpack.c.h.b16 %v60
  %v433 = vunpack.c.l.b16 %v61
  %v434 = vunpack.c.h.b16 %v61
  %v435 = vunpack.c.l.b16 %v62
  %v436 = vunpack.c.h.b16 %v62
  %v437 = vunpack.c.l.b16 %v63
  %v438 = vunpack.c.h.b16 %v63
  %v439 = vunpack.c.l.b16 %v64
  %v440 = vunpack.c.h.b16 %v64
  %v441 = vunpack.c.l.b16 %v65
  %v442 = vunpack.c.h.b16 %v65
  %v443 = vunpack.c.l.b16 %v66
  %v444 = vunpack.c.h.b16 %v66
  %v445 = vunpack.c.l.b16 %v67
  %v446 = vunpack.c.h.b16 %v67
  %v447 = vunpack.c.l.b16 %v68
  %v448 = vunpack.c.h.b16 %v68
  %v449 = vunpack.c.l.b16 %v69
  %v450 = vunpack.c.h.b16 %v69
  %v451 = vunpack.c.l.b16 %v70
  %v452 = vunpack.c.h.b16 %v70
  %v453 = vunpack.c.l.b16 %v71
  %v454 = vunpack.c.h.b16 %v71
  %v455 = vunpack.c.l.b16 %v72
  %v456 = vunpack.c.h.b16 %v72
  %v457 = vunpack.c.l.b16 %v73
  %v458 = vunpack.c.h.b16 %v73
  %v459 = vunpack.c.l.b16 %v74
  %v460 = vunpack.c.h.b16 %v74
  %v461 = vunpack.c.l.b16 %v75
  %v462 = vunpack.c.h.b16 %v75
  %v463 = vunpack.c.l.b16 %v76
  %v464 = vunpack.c.h.b16 %v76
  %v465 = vunpack.c.l.b16 %v77
  %v466 = vunpack.c.h.b16 %v77
  %v467 = vunpack.c.l.b16 %v78
  %v468 = vunpack.c.h.b16 %v78
  %v469 = vunpack.c.l.b16 %v79
  %v470 = vunpack.c.h.b16 %v79
  %v471 = vunpack.c.l.b16 %v80
  %v472 = vunpack.c.h.b16 %v80
  %v473 = vunpack.c.l.b16 %v81
  %v474 = vunpack.c.h.b16 %v81
  %v475 = vunpack.c.l.b16 %v82
  %v476 = vunpack.c.h.b16 %v82
  %v477 = vunpack.c.l.b16 %v83
  %v478 = vunpack.c.h.b16 %v83
  %v479 = vunpack.c.l.b16 %v84
  %v480 = vunpack.c.h.b16 %v84
  %v481 = vunpack.c.l.b16 %v85
  %v482 = vunpack.c.h.b16 %v85
  %v483 = vunpack.c.l.b16 %v86
  %v484 = vunpack.c.h.b16 %v86
  %v485 = vunpack.c.l.b16 %v87
  %v486 = vunpack.c.h.b16 %v87
  %v487 = vunpack.c.l.b16 %v88
  %v488 = vunpack.c.h.b16 %v88
  %v489 = vunpack.c.l.b16 %v89
  %v490 = vunpack.c.h.b16 %v89
  %v491 = vunpack.c.l.b16 %v90
  %v492 = vunpack.c.h.b16 %v90
  %v493 = vunpack.c.l.b16 %v91
  %v494 = vunpack.c.h.b16 %v91
  %v495 = vunpack.c.l.b16 %v92
  %v496 = vunpack.c.h.b16 %v92
  %v497 = vunpack.c.l.b16 %v93
  %v498 = vunpack.c.h.b16 %v93
  %v499 = vunpack.c.l.b16 %v94
  %v500 = vunpack.c.h.b16 %v94
  %v501 = vunpack.c.l.b16 %v95
  %v502 = vunpack.c.h.b16 %v95
  %v503 = vunpack.c.l.b16 %v96
  %v504 = vunpack.c.h.b16 %v96
  %v505 = vunpack.c.l.b16 %v97
  %v506 = vunpack.c.h.b16 %v97
  %v507 = vunpack.c.l.b16 %v98
  %v508 = vunpack.c.h.b16 %v98
  %v509 = vunpack.c.l.b16 %v99
  %v510 = vunpack.c.h.b16 %v99
  %v511 = vunpack.c.l.b16 %v100
  %v512 = vunpack.c.h.b16 %v100
  %v513 = vunpack.c.l.b16 %v101
  %v514 = vunpack.c.h.b16 %v101
  %v515 = vunpack.c.l.b16 %v102
  %v516 = vunpack.c.h.b16 %v102
  %v517 = vunpack.c.l.b16 %v103
  %v518 = vunpack.c.h.b16 %v103
  %v519 = vunpack.c.l.b16 %v104
  %v520 = vunpack.c.h.b16 %v104
  %v521 = vunpack.c.l.b16 %v105
  %v522 = vunpack.c.h.b16 %v105
  %v523 = vunpack.c.l.b16 %v106
  %v524 = vunpack.c.h.b16 %v106
  %v525 = vunpack.c.l.b16 %v107
  %v526 = vunpack.c.h.b16 %v107
  %v527 = vunpack.c.l.b16 %v108
  %v528 = vunpack.c.h.b16 %v108
  %v529 = vunpack.c.l.b16 %v109
  %v530 = vunpack.c.h.b16 %v109
  %v531 = vunpack.c.l.b16 %v110
  %v532 = vunpack.c.h.b16 %v110
  %v533 = vunpack.c.l.b16 %v111
  %v534 = vunpack.c.h.b16 %v111
  %v535 = vunpack.c.l.b16 %v112
  %v536 = vunpack.c.h.b16 %v112
  %v537 = vunpack.c.l.b16 %v113
  %v538 = vunpack.c.h.b16 %v113
  %v539 = vunpack.c.l.b16 %v114
  %v540 = vunpack.c.h.b16 %v114
  %v541 = vunpack.c.l.b16 %v115
  %v542 = vunpack.c.h.b16 %v115
  %v543 = vunpack.c.l.b16 %v116
  %v544 = vunpack.c.h.b16 %v116
  %v545 = vunpack.c.l.b16 %v117
  %v546 = vunpack.c.h.b16 %v117
  %v547 = vunpack.c.l.b16 %v118
  %v548 = vunpack.c.h.b16 %v118
  %v549 = vunpack.c.l.b16 %v119
  %v550 = vunpack.c.h.b16 %v119
  %v551 = vunpack.c.l.b16 %v120
  %v552 = vunpack.c.h.b16 %v120
  %v553 = vunpack.c.l.b16 %v121
  %v554 = vunpack.c.h.b16 %v121
  %v555 = vunpack.c.l.b16 %v122
  %v556 = vunpack.c.h.b16 %v122
  %v557 = vunpack.c.l.b16 %v123
  %v558 = vunpack.c.h.b16 %v123
  %v559 = vunpack.c.l.b16 %v124
  %v560 = vunpack.c.h.b16 %v124
  %v561 = vunpack.c.l.b16 %v125
  %v562 = vunpack.c.h.b16 %v125
  %v563 = vunpack.c.l.b16 %v126
  %v564 = vunpack.c.h.b16 %v126
  %v565 = vunpack.c.l.b16 %v127
  %v566 = vunpack.c.h.b16 %v127
  %v567 = vunpack.c.l.b16 %v128
  %v568 = vunpack.c.h.b16 %v128
  %v569 = vunpack.c.l.b16 %v129
  %v570 = vunpack.c.h.b16 %v129
  %v571 = vunpack.c.l.b16 %v130
  %v572 = vunpack.c.h.b16 %v130
  %v573 = vunpack.c.l.b16 %v131
  %v574 = vunpack.c.h.b16 %v131
  %v575 = vunpack.c.l.b16 %v132
  %v576 = vunpack.c.h.b16 %v132
  %v577 = vunpack.c.l.b16 %v133
  %v578 = vunpack.c.h.b16 %v133
  %v579 = vunpack.c.l.b16 %v134
  %v580 = vunpack.c.h.b16 %v134
  %v581 = vunpack.c.l.b16 %v135
  %v582 = vunpack.c.h.b16 %v135
  %v583 = vunpack.c.l.b16 %v136
  %v584 = vunpack.c.h.b16 %v136
  %v585 = vunpack.c.l.b16 %v137
  %v586 = vunpack.c.h.b16 %v137
  %v587 = vunpack.c.l.b16 %v138
  %v588 = vunpack.c.h.b16 %v138
  %v589 = vunpack.c.l.b16 %v139
  %v590 = vunpack.c.h.b16 %v139
  %v591 = vunpack.c.l.b16 %v140
  %v592 = vunpack.c.h.b16 %v140
  %v593 = vunpack.c.l.b16 %v141
  %v594 = vunpack.c.h.b16 %v141
  %v595 = vunpack.c.l.b16 %v142
  %v596 = vunpack.c.h.b16 %v142
  %v597 = vunpack.c.l.b16 %v143
  %v598 = vunpack.c.h.b16 %v143
  %v599 = vunpack.c.l.b16 %v144
  %v600 = vunpack.c.h.b16 %v144
  %v601 = vunpack.c.l.b16 %v145
  %v602 = vunpack.c.h.b16 %v145
  %v603 = vunpack.c.l.b16 %v146
  %v604 = vunpack.c.h.b16 %v146
  %v605 = vunpack.c.l.b16 %v147
  %v606 = vunpack.c.h.b16 %v147
  %v607 = vunpack.c.l.b16 %v148
  %v608 = vunpack.c.h.b16 %v148
  %v609 = vunpack.c.l.b16 %v149
  %v610 = vunpack.c.h.b16 %v149
  %v611 = vunpack.c.l.b16 %v150
  %v612 = vunpack.c.h.b16 %v150
  %v613 = vunpack.c.l.b16 %v151
  %v614 = vunpack.c.h.b16 %v151
  %v615 = vunpack.c.l.b16 %v152
  %v616 = vunpack.c.h.b16 %v152
  %v617 = vunpack.c.l.b16 %v153
  %v618 = vunpack.c.h.b16 %v153
  %v619 = vunpack.c.l.b16 %v154
  %v620 = vunpack.c.h.b16 %v154
  %v621 = vunpack.c.l.b16 %v155
  %v622 = vunpack.c.h.b16 %v155
  %v623 = vunpack.c.l.b16 %v156
  %v624 = vunpack.c.h.b16 %v156
  %v625 = vunpack.c.l.b16 %v157
  %v626 = vunpack.c.h.b16 %v157
  %v627 = vpack.c.b16 %v341, %v339
  %v628 = vpack.c.b16 %v342, %v340
  %v629 = vpack.c.b16 %v345, %v343
  %v630 = vpack.c.b16 %v346, %v344
  %v631 = vpack.c.b16 %v349, %v347
  %v632 = vpack.c.b16 %v350, %v348
  %v633 = vpack.c.b16 %v353, %v351
  %v634 = vpack.c.b16 %v354, %v352
  %v635 = vpack.c.b16 %v357, %v355
  %v636 = vpack.c.b16 %v358, %v356
  %v637 = vpack.c.b16 %v361, %v359
  %v638 = vpack.c.b16 %v362, %v360
  %v639 = vpack.c.b16 %v365, %v363
  %v640 = vpack.c.b16 %v366, %v364
  %v641 = vpack.c.b16 %v369, %v367
  %v642 = vpack.c.b16 %v370, %v368
  %v643 = vpack.c.b16 %v373, %v371
  %v644 = vpack.c.b16 %v374, %v372
  %v645 = vpack.c.b16 %v377, %v375
  %v646 = vpack.c.b16 %v378, %v376
  %v647 = vpack.c.b16 %v381, %v379
  %v648 = vpack.c.b16 %v382, %v380
  %v649 = vpack.c.b16 %v385, %v383
  %v650 = vpack.c.b16 %v386, %v384
  %v651 = vpack.c.b16 %v389, %v387
  %v652 = vpack.c.b16 %v390, %v388
  %v653 = vpack.c.b16 %v393, %v391
  %v654 = vpack.c.b16 %v394, %v392
  %v655 = vpack.c.b16 %v397, %v395
  %v656 = vpack.c.b16 %v398, %v396
  %v657 = vpack.c.b16 %v401, %v399
  %v658 = vpack.c.b16 %v402, %v400
  %v659 = vpack.c.b16 %v405, %v403
  %v660 = vpack.c.b16 %v406, %v404
  %v661 = vpack.c.b16 %v409, %v407
  %v662 = vpack.c.b16 %v410, %v408
  %v663 = vpack.c.b16 %v413, %v411
  %v664 = vpack.c.b16 %v414, %v412
  %v665 = vpack.c.b16 %v417, %v415
  %v666 = vpack.c.b16 %v418, %v416
  %v667 = vpack.c.b16 %v421, %v419
  %v668 = vpack.c.b16 %v422, %v420
  %v669 = vpack.c.b16 %v425, %v423
  %v670 = vpack.c.b16 %v426, %v424
  %v671 = vpack.c.b16 %v429, %v427
  %v672 = vpack.c.b16 %v430, %v428
  %v673 = vpack.c.b16 %v433, %v431
  %v674 = vpack.c.b16 %v434, %v432
  %v675 = vpack.c.b16 %v437, %v435
  %v676 = vpack.c.b16 %v438, %v436
  %v677 = vpack.c.b16 %v441, %v439
  %v678 = vpack.c.b16 %v442, %v440
  %v679 = vpack.c.b16 %v445, %v443
  %v680 = vpack.c.b16 %v446, %v444
  %v681 = vpack.c.b16 %v449, %v447
  %v682 = vpack.c.b16 %v450, %v448
  %v683 = vpack.c.b16 %v453, %v451
  %v684 = vpack.c.b16 %v454, %v452
  %v685 = vpack.c.b16 %v457, %v455
  %v686 = vpack.c.b16 %v458, %v456
  %v687 = vpack.c.b16 %v461, %v459
  %v688 = vpack.c.b16 %v462, %v460
  %v689 = vpack.c.b16 %v465, %v463
  %v690 = vpack.c.b16 %v466, %v464
  %v691 = vpack.c.b16 %v469, %v467
  %v692 = vpack.c.b16 %v470, %v468
  %v693 = vpack.c.b16 %v473, %v471
  %v694 = vpack.c.b16 %v474, %v472
  %v695 = vpack.c.b16 %v477, %v475
  %v696 = vpack.c.b16 %v478, %v476
  %v697 = vpack.c.b16 %v481, %v479
  %v698 = vpack.c.b16 %v482, %v480
  %v699 = vpack.c.b16 %v485, %v483
  %v700 = vpack.c.b16 %v486, %v484
  %v701 = vpack.c.b16 %v489, %v487
  %v702 = vpack.c.b16 %v490, %v488
  %v703 = vpack.c.b16 %v493, %v491
  %v704 = vpack.c.b16 %v494, %v492
  %v705 = vpack.c.b16 %v497, %v495
  %v706 = vpack.c.b16 %v498, %v496
  %v707 = vpack.c.b16 %v501, %v499
  %v708 = vpack.c.b16 %v502, %v500
  %v709 = vpack.c.b16 %v505, %v503
  %v710 = vpack.c.b16 %v506, %v504
  %v711 = vpack.c.b16 %v509, %v507
  %v712 = vpack.c.b16 %v510, %v508
  %v713 = vpack.c.b16 %v513, %v511
  %v714 = vpack.c.b16 %v514, %v512
  %v715 = vpack.c.b16 %v517, %v515
  %v716 = vpack.c.b16 %v518, %v516
  %v717 = vpack.c.b16 %v521, %v519
  %v718 = vpack.c.b16 %v522, %v520
  %v719 = vpack.c.b16 %v525, %v523
  %v720 = vpack.c.b16 %v526, %v524
  %v721 = vpack.c.b16 %v529, %v527
  %v722 = vpack.c.b16 %v530, %v528
  %v723 = vpack.c.b16 %v533, %v531
  %v724 = vpack.c.b16 %v534, %v532
  %v725 = vpack.c.b16 %v537, %v535
  %v726 = vpack.c.b16 %v538, %v536
  %v727 = vpack.c.b16 %v541, %v539
  %v728 = vpack.c.b16 %v542, %v540
  %v729 = vpack.c.b16 %v545, %v543
  %v730 = vpack.c.b16 %v546, %v544
  %v731 = vpack.c.b16 %v549, %v547
  %v732 = vpack.c.b16 %v550, %v548
  %v733 = vpack.c.b16 %v553, %v551
  %v734 = vpack.c.b16 %v554, %v552
  %v735 = vpack.c.b16 %v557, %v555
  %v736 = vpack.c.b16 %v558, %v556
  %v737 = vpack.c.b16 %v561, %v559
  %v738 = vpack.c.b16 %v562, %v560
  %v739 = vpack.c.b16 %v565, %v563
  %v740 = vpack.c.b16 %v566, %v564
  %v741 = vpack.c.b16 %v569, %v567
  %v742 = vpack.c.b16 %v570, %v568
  %v743 = vpack.c.b16 %v573, %v571
  %v744 = vpack.c.b16 %v574, %v572
  %v745 = vpack.c.b16 %v577, %v575
  %v746 = vpack.c.b16 %v578, %v576
  %v747 = vpack.c.b16 %v581, %v579
  %v748 = vpack.c.b16 %v582, %v580
  %v749 = vpack.c.b16 %v585, %v583
  %v750 = vpack.c.b16 %v586, %v584
  %v751 = vpack.c.b16 %v589, %v587
  %v752 = vpack.c.b16 %v590, %v588
  %v753 = vpack.c.b16 %v593, %v591
  %v754 = vpack.c.b16 %v594, %v592
  %v755 = vpack.c.b16 %v597, %v595
  %v756 = vpack.c.b16 %v598, %v596
  %v757 = vpack.c.b16 %v601, %v599
  %v758 = vpack.c.b16 %v602, %v600
  %v759 = vpack.c.b16 %v605, %v603
  %v760 = vpack.c.b16 %v606, %v604
  %v761 = vpack.c.b16 %v609, %v607
  %v762 = vpack.c.b16 %v610, %v608
  %v763 = vpack.c.b16 %v613, %v611
  %v764 = vpack.c.b16 %v614, %v612
  %v765 = vpack.c.b16 %v617, %v615
  %v766 = vpack.c.b16 %v618, %v616
  %v767 = vpack.c.b16 %v621, %v619
  %v768 = vpack.c.b16 %v622, %v620
  %v769 = vpack.c.b16 %v625, %v623
  %v770 = vpack.c.b16 %v626, %v624
  %915 = vmatpush.bf16.msra.mxu0 %v641
  %916 = vmatpush.bf16.msra.mxu0 %v639
  %917 = vmatpush.bf16.msra.mxu0 %v637
  %918 = vmatpush.bf16.msra.mxu0 %v635
  %919 = vmatpush.bf16.msra.mxu0 %v633
  %920 = vmatpush.bf16.msra.mxu0 %v631
  %921 = vmatpush.bf16.msra.mxu0 %v629
  %922 = vmatpush.bf16.msra.mxu0 %v627
  %923 = vmatmul.bf16.gmra.mxu0 %v177
  %v924 = vpop.f32.mrf.mxu0
  %v925 = vadd.f32 0.0, %v924
  %v926 = vpop.f32.mrf.mxu0
  %927 = vdwg.mxu0
  %928 = vmatpush.bf16.msra.mxu0 %v657
  %929 = vmatpush.bf16.msra.mxu0 %v655
  %930 = vmatpush.bf16.msra.mxu0 %v653
  %931 = vmatpush.bf16.msra.mxu0 %v651
  %932 = vmatpush.bf16.msra.mxu0 %v649
  %933 = vmatpush.bf16.msra.mxu0 %v647
  %934 = vmatpush.bf16.msra.mxu0 %v645
  %935 = vmatpush.bf16.msra.mxu0 %v643
  %936 = vmatmul.bf16.gmra.mxu0 %v178
  %v937 = vpop.f32.mrf.mxu0
  %v938 = vadd.f32 %v925, %v937
  %v939 = vpop.f32.mrf.mxu0
  %940 = vdwg.mxu0
  %941 = vmatpush.bf16.msra.mxu0 %v673
  %942 = vmatpush.bf16.msra.mxu0 %v671
  %943 = vmatpush.bf16.msra.mxu0 %v669
  %944 = vmatpush.bf16.msra.mxu0 %v667
  %945 = vmatpush.bf16.msra.mxu0 %v665
  %946 = vmatpush.bf16.msra.mxu0 %v663
  %947 = vmatpush.bf16.msra.mxu0 %v661
  %948 = vmatpush.bf16.msra.mxu0 %v659
  %949 = vmatmul.bf16.gmra.mxu0 %v179
  %v950 = vpop.f32.mrf.mxu0
  %v951 = vadd.f32 %v938, %v950
  %v952 = vpop.f32.mrf.mxu0
  %953 = vdwg.mxu0
  %954 = vmatpush.bf16.msra.mxu0 %v689
  %955 = vmatpush.bf16.msra.mxu0 %v687
  %956 = vmatpush.bf16.msra.mxu0 %v685
  %957 = vmatpush.bf16.msra.mxu0 %v683
  %958 = vmatpush.bf16.msra.mxu0 %v681
  %959 = vmatpush.bf16.msra.mxu0 %v679
  %960 = vmatpush.bf16.msra.mxu0 %v677
  %961 = vmatpush.bf16.msra.mxu0 %v675
  %962 = vmatmul.bf16.gmra.mxu0 %v180
  %v963 = vpop.f32.mrf.mxu0
  %v964 = vadd.f32 %v951, %v963
  %v965 = vpop.f32.mrf.mxu0
  %966 = vdwg.mxu0
  %967 = vmatpush.bf16.msra.mxu0 %v705
  %968 = vmatpush.bf16.msra.mxu0 %v703
  %969 = vmatpush.bf16.msra.mxu0 %v701
  %970 = vmatpush.bf16.msra.mxu0 %v699
  %971 = vmatpush.bf16.msra.mxu0 %v697
  %972 = vmatpush.bf16.msra.mxu0 %v695
  %973 = vmatpush.bf16.msra.mxu0 %v693
  %974 = vmatpush.bf16.msra.mxu0 %v691
  %975 = vmatmul.bf16.gmra.mxu0 %v181
  %v976 = vpop.f32.mrf.mxu0
  %v977 = vadd.f32 %v964, %v976
  %v978 = vpop.f32.mrf.mxu0
  %979 = vdwg.mxu0
  %980 = vmatpush.bf16.msra.mxu0 %v721
  %981 = vmatpush.bf16.msra.mxu0 %v719
  %982 = vmatpush.bf16.msra.mxu0 %v717
  %983 = vmatpush.bf16.msra.mxu0 %v715
  %984 = vmatpush.bf16.msra.mxu0 %v713
  %985 = vmatpush.bf16.msra.mxu0 %v711
  %986 = vmatpush.bf16.msra.mxu0 %v709
  %987 = vmatpush.bf16.msra.mxu0 %v707
  %988 = vmatmul.bf16.gmra.mxu0 %v182
  %v989 = vpop.f32.mrf.mxu0
  %v990 = vadd.f32 %v977, %v989
  %v991 = vpop.f32.mrf.mxu0
  %992 = vdwg.mxu0
  %993 = vmatpush.bf16.msra.mxu0 %v737
  %994 = vmatpush.bf16.msra.mxu0 %v735
  %995 = vmatpush.bf16.msra.mxu0 %v733
  %996 = vmatpush.bf16.msra.mxu0 %v731
  %997 = vmatpush.bf16.msra.mxu0 %v729
  %998 = vmatpush.bf16.msra.mxu0 %v727
  %999 = vmatpush.bf16.msra.mxu0 %v725
  %1000 = vmatpush.bf16.msra.mxu0 %v723
  %1001 = vmatmul.bf16.gmra.mxu0 %v183
  %v1002 = vpop.f32.mrf.mxu0
  %v1003 = vadd.f32 %v990, %v1002
  %v1004 = vpop.f32.mrf.mxu0
  %1005 = vdwg.mxu0
  %1006 = vmatpush.bf16.msra.mxu0 %v753
  %1007 = vmatpush.bf16.msra.mxu0 %v751
  %1008 = vmatpush.bf16.msra.mxu0 %v749
  %1009 = vmatpush.bf16.msra.mxu0 %v747
  %1010 = vmatpush.bf16.msra.mxu0 %v745
  %1011 = vmatpush.bf16.msra.mxu0 %v743
  %1012 = vmatpush.bf16.msra.mxu0 %v741
  %1013 = vmatpush.bf16.msra.mxu0 %v739
  %1014 = vmatmul.bf16.gmra.mxu0 %v184
  %v1015 = vpop.f32.mrf.mxu0
  %v1016 = vadd.f32 %v1003, %v1015
  %v1017 = vpop.f32.mrf.mxu0
  %1018 = vdwg.mxu0
  %1019 = vmatpush.bf16.msra.mxu0 %v769
  %1020 = vmatpush.bf16.msra.mxu0 %v767
  %1021 = vmatpush.bf16.msra.mxu0 %v765
  %1022 = vmatpush.bf16.msra.mxu0 %v763
  %1023 = vmatpush.bf16.msra.mxu0 %v761
  %1024 = vmatpush.bf16.msra.mxu0 %v759
  %1025 = vmatpush.bf16.msra.mxu0 %v757
  %1026 = vmatpush.bf16.msra.mxu0 %v755
  %1027 = vmatmul.bf16.gmra.mxu0 %v185
  %v1028 = vpop.f32.mrf.mxu0
  %v1029 = vadd.f32 %v1016, %v1028
  %v1030 = vpop.f32.mrf.mxu0
  %1031 = vdwg.mxu0
  %1032 = vmatpush.bf16.msra.mxu0 %v642
  %1033 = vmatpush.bf16.msra.mxu0 %v640
  %1034 = vmatpush.bf16.msra.mxu0 %v638
  %1035 = vmatpush.bf16.msra.mxu0 %v636
  %1036 = vmatpush.bf16.msra.mxu0 %v634
  %1037 = vmatpush.bf16.msra.mxu0 %v632
  %1038 = vmatpush.bf16.msra.mxu0 %v630
  %1039 = vmatpush.bf16.msra.mxu0 %v628
  %1040 = vmatmul.bf16.gmra.mxu0 %v177
  %v1041 = vpop.f32.mrf.mxu0
  %v1042 = vadd.f32 0.0, %v1041
  %v1043 = vpop.f32.mrf.mxu0
  %1044 = vdwg.mxu0
  %1045 = vmatpush.bf16.msra.mxu0 %v658
  %1046 = vmatpush.bf16.msra.mxu0 %v656
  %1047 = vmatpush.bf16.msra.mxu0 %v654
  %1048 = vmatpush.bf16.msra.mxu0 %v652
  %1049 = vmatpush.bf16.msra.mxu0 %v650
  %1050 = vmatpush.bf16.msra.mxu0 %v648
  %1051 = vmatpush.bf16.msra.mxu0 %v646
  %1052 = vmatpush.bf16.msra.mxu0 %v644
  %1053 = vmatmul.bf16.gmra.mxu0 %v178
  %v1054 = vpop.f32.mrf.mxu0
  %v1055 = vadd.f32 %v1042, %v1054
  %v1056 = vpop.f32.mrf.mxu0
  %1057 = vdwg.mxu0
  %1058 = vmatpush.bf16.msra.mxu0 %v674
  %1059 = vmatpush.bf16.msra.mxu0 %v672
  %1060 = vmatpush.bf16.msra.mxu0 %v670
  %1061 = vmatpush.bf16.msra.mxu0 %v668
  %1062 = vmatpush.bf16.msra.mxu0 %v666
  %1063 = vmatpush.bf16.msra.mxu0 %v664
  %1064 = vmatpush.bf16.msra.mxu0 %v662
  %1065 = vmatpush.bf16.msra.mxu0 %v660
  %1066 = vmatmul.bf16.gmra.mxu0 %v179
  %v1067 = vpop.f32.mrf.mxu0
  %v1068 = vadd.f32 %v1055, %v1067
  %v1069 = vpop.f32.mrf.mxu0
  %1070 = vdwg.mxu0
  %1071 = vmatpush.bf16.msra.mxu0 %v690
  %1072 = vmatpush.bf16.msra.mxu0 %v688
  %1073 = vmatpush.bf16.msra.mxu0 %v686
  %1074 = vmatpush.bf16.msra.mxu0 %v684
  %1075 = vmatpush.bf16.msra.mxu0 %v682
  %1076 = vmatpush.bf16.msra.mxu0 %v680
  %1077 = vmatpush.bf16.msra.mxu0 %v678
  %1078 = vmatpush.bf16.msra.mxu0 %v676
  %1079 = vmatmul.bf16.gmra.mxu0 %v180
  %v1080 = vpop.f32.mrf.mxu0
  %v1081 = vadd.f32 %v1068, %v1080
  %v1082 = vpop.f32.mrf.mxu0
  %1083 = vdwg.mxu0
  %1084 = vmatpush.bf16.msra.mxu0 %v706
  %1085 = vmatpush.bf16.msra.mxu0 %v704
  %1086 = vmatpush.bf16.msra.mxu0 %v702
  %1087 = vmatpush.bf16.msra.mxu0 %v700
  %1088 = vmatpush.bf16.msra.mxu0 %v698
  %1089 = vmatpush.bf16.msra.mxu0 %v696
  %1090 = vmatpush.bf16.msra.mxu0 %v694
  %1091 = vmatpush.bf16.msra.mxu0 %v692
  %1092 = vmatmul.bf16.gmra.mxu0 %v181
  %v1093 = vpop.f32.mrf.mxu0
  %v1094 = vadd.f32 %v1081, %v1093
  %v1095 = vpop.f32.mrf.mxu0
  %1096 = vdwg.mxu0
  %1097 = vmatpush.bf16.msra.mxu0 %v722
  %1098 = vmatpush.bf16.msra.mxu0 %v720
  %1099 = vmatpush.bf16.msra.mxu0 %v718
  %1100 = vmatpush.bf16.msra.mxu0 %v716
  %1101 = vmatpush.bf16.msra.mxu0 %v714
  %1102 = vmatpush.bf16.msra.mxu0 %v712
  %1103 = vmatpush.bf16.msra.mxu0 %v710
  %1104 = vmatpush.bf16.msra.mxu0 %v708
  %1105 = vmatmul.bf16.gmra.mxu0 %v182
  %v1106 = vpop.f32.mrf.mxu0
  %v1107 = vadd.f32 %v1094, %v1106
  %v1108 = vpop.f32.mrf.mxu0
  %1109 = vdwg.mxu0
  %1110 = vmatpush.bf16.msra.mxu0 %v738
  %1111 = vmatpush.bf16.msra.mxu0 %v736
  %1112 = vmatpush.bf16.msra.mxu0 %v734
  %1113 = vmatpush.bf16.msra.mxu0 %v732
  %1114 = vmatpush.bf16.msra.mxu0 %v730
  %1115 = vmatpush.bf16.msra.mxu0 %v728
  %1116 = vmatpush.bf16.msra.mxu0 %v726
  %1117 = vmatpush.bf16.msra.mxu0 %v724
  %1118 = vmatmul.bf16.gmra.mxu0 %v183
  %v1119 = vpop.f32.mrf.mxu0
  %v1120 = vadd.f32 %v1107, %v1119
  %v1121 = vpop.f32.mrf.mxu0
  %1122 = vdwg.mxu0
  %1123 = vmatpush.bf16.msra.mxu0 %v754
  %1124 = vmatpush.bf16.msra.mxu0 %v752
  %1125 = vmatpush.bf16.msra.mxu0 %v750
  %1126 = vmatpush.bf16.msra.mxu0 %v748
  %1127 = vmatpush.bf16.msra.mxu0 %v746
  %1128 = vmatpush.bf16.msra.mxu0 %v744
  %1129 = vmatpush.bf16.msra.mxu0 %v742
  %1130 = vmatpush.bf16.msra.mxu0 %v740
  %1131 = vmatmul.bf16.gmra.mxu0 %v184
  %v1132 = vpop.f32.mrf.mxu0
  %v1133 = vadd.f32 %v1120, %v1132
  %v1134 = vpop.f32.mrf.mxu0
  %1135 = vdwg.mxu0
  %1136 = vmatpush.bf16.msra.mxu0 %v770
  %1137 = vmatpush.bf16.msra.mxu0 %v768
  %1138 = vmatpush.bf16.msra.mxu0 %v766
  %1139 = vmatpush.bf16.msra.mxu0 %v764
  %1140 = vmatpush.bf16.msra.mxu0 %v762
  %1141 = vmatpush.bf16.msra.mxu0 %v760
  %1142 = vmatpush.bf16.msra.mxu0 %v758
  %1143 = vmatpush.bf16.msra.mxu0 %v756
  %1144 = vmatmul.bf16.gmra.mxu0 %v185
  %v1145 = vpop.f32.mrf.mxu0
  %v1146 = vadd.f32 %v1133, %v1145
  %v1147 = vpop.f32.mrf.mxu0
  %1148 = vdwg.mxu0
  %s1149 = scalar_lea.vmem %s0, 36
  %v1150 = vld [vmem:[%s1149] sm:$0xff]
  %v1151 = vld [vmem:[%s1149 + $0x8] sm:$0xff]
  %v1152 = vld [vmem:[%s1149 + $0x10] sm:$0xff]
  %v1153 = vld [vmem:[%s1149 + $0x18] sm:$0xff]
  %v1154 = vld [vmem:[%s1149 + $0x20] sm:$0xf]
  %v1160 = vunpack.c.l.b16 %v1150
  %v1161 = vunpack.c.h.b16 %v1150
  %v1162 = vunpack.c.l.b16 %v1151
  %v1163 = vunpack.c.h.b16 %v1151
  %v1164 = vunpack.c.l.b16 %v1152
  %v1165 = vunpack.c.h.b16 %v1152
  %v1166 = vunpack.c.l.b16 %v1153
  %v1167 = vunpack.c.h.b16 %v1153
  %v1168 = vunpack.c.l.b16 %v1154
  %v1169 = vpack.c.b16 %v1160, %v1160
  %v1170 = vpack.c.b16 %v1161, %v1161
  %v1171 = vpack.c.b16 %v1162, %v1162
  %v1172 = vpack.c.b16 %v1163, %v1163
  %v1173 = vpack.c.b16 %v1164, %v1164
  %v1174 = vpack.c.b16 %v1165, %v1165
  %v1175 = vpack.c.b16 %v1166, %v1166
  %v1176 = vpack.c.b16 %v1167, %v1167
  %v1177 = vpack.c.b16 %v1168, %v1168
  %1187 = vmatpush.bf16.msra.mxu0 %v641
  %1188 = vmatpush.bf16.msra.mxu0 %v639
  %1189 = vmatpush.bf16.msra.mxu0 %v637
  %1190 = vmatpush.bf16.msra.mxu0 %v635
  %1191 = vmatpush.bf16.msra.mxu0 %v633
  %1192 = vmatpush.bf16.msra.mxu0 %v631
  %1193 = vmatpush.bf16.msra.mxu0 %v629
  %1194 = vmatpush.bf16.msra.mxu0 %v627
  %1195 = vmatmul.bf16.gmra.mxu0 %v1169
  %v1196 = vpop.f32.mrf.mxu0
  %v1197 = vadd.f32 0.0, %v1196
  %v1198 = vpop.f32.mrf.mxu0
  %1199 = vdwg.mxu0
  %1200 = vmatpush.bf16.msra.mxu0 %v657
  %1201 = vmatpush.bf16.msra.mxu0 %v655
  %1202 = vmatpush.bf16.msra.mxu0 %v653
  %1203 = vmatpush.bf16.msra.mxu0 %v651
  %1204 = vmatpush.bf16.msra.mxu0 %v649
  %1205 = vmatpush.bf16.msra.mxu0 %v647
  %1206 = vmatpush.bf16.msra.mxu0 %v645
  %1207 = vmatpush.bf16.msra.mxu0 %v643
  %1208 = vmatmul.bf16.gmra.mxu0 %v1170
  %v1209 = vpop.f32.mrf.mxu0
  %v1210 = vadd.f32 %v1197, %v1209
  %v1211 = vpop.f32.mrf.mxu0
  %1212 = vdwg.mxu0
  %1213 = vmatpush.bf16.msra.mxu0 %v673
  %1214 = vmatpush.bf16.msra.mxu0 %v671
  %1215 = vmatpush.bf16.msra.mxu0 %v669
  %1216 = vmatpush.bf16.msra.mxu0 %v667
  %1217 = vmatpush.bf16.msra.mxu0 %v665
  %1218 = vmatpush.bf16.msra.mxu0 %v663
  %1219 = vmatpush.bf16.msra.mxu0 %v661
  %1220 = vmatpush.bf16.msra.mxu0 %v659
  %1221 = vmatmul.bf16.gmra.mxu0 %v1171
  %v1222 = vpop.f32.mrf.mxu0
  %v1223 = vadd.f32 %v1210, %v1222
  %v1224 = vpop.f32.mrf.mxu0
  %1225 = vdwg.mxu0
  %1226 = vmatpush.bf16.msra.mxu0 %v689
  %1227 = vmatpush.bf16.msra.mxu0 %v687
  %1228 = vmatpush.bf16.msra.mxu0 %v685
  %1229 = vmatpush.bf16.msra.mxu0 %v683
  %1230 = vmatpush.bf16.msra.mxu0 %v681
  %1231 = vmatpush.bf16.msra.mxu0 %v679
  %1232 = vmatpush.bf16.msra.mxu0 %v677
  %1233 = vmatpush.bf16.msra.mxu0 %v675
  %1234 = vmatmul.bf16.gmra.mxu0 %v1172
  %v1235 = vpop.f32.mrf.mxu0
  %v1236 = vadd.f32 %v1223, %v1235
  %v1237 = vpop.f32.mrf.mxu0
  %1238 = vdwg.mxu0
  %1239 = vmatpush.bf16.msra.mxu0 %v705
  %1240 = vmatpush.bf16.msra.mxu0 %v703
  %1241 = vmatpush.bf16.msra.mxu0 %v701
  %1242 = vmatpush.bf16.msra.mxu0 %v699
  %1243 = vmatpush.bf16.msra.mxu0 %v697
  %1244 = vmatpush.bf16.msra.mxu0 %v695
  %1245 = vmatpush.bf16.msra.mxu0 %v693
  %1246 = vmatpush.bf16.msra.mxu0 %v691
  %1247 = vmatmul.bf16.gmra.mxu0 %v1173
  %v1248 = vpop.f32.mrf.mxu0
  %v1249 = vadd.f32 %v1236, %v1248
  %v1250 = vpop.f32.mrf.mxu0
  %1251 = vdwg.mxu0
  %1252 = vmatpush.bf16.msra.mxu0 %v721
  %1253 = vmatpush.bf16.msra.mxu0 %v719
  %1254 = vmatpush.bf16.msra.mxu0 %v717
  %1255 = vmatpush.bf16.msra.mxu0 %v715
  %1256 = vmatpush.bf16.msra.mxu0 %v713
  %1257 = vmatpush.bf16.msra.mxu0 %v711
  %1258 = vmatpush.bf16.msra.mxu0 %v709
  %1259 = vmatpush.bf16.msra.mxu0 %v707
  %1260 = vmatmul.bf16.gmra.mxu0 %v1174
  %v1261 = vpop.f32.mrf.mxu0
  %v1262 = vadd.f32 %v1249, %v1261
  %v1263 = vpop.f32.mrf.mxu0
  %1264 = vdwg.mxu0
  %1265 = vmatpush.bf16.msra.mxu0 %v737
  %1266 = vmatpush.bf16.msra.mxu0 %v735
  %1267 = vmatpush.bf16.msra.mxu0 %v733
  %1268 = vmatpush.bf16.msra.mxu0 %v731
  %1269 = vmatpush.bf16.msra.mxu0 %v729
  %1270 = vmatpush.bf16.msra.mxu0 %v727
  %1271 = vmatpush.bf16.msra.mxu0 %v725
  %1272 = vmatpush.bf16.msra.mxu0 %v723
  %1273 = vmatmul.bf16.gmra.mxu0 %v1175
  %v1274 = vpop.f32.mrf.mxu0
  %v1275 = vadd.f32 %v1262, %v1274
  %v1276 = vpop.f32.mrf.mxu0
  %1277 = vdwg.mxu0
  %1278 = vmatpush.bf16.msra.mxu0 %v753
  %1279 = vmatpush.bf16.msra.mxu0 %v751
  %1280 = vmatpush.bf16.msra.mxu0 %v749
  %1281 = vmatpush.bf16.msra.mxu0 %v747
  %1282 = vmatpush.bf16.msra.mxu0 %v745
  %1283 = vmatpush.bf16.msra.mxu0 %v743
  %1284 = vmatpush.bf16.msra.mxu0 %v741
  %1285 = vmatpush.bf16.msra.mxu0 %v739
  %1286 = vmatmul.bf16.gmra.mxu0 %v1176
  %v1287 = vpop.f32.mrf.mxu0
  %v1288 = vadd.f32 %v1275, %v1287
  %v1289 = vpop.f32.mrf.mxu0
  %1290 = vdwg.mxu0
  %1291 = vmatpush.bf16.msra.mxu0 %v769
  %1292 = vmatpush.bf16.msra.mxu0 %v767
  %1293 = vmatpush.bf16.msra.mxu0 %v765
  %1294 = vmatpush.bf16.msra.mxu0 %v763
  %1295 = vmatpush.bf16.msra.mxu0 %v761
  %1296 = vmatpush.bf16.msra.mxu0 %v759
  %1297 = vmatpush.bf16.msra.mxu0 %v757
  %1298 = vmatpush.bf16.msra.mxu0 %v755
  %1299 = vmatmul.bf16.gmra.mxu0 %v1177
  %v1300 = vpop.f32.mrf.mxu0
  %v1301 = vadd.f32 %v1288, %v1300
  %v1302 = vpop.f32.mrf.mxu0
  %1303 = vdwg.mxu0
  %1304 = vmatpush.bf16.msra.mxu0 %v642
  %1305 = vmatpush.bf16.msra.mxu0 %v640
  %1306 = vmatpush.bf16.msra.mxu0 %v638
  %1307 = vmatpush.bf16.msra.mxu0 %v636
  %1308 = vmatpush.bf16.msra.mxu0 %v634
  %1309 = vmatpush.bf16.msra.mxu0 %v632
  %1310 = vmatpush.bf16.msra.mxu0 %v630
  %1311 = vmatpush.bf16.msra.mxu0 %v628
  %1312 = vmatmul.bf16.gmra.mxu0 %v1169
  %v1313 = vpop.f32.mrf.mxu0
  %v1314 = vadd.f32 0.0, %v1313
  %v1315 = vpop.f32.mrf.mxu0
  %1316 = vdwg.mxu0
  %1317 = vmatpush.bf16.msra.mxu0 %v658
  %1318 = vmatpush.bf16.msra.mxu0 %v656
  %1319 = vmatpush.bf16.msra.mxu0 %v654
  %1320 = vmatpush.bf16.msra.mxu0 %v652
  %1321 = vmatpush.bf16.msra.mxu0 %v650
  %1322 = vmatpush.bf16.msra.mxu0 %v648
  %1323 = vmatpush.bf16.msra.mxu0 %v646
  %1324 = vmatpush.bf16.msra.mxu0 %v644
  %1325 = vmatmul.bf16.gmra.mxu0 %v1170
  %v1326 = vpop.f32.mrf.mxu0
  %v1327 = vadd.f32 %v1314, %v1326
  %v1328 = vpop.f32.mrf.mxu0
  %1329 = vdwg.mxu0
  %1330 = vmatpush.bf16.msra.mxu0 %v674
  %1331 = vmatpush.bf16.msra.mxu0 %v672
  %1332 = vmatpush.bf16.msra.mxu0 %v670
  %1333 = vmatpush.bf16.msra.mxu0 %v668
  %1334 = vmatpush.bf16.msra.mxu0 %v666
  %1335 = vmatpush.bf16.msra.mxu0 %v664
  %1336 = vmatpush.bf16.msra.mxu0 %v662
  %1337 = vmatpush.bf16.msra.mxu0 %v660
  %1338 = vmatmul.bf16.gmra.mxu0 %v1171
  %v1339 = vpop.f32.mrf.mxu0
  %v1340 = vadd.f32 %v1327, %v1339
  %v1341 = vpop.f32.mrf.mxu0
  %1342 = vdwg.mxu0
  %1343 = vmatpush.bf16.msra.mxu0 %v690
  %1344 = vmatpush.bf16.msra.mxu0 %v688
  %1345 = vmatpush.bf16.msra.mxu0 %v686
  %1346 = vmatpush.bf16.msra.mxu0 %v684
  %1347 = vmatpush.bf16.msra.mxu0 %v682
  %1348 = vmatpush.bf16.msra.mxu0 %v680
  %1349 = vmatpush.bf16.msra.mxu0 %v678
  %1350 = vmatpush.bf16.msra.mxu0 %v676
  %1351 = vmatmul.bf16.gmra.mxu0 %v1172
  %v1352 = vpop.f32.mrf.mxu0
  %v1353 = vadd.f32 %v1340, %v1352
  %v1354 = vpop.f32.mrf.mxu0
  %1355 = vdwg.mxu0
  %1356 = vmatpush.bf16.msra.mxu0 %v706
  %1357 = vmatpush.bf16.msra.mxu0 %v704
  %1358 = vmatpush.bf16.msra.mxu0 %v702
  %1359 = vmatpush.bf16.msra.mxu0 %v700
  %1360 = vmatpush.bf16.msra.mxu0 %v698
  %1361 = vmatpush.bf16.msra.mxu0 %v696
  %1362 = vmatpush.bf16.msra.mxu0 %v694
  %1363 = vmatpush.bf16.msra.mxu0 %v692
  %1364 = vmatmul.bf16.gmra.mxu0 %v1173
  %v1365 = vpop.f32.mrf.mxu0
  %v1366 = vadd.f32 %v1353, %v1365
  %v1367 = vpop.f32.mrf.mxu0
  %1368 = vdwg.mxu0
  %1369 = vmatpush.bf16.msra.mxu0 %v722
  %1370 = vmatpush.bf16.msra.mxu0 %v720
  %1371 = vmatpush.bf16.msra.mxu0 %v718
  %1372 = vmatpush.bf16.msra.mxu0 %v716
  %1373 = vmatpush.bf16.msra.mxu0 %v714
  %1374 = vmatpush.bf16.msra.mxu0 %v712
  %1375 = vmatpush.bf16.msra.mxu0 %v710
  %1376 = vmatpush.bf16.msra.mxu0 %v708
  %1377 = vmatmul.bf16.gmra.mxu0 %v1174
  %v1378 = vpop.f32.mrf.mxu0
  %v1379 = vadd.f32 %v1366, %v1378
  %v1380 = vpop.f32.mrf.mxu0
  %1381 = vdwg.mxu0
  %1382 = vmatpush.bf16.msra.mxu0 %v738
  %1383 = vmatpush.bf16.msra.mxu0 %v736
  %1384 = vmatpush.bf16.msra.mxu0 %v734
  %1385 = vmatpush.bf16.msra.mxu0 %v732
  %1386 = vmatpush.bf16.msra.mxu0 %v730
  %1387 = vmatpush.bf16.msra.mxu0 %v728
  %1388 = vmatpush.bf16.msra.mxu0 %v726
  %1389 = vmatpush.bf16.msra.mxu0 %v724
  %1390 = vmatmul.bf16.gmra.mxu0 %v1175
  %v1391 = vpop.f32.mrf.mxu0
  %v1392 = vadd.f32 %v1379, %v1391
  %v1393 = vpop.f32.mrf.mxu0
  %1394 = vdwg.mxu0
  %1395 = vmatpush.bf16.msra.mxu0 %v754
  %1396 = vmatpush.bf16.msra.mxu0 %v752
  %1397 = vmatpush.bf16.msra.mxu0 %v750
  %1398 = vmatpush.bf16.msra.mxu0 %v748
  %1399 = vmatpush.bf16.msra.mxu0 %v746
  %1400 = vmatpush.bf16.msra.mxu0 %v744
  %1401 = vmatpush.bf16.msra.mxu0 %v742
  %1402 = vmatpush.bf16.msra.mxu0 %v740
  %1403 = vmatmul.bf16.gmra.mxu0 %v1176
  %v1404 = vpop.f32.mrf.mxu0
  %v1405 = vadd.f32 %v1392, %v1404
  %v1406 = vpop.f32.mrf.mxu0
  %1407 = vdwg.mxu0
  %1408 = vmatpush.bf16.msra.mxu0 %v770
  %1409 = vmatpush.bf16.msra.mxu0 %v768
  %1410 = vmatpush.bf16.msra.mxu0 %v766
  %1411 = vmatpush.bf16.msra.mxu0 %v764
  %1412 = vmatpush.bf16.msra.mxu0 %v762
  %1413 = vmatpush.bf16.msra.mxu0 %v760
  %1414 = vmatpush.bf16.msra.mxu0 %v758
  %1415 = vmatpush.bf16.msra.mxu0 %v756
  %1416 = vmatmul.bf16.gmra.mxu0 %v1177
  %v1417 = vpop.f32.mrf.mxu0
  %v1418 = vadd.f32 %v1405, %v1417
  %v1419 = vpop.f32.mrf.mxu0
  %1420 = vdwg.mxu0
  %v1421 = vmax.f32 %v1029, %v1301
  %v1422 = vmax.f32 %v1146, %v1418
  %s1423 = scalar_lea.vmem %s0, 72
  %v1424 = vld [vmem:[%s1423] sm:$0xff]
  %v1425 = vld [vmem:[%s1423 + $0x8] sm:$0xff]
  %v1426 = vld [vmem:[%s1423 + $0x10] sm:$0xff]
  %v1427 = vld [vmem:[%s1423 + $0x18] sm:$0xff]
  %v1428 = vld [vmem:[%s1423 + $0x20] sm:$0xf]
  %v1434 = vunpack.c.l.b16 %v1424
  %v1435 = vunpack.c.h.b16 %v1424
  %v1436 = vunpack.c.l.b16 %v1425
  %v1437 = vunpack.c.h.b16 %v1425
  %v1438 = vunpack.c.l.b16 %v1426
  %v1439 = vunpack.c.h.b16 %v1426
  %v1440 = vunpack.c.l.b16 %v1427
  %v1441 = vunpack.c.h.b16 %v1427
  %v1442 = vunpack.c.l.b16 %v1428
  %v1443 = vpack.c.b16 %v1434, %v1434
  %v1444 = vpack.c.b16 %v1435, %v1435
  %v1445 = vpack.c.b16 %v1436, %v1436
  %v1446 = vpack.c.b16 %v1437, %v1437
  %v1447 = vpack.c.b16 %v1438, %v1438
  %v1448 = vpack.c.b16 %v1439, %v1439
  %v1449 = vpack.c.b16 %v1440, %v1440
  %v1450 = vpack.c.b16 %v1441, %v1441
  %v1451 = vpack.c.b16 %v1442, %v1442
  %1461 = vmatpush.bf16.msra.mxu0 %v641
  %1462 = vmatpush.bf16.msra.mxu0 %v639
  %1463 = vmatpush.bf16.msra.mxu0 %v637
  %1464 = vmatpush.bf16.msra.mxu0 %v635
  %1465 = vmatpush.bf16.msra.mxu0 %v633
  %1466 = vmatpush.bf16.msra.mxu0 %v631
  %1467 = vmatpush.bf16.msra.mxu0 %v629
  %1468 = vmatpush.bf16.msra.mxu0 %v627
  %1469 = vmatmul.bf16.gmra.mxu0 %v1443
  %v1470 = vpop.f32.mrf.mxu0
  %v1471 = vadd.f32 0.0, %v1470
  %v1472 = vpop.f32.mrf.mxu0
  %1473 = vdwg.mxu0
  %1474 = vmatpush.bf16.msra.mxu0 %v657
  %1475 = vmatpush.bf16.msra.mxu0 %v655
  %1476 = vmatpush.bf16.msra.mxu0 %v653
  %1477 = vmatpush.bf16.msra.mxu0 %v651
  %1478 = vmatpush.bf16.msra.mxu0 %v649
  %1479 = vmatpush.bf16.msra.mxu0 %v647
  %1480 = vmatpush.bf16.msra.mxu0 %v645
  %1481 = vmatpush.bf16.msra.mxu0 %v643
  %1482 = vmatmul.bf16.gmra.mxu0 %v1444
  %v1483 = vpop.f32.mrf.mxu0
  %v1484 = vadd.f32 %v1471, %v1483
  %v1485 = vpop.f32.mrf.mxu0
  %1486 = vdwg.mxu0
  %1487 = vmatpush.bf16.msra.mxu0 %v673
  %1488 = vmatpush.bf16.msra.mxu0 %v671
  %1489 = vmatpush.bf16.msra.mxu0 %v669
  %1490 = vmatpush.bf16.msra.mxu0 %v667
  %1491 = vmatpush.bf16.msra.mxu0 %v665
  %1492 = vmatpush.bf16.msra.mxu0 %v663
  %1493 = vmatpush.bf16.msra.mxu0 %v661
  %1494 = vmatpush.bf16.msra.mxu0 %v659
  %1495 = vmatmul.bf16.gmra.mxu0 %v1445
  %v1496 = vpop.f32.mrf.mxu0
  %v1497 = vadd.f32 %v1484, %v1496
  %v1498 = vpop.f32.mrf.mxu0
  %1499 = vdwg.mxu0
  %1500 = vmatpush.bf16.msra.mxu0 %v689
  %1501 = vmatpush.bf16.msra.mxu0 %v687
  %1502 = vmatpush.bf16.msra.mxu0 %v685
  %1503 = vmatpush.bf16.msra.mxu0 %v683
  %1504 = vmatpush.bf16.msra.mxu0 %v681
  %1505 = vmatpush.bf16.msra.mxu0 %v679
  %1506 = vmatpush.bf16.msra.mxu0 %v677
  %1507 = vmatpush.bf16.msra.mxu0 %v675
  %1508 = vmatmul.bf16.gmra.mxu0 %v1446
  %v1509 = vpop.f32.mrf.mxu0
  %v1510 = vadd.f32 %v1497, %v1509
  %v1511 = vpop.f32.mrf.mxu0
  %1512 = vdwg.mxu0
  %1513 = vmatpush.bf16.msra.mxu0 %v705
  %1514 = vmatpush.bf16.msra.mxu0 %v703
  %1515 = vmatpush.bf16.msra.mxu0 %v701
  %1516 = vmatpush.bf16.msra.mxu0 %v699
  %1517 = vmatpush.bf16.msra.mxu0 %v697
  %1518 = vmatpush.bf16.msra.mxu0 %v695
  %1519 = vmatpush.bf16.msra.mxu0 %v693
  %1520 = vmatpush.bf16.msra.mxu0 %v691
  %1521 = vmatmul.bf16.gmra.mxu0 %v1447
  %v1522 = vpop.f32.mrf.mxu0
  %v1523 = vadd.f32 %v1510, %v1522
  %v1524 = vpop.f32.mrf.mxu0
  %1525 = vdwg.mxu0
  %1526 = vmatpush.bf16.msra.mxu0 %v721
  %1527 = vmatpush.bf16.msra.mxu0 %v719
  %1528 = vmatpush.bf16.msra.mxu0 %v717
  %1529 = vmatpush.bf16.msra.mxu0 %v715
  %1530 = vmatpush.bf16.msra.mxu0 %v713
  %1531 = vmatpush.bf16.msra.mxu0 %v711
  %1532 = vmatpush.bf16.msra.mxu0 %v709
  %1533 = vmatpush.bf16.msra.mxu0 %v707
  %1534 = vmatmul.bf16.gmra.mxu0 %v1448
  %v1535 = vpop.f32.mrf.mxu0
  %v1536 = vadd.f32 %v1523, %v1535
  %v1537 = vpop.f32.mrf.mxu0
  %1538 = vdwg.mxu0
  %1539 = vmatpush.bf16.msra.mxu0 %v737
  %1540 = vmatpush.bf16.msra.mxu0 %v735
  %1541 = vmatpush.bf16.msra.mxu0 %v733
  %1542 = vmatpush.bf16.msra.mxu0 %v731
  %1543 = vmatpush.bf16.msra.mxu0 %v729
  %1544 = vmatpush.bf16.msra.mxu0 %v727
  %1545 = vmatpush.bf16.msra.mxu0 %v725
  %1546 = vmatpush.bf16.msra.mxu0 %v723
  %1547 = vmatmul.bf16.gmra.mxu0 %v1449
  %v1548 = vpop.f32.mrf.mxu0
  %v1549 = vadd.f32 %v1536, %v1548
  %v1550 = vpop.f32.mrf.mxu0
  %1551 = vdwg.mxu0
  %1552 = vmatpush.bf16.msra.mxu0 %v753
  %1553 = vmatpush.bf16.msra.mxu0 %v751
  %1554 = vmatpush.bf16.msra.mxu0 %v749
  %1555 = vmatpush.bf16.msra.mxu0 %v747
  %1556 = vmatpush.bf16.msra.mxu0 %v745
  %1557 = vmatpush.bf16.msra.mxu0 %v743
  %1558 = vmatpush.bf16.msra.mxu0 %v741
  %1559 = vmatpush.bf16.msra.mxu0 %v739
  %1560 = vmatmul.bf16.gmra.mxu0 %v1450
  %v1561 = vpop.f32.mrf.mxu0
  %v1562 = vadd.f32 %v1549, %v1561
  %v1563 = vpop.f32.mrf.mxu0
  %1564 = vdwg.mxu0
  %1565 = vmatpush.bf16.msra.mxu0 %v769
  %1566 = vmatpush.bf16.msra.mxu0 %v767
  %1567 = vmatpush.bf16.msra.mxu0 %v765
  %1568 = vmatpush.bf16.msra.mxu0 %v763
  %1569 = vmatpush.bf16.msra.mxu0 %v761
  %1570 = vmatpush.bf16.msra.mxu0 %v759
  %1571 = vmatpush.bf16.msra.mxu0 %v757
  %1572 = vmatpush.bf16.msra.mxu0 %v755
  %1573 = vmatmul.bf16.gmra.mxu0 %v1451
  %v1574 = vpop.f32.mrf.mxu0
  %v1575 = vadd.f32 %v1562, %v1574
  %v1576 = vpop.f32.mrf.mxu0
  %1577 = vdwg.mxu0
  %1578 = vmatpush.bf16.msra.mxu0 %v642
  %1579 = vmatpush.bf16.msra.mxu0 %v640
  %1580 = vmatpush.bf16.msra.mxu0 %v638
  %1581 = vmatpush.bf16.msra.mxu0 %v636
  %1582 = vmatpush.bf16.msra.mxu0 %v634
  %1583 = vmatpush.bf16.msra.mxu0 %v632
  %1584 = vmatpush.bf16.msra.mxu0 %v630
  %1585 = vmatpush.bf16.msra.mxu0 %v628
  %1586 = vmatmul.bf16.gmra.mxu0 %v1443
  %v1587 = vpop.f32.mrf.mxu0
  %v1588 = vadd.f32 0.0, %v1587
  %v1589 = vpop.f32.mrf.mxu0
  %1590 = vdwg.mxu0
  %1591 = vmatpush.bf16.msra.mxu0 %v658
  %1592 = vmatpush.bf16.msra.mxu0 %v656
  %1593 = vmatpush.bf16.msra.mxu0 %v654
  %1594 = vmatpush.bf16.msra.mxu0 %v652
  %1595 = vmatpush.bf16.msra.mxu0 %v650
  %1596 = vmatpush.bf16.msra.mxu0 %v648
  %1597 = vmatpush.bf16.msra.mxu0 %v646
  %1598 = vmatpush.bf16.msra.mxu0 %v644
  %1599 = vmatmul.bf16.gmra.mxu0 %v1444
  %v1600 = vpop.f32.mrf.mxu0
  %v1601 = vadd.f32 %v1588, %v1600
  %v1602 = vpop.f32.mrf.mxu0
  %1603 = vdwg.mxu0
  %1604 = vmatpush.bf16.msra.mxu0 %v674
  %1605 = vmatpush.bf16.msra.mxu0 %v672
  %1606 = vmatpush.bf16.msra.mxu0 %v670
  %1607 = vmatpush.bf16.msra.mxu0 %v668
  %1608 = vmatpush.bf16.msra.mxu0 %v666
  %1609 = vmatpush.bf16.msra.mxu0 %v664
  %1610 = vmatpush.bf16.msra.mxu0 %v662
  %1611 = vmatpush.bf16.msra.mxu0 %v660
  %1612 = vmatmul.bf16.gmra.mxu0 %v1445
  %v1613 = vpop.f32.mrf.mxu0
  %v1614 = vadd.f32 %v1601, %v1613
  %v1615 = vpop.f32.mrf.mxu0
  %1616 = vdwg.mxu0
  %1617 = vmatpush.bf16.msra.mxu0 %v690
  %1618 = vmatpush.bf16.msra.mxu0 %v688
  %1619 = vmatpush.bf16.msra.mxu0 %v686
  %1620 = vmatpush.bf16.msra.mxu0 %v684
  %1621 = vmatpush.bf16.msra.mxu0 %v682
  %1622 = vmatpush.bf16.msra.mxu0 %v680
  %1623 = vmatpush.bf16.msra.mxu0 %v678
  %1624 = vmatpush.bf16.msra.mxu0 %v676
  %1625 = vmatmul.bf16.gmra.mxu0 %v1446
  %v1626 = vpop.f32.mrf.mxu0
  %v1627 = vadd.f32 %v1614, %v1626
  %v1628 = vpop.f32.mrf.mxu0
  %1629 = vdwg.mxu0
  %1630 = vmatpush.bf16.msra.mxu0 %v706
  %1631 = vmatpush.bf16.msra.mxu0 %v704
  %1632 = vmatpush.bf16.msra.mxu0 %v702
  %1633 = vmatpush.bf16.msra.mxu0 %v700
  %1634 = vmatpush.bf16.msra.mxu0 %v698
  %1635 = vmatpush.bf16.msra.mxu0 %v696
  %1636 = vmatpush.bf16.msra.mxu0 %v694
  %1637 = vmatpush.bf16.msra.mxu0 %v692
  %1638 = vmatmul.bf16.gmra.mxu0 %v1447
  %v1639 = vpop.f32.mrf.mxu0
  %v1640 = vadd.f32 %v1627, %v1639
  %v1641 = vpop.f32.mrf.mxu0
  %1642 = vdwg.mxu0
  %1643 = vmatpush.bf16.msra.mxu0 %v722
  %1644 = vmatpush.bf16.msra.mxu0 %v720
  %1645 = vmatpush.bf16.msra.mxu0 %v718
  %1646 = vmatpush.bf16.msra.mxu0 %v716
  %1647 = vmatpush.bf16.msra.mxu0 %v714
  %1648 = vmatpush.bf16.msra.mxu0 %v712
  %1649 = vmatpush.bf16.msra.mxu0 %v710
  %1650 = vmatpush.bf16.msra.mxu0 %v708
  %1651 = vmatmul.bf16.gmra.mxu0 %v1448
  %v1652 = vpop.f32.mrf.mxu0
  %v1653 = vadd.f32 %v1640, %v1652
  %v1654 = vpop.f32.mrf.mxu0
  %1655 = vdwg.mxu0
  %1656 = vmatpush.bf16.msra.mxu0 %v738
  %1657 = vmatpush.bf16.msra.mxu0 %v736
  %1658 = vmatpush.bf16.msra.mxu0 %v734
  %1659 = vmatpush.bf16.msra.mxu0 %v732
  %1660 = vmatpush.bf16.msra.mxu0 %v730
  %1661 = vmatpush.bf16.msra.mxu0 %v728
  %1662 = vmatpush.bf16.msra.mxu0 %v726
  %1663 = vmatpush.bf16.msra.mxu0 %v724
  %1664 = vmatmul.bf16.gmra.mxu0 %v1449
  %v1665 = vpop.f32.mrf.mxu0
  %v1666 = vadd.f32 %v1653, %v1665
  %v1667 = vpop.f32.mrf.mxu0
  %1668 = vdwg.mxu0
  %1669 = vmatpush.bf16.msra.mxu0 %v754
  %1670 = vmatpush.bf16.msra.mxu0 %v752
  %1671 = vmatpush.bf16.msra.mxu0 %v750
  %1672 = vmatpush.bf16.msra.mxu0 %v748
  %1673 = vmatpush.bf16.msra.mxu0 %v746
  %1674 = vmatpush.bf16.msra.mxu0 %v744
  %1675 = vmatpush.bf16.msra.mxu0 %v742
  %1676 = vmatpush.bf16.msra.mxu0 %v740
  %1677 = vmatmul.bf16.gmra.mxu0 %v1450
  %v1678 = vpop.f32.mrf.mxu0
  %v1679 = vadd.f32 %v1666, %v1678
  %v1680 = vpop.f32.mrf.mxu0
  %1681 = vdwg.mxu0
  %1682 = vmatpush.bf16.msra.mxu0 %v770
  %1683 = vmatpush.bf16.msra.mxu0 %v768
  %1684 = vmatpush.bf16.msra.mxu0 %v766
  %1685 = vmatpush.bf16.msra.mxu0 %v764
  %1686 = vmatpush.bf16.msra.mxu0 %v762
  %1687 = vmatpush.bf16.msra.mxu0 %v760
  %1688 = vmatpush.bf16.msra.mxu0 %v758
  %1689 = vmatpush.bf16.msra.mxu0 %v756
  %1690 = vmatmul.bf16.gmra.mxu0 %v1451
  %v1691 = vpop.f32.mrf.mxu0
  %v1692 = vadd.f32 %v1679, %v1691
  %v1693 = vpop.f32.mrf.mxu0
  %1694 = vdwg.mxu0
  %v1695 = vmax.f32 %v1421, %v1575
  %v1696 = vmax.f32 %v1422, %v1692
  %s1697 = scalar_lea.vmem %s0, 108
  %v1698 = vld [vmem:[%s1697] sm:$0xff]
  %v1699 = vld [vmem:[%s1697 + $0x8] sm:$0xff]
  %v1700 = vld [vmem:[%s1697 + $0x10] sm:$0xff]
  %v1701 = vld [vmem:[%s1697 + $0x18] sm:$0xff]
  %v1702 = vld [vmem:[%s1697 + $0x20] sm:$0xf]
  %v1708 = vunpack.c.l.b16 %v1698
  %v1709 = vunpack.c.h.b16 %v1698
  %v1710 = vunpack.c.l.b16 %v1699
  %v1711 = vunpack.c.h.b16 %v1699
  %v1712 = vunpack.c.l.b16 %v1700
  %v1713 = vunpack.c.h.b16 %v1700
  %v1714 = vunpack.c.l.b16 %v1701
  %v1715 = vunpack.c.h.b16 %v1701
  %v1716 = vunpack.c.l.b16 %v1702
  %v1717 = vpack.c.b16 %v1708, %v1708
  %v1718 = vpack.c.b16 %v1709, %v1709
  %v1719 = vpack.c.b16 %v1710, %v1710
  %v1720 = vpack.c.b16 %v1711, %v1711
  %v1721 = vpack.c.b16 %v1712, %v1712
  %v1722 = vpack.c.b16 %v1713, %v1713
  %v1723 = vpack.c.b16 %v1714, %v1714
  %v1724 = vpack.c.b16 %v1715, %v1715
  %v1725 = vpack.c.b16 %v1716, %v1716
  %1735 = vmatpush.bf16.msra.mxu0 %v641
  %1736 = vmatpush.bf16.msra.mxu0 %v639
  %1737 = vmatpush.bf16.msra.mxu0 %v637
  %1738 = vmatpush.bf16.msra.mxu0 %v635
  %1739 = vmatpush.bf16.msra.mxu0 %v633
  %1740 = vmatpush.bf16.msra.mxu0 %v631
  %1741 = vmatpush.bf16.msra.mxu0 %v629
  %1742 = vmatpush.bf16.msra.mxu0 %v627
  %1743 = vmatmul.bf16.gmra.mxu0 %v1717
  %v1744 = vpop.f32.mrf.mxu0
  %v1745 = vadd.f32 0.0, %v1744
  %v1746 = vpop.f32.mrf.mxu0
  %1747 = vdwg.mxu0
  %1748 = vmatpush.bf16.msra.mxu0 %v657
  %1749 = vmatpush.bf16.msra.mxu0 %v655
  %1750 = vmatpush.bf16.msra.mxu0 %v653
  %1751 = vmatpush.bf16.msra.mxu0 %v651
  %1752 = vmatpush.bf16.msra.mxu0 %v649
  %1753 = vmatpush.bf16.msra.mxu0 %v647
  %1754 = vmatpush.bf16.msra.mxu0 %v645
  %1755 = vmatpush.bf16.msra.mxu0 %v643
  %1756 = vmatmul.bf16.gmra.mxu0 %v1718
  %v1757 = vpop.f32.mrf.mxu0
  %v1758 = vadd.f32 %v1745, %v1757
  %v1759 = vpop.f32.mrf.mxu0
  %1760 = vdwg.mxu0
  %1761 = vmatpush.bf16.msra.mxu0 %v673
  %1762 = vmatpush.bf16.msra.mxu0 %v671
  %1763 = vmatpush.bf16.msra.mxu0 %v669
  %1764 = vmatpush.bf16.msra.mxu0 %v667
  %1765 = vmatpush.bf16.msra.mxu0 %v665
  %1766 = vmatpush.bf16.msra.mxu0 %v663
  %1767 = vmatpush.bf16.msra.mxu0 %v661
  %1768 = vmatpush.bf16.msra.mxu0 %v659
  %1769 = vmatmul.bf16.gmra.mxu0 %v1719
  %v1770 = vpop.f32.mrf.mxu0
  %v1771 = vadd.f32 %v1758, %v1770
  %v1772 = vpop.f32.mrf.mxu0
  %1773 = vdwg.mxu0
  %1774 = vmatpush.bf16.msra.mxu0 %v689
  %1775 = vmatpush.bf16.msra.mxu0 %v687
  %1776 = vmatpush.bf16.msra.mxu0 %v685
  %1777 = vmatpush.bf16.msra.mxu0 %v683
  %1778 = vmatpush.bf16.msra.mxu0 %v681
  %1779 = vmatpush.bf16.msra.mxu0 %v679
  %1780 = vmatpush.bf16.msra.mxu0 %v677
  %1781 = vmatpush.bf16.msra.mxu0 %v675
  %1782 = vmatmul.bf16.gmra.mxu0 %v1720
  %v1783 = vpop.f32.mrf.mxu0
  %v1784 = vadd.f32 %v1771, %v1783
  %v1785 = vpop.f32.mrf.mxu0
  %1786 = vdwg.mxu0
  %1787 = vmatpush.bf16.msra.mxu0 %v705
  %1788 = vmatpush.bf16.msra.mxu0 %v703
  %1789 = vmatpush.bf16.msra.mxu0 %v701
  %1790 = vmatpush.bf16.msra.mxu0 %v699
  %1791 = vmatpush.bf16.msra.mxu0 %v697
  %1792 = vmatpush.bf16.msra.mxu0 %v695
  %1793 = vmatpush.bf16.msra.mxu0 %v693
  %1794 = vmatpush.bf16.msra.mxu0 %v691
  %1795 = vmatmul.bf16.gmra.mxu0 %v1721
  %v1796 = vpop.f32.mrf.mxu0
  %v1797 = vadd.f32 %v1784, %v1796
  %v1798 = vpop.f32.mrf.mxu0
  %1799 = vdwg.mxu0
  %1800 = vmatpush.bf16.msra.mxu0 %v721
  %1801 = vmatpush.bf16.msra.mxu0 %v719
  %1802 = vmatpush.bf16.msra.mxu0 %v717
  %1803 = vmatpush.bf16.msra.mxu0 %v715
  %1804 = vmatpush.bf16.msra.mxu0 %v713
  %1805 = vmatpush.bf16.msra.mxu0 %v711
  %1806 = vmatpush.bf16.msra.mxu0 %v709
  %1807 = vmatpush.bf16.msra.mxu0 %v707
  %1808 = vmatmul.bf16.gmra.mxu0 %v1722
  %v1809 = vpop.f32.mrf.mxu0
  %v1810 = vadd.f32 %v1797, %v1809
  %v1811 = vpop.f32.mrf.mxu0
  %1812 = vdwg.mxu0
  %1813 = vmatpush.bf16.msra.mxu0 %v737
  %1814 = vmatpush.bf16.msra.mxu0 %v735
  %1815 = vmatpush.bf16.msra.mxu0 %v733
  %1816 = vmatpush.bf16.msra.mxu0 %v731
  %1817 = vmatpush.bf16.msra.mxu0 %v729
  %1818 = vmatpush.bf16.msra.mxu0 %v727
  %1819 = vmatpush.bf16.msra.mxu0 %v725
  %1820 = vmatpush.bf16.msra.mxu0 %v723
  %1821 = vmatmul.bf16.gmra.mxu0 %v1723
  %v1822 = vpop.f32.mrf.mxu0
  %v1823 = vadd.f32 %v1810, %v1822
  %v1824 = vpop.f32.mrf.mxu0
  %1825 = vdwg.mxu0
  %1826 = vmatpush.bf16.msra.mxu0 %v753
  %1827 = vmatpush.bf16.msra.mxu0 %v751
  %1828 = vmatpush.bf16.msra.mxu0 %v749
  %1829 = vmatpush.bf16.msra.mxu0 %v747
  %1830 = vmatpush.bf16.msra.mxu0 %v745
  %1831 = vmatpush.bf16.msra.mxu0 %v743
  %1832 = vmatpush.bf16.msra.mxu0 %v741
  %1833 = vmatpush.bf16.msra.mxu0 %v739
  %1834 = vmatmul.bf16.gmra.mxu0 %v1724
  %v1835 = vpop.f32.mrf.mxu0
  %v1836 = vadd.f32 %v1823, %v1835
  %v1837 = vpop.f32.mrf.mxu0
  %1838 = vdwg.mxu0
  %1839 = vmatpush.bf16.msra.mxu0 %v769
  %1840 = vmatpush.bf16.msra.mxu0 %v767
  %1841 = vmatpush.bf16.msra.mxu0 %v765
  %1842 = vmatpush.bf16.msra.mxu0 %v763
  %1843 = vmatpush.bf16.msra.mxu0 %v761
  %1844 = vmatpush.bf16.msra.mxu0 %v759
  %1845 = vmatpush.bf16.msra.mxu0 %v757
  %1846 = vmatpush.bf16.msra.mxu0 %v755
  %1847 = vmatmul.bf16.gmra.mxu0 %v1725
  %v1848 = vpop.f32.mrf.mxu0
  %v1849 = vadd.f32 %v1836, %v1848
  %v1850 = vpop.f32.mrf.mxu0
  %1851 = vdwg.mxu0
  %1852 = vmatpush.bf16.msra.mxu0 %v642
  %1853 = vmatpush.bf16.msra.mxu0 %v640
  %1854 = vmatpush.bf16.msra.mxu0 %v638
  %1855 = vmatpush.bf16.msra.mxu0 %v636
  %1856 = vmatpush.bf16.msra.mxu0 %v634
  %1857 = vmatpush.bf16.msra.mxu0 %v632
  %1858 = vmatpush.bf16.msra.mxu0 %v630
  %1859 = vmatpush.bf16.msra.mxu0 %v628
  %1860 = vmatmul.bf16.gmra.mxu0 %v1717
  %v1861 = vpop.f32.mrf.mxu0
  %v1862 = vadd.f32 0.0, %v1861
  %v1863 = vpop.f32.mrf.mxu0
  %1864 = vdwg.mxu0
  %1865 = vmatpush.bf16.msra.mxu0 %v658
  %1866 = vmatpush.bf16.msra.mxu0 %v656
  %1867 = vmatpush.bf16.msra.mxu0 %v654
  %1868 = vmatpush.bf16.msra.mxu0 %v652
  %1869 = vmatpush.bf16.msra.mxu0 %v650
  %1870 = vmatpush.bf16.msra.mxu0 %v648
  %1871 = vmatpush.bf16.msra.mxu0 %v646
  %1872 = vmatpush.bf16.msra.mxu0 %v644
  %1873 = vmatmul.bf16.gmra.mxu0 %v1718
  %v1874 = vpop.f32.mrf.mxu0
  %v1875 = vadd.f32 %v1862, %v1874
  %v1876 = vpop.f32.mrf.mxu0
  %1877 = vdwg.mxu0
  %1878 = vmatpush.bf16.msra.mxu0 %v674
  %1879 = vmatpush.bf16.msra.mxu0 %v672
  %1880 = vmatpush.bf16.msra.mxu0 %v670
  %1881 = vmatpush.bf16.msra.mxu0 %v668
  %1882 = vmatpush.bf16.msra.mxu0 %v666
  %1883 = vmatpush.bf16.msra.mxu0 %v664
  %1884 = vmatpush.bf16.msra.mxu0 %v662
  %1885 = vmatpush.bf16.msra.mxu0 %v660
  %1886 = vmatmul.bf16.gmra.mxu0 %v1719
  %v1887 = vpop.f32.mrf.mxu0
  %v1888 = vadd.f32 %v1875, %v1887
  %v1889 = vpop.f32.mrf.mxu0
  %1890 = vdwg.mxu0
  %1891 = vmatpush.bf16.msra.mxu0 %v690
  %1892 = vmatpush.bf16.msra.mxu0 %v688
  %1893 = vmatpush.bf16.msra.mxu0 %v686
  %1894 = vmatpush.bf16.msra.mxu0 %v684
  %1895 = vmatpush.bf16.msra.mxu0 %v682
  %1896 = vmatpush.bf16.msra.mxu0 %v680
  %1897 = vmatpush.bf16.msra.mxu0 %v678
  %1898 = vmatpush.bf16.msra.mxu0 %v676
  %1899 = vmatmul.bf16.gmra.mxu0 %v1720
  %v1900 = vpop.f32.mrf.mxu0
  %v1901 = vadd.f32 %v1888, %v1900
  %v1902 = vpop.f32.mrf.mxu0
  %1903 = vdwg.mxu0
  %1904 = vmatpush.bf16.msra.mxu0 %v706
  %1905 = vmatpush.bf16.msra.mxu0 %v704
  %1906 = vmatpush.bf16.msra.mxu0 %v702
  %1907 = vmatpush.bf16.msra.mxu0 %v700
  %1908 = vmatpush.bf16.msra.mxu0 %v698
  %1909 = vmatpush.bf16.msra.mxu0 %v696
  %1910 = vmatpush.bf16.msra.mxu0 %v694
  %1911 = vmatpush.bf16.msra.mxu0 %v692
  %1912 = vmatmul.bf16.gmra.mxu0 %v1721
  %v1913 = vpop.f32.mrf.mxu0
  %v1914 = vadd.f32 %v1901, %v1913
  %v1915 = vpop.f32.mrf.mxu0
  %1916 = vdwg.mxu0
  %1917 = vmatpush.bf16.msra.mxu0 %v722
  %1918 = vmatpush.bf16.msra.mxu0 %v720
  %1919 = vmatpush.bf16.msra.mxu0 %v718
  %1920 = vmatpush.bf16.msra.mxu0 %v716
  %1921 = vmatpush.bf16.msra.mxu0 %v714
  %1922 = vmatpush.bf16.msra.mxu0 %v712
  %1923 = vmatpush.bf16.msra.mxu0 %v710
  %1924 = vmatpush.bf16.msra.mxu0 %v708
  %1925 = vmatmul.bf16.gmra.mxu0 %v1722
  %v1926 = vpop.f32.mrf.mxu0
  %v1927 = vadd.f32 %v1914, %v1926
  %v1928 = vpop.f32.mrf.mxu0
  %1929 = vdwg.mxu0
  %1930 = vmatpush.bf16.msra.mxu0 %v738
  %1931 = vmatpush.bf16.msra.mxu0 %v736
  %1932 = vmatpush.bf16.msra.mxu0 %v734
  %1933 = vmatpush.bf16.msra.mxu0 %v732
  %1934 = vmatpush.bf16.msra.mxu0 %v730
  %1935 = vmatpush.bf16.msra.mxu0 %v728
  %1936 = vmatpush.bf16.msra.mxu0 %v726
  %1937 = vmatpush.bf16.msra.mxu0 %v724
  %1938 = vmatmul.bf16.gmra.mxu0 %v1723
  %v1939 = vpop.f32.mrf.mxu0
  %v1940 = vadd.f32 %v1927, %v1939
  %v1941 = vpop.f32.mrf.mxu0
  %1942 = vdwg.mxu0
  %1943 = vmatpush.bf16.msra.mxu0 %v754
  %1944 = vmatpush.bf16.msra.mxu0 %v752
  %1945 = vmatpush.bf16.msra.mxu0 %v750
  %1946 = vmatpush.bf16.msra.mxu0 %v748
  %1947 = vmatpush.bf16.msra.mxu0 %v746
  %1948 = vmatpush.bf16.msra.mxu0 %v744
  %1949 = vmatpush.bf16.msra.mxu0 %v742
  %1950 = vmatpush.bf16.msra.mxu0 %v740
  %1951 = vmatmul.bf16.gmra.mxu0 %v1724
  %v1952 = vpop.f32.mrf.mxu0
  %v1953 = vadd.f32 %v1940, %v1952
  %v1954 = vpop.f32.mrf.mxu0
  %1955 = vdwg.mxu0
  %1956 = vmatpush.bf16.msra.mxu0 %v770
  %1957 = vmatpush.bf16.msra.mxu0 %v768
  %1958 = vmatpush.bf16.msra.mxu0 %v766
  %1959 = vmatpush.bf16.msra.mxu0 %v764
  %1960 = vmatpush.bf16.msra.mxu0 %v762
  %1961 = vmatpush.bf16.msra.mxu0 %v760
  %1962 = vmatpush.bf16.msra.mxu0 %v758
  %1963 = vmatpush.bf16.msra.mxu0 %v756
  %1964 = vmatmul.bf16.gmra.mxu0 %v1725
  %v1965 = vpop.f32.mrf.mxu0
  %v1966 = vadd.f32 %v1953, %v1965
  %v1967 = vpop.f32.mrf.mxu0
  %1968 = vdwg.mxu0
  %v1969 = vmax.f32 %v1695, %v1849
  %v1970 = vmax.f32 %v1696, %v1966
  %v1971 = vld [vmem:[%s2] sm:$0x3]
  %v1973 = vperm.slane %v1971, 0
  %v1974 = vperm.slane %v1971, 1
  %v1977 = vadd.f32 %v1969, %v1973
  %v1978 = vadd.f32 %v1970, %v1974
  %v1979 = vmax.f32 %v1977, 0.0
  %v1980 = vmax.f32 %v1978, 0.0
  %1981 = vst [vmem:[%s3] sm:$0xff] %v1979
  %1982 = vst [vmem:[%s3 + $0x8] sm:$0xff] %v1980
  // Predicated region
  $region14: #{lane_detection_cnn_forward.9} parent=0 // pred_check
    _
  $region15: #{lane_detection_cnn_forward.9} parent=0 // pred_check_branch
    %1984 = sbr.rel (0) target = $region17
  $region16: #{lane_detection_cnn_forward.9} parent=0 // pred_region
    _
  $region17: #{lane_detection_cnn_forward.9} parent=0 // pred_fallthru
    _
  // Predicated region
  $region18: #{lane_detection_cnn_forward.9} parent=0 // pred_check
    _
  $region19: #{lane_detection_cnn_forward.9} parent=0 // pred_check_branch
    %1986 = sbr.rel (0) target = $region21
  $region20: #{lane_detection_cnn_forward.9} parent=0 // pred_region
    _
  $region21: #{lane_detection_cnn_forward.9} parent=0 // pred_fallthru
    _

</llo_original>
